<compile_context>
chip_gen: v7x
topology: tpu7x:2x2x1
jax: 0.10.0
libtpu: 0.0.40
codegen_flags: <defaults>
</compile_context>

<pallas_src>
import jax
import jax.numpy as jnp
from jax.experimental import pallas as pl
from jax.experimental.pallas import tpu as pltpu

_EPS = 1e-5
_LANE = 128


# ---------------------------------------------------------------------------
# small helpers (wrapper-side layout / config glue only)
# ---------------------------------------------------------------------------
def _round_up(x, m):
  return (x + m - 1) // m * m


def _pad_to(a, shape):
  return jnp.pad(a, [(0, t - s) for s, t in zip(a.shape, shape)])


def _vmem_limit_bytes():
  """Per-generation VMEM limit: ~48 MiB on 64 MiB chips, 96 MiB on 128 MiB."""
  cap = 64 * 1024 * 1024                      # conservative default (v7x)
  try:
    cap = int(getattr(pltpu.get_tpu_info(), "vmem_capacity_bytes", cap))
  except Exception:
    pass
  return min(cap * 3 // 4, 96 * 1024 * 1024)


def _pick_tile_m(m, row_bytes, vmem_budget):
  """Largest row tile (<=1024, divides M) whose buffered working set fits."""
  for t in (1024, 512, 256, 128, 64, 32, 16, 8):
    if m % t == 0 and t * row_bytes * 4 <= vmem_budget:
      return t
  # TODO(synk): cdiv grid + masked tail for row counts not divisible by 8.
  return m


def _cp(semantics, vmem_limit):
  return pltpu.CompilerParams(
      dimension_semantics=semantics, vmem_limit_bytes=int(vmem_limit))


def _scale_shift(ssum, ssq, gamma, beta, m):
  """Finalize BN from partial (sum, sum_sq) -- tiny jnp op between kernels."""
  c = ssum.shape[-1]
  s = jnp.sum(ssum.reshape(-1, c), axis=0)
  q = jnp.sum(ssq.reshape(-1, c), axis=0)
  mean = s * (1.0 / m)
  var = jnp.maximum(q * (1.0 / m) - mean * mean, 0.0)   # guard cancellation
  scale = gamma * jax.lax.rsqrt(var + _EPS)
  shift = beta - mean * scale
  return (scale.reshape(1, c).astype(jnp.float32),
          shift.reshape(1, c).astype(jnp.float32))


# ---------------------------------------------------------------------------
# Pallas kernels
# ---------------------------------------------------------------------------
def _conv1x1_stats_kernel(x_ref, w_ref, y_ref, ss_ref, sq_ref):
  """1x1 conv (bf16 MXU matmul, f32 accum) + per-tile BN partial stats."""
  y = jnp.dot(x_ref[...].astype(jnp.bfloat16), w_ref[...],
              preferred_element_type=jnp.float32)
  y_ref[...] = y.astype(y_ref.dtype)                 # bf16 HBM intermediate
  ss_ref[...] = jnp.sum(y, axis=0, keepdims=True)
  sq_ref[...] = jnp.sum(y * y, axis=0, keepdims=True)


def _norm_conv1x1_stats_kernel(x_ref, sc_ref, sh_ref, w_ref,
                               y_ref, ss_ref, sq_ref):
  """Fused BN(scale,shift)+ReLU -> 1x1 conv -> per-tile BN partial stats."""
  a = jnp.maximum(x_ref[...].astype(jnp.float32) * sc_ref[...] + sh_ref[...],
                  0.0)
  y = jnp.dot(a.astype(jnp.bfloat16), w_ref[...],
              preferred_element_type=jnp.float32)
  y_ref[...] = y.astype(y_ref.dtype)
  ss_ref[...] = jnp.sum(y, axis=0, keepdims=True)
  sq_ref[...] = jnp.sum(y * y, axis=0, keepdims=True)


def _make_conv2_kernel(H, W, C, pad_top):
  """Fused BN1+ReLU -> 3x3 conv (3 K-stacked matmuls) -> BN2 partial stats."""
  HW = H * W

  def kernel(x_ref, sc_ref, sh_ref, w_ref, y_ref, ss_ref, sq_ref, pad_ref):
    # Zero the halo frame of the persistent scratch exactly once.  The grid
    # axis is "arbitrary" (sequential, in order) so this is safe; interior
    # rows are fully rewritten every step, halo rows never are.
    @pl.when(pl.program_id(0) == 0)
    def _():
      pad_ref[...] = jnp.zeros_like(pad_ref)

    # BN1 (hoisted stats) + ReLU, then drop the image into the zero-framed
    # flattened scratch: real pixels occupy rows [pad_top, pad_top + HW).
    act = jnp.maximum(
        x_ref[...].astype(jnp.float32) * sc_ref[...] + sh_ref[...], 0.0)
    pad_ref[pl.ds(pad_top, HW), :] = act

    col = jax.lax.broadcasted_iota(jnp.int32, (HW, 1), 0) % W

    def tap_group(dw):
      # Stack the 3 kh taps along the contraction dim -> one K = 3*C matmul.
      # Slices only offset the leading (row) axis of the scratch: no window
      # copies, no reshapes of partially tiled values.
      slabs = [pad_ref[pl.ds(pad_top + (dh - 1) * W + (dw - 1), HW), :]
               for dh in range(3)]
      lhs = jnp.concatenate(slabs, axis=1).astype(jnp.bfloat16)
      return jnp.dot(lhs, w_ref[dw], preferred_element_type=jnp.float32)

    # Mask output columns whose flattened kw shift wrapped across an image
    # row (the vertical halo is handled by the zero frame for free).
    acc = jnp.where(col >= 1, tap_group(0), 0.0)
    acc = acc + tap_group(1)
    acc = acc + jnp.where(col <= W - 2, tap_group(2), 0.0)

    y_ref[...] = acc.astype(y_ref.dtype)             # single output write
    ss_ref[...] = jnp.sum(acc, axis=0, keepdims=True)
    sq_ref[...] = jnp.sum(acc * acc, axis=0, keepdims=True)

  return kernel


def _bn_add_relu_kernel(y_ref, sc_ref, sh_ref, res_ref, o_ref):
  """BN3(scale,shift) + identity residual + ReLU (f32 elementwise)."""
  o_ref[...] = jnp.maximum(
      y_ref[...].astype(jnp.float32) * sc_ref[...] + sh_ref[...]
      + res_ref[...], 0.0)


# ---------------------------------------------------------------------------
# Bottleneck forward (wrapper = layout glue + tiny BN-finalize jnp ops)
# ---------------------------------------------------------------------------
def bottleneck_forward(x_nchw, params):
  x = jnp.transpose(x_nchw, (0, 2, 3, 1)).astype(jnp.float32)   # NCHW -> NHWC
  N, H, W, Cin = x.shape
  P = params["w1"].shape[1]
  Cout = 4 * P
  if Cin != Cout:
    # TODO(synk): stride > 1 / downsample branch not implemented.
    raise ValueError("identity residual requires inplanes == 4*planes")
  HW = H * W
  M = N * HW
  if M % 8 != 0 or HW % 8 != 0 or W < 2:
    # TODO(synk): masked tails for awkward spatial sizes.
    raise ValueError("H*W and N*H*W must be multiples of 8, W >= 2")

  C1 = _round_up(Cin, _LANE)
  C2 = _round_up(P, _LANE)
  C3 = _round_up(Cout, _LANE)          # == C1 since Cin == Cout
  vmem_limit = _vmem_limit_bytes()
  tile_m = _pick_tile_m(M, 4 * (C1 + C2 + C3), vmem_limit)
  T = M // tile_m
  pad_top = _round_up(W + 1, 8)
  pad_rows = pad_top + HW + _round_up(W + 1, 8)

  # one-time layout glue: lane-dense channel padding + weight casts
  xp = _pad_to(x.reshape(M, Cin), (M, C1))                       # f32 residual
  w1 = _pad_to(params["w1"], (C1, C2)).astype(jnp.bfloat16)
  w2p = _pad_to(params["w2"], (3, 3, C2, C2))
  w2cat = jnp.transpose(w2p, (1, 0, 2, 3)).reshape(3, 3 * C2, C2)
  w2cat = w2cat.astype(jnp.bfloat16)                             # (kw, kh*Ci, Co)
  w3 = _pad_to(params["w3"], (C2, C3)).astype(jnp.bfloat16)
  g1 = _pad_to(params["g1"].astype(jnp.float32), (C2,))
  b1 = _pad_to(params["b1"].astype(jnp.float32), (C2,))
  g2 = _pad_to(params["g2"].astype(jnp.float32), (C2,))
  b2 = _pad_to(params["b2"].astype(jnp.float32), (C2,))
  g3 = _pad_to(params["g3"].astype(jnp.float32), (C3,))
  b3 = _pad_to(params["b3"].astype(jnp.float32), (C3,))

  # ---- layer 1: conv1 (1x1 matmul) + BN1 partial stats ---------------------
  y1, s1s, s1q = pl.pallas_call(
      _conv1x1_stats_kernel,
      grid=(T,),
      in_specs=[
          pl.BlockSpec((tile_m, C1), lambda i: (i, 0)),
          pl.BlockSpec((C1, C2), lambda i: (0, 0)),
      ],
      out_specs=[
          pl.BlockSpec((tile_m, C2), lambda i: (i, 0)),
          pl.BlockSpec((None, 1, C2), lambda i: (i, 0, 0)),
          pl.BlockSpec((None, 1, C2), lambda i: (i, 0, 0)),
      ],
      out_shape=[
          jax.ShapeDtypeStruct((M, C2), jnp.bfloat16),
          jax.ShapeDtypeStruct((T, 1, C2), jnp.float32),
          jax.ShapeDtypeStruct((T, 1, C2), jnp.float32),
      ],
      compiler_params=_cp(("parallel",), vmem_limit),
  )(xp, w1)
  sc1, sh1 = _scale_shift(s1s, s1q, g1, b1, M)

  # ---- layer 2: BN1+ReLU -> 3x3 conv -> BN2 partial stats ------------------
  y2, s2s, s2q = pl.pallas_call(
      _make_conv2_kernel(H, W, C2, pad_top),
      grid=(N,),
      in_specs=[
          pl.BlockSpec((None, HW, C2), lambda n: (n, 0, 0)),
          pl.BlockSpec((1, C2), lambda n: (0, 0)),
          pl.BlockSpec((1, C2), lambda n: (0, 0)),
          pl.BlockSpec((3, 3 * C2, C2), lambda n: (0, 0, 0)),
      ],
      out_specs=[
          pl.BlockSpec((None, HW, C2), lambda n: (n, 0, 0)),
          pl.BlockSpec((None, 1, C2), lambda n: (n, 0, 0)),
          pl.BlockSpec((None, 1, C2), lambda n: (n, 0, 0)),
      ],
      out_shape=[
          jax.ShapeDtypeStruct((N, HW, C2), jnp.bfloat16),
          jax.ShapeDtypeStruct((N, 1, C2), jnp.float32),
          jax.ShapeDtypeStruct((N, 1, C2), jnp.float32),
      ],
      scratch_shapes=[pltpu.VMEM((pad_rows, C2), jnp.float32)],
      # "arbitrary": the scratch's zero frame is written only at step 0, so
      # steps must run sequentially in order on one core.
      compiler_params=_cp(("arbitrary",), vmem_limit),
  )(y1.reshape(N, HW, C2), sc1, sh1, w2cat)
  sc2, sh2 = _scale_shift(s2s, s2q, g2, b2, M)

  # ---- layer 3: BN2+ReLU -> conv3 (1x1 matmul) -> BN3 partial stats --------
  y3, s3s, s3q = pl.pallas_call(
      _norm_conv1x1_stats_kernel,
      grid=(T,),
      in_specs=[
          pl.BlockSpec((tile_m, C2), lambda i: (i, 0)),
          pl.BlockSpec((1, C2), lambda i: (0, 0)),
          pl.BlockSpec((1, C2), lambda i: (0, 0)),
          pl.BlockSpec((C2, C3), lambda i: (0, 0)),
      ],
      out_specs=[
          pl.BlockSpec((tile_m, C3), lambda i: (i, 0)),
          pl.BlockSpec((None, 1, C3), lambda i: (i, 0, 0)),
          pl.BlockSpec((None, 1, C3), lambda i: (i, 0, 0)),
      ],
      out_shape=[
          jax.ShapeDtypeStruct((M, C3), jnp.bfloat16),
          jax.ShapeDtypeStruct((T, 1, C3), jnp.float32),
          jax.ShapeDtypeStruct((T, 1, C3), jnp.float32),
      ],
      compiler_params=_cp(("parallel",), vmem_limit),
  )(y2.reshape(M, C2), sc2, sh2, w3)
  sc3, sh3 = _scale_shift(s3s, s3q, g3, b3, M)

  # ---- finalize: BN3 + identity residual + ReLU ----------------------------
  out = pl.pallas_call(
      _bn_add_relu_kernel,
      grid=(T,),
      in_specs=[
          pl.BlockSpec((tile_m, C3), lambda i: (i, 0)),
          pl.BlockSpec((1, C3), lambda i: (0, 0)),
          pl.BlockSpec((1, C3), lambda i: (0, 0)),
          pl.BlockSpec((tile_m, C3), lambda i: (i, 0)),
      ],
      out_specs=pl.BlockSpec((tile_m, C3), lambda i: (i, 0)),
      out_shape=jax.ShapeDtypeStruct((M, C3), jnp.float32),
      compiler_params=_cp(("parallel",), vmem_limit),
  )(y3, sc3, sh3, xp)

  out = out.reshape(N, H, W, C3)[:, :, :, :Cout]
  return jnp.transpose(out, (0, 3, 1, 2))                        # back to NCHW


# ---------------------------------------------------------------------------
# Pure-JAX f32 reference (for correctness check)
# ---------------------------------------------------------------------------
def ref_bottleneck(x_nchw, p):
  x = jnp.transpose(x_nchw, (0, 2, 3, 1)).astype(jnp.float32)

  def bn(y, g, b):
    mean = jnp.mean(y, axis=(0, 1, 2), keepdims=True)
    var = jnp.mean((y - mean) ** 2, axis=(0, 1, 2), keepdims=True)
    return (y - mean) * (g / jnp.sqrt(var + _EPS)) + b

  y = jnp.einsum("nhwc,cp->nhwp", x, p["w1"])
  y = jax.nn.relu(bn(y, p["g1"], p["b1"]))
  y = jax.lax.conv_general_dilated(
      y, p["w2"], window_strides=(1, 1), padding=((1, 1), (1, 1)),
      dimension_numbers=("NHWC", "HWIO", "NHWC"))
  y = jax.nn.relu(bn(y, p["g2"], p["b2"]))
  y = jnp.einsum("nhwc,cp->nhwp", y, p["w3"])
  y = jax.nn.relu(bn(y, p["g3"], p["b3"]) + x)
  return jnp.transpose(y, (0, 3, 1, 2))


# ---------------------------------------------------------------------------
def make_params(key, inplanes, planes):
  ks = jax.random.split(key, 9)
  return {
      # conv weights stored channel-last (HWIO / (Cin, Cout)) for the kernels
      "w1": 0.2 * jax.random.normal(ks[0], (inplanes, planes), jnp.float32),
      "w2": 0.2 * jax.random.normal(ks[1], (3, 3, planes, planes), jnp.float32),
      "w3": 0.2 * jax.random.normal(ks[2], (planes, 4 * planes), jnp.float32),
      "g1": 1.0 + 0.1 * jax.random.normal(ks[3], (planes,), jnp.float32),
      "b1": 0.1 * jax.random.normal(ks[4], (planes,), jnp.float32),
      "g2": 1.0 + 0.1 * jax.random.normal(ks[5], (planes,), jnp.float32),
      "b2": 0.1 * jax.random.normal(ks[6], (planes,), jnp.float32),
      "g3": 1.0 + 0.1 * jax.random.normal(ks[7], (4 * planes,), jnp.float32),
      "b3": 0.1 * jax.random.normal(ks[8], (4 * planes,), jnp.float32),
  }


if __name__ == "__main__":
  # small shapes: inplanes = planes*expansion so the identity residual is valid
  N, H, W = 2, 16, 16
  planes = 4
  inplanes = planes * 4  # = 16

  key = jax.random.PRNGKey(0)
  kx, kp = jax.random.split(key)
  x = jax.random.normal(kx, (N, inplanes, H, W), jnp.float32)   # NCHW like torch
  params = make_params(kp, inplanes, planes)

  out = jax.block_until_ready(jax.jit(bottleneck_forward)(x, params))
  ref = jax.block_until_ready(jax.jit(ref_bottleneck)(x, params))

  assert out.shape == (N, 4 * planes, H, W), out.shape
  # bf16 MXU inputs / bf16 HBM intermediates vs pure-f32 reference.
  if not jnp.allclose(out, ref, atol=5e-2, rtol=5e-2):
    raise AssertionError(
        f"mismatch vs reference: max abs err {jnp.max(jnp.abs(out - ref))}")

  print("KERNEL_OK")
</pallas_src>

<mosaic_0001>
module attributes {stable_mosaic.version = 11 : i64} {
  func.func @_conv1x1_stats_kernel(%arg0: i32, %arg1: memref<512x128xf32, #tpu.memory_space<vmem>>, %arg2: memref<128x128xbf16, #tpu.memory_space<vmem>>, %arg3: memref<512x128xbf16, #tpu.memory_space<vmem>>, %arg4: memref<1x1x128xf32, #tpu.memory_space<vmem>>, %arg5: memref<1x1x128xf32, #tpu.memory_space<vmem>>) attributes {dimension_semantics = [#tpu.dimension_semantics<parallel>], iteration_bounds = array<i64: 1>, scalar_prefetch = 0 : i64, scratch_operands = 0 : i64, tpu.core_type = #tpu.core_type<tc>, window_params = [{transform_indices = @transform_0, window_bounds = array<i64: 512, 128>}, {pipeline_mode = #tpu.pipeline_mode<synchronous>, transform_indices = @transform_1, window_bounds = array<i64: 128, 128>}, {transform_indices = @transform_2, window_bounds = array<i64: 512, 128>}, {transform_indices = @transform_3, window_bounds = array<i64: 1, 1, 128>}, {transform_indices = @transform_4, window_bounds = array<i64: 1, 1, 128>}]} {
    %c0 = arith.constant 0 : index
    %c0_0 = arith.constant 0 : index
    %0 = vector.load %arg1[%c0, %c0_0] : memref<512x128xf32, #tpu.memory_space<vmem>>, vector<512x128xf32>
    %1 = arith.truncf %0 : vector<512x128xf32> to vector<512x128xbf16>
    %c0_1 = arith.constant 0 : index
    %c0_2 = arith.constant 0 : index
    %2 = vector.load %arg2[%c0_1, %c0_2] : memref<128x128xbf16, #tpu.memory_space<vmem>>, vector<128x128xbf16>
    %cst = arith.constant dense<0.000000e+00> : vector<512x128xf32>
    %3 = tpu.matmul %1, %2, %cst {dimension_numbers = #tpu.dot_dimension_numbers<[1], [0], [0], [1], [0, 0, 1, 1], [], []>} : vector<512x128xbf16>, vector<128x128xbf16>, vector<512x128xf32> -> vector<512x128xf32>
    %4 = arith.truncf %3 : vector<512x128xf32> to vector<512x128xbf16>
    %c0_3 = arith.constant 0 : index
    %c0_4 = arith.constant 0 : index
    %5 = vector.load %arg3[%c0_3, %c0_4] : memref<512x128xbf16, #tpu.memory_space<vmem>>, vector<512x128xbf16>
    tpu.vector_store %arg3[%c0_3, %c0_4], %4 {strides = array<i32>} : memref<512x128xbf16, #tpu.memory_space<vmem>>, vector<512x128xbf16>,
    %cst_5 = arith.constant dense<0.000000e+00> : vector<128xf32>
    %6 = vector.multi_reduction <add>, %3, %cst_5 [0] : vector<512x128xf32> to vector<128xf32>
    %7 = vector.shape_cast %6 : vector<128xf32> to vector<1x128xf32>
    %c0_6 = arith.constant 0 : index
    %c0_7 = arith.constant 0 : index
    %c0_8 = arith.constant 0 : index
    %8 = vector.load %arg4[%c0_6, %c0_7, %c0_8] : memref<1x1x128xf32, #tpu.memory_space<vmem>>, vector<1x1x128xf32>
    %9 = vector.shape_cast %8 : vector<1x1x128xf32> to vector<1x128xf32>
    %10 = vector.shape_cast %7 : vector<1x128xf32> to vector<1x1x128xf32>
    tpu.vector_store %arg4[%c0_6, %c0_7, %c0_8], %10 {strides = array<i32>} : memref<1x1x128xf32, #tpu.memory_space<vmem>>, vector<1x1x128xf32>,
    %11 = arith.mulf %3, %3 : vector<512x128xf32>
    %cst_9 = arith.constant dense<0.000000e+00> : vector<128xf32>
    %12 = vector.multi_reduction <add>, %11, %cst_9 [0] : vector<512x128xf32> to vector<128xf32>
    %13 = vector.shape_cast %12 : vector<128xf32> to vector<1x128xf32>
    %c0_10 = arith.constant 0 : index
    %c0_11 = arith.constant 0 : index
    %c0_12 = arith.constant 0 : index
    %14 = vector.load %arg5[%c0_10, %c0_11, %c0_12] : memref<1x1x128xf32, #tpu.memory_space<vmem>>, vector<1x1x128xf32>
    %15 = vector.shape_cast %14 : vector<1x1x128xf32> to vector<1x128xf32>
    %16 = vector.shape_cast %13 : vector<1x128xf32> to vector<1x1x128xf32>
    tpu.vector_store %arg5[%c0_10, %c0_11, %c0_12], %16 {strides = array<i32>} : memref<1x1x128xf32, #tpu.memory_space<vmem>>, vector<1x1x128xf32>,
    return
  }
  func.func @transform_0(%arg0: i32) -> (i32, i32) {
    %c0_i32 = arith.constant 0 : i32
    %c0_i32_0 = arith.constant 0 : i32
    return %arg0, %c0_i32 : i32, i32
  }
  func.func @transform_1(%arg0: i32) -> (i32, i32) {
    %c0_i32 = arith.constant 0 : i32
    %c0_i32_0 = arith.constant 0 : i32
    %c0_i32_1 = arith.constant 0 : i32
    return %c0_i32, %c0_i32_0 : i32, i32
  }
  func.func @transform_2(%arg0: i32) -> (i32, i32) {
    %c0_i32 = arith.constant 0 : i32
    %c0_i32_0 = arith.constant 0 : i32
    return %arg0, %c0_i32 : i32, i32
  }
  func.func @transform_3(%arg0: i32) -> (i32, i32, i32) {
    %c0_i32 = arith.constant 0 : i32
    %c0_i32_0 = arith.constant 0 : i32
    %c0_i32_1 = arith.constant 0 : i32
    return %arg0, %c0_i32, %c0_i32_0 : i32, i32, i32
  }
  func.func @transform_4(%arg0: i32) -> (i32, i32, i32) {
    %c0_i32 = arith.constant 0 : i32
    %c0_i32_0 = arith.constant 0 : i32
    %c0_i32_1 = arith.constant 0 : i32
    return %arg0, %c0_i32, %c0_i32_0 : i32, i32, i32
  }
}

module attributes {stable_mosaic.version = 11 : i64} {
  func.func @kernel(%arg0: i32, %arg1: memref<1x256x128xbf16, #tpu.memory_space<vmem>>, %arg2: memref<1x128xf32, #tpu.memory_space<vmem>>, %arg3: memref<1x128xf32, #tpu.memory_space<vmem>>, %arg4: memref<3x384x128xbf16, #tpu.memory_space<vmem>>, %arg5: memref<1x256x128xbf16, #tpu.memory_space<vmem>>, %arg6: memref<1x1x128xf32, #tpu.memory_space<vmem>>, %arg7: memref<1x1x128xf32, #tpu.memory_space<vmem>>, %arg8: memref<304x128xf32, #tpu.memory_space<vmem>>) attributes {dimension_semantics = [#tpu.dimension_semantics<arbitrary>], iteration_bounds = array<i64: 2>, scalar_prefetch = 0 : i64, scratch_operands = 1 : i64, tpu.core_type = #tpu.core_type<tc>, window_params = [{transform_indices = @transform_0, window_bounds = array<i64: 1, 256, 128>}, {pipeline_mode = #tpu.pipeline_mode<synchronous>, transform_indices = @transform_1, window_bounds = array<i64: 1, 128>}, {pipeline_mode = #tpu.pipeline_mode<synchronous>, transform_indices = @transform_2, window_bounds = array<i64: 1, 128>}, {pipeline_mode = #tpu.pipeline_mode<synchronous>, transform_indices = @transform_3, window_bounds = array<i64: 3, 384, 128>}, {transform_indices = @transform_4, window_bounds = array<i64: 1, 256, 128>}, {transform_indices = @transform_5, window_bounds = array<i64: 1, 1, 128>}, {transform_indices = @transform_6, window_bounds = array<i64: 1, 1, 128>}]} {
    %c0_i32 = arith.constant 0 : i32
    %0 = arith.cmpi eq, %arg0, %c0_i32 : i32
    %1 = arith.extui %0 : i1 to i32
    %c0_i32_0 = arith.constant 0 : i32
    %2 = arith.cmpi ne, %1, %c0_i32_0 : i32
    scf.if %2 {
      %cst_46 = arith.constant 0.000000e+00 : f32
      %85 = vector.broadcast %cst_46 : f32 to vector<304x128xf32>
      %c0_47 = arith.constant 0 : index
      %c0_48 = arith.constant 0 : index
      %86 = vector.load %arg8[%c0_47, %c0_48] : memref<304x128xf32, #tpu.memory_space<vmem>>, vector<304x128xf32>
      tpu.vector_store %arg8[%c0_47, %c0_48], %85 {strides = array<i32>} : memref<304x128xf32, #tpu.memory_space<vmem>>, vector<304x128xf32>,
    } else {
    }
    %c0 = arith.constant 0 : index
    %c0_1 = arith.constant 0 : index
    %c0_2 = arith.constant 0 : index
    %3 = vector.load %arg1[%c0, %c0_1, %c0_2] : memref<1x256x128xbf16, #tpu.memory_space<vmem>>, vector<1x256x128xbf16>
    %4 = vector.shape_cast %3 : vector<1x256x128xbf16> to vector<256x128xbf16>
    %5 = arith.extf %4 : vector<256x128xbf16> to vector<256x128xf32>
    %c0_3 = arith.constant 0 : index
    %c0_4 = arith.constant 0 : index
    %6 = vector.load %arg2[%c0_3, %c0_4] : memref<1x128xf32, #tpu.memory_space<vmem>>, vector<1x128xf32>
    %7 = vector.broadcast %6 : vector<1x128xf32> to vector<256x128xf32>
    %8 = arith.mulf %5, %7 : vector<256x128xf32>
    %c0_5 = arith.constant 0 : index
    %c0_6 = arith.constant 0 : index
    %9 = vector.load %arg3[%c0_5, %c0_6] : memref<1x128xf32, #tpu.memory_space<vmem>>, vector<1x128xf32>
    %10 = vector.broadcast %9 : vector<1x128xf32> to vector<256x128xf32>
    %11 = arith.addf %8, %10 : vector<256x128xf32>
    %cst = arith.constant 0.000000e+00 : f32
    %12 = vector.broadcast %cst : f32 to vector<256x128xf32>
    %13 = arith.maximumf %11, %12 : vector<256x128xf32>
    %c24 = arith.constant 24 : index
    %c0_7 = arith.constant 0 : index
    %14 = vector.load %arg8[%c24, %c0_7] : memref<304x128xf32, #tpu.memory_space<vmem>>, vector<256x128xf32>
    tpu.vector_store %arg8[%c24, %c0_7], %13 {strides = array<i32>} : memref<304x128xf32, #tpu.memory_space<vmem>>, vector<256x128xf32>,
    %15 = tpu.iota {dimensions = array<i32: 0>} : vector<256x1xi32>
    %c16_i32 = arith.constant 16 : i32
    %c0_i32_8 = arith.constant 0 : i32
    %16 = arith.cmpi eq, %c16_i32, %c0_i32_8 : i32
    %c1_i32 = arith.constant 1 : i32
    %17 = arith.select %16, %c1_i32, %c16_i32 : i32
    %18 = vector.broadcast %17 : i32 to vector<256x1xi32>
    %19 = arith.remsi %15, %18 : vector<256x1xi32>
    %c0_i32_9 = arith.constant 0 : i32
    %20 = vector.broadcast %c0_i32_9 : i32 to vector<256x1xi32>
    %21 = arith.cmpi ne, %19, %20 : vector<256x1xi32>
    %c0_i32_10 = arith.constant 0 : i32
    %22 = vector.broadcast %c0_i32_10 : i32 to vector<256x1xi32>
    %23 = arith.cmpi slt, %19, %22 : vector<256x1xi32>
    %c0_i32_11 = arith.constant 0 : i32
    %24 = arith.cmpi slt, %17, %c0_i32_11 : i32
    %25 = vector.broadcast %24 : i1 to vector<256x1xi1>
    %26 = vector.broadcast %25 : vector<256x1xi1> to vector<256x1xi1>
    %27 = arith.xori %23, %26 : vector<256x1xi1>
    %28 = arith.andi %27, %21 : vector<256x1xi1>
    %29 = vector.broadcast %17 : i32 to vector<256x1xi32>
    %30 = arith.addi %19, %29 : vector<256x1xi32>
    %31 = arith.select %28, %30, %19 : vector<256x1xi1>, vector<256x1xi32>
    %c1_i32_12 = arith.constant 1 : i32
    %32 = vector.broadcast %c1_i32_12 : i32 to vector<256x1xi32>
    %33 = arith.cmpi sge, %31, %32 : vector<256x1xi32>
    %c7 = arith.constant 7 : index
    %c0_13 = arith.constant 0 : index
    %34 = vector.load %arg8[%c7, %c0_13] : memref<304x128xf32, #tpu.memory_space<vmem>>, vector<256x128xf32>
    %c23 = arith.constant 23 : index
    %c0_14 = arith.constant 0 : index
    %35 = vector.load %arg8[%c23, %c0_14] : memref<304x128xf32, #tpu.memory_space<vmem>>, vector<256x128xf32>
    %c39 = arith.constant 39 : index
    %c0_15 = arith.constant 0 : index
    %36 = vector.load %arg8[%c39, %c0_15] : memref<304x128xf32, #tpu.memory_space<vmem>>, vector<256x128xf32>
    %37 = tpu.concatenate %34, %35, %36 in 1 : vector<256x128xf32>, vector<256x128xf32>, vector<256x128xf32> -> vector<256x384xf32>
    %38 = arith.truncf %37 : vector<256x384xf32> to vector<256x384xbf16>
    %c0_16 = arith.constant 0 : index
    %c0_17 = arith.constant 0 : index
    %c0_18 = arith.constant 0 : index
    %39 = vector.load %arg4[%c0_16, %c0_17, %c0_18] : memref<3x384x128xbf16, #tpu.memory_space<vmem>>, vector<1x384x128xbf16>
    %40 = vector.shape_cast %39 : vector<1x384x128xbf16> to vector<384x128xbf16>
    %cst_19 = arith.constant dense<0.000000e+00> : vector<256x128xf32>
    %41 = tpu.matmul %38, %40, %cst_19 {dimension_numbers = #tpu.dot_dimension_numbers<[1], [0], [0], [1], [0, 0, 1, 1], [], []>} : vector<256x384xbf16>, vector<384x128xbf16>, vector<256x128xf32> -> vector<256x128xf32>
    %cst_20 = arith.constant 0.000000e+00 : f32
    %42 = vector.shape_cast %33 : vector<256x1xi1> to vector<256x1xi1>
    %43 = vector.broadcast %42 : vector<256x1xi1> to vector<256x128xi1>
    %44 = vector.broadcast %cst_20 : f32 to vector<256x128xf32>
    %45 = arith.select %43, %41, %44 : vector<256x128xi1>, vector<256x128xf32>
    %c8 = arith.constant 8 : index
    %c0_21 = arith.constant 0 : index
    %46 = vector.load %arg8[%c8, %c0_21] : memref<304x128xf32, #tpu.memory_space<vmem>>, vector<256x128xf32>
    %c24_22 = arith.constant 24 : index
    %c0_23 = arith.constant 0 : index
    %47 = vector.load %arg8[%c24_22, %c0_23] : memref<304x128xf32, #tpu.memory_space<vmem>>, vector<256x128xf32>
    %c40 = arith.constant 40 : index
    %c0_24 = arith.constant 0 : index
    %48 = vector.load %arg8[%c40, %c0_24] : memref<304x128xf32, #tpu.memory_space<vmem>>, vector<256x128xf32>
    %49 = tpu.concatenate %46, %47, %48 in 1 : vector<256x128xf32>, vector<256x128xf32>, vector<256x128xf32> -> vector<256x384xf32>
    %50 = arith.truncf %49 : vector<256x384xf32> to vector<256x384xbf16>
    %c1 = arith.constant 1 : index
    %c0_25 = arith.constant 0 : index
    %c0_26 = arith.constant 0 : index
    %51 = vector.load %arg4[%c1, %c0_25, %c0_26] : memref<3x384x128xbf16, #tpu.memory_space<vmem>>, vector<1x384x128xbf16>
    %52 = vector.shape_cast %51 : vector<1x384x128xbf16> to vector<384x128xbf16>
    %cst_27 = arith.constant dense<0.000000e+00> : vector<256x128xf32>
    %53 = tpu.matmul %50, %52, %cst_27 {dimension_numbers = #tpu.dot_dimension_numbers<[1], [0], [0], [1], [0, 0, 1, 1], [], []>} : vector<256x384xbf16>, vector<384x128xbf16>, vector<256x128xf32> -> vector<256x128xf32>
    %54 = arith.addf %45, %53 : vector<256x128xf32>
    %c14_i32 = arith.constant 14 : i32
    %55 = vector.broadcast %c14_i32 : i32 to vector<256x1xi32>
    %56 = arith.cmpi sle, %31, %55 : vector<256x1xi32>
    %c9 = arith.constant 9 : index
    %c0_28 = arith.constant 0 : index
    %57 = vector.load %arg8[%c9, %c0_28] : memref<304x128xf32, #tpu.memory_space<vmem>>, vector<256x128xf32>
    %c25 = arith.constant 25 : index
    %c0_29 = arith.constant 0 : index
    %58 = vector.load %arg8[%c25, %c0_29] : memref<304x128xf32, #tpu.memory_space<vmem>>, vector<256x128xf32>
    %c41 = arith.constant 41 : index
    %c0_30 = arith.constant 0 : index
    %59 = vector.load %arg8[%c41, %c0_30] : memref<304x128xf32, #tpu.memory_space<vmem>>, vector<256x128xf32>
    %60 = tpu.concatenate %57, %58, %59 in 1 : vector<256x128xf32>, vector<256x128xf32>, vector<256x128xf32> -> vector<256x384xf32>
    %61 = arith.truncf %60 : vector<256x384xf32> to vector<256x384xbf16>
    %c2 = arith.constant 2 : index
    %c0_31 = arith.constant 0 : index
    %c0_32 = arith.constant 0 : index
    %62 = vector.load %arg4[%c2, %c0_31, %c0_32] : memref<3x384x128xbf16, #tpu.memory_space<vmem>>, vector<1x384x128xbf16>
    %63 = vector.shape_cast %62 : vector<1x384x128xbf16> to vector<384x128xbf16>
    %cst_33 = arith.constant dense<0.000000e+00> : vector<256x128xf32>
    %64 = tpu.matmul %61, %63, %cst_33 {dimension_numbers = #tpu.dot_dimension_numbers<[1], [0], [0], [1], [0, 0, 1, 1], [], []>} : vector<256x384xbf16>, vector<384x128xbf16>, vector<256x128xf32> -> vector<256x128xf32>
    %cst_34 = arith.constant 0.000000e+00 : f32
    %65 = vector.shape_cast %56 : vector<256x1xi1> to vector<256x1xi1>
    %66 = vector.broadcast %65 : vector<256x1xi1> to vector<256x128xi1>
    %67 = vector.broadcast %cst_34 : f32 to vector<256x128xf32>
    %68 = arith.select %66, %64, %67 : vector<256x128xi1>, vector<256x128xf32>
    %69 = arith.addf %54, %68 : vector<256x128xf32>
    %70 = arith.truncf %69 : vector<256x128xf32> to vector<256x128xbf16>
    %c0_35 = arith.constant 0 : index
    %c0_36 = arith.constant 0 : index
    %c0_37 = arith.constant 0 : index
    %71 = vector.load %arg5[%c0_35, %c0_36, %c0_37] : memref<1x256x128xbf16, #tpu.memory_space<vmem>>, vector<1x256x128xbf16>
    %72 = vector.shape_cast %71 : vector<1x256x128xbf16> to vector<256x128xbf16>
    %73 = vector.shape_cast %70 : vector<256x128xbf16> to vector<1x256x128xbf16>
    tpu.vector_store %arg5[%c0_35, %c0_36, %c0_37], %73 {strides = array<i32>} : memref<1x256x128xbf16, #tpu.memory_space<vmem>>, vector<1x256x128xbf16>,
    %cst_38 = arith.constant dense<0.000000e+00> : vector<128xf32>
    %74 = vector.multi_reduction <add>, %69, %cst_38 [0] : vector<256x128xf32> to vector<128xf32>
    %75 = vector.shape_cast %74 : vector<128xf32> to vector<1x128xf32>
    %c0_39 = arith.constant 0 : index
    %c0_40 = arith.constant 0 : index
    %c0_41 = arith.constant 0 : index
    %76 = vector.load %arg6[%c0_39, %c0_40, %c0_41] : memref<1x1x128xf32, #tpu.memory_space<vmem>>, vector<1x1x128xf32>
    %77 = vector.shape_cast %76 : vector<1x1x128xf32> to vector<1x128xf32>
    %78 = vector.shape_cast %75 : vector<1x128xf32> to vector<1x1x128xf32>
    tpu.vector_store %arg6[%c0_39, %c0_40, %c0_41], %78 {strides = array<i32>} : memref<1x1x128xf32, #tpu.memory_space<vmem>>, vector<1x1x128xf32>,
    %79 = arith.mulf %69, %69 : vector<256x128xf32>
    %cst_42 = arith.constant dense<0.000000e+00> : vector<128xf32>
    %80 = vector.multi_reduction <add>, %79, %cst_42 [0] : vector<256x128xf32> to vector<128xf32>
    %81 = vector.shape_cast %80 : vector<128xf32> to vector<1x128xf32>
    %c0_43 = arith.constant 0 : index
    %c0_44 = arith.constant 0 : index
    %c0_45 = arith.constant 0 : index
    %82 = vector.load %arg7[%c0_43, %c0_44, %c0_45] : memref<1x1x128xf32, #tpu.memory_space<vmem>>, vector<1x1x128xf32>
    %83 = vector.shape_cast %82 : vector<1x1x128xf32> to vector<1x128xf32>
    %84 = vector.shape_cast %81 : vector<1x128xf32> to vector<1x1x128xf32>
    tpu.vector_store %arg7[%c0_43, %c0_44, %c0_45], %84 {strides = array<i32>} : memref<1x1x128xf32, #tpu.memory_space<vmem>>, vector<1x1x128xf32>,
    return
  }
  func.func @transform_0(%arg0: i32) -> (i32, i32, i32) {
    %c0_i32 = arith.constant 0 : i32
    %c0_i32_0 = arith.constant 0 : i32
    %c0_i32_1 = arith.constant 0 : i32
    return %arg0, %c0_i32, %c0_i32_0 : i32, i32, i32
  }
  func.func @transform_1(%arg0: i32) -> (i32, i32) {
    %c0_i32 = arith.constant 0 : i32
    %c0_i32_0 = arith.constant 0 : i32
    %c0_i32_1 = arith.constant 0 : i32
    return %c0_i32, %c0_i32_0 : i32, i32
  }
  func.func @transform_2(%arg0: i32) -> (i32, i32) {
    %c0_i32 = arith.constant 0 : i32
    %c0_i32_0 = arith.constant 0 : i32
    %c0_i32_1 = arith.constant 0 : i32
    return %c0_i32, %c0_i32_0 : i32, i32
  }
  func.func @transform_3(%arg0: i32) -> (i32, i32, i32) {
    %c0_i32 = arith.constant 0 : i32
    %c0_i32_0 = arith.constant 0 : i32
    %c0_i32_1 = arith.constant 0 : i32
    %c0_i32_2 = arith.constant 0 : i32
    return %c0_i32, %c0_i32_0, %c0_i32_1 : i32, i32, i32
  }
  func.func @transform_4(%arg0: i32) -> (i32, i32, i32) {
    %c0_i32 = arith.constant 0 : i32
    %c0_i32_0 = arith.constant 0 : i32
    %c0_i32_1 = arith.constant 0 : i32
    return %arg0, %c0_i32, %c0_i32_0 : i32, i32, i32
  }
  func.func @transform_5(%arg0: i32) -> (i32, i32, i32) {
    %c0_i32 = arith.constant 0 : i32
    %c0_i32_0 = arith.constant 0 : i32
    %c0_i32_1 = arith.constant 0 : i32
    return %arg0, %c0_i32, %c0_i32_0 : i32, i32, i32
  }
  func.func @transform_6(%arg0: i32) -> (i32, i32, i32) {
    %c0_i32 = arith.constant 0 : i32
    %c0_i32_0 = arith.constant 0 : i32
    %c0_i32_1 = arith.constant 0 : i32
    return %arg0, %c0_i32, %c0_i32_0 : i32, i32, i32
  }
}

module attributes {stable_mosaic.version = 11 : i64} {
  func.func @_norm_conv1x1_stats_kernel(%arg0: i32, %arg1: memref<512x128xbf16, #tpu.memory_space<vmem>>, %arg2: memref<1x128xf32, #tpu.memory_space<vmem>>, %arg3: memref<1x128xf32, #tpu.memory_space<vmem>>, %arg4: memref<128x128xbf16, #tpu.memory_space<vmem>>, %arg5: memref<512x128xbf16, #tpu.memory_space<vmem>>, %arg6: memref<1x1x128xf32, #tpu.memory_space<vmem>>, %arg7: memref<1x1x128xf32, #tpu.memory_space<vmem>>) attributes {dimension_semantics = [#tpu.dimension_semantics<parallel>], iteration_bounds = array<i64: 1>, scalar_prefetch = 0 : i64, scratch_operands = 0 : i64, tpu.core_type = #tpu.core_type<tc>, window_params = [{transform_indices = @transform_0, window_bounds = array<i64: 512, 128>}, {pipeline_mode = #tpu.pipeline_mode<synchronous>, transform_indices = @transform_1, window_bounds = array<i64: 1, 128>}, {pipeline_mode = #tpu.pipeline_mode<synchronous>, transform_indices = @transform_2, window_bounds = array<i64: 1, 128>}, {pipeline_mode = #tpu.pipeline_mode<synchronous>, transform_indices = @transform_3, window_bounds = array<i64: 128, 128>}, {transform_indices = @transform_4, window_bounds = array<i64: 512, 128>}, {transform_indices = @transform_5, window_bounds = array<i64: 1, 1, 128>}, {transform_indices = @transform_6, window_bounds = array<i64: 1, 1, 128>}]} {
    %c0 = arith.constant 0 : index
    %c0_0 = arith.constant 0 : index
    %0 = vector.load %arg1[%c0, %c0_0] : memref<512x128xbf16, #tpu.memory_space<vmem>>, vector<512x128xbf16>
    %1 = arith.extf %0 : vector<512x128xbf16> to vector<512x128xf32>
    %c0_1 = arith.constant 0 : index
    %c0_2 = arith.constant 0 : index
    %2 = vector.load %arg2[%c0_1, %c0_2] : memref<1x128xf32, #tpu.memory_space<vmem>>, vector<1x128xf32>
    %3 = vector.broadcast %2 : vector<1x128xf32> to vector<512x128xf32>
    %4 = arith.mulf %1, %3 : vector<512x128xf32>
    %c0_3 = arith.constant 0 : index
    %c0_4 = arith.constant 0 : index
    %5 = vector.load %arg3[%c0_3, %c0_4] : memref<1x128xf32, #tpu.memory_space<vmem>>, vector<1x128xf32>
    %6 = vector.broadcast %5 : vector<1x128xf32> to vector<512x128xf32>
    %7 = arith.addf %4, %6 : vector<512x128xf32>
    %cst = arith.constant 0.000000e+00 : f32
    %8 = vector.broadcast %cst : f32 to vector<512x128xf32>
    %9 = arith.maximumf %7, %8 : vector<512x128xf32>
    %10 = arith.truncf %9 : vector<512x128xf32> to vector<512x128xbf16>
    %c0_5 = arith.constant 0 : index
    %c0_6 = arith.constant 0 : index
    %11 = vector.load %arg4[%c0_5, %c0_6] : memref<128x128xbf16, #tpu.memory_space<vmem>>, vector<128x128xbf16>
    %cst_7 = arith.constant dense<0.000000e+00> : vector<512x128xf32>
    %12 = tpu.matmul %10, %11, %cst_7 {dimension_numbers = #tpu.dot_dimension_numbers<[1], [0], [0], [1], [0, 0, 1, 1], [], []>} : vector<512x128xbf16>, vector<128x128xbf16>, vector<512x128xf32> -> vector<512x128xf32>
    %13 = arith.truncf %12 : vector<512x128xf32> to vector<512x128xbf16>
    %c0_8 = arith.constant 0 : index
    %c0_9 = arith.constant 0 : index
    %14 = vector.load %arg5[%c0_8, %c0_9] : memref<512x128xbf16, #tpu.memory_space<vmem>>, vector<512x128xbf16>
    tpu.vector_store %arg5[%c0_8, %c0_9], %13 {strides = array<i32>} : memref<512x128xbf16, #tpu.memory_space<vmem>>, vector<512x128xbf16>,
    %cst_10 = arith.constant dense<0.000000e+00> : vector<128xf32>
    %15 = vector.multi_reduction <add>, %12, %cst_10 [0] : vector<512x128xf32> to vector<128xf32>
    %16 = vector.shape_cast %15 : vector<128xf32> to vector<1x128xf32>
    %c0_11 = arith.constant 0 : index
    %c0_12 = arith.constant 0 : index
    %c0_13 = arith.constant 0 : index
    %17 = vector.load %arg6[%c0_11, %c0_12, %c0_13] : memref<1x1x128xf32, #tpu.memory_space<vmem>>, vector<1x1x128xf32>
    %18 = vector.shape_cast %17 : vector<1x1x128xf32> to vector<1x128xf32>
    %19 = vector.shape_cast %16 : vector<1x128xf32> to vector<1x1x128xf32>
    tpu.vector_store %arg6[%c0_11, %c0_12, %c0_13], %19 {strides = array<i32>} : memref<1x1x128xf32, #tpu.memory_space<vmem>>, vector<1x1x128xf32>,
    %20 = arith.mulf %12, %12 : vector<512x128xf32>
    %cst_14 = arith.constant dense<0.000000e+00> : vector<128xf32>
    %21 = vector.multi_reduction <add>, %20, %cst_14 [0] : vector<512x128xf32> to vector<128xf32>
    %22 = vector.shape_cast %21 : vector<128xf32> to vector<1x128xf32>
    %c0_15 = arith.constant 0 : index
    %c0_16 = arith.constant 0 : index
    %c0_17 = arith.constant 0 : index
    %23 = vector.load %arg7[%c0_15, %c0_16, %c0_17] : memref<1x1x128xf32, #tpu.memory_space<vmem>>, vector<1x1x128xf32>
    %24 = vector.shape_cast %23 : vector<1x1x128xf32> to vector<1x128xf32>
    %25 = vector.shape_cast %22 : vector<1x128xf32> to vector<1x1x128xf32>
    tpu.vector_store %arg7[%c0_15, %c0_16, %c0_17], %25 {strides = array<i32>} : memref<1x1x128xf32, #tpu.memory_space<vmem>>, vector<1x1x128xf32>,
    return
  }
  func.func @transform_0(%arg0: i32) -> (i32, i32) {
    %c0_i32 = arith.constant 0 : i32
    %c0_i32_0 = arith.constant 0 : i32
    return %arg0, %c0_i32 : i32, i32
  }
  func.func @transform_1(%arg0: i32) -> (i32, i32) {
    %c0_i32 = arith.constant 0 : i32
    %c0_i32_0 = arith.constant 0 : i32
    %c0_i32_1 = arith.constant 0 : i32
    return %c0_i32, %c0_i32_0 : i32, i32
  }
  func.func @transform_2(%arg0: i32) -> (i32, i32) {
    %c0_i32 = arith.constant 0 : i32
    %c0_i32_0 = arith.constant 0 : i32
    %c0_i32_1 = arith.constant 0 : i32
    return %c0_i32, %c0_i32_0 : i32, i32
  }
  func.func @transform_3(%arg0: i32) -> (i32, i32) {
    %c0_i32 = arith.constant 0 : i32
    %c0_i32_0 = arith.constant 0 : i32
    %c0_i32_1 = arith.constant 0 : i32
    return %c0_i32, %c0_i32_0 : i32, i32
  }
  func.func @transform_4(%arg0: i32) -> (i32, i32) {
    %c0_i32 = arith.constant 0 : i32
    %c0_i32_0 = arith.constant 0 : i32
    return %arg0, %c0_i32 : i32, i32
  }
  func.func @transform_5(%arg0: i32) -> (i32, i32, i32) {
    %c0_i32 = arith.constant 0 : i32
    %c0_i32_0 = arith.constant 0 : i32
    %c0_i32_1 = arith.constant 0 : i32
    return %arg0, %c0_i32, %c0_i32_0 : i32, i32, i32
  }
  func.func @transform_6(%arg0: i32) -> (i32, i32, i32) {
    %c0_i32 = arith.constant 0 : i32
    %c0_i32_0 = arith.constant 0 : i32
    %c0_i32_1 = arith.constant 0 : i32
    return %arg0, %c0_i32, %c0_i32_0 : i32, i32, i32
  }
}

module attributes {stable_mosaic.version = 11 : i64} {
  func.func @_bn_add_relu_kernel(%arg0: i32, %arg1: memref<512x128xbf16, #tpu.memory_space<vmem>>, %arg2: memref<1x128xf32, #tpu.memory_space<vmem>>, %arg3: memref<1x128xf32, #tpu.memory_space<vmem>>, %arg4: memref<512x128xf32, #tpu.memory_space<vmem>>, %arg5: memref<512x128xf32, #tpu.memory_space<vmem>>) attributes {dimension_semantics = [#tpu.dimension_semantics<parallel>], iteration_bounds = array<i64: 1>, scalar_prefetch = 0 : i64, scratch_operands = 0 : i64, tpu.core_type = #tpu.core_type<tc>, window_params = [{transform_indices = @transform_0, window_bounds = array<i64: 512, 128>}, {pipeline_mode = #tpu.pipeline_mode<synchronous>, transform_indices = @transform_1, window_bounds = array<i64: 1, 128>}, {pipeline_mode = #tpu.pipeline_mode<synchronous>, transform_indices = @transform_2, window_bounds = array<i64: 1, 128>}, {transform_indices = @transform_3, window_bounds = array<i64: 512, 128>}, {transform_indices = @transform_4, window_bounds = array<i64: 512, 128>}]} {
    %c0 = arith.constant 0 : index
    %c0_0 = arith.constant 0 : index
    %0 = vector.load %arg1[%c0, %c0_0] : memref<512x128xbf16, #tpu.memory_space<vmem>>, vector<512x128xbf16>
    %1 = arith.extf %0 : vector<512x128xbf16> to vector<512x128xf32>
    %c0_1 = arith.constant 0 : index
    %c0_2 = arith.constant 0 : index
    %2 = vector.load %arg2[%c0_1, %c0_2] : memref<1x128xf32, #tpu.memory_space<vmem>>, vector<1x128xf32>
    %3 = vector.broadcast %2 : vector<1x128xf32> to vector<512x128xf32>
    %4 = arith.mulf %1, %3 : vector<512x128xf32>
    %c0_3 = arith.constant 0 : index
    %c0_4 = arith.constant 0 : index
    %5 = vector.load %arg3[%c0_3, %c0_4] : memref<1x128xf32, #tpu.memory_space<vmem>>, vector<1x128xf32>
    %6 = vector.broadcast %5 : vector<1x128xf32> to vector<512x128xf32>
    %7 = arith.addf %4, %6 : vector<512x128xf32>
    %c0_5 = arith.constant 0 : index
    %c0_6 = arith.constant 0 : index
    %8 = vector.load %arg4[%c0_5, %c0_6] : memref<512x128xf32, #tpu.memory_space<vmem>>, vector<512x128xf32>
    %9 = arith.addf %7, %8 : vector<512x128xf32>
    %cst = arith.constant 0.000000e+00 : f32
    %10 = vector.broadcast %cst : f32 to vector<512x128xf32>
    %11 = arith.maximumf %9, %10 : vector<512x128xf32>
    %c0_7 = arith.constant 0 : index
    %c0_8 = arith.constant 0 : index
    %12 = vector.load %arg5[%c0_7, %c0_8] : memref<512x128xf32, #tpu.memory_space<vmem>>, vector<512x128xf32>
    tpu.vector_store %arg5[%c0_7, %c0_8], %11 {strides = array<i32>} : memref<512x128xf32, #tpu.memory_space<vmem>>, vector<512x128xf32>,
    return
  }
  func.func @transform_0(%arg0: i32) -> (i32, i32) {
    %c0_i32 = arith.constant 0 : i32
    %c0_i32_0 = arith.constant 0 : i32
    return %arg0, %c0_i32 : i32, i32
  }
  func.func @transform_1(%arg0: i32) -> (i32, i32) {
    %c0_i32 = arith.constant 0 : i32
    %c0_i32_0 = arith.constant 0 : i32
    %c0_i32_1 = arith.constant 0 : i32
    return %c0_i32, %c0_i32_0 : i32, i32
  }
  func.func @transform_2(%arg0: i32) -> (i32, i32) {
    %c0_i32 = arith.constant 0 : i32
    %c0_i32_0 = arith.constant 0 : i32
    %c0_i32_1 = arith.constant 0 : i32
    return %c0_i32, %c0_i32_0 : i32, i32
  }
  func.func @transform_3(%arg0: i32) -> (i32, i32) {
    %c0_i32 = arith.constant 0 : i32
    %c0_i32_0 = arith.constant 0 : i32
    return %arg0, %c0_i32 : i32, i32
  }
  func.func @transform_4(%arg0: i32) -> (i32, i32) {
    %c0_i32 = arith.constant 0 : i32
    %c0_i32_0 = arith.constant 0 : i32
    return %arg0, %c0_i32 : i32, i32
  }
}

</mosaic_0001>

<llo_original>
// kernel: bottleneck_forward.4
$region0: #{bottleneck_forward.4}
  #allocation0 [shape = 'u32[]', space=smem, size = 0x4, offset = 0x4, fixed_abs, tag = 'smem constant byte address 0x4 - core index']
  #allocation1 [shape = 'u32[144,128]{1,0:T(1,128)}', space=vmem, size = 0x12000, scoped, tag = 'internal scratch']
  %s0 = inlined_call_operand.vmem [shape: f32[512,128], index: 0, kind: input, shape index: {}]
  %s1 = inlined_call_operand.vmem [shape: bf16[128,128], index: 1, kind: input, shape index: {}]
  %s2 = inlined_call_operand.vmem [shape: bf16[512,128], index: 2, kind: output, shape index: {0}]
  %s3 = inlined_call_operand.vmem [shape: f32[1,1,128], index: 3, kind: output, shape index: {1}]
  %s4 = inlined_call_operand.vmem [shape: f32[1,1,128], index: 4, kind: output, shape index: {2}]
  %5 = xla_tuple %s2, %s3, %s4
  %s6 = sld [smem:[#allocation0]]
  $region34: #{bottleneck_forward.4} parent=0
    _
  %s8 = ssub.s32 1, %s6
  %s9 = scalar_select 0, %s8, %s6
  // Predicated region
  $region2: #{bottleneck_forward.4} parent=0 // pred_check
    _
  $region3: #{bottleneck_forward.4} parent=0 // pred_check_branch
    %11 = sbr.rel (0) target = $region5
  $region4: #{bottleneck_forward.4} parent=0 // pred_region
    _
  $region5: #{bottleneck_forward.4} parent=0 // pred_fallthru
    _
  // Predicated region
  $region6: #{bottleneck_forward.4} parent=0 // pred_check
    _
  $region7: #{bottleneck_forward.4} parent=0 // pred_check_branch
    %13 = sbr.rel (0) target = $region9
  $region8: #{bottleneck_forward.4} parent=0 // pred_region
    _
  $region9: #{bottleneck_forward.4} parent=0 // pred_fallthru
    _
  %v15 = vld [vmem:[%s0] sm:$0xff]
  %v16 = vld [vmem:[%s0 + $0x8] sm:$0xff]
  %v17 = vld [vmem:[%s0 + $0x10] sm:$0xff]
  %v18 = vld [vmem:[%s0 + $0x18] sm:$0xff]
  %v19 = vld [vmem:[%s0 + $0x20] sm:$0xff]
  %v20 = vld [vmem:[%s0 + $0x28] sm:$0xff]
  %v21 = vld [vmem:[%s0 + $0x30] sm:$0xff]
  %v22 = vld [vmem:[%s0 + $0x38] sm:$0xff]
  %v23 = vld [vmem:[%s0 + $0x40] sm:$0xff]
  %v24 = vld [vmem:[%s0 + $0x48] sm:$0xff]
  %v25 = vld [vmem:[%s0 + $0x50] sm:$0xff]
  %v26 = vld [vmem:[%s0 + $0x58] sm:$0xff]
  %v27 = vld [vmem:[%s0 + $0x60] sm:$0xff]
  %v28 = vld [vmem:[%s0 + $0x68] sm:$0xff]
  %v29 = vld [vmem:[%s0 + $0x70] sm:$0xff]
  %v30 = vld [vmem:[%s0 + $0x78] sm:$0xff]
  %v31 = vld [vmem:[%s0 + $0x80] sm:$0xff]
  %v32 = vld [vmem:[%s0 + $0x88] sm:$0xff]
  %v33 = vld [vmem:[%s0 + $0x90] sm:$0xff]
  %v34 = vld [vmem:[%s0 + $0x98] sm:$0xff]
  %v35 = vld [vmem:[%s0 + $0xa0] sm:$0xff]
  %v36 = vld [vmem:[%s0 + $0xa8] sm:$0xff]
  %v37 = vld [vmem:[%s0 + $0xb0] sm:$0xff]
  %v38 = vld [vmem:[%s0 + $0xb8] sm:$0xff]
  %v39 = vld [vmem:[%s0 + $0xc0] sm:$0xff]
  %v40 = vld [vmem:[%s0 + $0xc8] sm:$0xff]
  %v41 = vld [vmem:[%s0 + $0xd0] sm:$0xff]
  %v42 = vld [vmem:[%s0 + $0xd8] sm:$0xff]
  %v43 = vld [vmem:[%s0 + $0xe0] sm:$0xff]
  %v44 = vld [vmem:[%s0 + $0xe8] sm:$0xff]
  %v45 = vld [vmem:[%s0 + $0xf0] sm:$0xff]
  %v46 = vld [vmem:[%s0 + $0xf8] sm:$0xff]
  %v47 = vld [vmem:[%s0 + $0x100] sm:$0xff]
  %v48 = vld [vmem:[%s0 + $0x108] sm:$0xff]
  %v49 = vld [vmem:[%s0 + $0x110] sm:$0xff]
  %v50 = vld [vmem:[%s0 + $0x118] sm:$0xff]
  %v51 = vld [vmem:[%s0 + $0x120] sm:$0xff]
  %v52 = vld [vmem:[%s0 + $0x128] sm:$0xff]
  %v53 = vld [vmem:[%s0 + $0x130] sm:$0xff]
  %v54 = vld [vmem:[%s0 + $0x138] sm:$0xff]
  %v55 = vld [vmem:[%s0 + $0x140] sm:$0xff]
  %v56 = vld [vmem:[%s0 + $0x148] sm:$0xff]
  %v57 = vld [vmem:[%s0 + $0x150] sm:$0xff]
  %v58 = vld [vmem:[%s0 + $0x158] sm:$0xff]
  %v59 = vld [vmem:[%s0 + $0x160] sm:$0xff]
  %v60 = vld [vmem:[%s0 + $0x168] sm:$0xff]
  %v61 = vld [vmem:[%s0 + $0x170] sm:$0xff]
  %v62 = vld [vmem:[%s0 + $0x178] sm:$0xff]
  %v63 = vld [vmem:[%s0 + $0x180] sm:$0xff]
  %v64 = vld [vmem:[%s0 + $0x188] sm:$0xff]
  %v65 = vld [vmem:[%s0 + $0x190] sm:$0xff]
  %v66 = vld [vmem:[%s0 + $0x198] sm:$0xff]
  %v67 = vld [vmem:[%s0 + $0x1a0] sm:$0xff]
  %v68 = vld [vmem:[%s0 + $0x1a8] sm:$0xff]
  %v69 = vld [vmem:[%s0 + $0x1b0] sm:$0xff]
  %v70 = vld [vmem:[%s0 + $0x1b8] sm:$0xff]
  %v71 = vld [vmem:[%s0 + $0x1c0] sm:$0xff]
  %v72 = vld [vmem:[%s0 + $0x1c8] sm:$0xff]
  %v73 = vld [vmem:[%s0 + $0x1d0] sm:$0xff]
  %v74 = vld [vmem:[%s0 + $0x1d8] sm:$0xff]
  %v75 = vld [vmem:[%s0 + $0x1e0] sm:$0xff]
  %v76 = vld [vmem:[%s0 + $0x1e8] sm:$0xff]
  %v77 = vld [vmem:[%s0 + $0x1f0] sm:$0xff]
  %v78 = vld [vmem:[%s0 + $0x1f8] sm:$0xff]
  %v79 = vpack.c.bf16 %v16, %v15
  %v80 = vpack.c.bf16 %v18, %v17
  %v81 = vpack.c.bf16 %v20, %v19
  %v82 = vpack.c.bf16 %v22, %v21
  %v83 = vpack.c.bf16 %v24, %v23
  %v84 = vpack.c.bf16 %v26, %v25
  %v85 = vpack.c.bf16 %v28, %v27
  %v86 = vpack.c.bf16 %v30, %v29
  %v87 = vpack.c.bf16 %v32, %v31
  %v88 = vpack.c.bf16 %v34, %v33
  %v89 = vpack.c.bf16 %v36, %v35
  %v90 = vpack.c.bf16 %v38, %v37
  %v91 = vpack.c.bf16 %v40, %v39
  %v92 = vpack.c.bf16 %v42, %v41
  %v93 = vpack.c.bf16 %v44, %v43
  %v94 = vpack.c.bf16 %v46, %v45
  %v95 = vpack.c.bf16 %v48, %v47
  %v96 = vpack.c.bf16 %v50, %v49
  %v97 = vpack.c.bf16 %v52, %v51
  %v98 = vpack.c.bf16 %v54, %v53
  %v99 = vpack.c.bf16 %v56, %v55
  %v100 = vpack.c.bf16 %v58, %v57
  %v101 = vpack.c.bf16 %v60, %v59
  %v102 = vpack.c.bf16 %v62, %v61
  %v103 = vpack.c.bf16 %v64, %v63
  %v104 = vpack.c.bf16 %v66, %v65
  %v105 = vpack.c.bf16 %v68, %v67
  %v106 = vpack.c.bf16 %v70, %v69
  %v107 = vpack.c.bf16 %v72, %v71
  %v108 = vpack.c.bf16 %v74, %v73
  %v109 = vpack.c.bf16 %v76, %v75
  %v110 = vpack.c.bf16 %v78, %v77
  %v111 = vld [vmem:[%s1] sm:$0xf]
  %v112 = vld [vmem:[%s1 + $0x4] sm:$0xf]
  %v113 = vld [vmem:[%s1 + $0x8] sm:$0xf]
  %v114 = vld [vmem:[%s1 + $0xc] sm:$0xf]
  %v115 = vld [vmem:[%s1 + $0x10] sm:$0xf]
  %v116 = vld [vmem:[%s1 + $0x14] sm:$0xf]
  %v117 = vld [vmem:[%s1 + $0x18] sm:$0xf]
  %v118 = vld [vmem:[%s1 + $0x1c] sm:$0xf]
  %v119 = vld [vmem:[%s1 + $0x20] sm:$0xf]
  %v120 = vld [vmem:[%s1 + $0x24] sm:$0xf]
  %v121 = vld [vmem:[%s1 + $0x28] sm:$0xf]
  %v122 = vld [vmem:[%s1 + $0x2c] sm:$0xf]
  %v123 = vld [vmem:[%s1 + $0x30] sm:$0xf]
  %v124 = vld [vmem:[%s1 + $0x34] sm:$0xf]
  %v125 = vld [vmem:[%s1 + $0x38] sm:$0xf]
  %v126 = vld [vmem:[%s1 + $0x3c] sm:$0xf]
  %v143 = vunpack.c.l.b16 %v111
  %v144 = vunpack.c.l.b16 %v112
  %v145 = vunpack.c.l.b16 %v113
  %v146 = vunpack.c.l.b16 %v114
  %v147 = vunpack.c.l.b16 %v115
  %v148 = vunpack.c.l.b16 %v116
  %v149 = vunpack.c.l.b16 %v117
  %v150 = vunpack.c.l.b16 %v118
  %v151 = vunpack.c.l.b16 %v119
  %v152 = vunpack.c.l.b16 %v120
  %v153 = vunpack.c.l.b16 %v121
  %v154 = vunpack.c.l.b16 %v122
  %v155 = vunpack.c.l.b16 %v123
  %v156 = vunpack.c.l.b16 %v124
  %v157 = vunpack.c.l.b16 %v125
  %v158 = vunpack.c.l.b16 %v126
  %v159 = vpack.c.b16 %v144, %v143
  %v160 = vpack.c.b16 %v146, %v145
  %v161 = vpack.c.b16 %v148, %v147
  %v162 = vpack.c.b16 %v150, %v149
  %v163 = vpack.c.b16 %v152, %v151
  %v164 = vpack.c.b16 %v154, %v153
  %v165 = vpack.c.b16 %v156, %v155
  %v166 = vpack.c.b16 %v158, %v157
  %175 = vmatprep.subr.bf16.mxu0 0
  %176 = vmatpush1.bf16.msra.mxu0 %v159
  %177 = vmatprep.subr.bf16.mxu0 0
  %178 = vmatpush1.bf16.msra.mxu0 %v160
  %179 = vmatprep.subr.bf16.mxu0 0
  %180 = vmatpush1.bf16.msra.mxu0 %v161
  %181 = vmatprep.subr.bf16.mxu0 0
  %182 = vmatpush1.bf16.msra.mxu0 %v162
  %183 = vmatprep.subr.bf16.mxu0 0
  %184 = vmatpush1.bf16.msra.mxu0 %v163
  %185 = vmatprep.subr.bf16.mxu0 0
  %186 = vmatpush1.bf16.msra.mxu0 %v164
  %187 = vmatprep.subr.bf16.mxu0 0
  %188 = vmatpush1.bf16.msra.mxu0 %v165
  %189 = vmatprep.subr.bf16.mxu0 0
  %190 = vmatpush1.bf16.msra.mxu0 %v166
  %191 = vmatprep.subr.bf16.mxu0 0
  %192 = vmatpush1.bf16.msra.mxu0 0
  %193 = vmatprep.subr.bf16.mxu0 0
  %194 = vmatpush1.bf16.msra.mxu0 0
  %195 = vmatprep.subr.bf16.mxu0 0
  %196 = vmatpush1.bf16.msra.mxu0 0
  %197 = vmatprep.subr.bf16.mxu0 0
  %198 = vmatpush1.bf16.msra.mxu0 0
  %199 = vmatprep.subr.bf16.mxu0 0
  %200 = vmatpush1.bf16.msra.mxu0 0
  %201 = vmatprep.subr.bf16.mxu0 0
  %202 = vmatpush1.bf16.msra.mxu0 0
  %203 = vmatprep.subr.bf16.mxu0 0
  %204 = vmatpush1.bf16.msra.mxu0 0
  %205 = vmatprep.subr.bf16.mxu0 0
  %206 = vmatpush1.bf16.msra.mxu0 0
  %207 = vmatprep.mubr.bf16.mxu0 0
  %208 = vmatmul.mubr.bf16.gmra.mrb[0].mxu0 %v79
  %v209 = vpop.f32.mrb[0].mxu0
  %v210 = vadd.f32 0.0, %v209
  %v211 = vpop.f32.mrb[0].mxu0
  %v212 = vpop.f32.mrb[0].mxu0
  %v213 = vadd.f32 0.0, %v212
  %v214 = vpop.f32.mrb[0].mxu0
  %215 = vmatprep.mubr.bf16.mxu0 0
  %216 = vmatmul.mubr.bf16.gmra.mrb[0].mxu0 %v80
  %v217 = vpop.f32.mrb[0].mxu0
  %v218 = vadd.f32 0.0, %v217
  %v219 = vpop.f32.mrb[0].mxu0
  %v220 = vpop.f32.mrb[0].mxu0
  %v221 = vadd.f32 0.0, %v220
  %v222 = vpop.f32.mrb[0].mxu0
  %223 = vmatprep.mubr.bf16.mxu0 0
  %224 = vmatmul.mubr.bf16.gmra.mrb[0].mxu0 %v81
  %v225 = vpop.f32.mrb[0].mxu0
  %v226 = vadd.f32 0.0, %v225
  %v227 = vpop.f32.mrb[0].mxu0
  %v228 = vpop.f32.mrb[0].mxu0
  %v229 = vadd.f32 0.0, %v228
  %v230 = vpop.f32.mrb[0].mxu0
  %231 = vmatprep.mubr.bf16.mxu0 0
  %232 = vmatmul.mubr.bf16.gmra.mrb[0].mxu0 %v82
  %v233 = vpop.f32.mrb[0].mxu0
  %v234 = vadd.f32 0.0, %v233
  %v235 = vpop.f32.mrb[0].mxu0
  %v236 = vpop.f32.mrb[0].mxu0
  %v237 = vadd.f32 0.0, %v236
  %v238 = vpop.f32.mrb[0].mxu0
  %239 = vmatprep.mubr.bf16.mxu0 0
  %240 = vmatmul.mubr.bf16.gmra.mrb[0].mxu0 %v83
  %v241 = vpop.f32.mrb[0].mxu0
  %v242 = vadd.f32 0.0, %v241
  %v243 = vpop.f32.mrb[0].mxu0
  %v244 = vpop.f32.mrb[0].mxu0
  %v245 = vadd.f32 0.0, %v244
  %v246 = vpop.f32.mrb[0].mxu0
  %247 = vmatprep.mubr.bf16.mxu0 0
  %248 = vmatmul.mubr.bf16.gmra.mrb[0].mxu0 %v84
  %v249 = vpop.f32.mrb[0].mxu0
  %v250 = vadd.f32 0.0, %v249
  %v251 = vpop.f32.mrb[0].mxu0
  %v252 = vpop.f32.mrb[0].mxu0
  %v253 = vadd.f32 0.0, %v252
  %v254 = vpop.f32.mrb[0].mxu0
  %255 = vmatprep.mubr.bf16.mxu0 0
  %256 = vmatmul.mubr.bf16.gmra.mrb[0].mxu0 %v85
  %v257 = vpop.f32.mrb[0].mxu0
  %v258 = vadd.f32 0.0, %v257
  %v259 = vpop.f32.mrb[0].mxu0
  %v260 = vpop.f32.mrb[0].mxu0
  %v261 = vadd.f32 0.0, %v260
  %v262 = vpop.f32.mrb[0].mxu0
  %263 = vmatprep.mubr.bf16.mxu0 0
  %264 = vmatmul.mubr.bf16.gmra.mrb[0].mxu0 %v86
  %v265 = vpop.f32.mrb[0].mxu0
  %v266 = vadd.f32 0.0, %v265
  %v267 = vpop.f32.mrb[0].mxu0
  %v268 = vpop.f32.mrb[0].mxu0
  %v269 = vadd.f32 0.0, %v268
  %v270 = vpop.f32.mrb[0].mxu0
  %271 = vmatprep.mubr.bf16.mxu0 0
  %272 = vmatmul.mubr.bf16.gmra.mrb[0].mxu0 %v87
  %v273 = vpop.f32.mrb[0].mxu0
  %v274 = vadd.f32 0.0, %v273
  %v275 = vpop.f32.mrb[0].mxu0
  %v276 = vpop.f32.mrb[0].mxu0
  %v277 = vadd.f32 0.0, %v276
  %v278 = vpop.f32.mrb[0].mxu0
  %279 = vmatprep.mubr.bf16.mxu0 0
  %280 = vmatmul.mubr.bf16.gmra.mrb[0].mxu0 %v88
  %v281 = vpop.f32.mrb[0].mxu0
  %v282 = vadd.f32 0.0, %v281
  %v283 = vpop.f32.mrb[0].mxu0
  %v284 = vpop.f32.mrb[0].mxu0
  %v285 = vadd.f32 0.0, %v284
  %v286 = vpop.f32.mrb[0].mxu0
  %287 = vmatprep.mubr.bf16.mxu0 0
  %288 = vmatmul.mubr.bf16.gmra.mrb[0].mxu0 %v89
  %v289 = vpop.f32.mrb[0].mxu0
  %v290 = vadd.f32 0.0, %v289
  %v291 = vpop.f32.mrb[0].mxu0
  %v292 = vpop.f32.mrb[0].mxu0
  %v293 = vadd.f32 0.0, %v292
  %v294 = vpop.f32.mrb[0].mxu0
  %295 = vmatprep.mubr.bf16.mxu0 0
  %296 = vmatmul.mubr.bf16.gmra.mrb[0].mxu0 %v90
  %v297 = vpop.f32.mrb[0].mxu0
  %v298 = vadd.f32 0.0, %v297
  %v299 = vpop.f32.mrb[0].mxu0
  %v300 = vpop.f32.mrb[0].mxu0
  %v301 = vadd.f32 0.0, %v300
  %v302 = vpop.f32.mrb[0].mxu0
  %303 = vmatprep.mubr.bf16.mxu0 0
  %304 = vmatmul.mubr.bf16.gmra.mrb[0].mxu0 %v91
  %v305 = vpop.f32.mrb[0].mxu0
  %v306 = vadd.f32 0.0, %v305
  %v307 = vpop.f32.mrb[0].mxu0
  %v308 = vpop.f32.mrb[0].mxu0
  %v309 = vadd.f32 0.0, %v308
  %v310 = vpop.f32.mrb[0].mxu0
  %311 = vmatprep.mubr.bf16.mxu0 0
  %312 = vmatmul.mubr.bf16.gmra.mrb[0].mxu0 %v92
  %v313 = vpop.f32.mrb[0].mxu0
  %v314 = vadd.f32 0.0, %v313
  %v315 = vpop.f32.mrb[0].mxu0
  %v316 = vpop.f32.mrb[0].mxu0
  %v317 = vadd.f32 0.0, %v316
  %v318 = vpop.f32.mrb[0].mxu0
  %319 = vmatprep.mubr.bf16.mxu0 0
  %320 = vmatmul.mubr.bf16.gmra.mrb[0].mxu0 %v93
  %v321 = vpop.f32.mrb[0].mxu0
  %v322 = vadd.f32 0.0, %v321
  %v323 = vpop.f32.mrb[0].mxu0
  %v324 = vpop.f32.mrb[0].mxu0
  %v325 = vadd.f32 0.0, %v324
  %v326 = vpop.f32.mrb[0].mxu0
  %327 = vmatprep.mubr.bf16.mxu0 0
  %328 = vmatmul.mubr.bf16.gmra.mrb[0].mxu0 %v94
  %v329 = vpop.f32.mrb[0].mxu0
  %v330 = vadd.f32 0.0, %v329
  %v331 = vpop.f32.mrb[0].mxu0
  %v332 = vpop.f32.mrb[0].mxu0
  %v333 = vadd.f32 0.0, %v332
  %v334 = vpop.f32.mrb[0].mxu0
  %335 = vmatprep.mubr.bf16.mxu0 0
  %336 = vmatmul.mubr.bf16.gmra.mrb[0].mxu0 %v95
  %v337 = vpop.f32.mrb[0].mxu0
  %v338 = vadd.f32 0.0, %v337
  %v339 = vpop.f32.mrb[0].mxu0
  %v340 = vpop.f32.mrb[0].mxu0
  %v341 = vadd.f32 0.0, %v340
  %v342 = vpop.f32.mrb[0].mxu0
  %343 = vmatprep.mubr.bf16.mxu0 0
  %344 = vmatmul.mubr.bf16.gmra.mrb[0].mxu0 %v96
  %v345 = vpop.f32.mrb[0].mxu0
  %v346 = vadd.f32 0.0, %v345
  %v347 = vpop.f32.mrb[0].mxu0
  %v348 = vpop.f32.mrb[0].mxu0
  %v349 = vadd.f32 0.0, %v348
  %v350 = vpop.f32.mrb[0].mxu0
  %351 = vmatprep.mubr.bf16.mxu0 0
  %352 = vmatmul.mubr.bf16.gmra.mrb[0].mxu0 %v97
  %v353 = vpop.f32.mrb[0].mxu0
  %v354 = vadd.f32 0.0, %v353
  %v355 = vpop.f32.mrb[0].mxu0
  %v356 = vpop.f32.mrb[0].mxu0
  %v357 = vadd.f32 0.0, %v356
  %v358 = vpop.f32.mrb[0].mxu0
  %359 = vmatprep.mubr.bf16.mxu0 0
  %360 = vmatmul.mubr.bf16.gmra.mrb[0].mxu0 %v98
  %v361 = vpop.f32.mrb[0].mxu0
  %v362 = vadd.f32 0.0, %v361
  %v363 = vpop.f32.mrb[0].mxu0
  %v364 = vpop.f32.mrb[0].mxu0
  %v365 = vadd.f32 0.0, %v364
  %v366 = vpop.f32.mrb[0].mxu0
  %367 = vmatprep.mubr.bf16.mxu0 0
  %368 = vmatmul.mubr.bf16.gmra.mrb[0].mxu0 %v99
  %v369 = vpop.f32.mrb[0].mxu0
  %v370 = vadd.f32 0.0, %v369
  %v371 = vpop.f32.mrb[0].mxu0
  %v372 = vpop.f32.mrb[0].mxu0
  %v373 = vadd.f32 0.0, %v372
  %v374 = vpop.f32.mrb[0].mxu0
  %375 = vmatprep.mubr.bf16.mxu0 0
  %376 = vmatmul.mubr.bf16.gmra.mrb[0].mxu0 %v100
  %v377 = vpop.f32.mrb[0].mxu0
  %v378 = vadd.f32 0.0, %v377
  %v379 = vpop.f32.mrb[0].mxu0
  %v380 = vpop.f32.mrb[0].mxu0
  %v381 = vadd.f32 0.0, %v380
  %v382 = vpop.f32.mrb[0].mxu0
  %383 = vmatprep.mubr.bf16.mxu0 0
  %384 = vmatmul.mubr.bf16.gmra.mrb[0].mxu0 %v101
  %v385 = vpop.f32.mrb[0].mxu0
  %v386 = vadd.f32 0.0, %v385
  %v387 = vpop.f32.mrb[0].mxu0
  %v388 = vpop.f32.mrb[0].mxu0
  %v389 = vadd.f32 0.0, %v388
  %v390 = vpop.f32.mrb[0].mxu0
  %391 = vmatprep.mubr.bf16.mxu0 0
  %392 = vmatmul.mubr.bf16.gmra.mrb[0].mxu0 %v102
  %v393 = vpop.f32.mrb[0].mxu0
  %v394 = vadd.f32 0.0, %v393
  %v395 = vpop.f32.mrb[0].mxu0
  %v396 = vpop.f32.mrb[0].mxu0
  %v397 = vadd.f32 0.0, %v396
  %v398 = vpop.f32.mrb[0].mxu0
  %399 = vmatprep.mubr.bf16.mxu0 0
  %400 = vmatmul.mubr.bf16.gmra.mrb[0].mxu0 %v103
  %v401 = vpop.f32.mrb[0].mxu0
  %v402 = vadd.f32 0.0, %v401
  %v403 = vpop.f32.mrb[0].mxu0
  %v404 = vpop.f32.mrb[0].mxu0
  %v405 = vadd.f32 0.0, %v404
  %v406 = vpop.f32.mrb[0].mxu0
  %407 = vmatprep.mubr.bf16.mxu0 0
  %408 = vmatmul.mubr.bf16.gmra.mrb[0].mxu0 %v104
  %v409 = vpop.f32.mrb[0].mxu0
  %v410 = vadd.f32 0.0, %v409
  %v411 = vpop.f32.mrb[0].mxu0
  %v412 = vpop.f32.mrb[0].mxu0
  %v413 = vadd.f32 0.0, %v412
  %v414 = vpop.f32.mrb[0].mxu0
  %415 = vmatprep.mubr.bf16.mxu0 0
  %416 = vmatmul.mubr.bf16.gmra.mrb[0].mxu0 %v105
  %v417 = vpop.f32.mrb[0].mxu0
  %v418 = vadd.f32 0.0, %v417
  %v419 = vpop.f32.mrb[0].mxu0
  %v420 = vpop.f32.mrb[0].mxu0
  %v421 = vadd.f32 0.0, %v420
  %v422 = vpop.f32.mrb[0].mxu0
  %423 = vmatprep.mubr.bf16.mxu0 0
  %424 = vmatmul.mubr.bf16.gmra.mrb[0].mxu0 %v106
  %v425 = vpop.f32.mrb[0].mxu0
  %v426 = vadd.f32 0.0, %v425
  %v427 = vpop.f32.mrb[0].mxu0
  %v428 = vpop.f32.mrb[0].mxu0
  %v429 = vadd.f32 0.0, %v428
  %v430 = vpop.f32.mrb[0].mxu0
  %431 = vmatprep.mubr.bf16.mxu0 0
  %432 = vmatmul.mubr.bf16.gmra.mrb[0].mxu0 %v107
  %v433 = vpop.f32.mrb[0].mxu0
  %v434 = vadd.f32 0.0, %v433
  %v435 = vpop.f32.mrb[0].mxu0
  %v436 = vpop.f32.mrb[0].mxu0
  %v437 = vadd.f32 0.0, %v436
  %v438 = vpop.f32.mrb[0].mxu0
  %439 = vmatprep.mubr.bf16.mxu0 0
  %440 = vmatmul.mubr.bf16.gmra.mrb[0].mxu0 %v108
  %v441 = vpop.f32.mrb[0].mxu0
  %v442 = vadd.f32 0.0, %v441
  %v443 = vpop.f32.mrb[0].mxu0
  %v444 = vpop.f32.mrb[0].mxu0
  %v445 = vadd.f32 0.0, %v444
  %v446 = vpop.f32.mrb[0].mxu0
  %447 = vmatprep.mubr.bf16.mxu0 0
  %448 = vmatmul.mubr.bf16.gmra.mrb[0].mxu0 %v109
  %v449 = vpop.f32.mrb[0].mxu0
  %v450 = vadd.f32 0.0, %v449
  %v451 = vpop.f32.mrb[0].mxu0
  %v452 = vpop.f32.mrb[0].mxu0
  %v453 = vadd.f32 0.0, %v452
  %v454 = vpop.f32.mrb[0].mxu0
  %455 = vmatprep.mubr.bf16.mxu0 0
  %456 = vmatmul.mubr.bf16.gmra.mrb[0].mxu0 %v110
  %v457 = vpop.f32.mrb[0].mxu0
  %v458 = vadd.f32 0.0, %v457
  %v459 = vpop.f32.mrb[0].mxu0
  %v460 = vpop.f32.mrb[0].mxu0
  %v461 = vadd.f32 0.0, %v460
  %v462 = vpop.f32.mrb[0].mxu0
  %463 = vdwg.mxu0
  %v464 = vpack.c.bf16 %v213, %v210
  %v465 = vpack.c.bf16 %v221, %v218
  %v466 = vpack.c.bf16 %v229, %v226
  %v467 = vpack.c.bf16 %v237, %v234
  %v468 = vpack.c.bf16 %v245, %v242
  %v469 = vpack.c.bf16 %v253, %v250
  %v470 = vpack.c.bf16 %v261, %v258
  %v471 = vpack.c.bf16 %v269, %v266
  %v472 = vpack.c.bf16 %v277, %v274
  %v473 = vpack.c.bf16 %v285, %v282
  %v474 = vpack.c.bf16 %v293, %v290
  %v475 = vpack.c.bf16 %v301, %v298
  %v476 = vpack.c.bf16 %v309, %v306
  %v477 = vpack.c.bf16 %v317, %v314
  %v478 = vpack.c.bf16 %v325, %v322
  %v479 = vpack.c.bf16 %v333, %v330
  %v480 = vpack.c.bf16 %v341, %v338
  %v481 = vpack.c.bf16 %v349, %v346
  %v482 = vpack.c.bf16 %v357, %v354
  %v483 = vpack.c.bf16 %v365, %v362
  %v484 = vpack.c.bf16 %v373, %v370
  %v485 = vpack.c.bf16 %v381, %v378
  %v486 = vpack.c.bf16 %v389, %v386
  %v487 = vpack.c.bf16 %v397, %v394
  %v488 = vpack.c.bf16 %v405, %v402
  %v489 = vpack.c.bf16 %v413, %v410
  %v490 = vpack.c.bf16 %v421, %v418
  %v491 = vpack.c.bf16 %v429, %v426
  %v492 = vpack.c.bf16 %v437, %v434
  %v493 = vpack.c.bf16 %v445, %v442
  %v494 = vpack.c.bf16 %v453, %v450
  %v495 = vpack.c.bf16 %v461, %v458
  %v528 = vunpack.c.l.b16 %v464
  %v529 = vunpack.c.h.b16 %v464
  %v530 = vunpack.c.l.b16 %v465
  %v531 = vunpack.c.h.b16 %v465
  %v532 = vunpack.c.l.b16 %v466
  %v533 = vunpack.c.h.b16 %v466
  %v534 = vunpack.c.l.b16 %v467
  %v535 = vunpack.c.h.b16 %v467
  %v536 = vunpack.c.l.b16 %v468
  %v537 = vunpack.c.h.b16 %v468
  %v538 = vunpack.c.l.b16 %v469
  %v539 = vunpack.c.h.b16 %v469
  %v540 = vunpack.c.l.b16 %v470
  %v541 = vunpack.c.h.b16 %v470
  %v542 = vunpack.c.l.b16 %v471
  %v543 = vunpack.c.h.b16 %v471
  %v544 = vunpack.c.l.b16 %v472
  %v545 = vunpack.c.h.b16 %v472
  %v546 = vunpack.c.l.b16 %v473
  %v547 = vunpack.c.h.b16 %v473
  %v548 = vunpack.c.l.b16 %v474
  %v549 = vunpack.c.h.b16 %v474
  %v550 = vunpack.c.l.b16 %v475
  %v551 = vunpack.c.h.b16 %v475
  %v552 = vunpack.c.l.b16 %v476
  %v553 = vunpack.c.h.b16 %v476
  %v554 = vunpack.c.l.b16 %v477
  %v555 = vunpack.c.h.b16 %v477
  %v556 = vunpack.c.l.b16 %v478
  %v557 = vunpack.c.h.b16 %v478
  %v558 = vunpack.c.l.b16 %v479
  %v559 = vunpack.c.h.b16 %v479
  %v560 = vunpack.c.l.b16 %v480
  %v561 = vunpack.c.h.b16 %v480
  %v562 = vunpack.c.l.b16 %v481
  %v563 = vunpack.c.h.b16 %v481
  %v564 = vunpack.c.l.b16 %v482
  %v565 = vunpack.c.h.b16 %v482
  %v566 = vunpack.c.l.b16 %v483
  %v567 = vunpack.c.h.b16 %v483
  %v568 = vunpack.c.l.b16 %v484
  %v569 = vunpack.c.h.b16 %v484
  %v570 = vunpack.c.l.b16 %v485
  %v571 = vunpack.c.h.b16 %v485
  %v572 = vunpack.c.l.b16 %v486
  %v573 = vunpack.c.h.b16 %v486
  %v574 = vunpack.c.l.b16 %v487
  %v575 = vunpack.c.h.b16 %v487
  %v576 = vunpack.c.l.b16 %v488
  %v577 = vunpack.c.h.b16 %v488
  %v578 = vunpack.c.l.b16 %v489
  %v579 = vunpack.c.h.b16 %v489
  %v580 = vunpack.c.l.b16 %v490
  %v581 = vunpack.c.h.b16 %v490
  %v582 = vunpack.c.l.b16 %v491
  %v583 = vunpack.c.h.b16 %v491
  %v584 = vunpack.c.l.b16 %v492
  %v585 = vunpack.c.h.b16 %v492
  %v586 = vunpack.c.l.b16 %v493
  %v587 = vunpack.c.h.b16 %v493
  %v588 = vunpack.c.l.b16 %v494
  %v589 = vunpack.c.h.b16 %v494
  %v590 = vunpack.c.l.b16 %v495
  %v591 = vunpack.c.h.b16 %v495
  %v592 = vpack.c.b16 %v528, %v528
  %v593 = vpack.c.b16 %v529, %v529
  %v594 = vpack.c.b16 %v530, %v530
  %v595 = vpack.c.b16 %v531, %v531
  %v596 = vpack.c.b16 %v532, %v532
  %v597 = vpack.c.b16 %v533, %v533
  %v598 = vpack.c.b16 %v534, %v534
  %v599 = vpack.c.b16 %v535, %v535
  %v600 = vpack.c.b16 %v536, %v536
  %v601 = vpack.c.b16 %v537, %v537
  %v602 = vpack.c.b16 %v538, %v538
  %v603 = vpack.c.b16 %v539, %v539
  %v604 = vpack.c.b16 %v540, %v540
  %v605 = vpack.c.b16 %v541, %v541
  %v606 = vpack.c.b16 %v542, %v542
  %v607 = vpack.c.b16 %v543, %v543
  %v608 = vpack.c.b16 %v544, %v544
  %v609 = vpack.c.b16 %v545, %v545
  %v610 = vpack.c.b16 %v546, %v546
  %v611 = vpack.c.b16 %v547, %v547
  %v612 = vpack.c.b16 %v548, %v548
  %v613 = vpack.c.b16 %v549, %v549
  %v614 = vpack.c.b16 %v550, %v550
  %v615 = vpack.c.b16 %v551, %v551
  %v616 = vpack.c.b16 %v552, %v552
  %v617 = vpack.c.b16 %v553, %v553
  %v618 = vpack.c.b16 %v554, %v554
  %v619 = vpack.c.b16 %v555, %v555
  %v620 = vpack.c.b16 %v556, %v556
  %v621 = vpack.c.b16 %v557, %v557
  %v622 = vpack.c.b16 %v558, %v558
  %v623 = vpack.c.b16 %v559, %v559
  %v624 = vpack.c.b16 %v560, %v560
  %v625 = vpack.c.b16 %v561, %v561
  %v626 = vpack.c.b16 %v562, %v562
  %v627 = vpack.c.b16 %v563, %v563
  %v628 = vpack.c.b16 %v564, %v564
  %v629 = vpack.c.b16 %v565, %v565
  %v630 = vpack.c.b16 %v566, %v566
  %v631 = vpack.c.b16 %v567, %v567
  %v632 = vpack.c.b16 %v568, %v568
  %v633 = vpack.c.b16 %v569, %v569
  %v634 = vpack.c.b16 %v570, %v570
  %v635 = vpack.c.b16 %v571, %v571
  %v636 = vpack.c.b16 %v572, %v572
  %v637 = vpack.c.b16 %v573, %v573
  %v638 = vpack.c.b16 %v574, %v574
  %v639 = vpack.c.b16 %v575, %v575
  %v640 = vpack.c.b16 %v576, %v576
  %v641 = vpack.c.b16 %v577, %v577
  %v642 = vpack.c.b16 %v578, %v578
  %v643 = vpack.c.b16 %v579, %v579
  %v644 = vpack.c.b16 %v580, %v580
  %v645 = vpack.c.b16 %v581, %v581
  %v646 = vpack.c.b16 %v582, %v582
  %v647 = vpack.c.b16 %v583, %v583
  %v648 = vpack.c.b16 %v584, %v584
  %v649 = vpack.c.b16 %v585, %v585
  %v650 = vpack.c.b16 %v586, %v586
  %v651 = vpack.c.b16 %v587, %v587
  %v652 = vpack.c.b16 %v588, %v588
  %v653 = vpack.c.b16 %v589, %v589
  %v654 = vpack.c.b16 %v590, %v590
  %v655 = vpack.c.b16 %v591, %v591
  %720 = vst [vmem:[%s2] sm:$0xf] %v592
  %721 = vst [vmem:[%s2 + $0x4] sm:$0xf] %v593
  %722 = vst [vmem:[%s2 + $0x8] sm:$0xf] %v594
  %723 = vst [vmem:[%s2 + $0xc] sm:$0xf] %v595
  %724 = vst [vmem:[%s2 + $0x10] sm:$0xf] %v596
  %725 = vst [vmem:[%s2 + $0x14] sm:$0xf] %v597
  %726 = vst [vmem:[%s2 + $0x18] sm:$0xf] %v598
  %727 = vst [vmem:[%s2 + $0x1c] sm:$0xf] %v599
  %728 = vst [vmem:[%s2 + $0x20] sm:$0xf] %v600
  %729 = vst [vmem:[%s2 + $0x24] sm:$0xf] %v601
  %730 = vst [vmem:[%s2 + $0x28] sm:$0xf] %v602
  %731 = vst [vmem:[%s2 + $0x2c] sm:$0xf] %v603
  %732 = vst [vmem:[%s2 + $0x30] sm:$0xf] %v604
  %733 = vst [vmem:[%s2 + $0x34] sm:$0xf] %v605
  %734 = vst [vmem:[%s2 + $0x38] sm:$0xf] %v606
  %735 = vst [vmem:[%s2 + $0x3c] sm:$0xf] %v607
  %736 = vst [vmem:[%s2 + $0x40] sm:$0xf] %v608
  %737 = vst [vmem:[%s2 + $0x44] sm:$0xf] %v609
  %738 = vst [vmem:[%s2 + $0x48] sm:$0xf] %v610
  %739 = vst [vmem:[%s2 + $0x4c] sm:$0xf] %v611
  %740 = vst [vmem:[%s2 + $0x50] sm:$0xf] %v612
  %741 = vst [vmem:[%s2 + $0x54] sm:$0xf] %v613
  %742 = vst [vmem:[%s2 + $0x58] sm:$0xf] %v614
  %743 = vst [vmem:[%s2 + $0x5c] sm:$0xf] %v615
  %744 = vst [vmem:[%s2 + $0x60] sm:$0xf] %v616
  %745 = vst [vmem:[%s2 + $0x64] sm:$0xf] %v617
  %746 = vst [vmem:[%s2 + $0x68] sm:$0xf] %v618
  %747 = vst [vmem:[%s2 + $0x6c] sm:$0xf] %v619
  %748 = vst [vmem:[%s2 + $0x70] sm:$0xf] %v620
  %749 = vst [vmem:[%s2 + $0x74] sm:$0xf] %v621
  %750 = vst [vmem:[%s2 + $0x78] sm:$0xf] %v622
  %751 = vst [vmem:[%s2 + $0x7c] sm:$0xf] %v623
  %752 = vst [vmem:[%s2 + $0x80] sm:$0xf] %v624
  %753 = vst [vmem:[%s2 + $0x84] sm:$0xf] %v625
  %754 = vst [vmem:[%s2 + $0x88] sm:$0xf] %v626
  %755 = vst [vmem:[%s2 + $0x8c] sm:$0xf] %v627
  %756 = vst [vmem:[%s2 + $0x90] sm:$0xf] %v628
  %757 = vst [vmem:[%s2 + $0x94] sm:$0xf] %v629
  %758 = vst [vmem:[%s2 + $0x98] sm:$0xf] %v630
  %759 = vst [vmem:[%s2 + $0x9c] sm:$0xf] %v631
  %760 = vst [vmem:[%s2 + $0xa0] sm:$0xf] %v632
  %761 = vst [vmem:[%s2 + $0xa4] sm:$0xf] %v633
  %762 = vst [vmem:[%s2 + $0xa8] sm:$0xf] %v634
  %763 = vst [vmem:[%s2 + $0xac] sm:$0xf] %v635
  %764 = vst [vmem:[%s2 + $0xb0] sm:$0xf] %v636
  %765 = vst [vmem:[%s2 + $0xb4] sm:$0xf] %v637
  %766 = vst [vmem:[%s2 + $0xb8] sm:$0xf] %v638
  %767 = vst [vmem:[%s2 + $0xbc] sm:$0xf] %v639
  %768 = vst [vmem:[%s2 + $0xc0] sm:$0xf] %v640
  %769 = vst [vmem:[%s2 + $0xc4] sm:$0xf] %v641
  %770 = vst [vmem:[%s2 + $0xc8] sm:$0xf] %v642
  %771 = vst [vmem:[%s2 + $0xcc] sm:$0xf] %v643
  %772 = vst [vmem:[%s2 + $0xd0] sm:$0xf] %v644
  %773 = vst [vmem:[%s2 + $0xd4] sm:$0xf] %v645
  %774 = vst [vmem:[%s2 + $0xd8] sm:$0xf] %v646
  %775 = vst [vmem:[%s2 + $0xdc] sm:$0xf] %v647
  %776 = vst [vmem:[%s2 + $0xe0] sm:$0xf] %v648
  %777 = vst [vmem:[%s2 + $0xe4] sm:$0xf] %v649
  %778 = vst [vmem:[%s2 + $0xe8] sm:$0xf] %v650
  %779 = vst [vmem:[%s2 + $0xec] sm:$0xf] %v651
  %780 = vst [vmem:[%s2 + $0xf0] sm:$0xf] %v652
  %781 = vst [vmem:[%s2 + $0xf4] sm:$0xf] %v653
  %782 = vst [vmem:[%s2 + $0xf8] sm:$0xf] %v654
  %783 = vst [vmem:[%s2 + $0xfc] sm:$0xf] %v655
  %v784 = vadd.f32 %v210, %v213
  %v785 = vadd.f32 %v784, %v218
  %v786 = vadd.f32 %v785, %v221
  %v787 = vadd.f32 %v786, %v226
  %v788 = vadd.f32 %v787, %v229
  %v789 = vadd.f32 %v788, %v234
  %v790 = vadd.f32 %v789, %v237
  %v791 = vadd.f32 %v790, %v242
  %v792 = vadd.f32 %v791, %v245
  %v793 = vadd.f32 %v792, %v250
  %v794 = vadd.f32 %v793, %v253
  %v795 = vadd.f32 %v794, %v258
  %v796 = vadd.f32 %v795, %v261
  %v797 = vadd.f32 %v796, %v266
  %v798 = vadd.f32 %v797, %v269
  %v799 = vadd.f32 %v798, %v274
  %v800 = vadd.f32 %v799, %v277
  %v801 = vadd.f32 %v800, %v282
  %v802 = vadd.f32 %v801, %v285
  %v803 = vadd.f32 %v802, %v290
  %v804 = vadd.f32 %v803, %v293
  %v805 = vadd.f32 %v804, %v298
  %v806 = vadd.f32 %v805, %v301
  %v807 = vadd.f32 %v806, %v306
  %v808 = vadd.f32 %v807, %v309
  %v809 = vadd.f32 %v808, %v314
  %v810 = vadd.f32 %v809, %v317
  %v811 = vadd.f32 %v810, %v322
  %v812 = vadd.f32 %v811, %v325
  %v813 = vadd.f32 %v812, %v330
  %v814 = vadd.f32 %v813, %v333
  %v815 = vadd.f32 %v814, %v338
  %v816 = vadd.f32 %v815, %v341
  %v817 = vadd.f32 %v816, %v346
  %v818 = vadd.f32 %v817, %v349
  %v819 = vadd.f32 %v818, %v354
  %v820 = vadd.f32 %v819, %v357
  %v821 = vadd.f32 %v820, %v362
  %v822 = vadd.f32 %v821, %v365
  %v823 = vadd.f32 %v822, %v370
  %v824 = vadd.f32 %v823, %v373
  %v825 = vadd.f32 %v824, %v378
  %v826 = vadd.f32 %v825, %v381
  %v827 = vadd.f32 %v826, %v386
  %v828 = vadd.f32 %v827, %v389
  %v829 = vadd.f32 %v828, %v394
  %v830 = vadd.f32 %v829, %v397
  %v831 = vadd.f32 %v830, %v402
  %v832 = vadd.f32 %v831, %v405
  %v833 = vadd.f32 %v832, %v410
  %v834 = vadd.f32 %v833, %v413
  %v835 = vadd.f32 %v834, %v418
  %v836 = vadd.f32 %v835, %v421
  %v837 = vadd.f32 %v836, %v426
  %v838 = vadd.f32 %v837, %v429
  %v839 = vadd.f32 %v838, %v434
  %v840 = vadd.f32 %v839, %v437
  %v841 = vadd.f32 %v840, %v442
  %v842 = vadd.f32 %v841, %v445
  %v843 = vadd.f32 %v842, %v450
  %v844 = vadd.f32 %v843, %v453
  %v845 = vadd.f32 %v844, %v458
  %v846 = vadd.f32 %v845, %v461
  %v847 = vrot.slane %v846, 4
  %v848 = vadd.f32 %v846, %v847
  %v849 = vrot.slane %v848, 2
  %v850 = vadd.f32 %v848, %v849
  %v851 = vrot.slane %v850, 1
  %v852 = vadd.f32 %v850, %v851
  %853 = vst [vmem:[%s3] sm:$0x1] %v852
  %v854 = vmul.f32 %v210, %v210
  %v855 = vmul.f32 %v213, %v213
  %v856 = vmul.f32 %v218, %v218
  %v857 = vmul.f32 %v221, %v221
  %v858 = vmul.f32 %v226, %v226
  %v859 = vmul.f32 %v229, %v229
  %v860 = vmul.f32 %v234, %v234
  %v861 = vmul.f32 %v237, %v237
  %v862 = vmul.f32 %v242, %v242
  %v863 = vmul.f32 %v245, %v245
  %v864 = vmul.f32 %v250, %v250
  %v865 = vmul.f32 %v253, %v253
  %v866 = vmul.f32 %v258, %v258
  %v867 = vmul.f32 %v261, %v261
  %v868 = vmul.f32 %v266, %v266
  %v869 = vmul.f32 %v269, %v269
  %v870 = vmul.f32 %v274, %v274
  %v871 = vmul.f32 %v277, %v277
  %v872 = vmul.f32 %v282, %v282
  %v873 = vmul.f32 %v285, %v285
  %v874 = vmul.f32 %v290, %v290
  %v875 = vmul.f32 %v293, %v293
  %v876 = vmul.f32 %v298, %v298
  %v877 = vmul.f32 %v301, %v301
  %v878 = vmul.f32 %v306, %v306
  %v879 = vmul.f32 %v309, %v309
  %v880 = vmul.f32 %v314, %v314
  %v881 = vmul.f32 %v317, %v317
  %v882 = vmul.f32 %v322, %v322
  %v883 = vmul.f32 %v325, %v325
  %v884 = vmul.f32 %v330, %v330
  %v885 = vmul.f32 %v333, %v333
  %v886 = vmul.f32 %v338, %v338
  %v887 = vmul.f32 %v341, %v341
  %v888 = vmul.f32 %v346, %v346
  %v889 = vmul.f32 %v349, %v349
  %v890 = vmul.f32 %v354, %v354
  %v891 = vmul.f32 %v357, %v357
  %v892 = vmul.f32 %v362, %v362
  %v893 = vmul.f32 %v365, %v365
  %v894 = vmul.f32 %v370, %v370
  %v895 = vmul.f32 %v373, %v373
  %v896 = vmul.f32 %v378, %v378
  %v897 = vmul.f32 %v381, %v381
  %v898 = vmul.f32 %v386, %v386
  %v899 = vmul.f32 %v389, %v389
  %v900 = vmul.f32 %v394, %v394
  %v901 = vmul.f32 %v397, %v397
  %v902 = vmul.f32 %v402, %v402
  %v903 = vmul.f32 %v405, %v405
  %v904 = vmul.f32 %v410, %v410
  %v905 = vmul.f32 %v413, %v413
  %v906 = vmul.f32 %v418, %v418
  %v907 = vmul.f32 %v421, %v421
  %v908 = vmul.f32 %v426, %v426
  %v909 = vmul.f32 %v429, %v429
  %v910 = vmul.f32 %v434, %v434
  %v911 = vmul.f32 %v437, %v437
  %v912 = vmul.f32 %v442, %v442
  %v913 = vmul.f32 %v445, %v445
  %v914 = vmul.f32 %v450, %v450
  %v915 = vmul.f32 %v453, %v453
  %v916 = vmul.f32 %v458, %v458
  %v917 = vmul.f32 %v461, %v461
  %v918 = vadd.f32 %v854, %v855
  %v919 = vadd.f32 %v918, %v856
  %v920 = vadd.f32 %v919, %v857
  %v921 = vadd.f32 %v920, %v858
  %v922 = vadd.f32 %v921, %v859
  %v923 = vadd.f32 %v922, %v860
  %v924 = vadd.f32 %v923, %v861
  %v925 = vadd.f32 %v924, %v862
  %v926 = vadd.f32 %v925, %v863
  %v927 = vadd.f32 %v926, %v864
  %v928 = vadd.f32 %v927, %v865
  %v929 = vadd.f32 %v928, %v866
  %v930 = vadd.f32 %v929, %v867
  %v931 = vadd.f32 %v930, %v868
  %v932 = vadd.f32 %v931, %v869
  %v933 = vadd.f32 %v932, %v870
  %v934 = vadd.f32 %v933, %v871
  %v935 = vadd.f32 %v934, %v872
  %v936 = vadd.f32 %v935, %v873
  %v937 = vadd.f32 %v936, %v874
  %v938 = vadd.f32 %v937, %v875
  %v939 = vadd.f32 %v938, %v876
  %v940 = vadd.f32 %v939, %v877
  %v941 = vadd.f32 %v940, %v878
  %v942 = vadd.f32 %v941, %v879
  %v943 = vadd.f32 %v942, %v880
  %v944 = vadd.f32 %v943, %v881
  %v945 = vadd.f32 %v944, %v882
  %v946 = vadd.f32 %v945, %v883
  %v947 = vadd.f32 %v946, %v884
  %v948 = vadd.f32 %v947, %v885
  %v949 = vadd.f32 %v948, %v886
  %v950 = vadd.f32 %v949, %v887
  %v951 = vadd.f32 %v950, %v888
  %v952 = vadd.f32 %v951, %v889
  %v953 = vadd.f32 %v952, %v890
  %v954 = vadd.f32 %v953, %v891
  %v955 = vadd.f32 %v954, %v892
  %v956 = vadd.f32 %v955, %v893
  %v957 = vadd.f32 %v956, %v894
  %v958 = vadd.f32 %v957, %v895
  %v959 = vadd.f32 %v958, %v896
  %v960 = vadd.f32 %v959, %v897
  %v961 = vadd.f32 %v960, %v898
  %v962 = vadd.f32 %v961, %v899
  %v963 = vadd.f32 %v962, %v900
  %v964 = vadd.f32 %v963, %v901
  %v965 = vadd.f32 %v964, %v902
  %v966 = vadd.f32 %v965, %v903
  %v967 = vadd.f32 %v966, %v904
  %v968 = vadd.f32 %v967, %v905
  %v969 = vadd.f32 %v968, %v906
  %v970 = vadd.f32 %v969, %v907
  %v971 = vadd.f32 %v970, %v908
  %v972 = vadd.f32 %v971, %v909
  %v973 = vadd.f32 %v972, %v910
  %v974 = vadd.f32 %v973, %v911
  %v975 = vadd.f32 %v974, %v912
  %v976 = vadd.f32 %v975, %v913
  %v977 = vadd.f32 %v976, %v914
  %v978 = vadd.f32 %v977, %v915
  %v979 = vadd.f32 %v978, %v916
  %v980 = vadd.f32 %v979, %v917
  %v981 = vrot.slane %v980, 4
  %v982 = vadd.f32 %v980, %v981
  %v983 = vrot.slane %v982, 2
  %v984 = vadd.f32 %v982, %v983
  %v985 = vrot.slane %v984, 1
  %v986 = vadd.f32 %v984, %v985
  %987 = vst [vmem:[%s4] sm:$0x1] %v986
  // Predicated region
  $region10: #{bottleneck_forward.4} parent=0 // pred_check
    _
  $region11: #{bottleneck_forward.4} parent=0 // pred_check_branch
    %989 = sbr.rel (0) target = $region13
  $region12: #{bottleneck_forward.4} parent=0 // pred_region
    _
  $region13: #{bottleneck_forward.4} parent=0 // pred_fallthru
    _
  // Predicated region
  $region14: #{bottleneck_forward.4} parent=0 // pred_check
    _
  $region15: #{bottleneck_forward.4} parent=0 // pred_check_branch
    %991 = sbr.rel (0) target = $region17
  $region16: #{bottleneck_forward.4} parent=0 // pred_region
    _
  $region17: #{bottleneck_forward.4} parent=0 // pred_fallthru
    _
  // Predicated region
  $region18: #{bottleneck_forward.4} parent=0 // pred_check
    _
  $region19: #{bottleneck_forward.4} parent=0 // pred_check_branch
    %993 = sbr.rel (0) target = $region21
  $region20: #{bottleneck_forward.4} parent=0 // pred_region
    _
  $region21: #{bottleneck_forward.4} parent=0 // pred_fallthru
    _
  // Predicated region
  $region22: #{bottleneck_forward.4} parent=0 // pred_check
    _
  $region23: #{bottleneck_forward.4} parent=0 // pred_check_branch
    %995 = sbr.rel (0) target = $region25
  $region24: #{bottleneck_forward.4} parent=0 // pred_region
    _
  $region25: #{bottleneck_forward.4} parent=0 // pred_fallthru
    _
  // Predicated region
  $region26: #{bottleneck_forward.4} parent=0 // pred_check
    _
  $region27: #{bottleneck_forward.4} parent=0 // pred_check_branch
    %997 = sbr.rel (0) target = $region29
  $region28: #{bottleneck_forward.4} parent=0 // pred_region
    _
  $region29: #{bottleneck_forward.4} parent=0 // pred_fallthru
    _
  // Predicated region
  $region30: #{bottleneck_forward.4} parent=0 // pred_check
    _
  $region31: #{bottleneck_forward.4} parent=0 // pred_check_branch
    %999 = sbr.rel (0) target = $region33
  $region32: #{bottleneck_forward.4} parent=0 // pred_region
    _
  $region33: #{bottleneck_forward.4} parent=0 // pred_fallthru
    _

// kernel: bottleneck_forward.7
$region0: #{bottleneck_forward.7}
  #allocation0 [shape = 'u32[]', space=smem, size = 0x4, offset = 0x4, fixed_abs, tag = 'smem constant byte address 0x4 - core index']
  #allocation1 [shape = 'u32[144,128]{1,0:T(1,128)}', space=vmem, size = 0x12000, scoped, tag = 'internal scratch']
  %s0 = inlined_call_operand.vmem [shape: bf16[512,128], index: 0, kind: input, shape index: {}]
  %s1 = inlined_call_operand.vmem [shape: f32[1,128], index: 1, kind: input, shape index: {}]
  %s2 = inlined_call_operand.vmem [shape: f32[1,128], index: 2, kind: input, shape index: {}]
  %s3 = inlined_call_operand.vmem [shape: f32[512,128], index: 3, kind: input, shape index: {}]
  %s4 = inlined_call_operand.vmem [shape: f32[512,128], index: 4, kind: output, shape index: {}]
  %s5 = sld [smem:[#allocation0]]
  $region26: #{bottleneck_forward.7} parent=0
    _
  %s7 = ssub.s32 1, %s5
  %s8 = scalar_select 0, %s7, %s5
  // Predicated region
  $region2: #{bottleneck_forward.7} parent=0 // pred_check
    _
  $region3: #{bottleneck_forward.7} parent=0 // pred_check_branch
    %10 = sbr.rel (0) target = $region5
  $region4: #{bottleneck_forward.7} parent=0 // pred_region
    _
  $region5: #{bottleneck_forward.7} parent=0 // pred_fallthru
    _
  // Predicated region
  $region6: #{bottleneck_forward.7} parent=0 // pred_check
    _
  $region7: #{bottleneck_forward.7} parent=0 // pred_check_branch
    %12 = sbr.rel (0) target = $region9
  $region8: #{bottleneck_forward.7} parent=0 // pred_region
    _
  $region9: #{bottleneck_forward.7} parent=0 // pred_fallthru
    _
  // Predicated region
  $region10: #{bottleneck_forward.7} parent=0 // pred_check
    _
  $region11: #{bottleneck_forward.7} parent=0 // pred_check_branch
    %14 = sbr.rel (0) target = $region13
  $region12: #{bottleneck_forward.7} parent=0 // pred_region
    _
  $region13: #{bottleneck_forward.7} parent=0 // pred_fallthru
    _
  // Predicated region
  $region14: #{bottleneck_forward.7} parent=0 // pred_check
    _
  $region15: #{bottleneck_forward.7} parent=0 // pred_check_branch
    %16 = sbr.rel (0) target = $region17
  $region16: #{bottleneck_forward.7} parent=0 // pred_region
    _
  $region17: #{bottleneck_forward.7} parent=0 // pred_fallthru
    _
  %v17 = vld [vmem:[%s0] sm:$0xf]
  %v18 = vld [vmem:[%s0 + $0x4] sm:$0xf]
  %v19 = vld [vmem:[%s0 + $0x8] sm:$0xf]
  %v20 = vld [vmem:[%s0 + $0xc] sm:$0xf]
  %v21 = vld [vmem:[%s0 + $0x10] sm:$0xf]
  %v22 = vld [vmem:[%s0 + $0x14] sm:$0xf]
  %v23 = vld [vmem:[%s0 + $0x18] sm:$0xf]
  %v24 = vld [vmem:[%s0 + $0x1c] sm:$0xf]
  %v25 = vld [vmem:[%s0 + $0x20] sm:$0xf]
  %v26 = vld [vmem:[%s0 + $0x24] sm:$0xf]
  %v27 = vld [vmem:[%s0 + $0x28] sm:$0xf]
  %v28 = vld [vmem:[%s0 + $0x2c] sm:$0xf]
  %v29 = vld [vmem:[%s0 + $0x30] sm:$0xf]
  %v30 = vld [vmem:[%s0 + $0x34] sm:$0xf]
  %v31 = vld [vmem:[%s0 + $0x38] sm:$0xf]
  %v32 = vld [vmem:[%s0 + $0x3c] sm:$0xf]
  %v33 = vld [vmem:[%s0 + $0x40] sm:$0xf]
  %v34 = vld [vmem:[%s0 + $0x44] sm:$0xf]
  %v35 = vld [vmem:[%s0 + $0x48] sm:$0xf]
  %v36 = vld [vmem:[%s0 + $0x4c] sm:$0xf]
  %v37 = vld [vmem:[%s0 + $0x50] sm:$0xf]
  %v38 = vld [vmem:[%s0 + $0x54] sm:$0xf]
  %v39 = vld [vmem:[%s0 + $0x58] sm:$0xf]
  %v40 = vld [vmem:[%s0 + $0x5c] sm:$0xf]
  %v41 = vld [vmem:[%s0 + $0x60] sm:$0xf]
  %v42 = vld [vmem:[%s0 + $0x64] sm:$0xf]
  %v43 = vld [vmem:[%s0 + $0x68] sm:$0xf]
  %v44 = vld [vmem:[%s0 + $0x6c] sm:$0xf]
  %v45 = vld [vmem:[%s0 + $0x70] sm:$0xf]
  %v46 = vld [vmem:[%s0 + $0x74] sm:$0xf]
  %v47 = vld [vmem:[%s0 + $0x78] sm:$0xf]
  %v48 = vld [vmem:[%s0 + $0x7c] sm:$0xf]
  %v49 = vld [vmem:[%s0 + $0x80] sm:$0xf]
  %v50 = vld [vmem:[%s0 + $0x84] sm:$0xf]
  %v51 = vld [vmem:[%s0 + $0x88] sm:$0xf]
  %v52 = vld [vmem:[%s0 + $0x8c] sm:$0xf]
  %v53 = vld [vmem:[%s0 + $0x90] sm:$0xf]
  %v54 = vld [vmem:[%s0 + $0x94] sm:$0xf]
  %v55 = vld [vmem:[%s0 + $0x98] sm:$0xf]
  %v56 = vld [vmem:[%s0 + $0x9c] sm:$0xf]
  %v57 = vld [vmem:[%s0 + $0xa0] sm:$0xf]
  %v58 = vld [vmem:[%s0 + $0xa4] sm:$0xf]
  %v59 = vld [vmem:[%s0 + $0xa8] sm:$0xf]
  %v60 = vld [vmem:[%s0 + $0xac] sm:$0xf]
  %v61 = vld [vmem:[%s0 + $0xb0] sm:$0xf]
  %v62 = vld [vmem:[%s0 + $0xb4] sm:$0xf]
  %v63 = vld [vmem:[%s0 + $0xb8] sm:$0xf]
  %v64 = vld [vmem:[%s0 + $0xbc] sm:$0xf]
  %v65 = vld [vmem:[%s0 + $0xc0] sm:$0xf]
  %v66 = vld [vmem:[%s0 + $0xc4] sm:$0xf]
  %v67 = vld [vmem:[%s0 + $0xc8] sm:$0xf]
  %v68 = vld [vmem:[%s0 + $0xcc] sm:$0xf]
  %v69 = vld [vmem:[%s0 + $0xd0] sm:$0xf]
  %v70 = vld [vmem:[%s0 + $0xd4] sm:$0xf]
  %v71 = vld [vmem:[%s0 + $0xd8] sm:$0xf]
  %v72 = vld [vmem:[%s0 + $0xdc] sm:$0xf]
  %v73 = vld [vmem:[%s0 + $0xe0] sm:$0xf]
  %v74 = vld [vmem:[%s0 + $0xe4] sm:$0xf]
  %v75 = vld [vmem:[%s0 + $0xe8] sm:$0xf]
  %v76 = vld [vmem:[%s0 + $0xec] sm:$0xf]
  %v77 = vld [vmem:[%s0 + $0xf0] sm:$0xf]
  %v78 = vld [vmem:[%s0 + $0xf4] sm:$0xf]
  %v79 = vld [vmem:[%s0 + $0xf8] sm:$0xf]
  %v80 = vld [vmem:[%s0 + $0xfc] sm:$0xf]
  %v81 = vunpack.c.l.bf16 %v17
  %v82 = vunpack.c.l.bf16 %v18
  %v83 = vunpack.c.l.bf16 %v19
  %v84 = vunpack.c.l.bf16 %v20
  %v85 = vunpack.c.l.bf16 %v21
  %v86 = vunpack.c.l.bf16 %v22
  %v87 = vunpack.c.l.bf16 %v23
  %v88 = vunpack.c.l.bf16 %v24
  %v89 = vunpack.c.l.bf16 %v25
  %v90 = vunpack.c.l.bf16 %v26
  %v91 = vunpack.c.l.bf16 %v27
  %v92 = vunpack.c.l.bf16 %v28
  %v93 = vunpack.c.l.bf16 %v29
  %v94 = vunpack.c.l.bf16 %v30
  %v95 = vunpack.c.l.bf16 %v31
  %v96 = vunpack.c.l.bf16 %v32
  %v97 = vunpack.c.l.bf16 %v33
  %v98 = vunpack.c.l.bf16 %v34
  %v99 = vunpack.c.l.bf16 %v35
  %v100 = vunpack.c.l.bf16 %v36
  %v101 = vunpack.c.l.bf16 %v37
  %v102 = vunpack.c.l.bf16 %v38
  %v103 = vunpack.c.l.bf16 %v39
  %v104 = vunpack.c.l.bf16 %v40
  %v105 = vunpack.c.l.bf16 %v41
  %v106 = vunpack.c.l.bf16 %v42
  %v107 = vunpack.c.l.bf16 %v43
  %v108 = vunpack.c.l.bf16 %v44
  %v109 = vunpack.c.l.bf16 %v45
  %v110 = vunpack.c.l.bf16 %v46
  %v111 = vunpack.c.l.bf16 %v47
  %v112 = vunpack.c.l.bf16 %v48
  %v113 = vunpack.c.l.bf16 %v49
  %v114 = vunpack.c.l.bf16 %v50
  %v115 = vunpack.c.l.bf16 %v51
  %v116 = vunpack.c.l.bf16 %v52
  %v117 = vunpack.c.l.bf16 %v53
  %v118 = vunpack.c.l.bf16 %v54
  %v119 = vunpack.c.l.bf16 %v55
  %v120 = vunpack.c.l.bf16 %v56
  %v121 = vunpack.c.l.bf16 %v57
  %v122 = vunpack.c.l.bf16 %v58
  %v123 = vunpack.c.l.bf16 %v59
  %v124 = vunpack.c.l.bf16 %v60
  %v125 = vunpack.c.l.bf16 %v61
  %v126 = vunpack.c.l.bf16 %v62
  %v127 = vunpack.c.l.bf16 %v63
  %v128 = vunpack.c.l.bf16 %v64
  %v129 = vunpack.c.l.bf16 %v65
  %v130 = vunpack.c.l.bf16 %v66
  %v131 = vunpack.c.l.bf16 %v67
  %v132 = vunpack.c.l.bf16 %v68
  %v133 = vunpack.c.l.bf16 %v69
  %v134 = vunpack.c.l.bf16 %v70
  %v135 = vunpack.c.l.bf16 %v71
  %v136 = vunpack.c.l.bf16 %v72
  %v137 = vunpack.c.l.bf16 %v73
  %v138 = vunpack.c.l.bf16 %v74
  %v139 = vunpack.c.l.bf16 %v75
  %v140 = vunpack.c.l.bf16 %v76
  %v141 = vunpack.c.l.bf16 %v77
  %v142 = vunpack.c.l.bf16 %v78
  %v143 = vunpack.c.l.bf16 %v79
  %v144 = vunpack.c.l.bf16 %v80
  %v145 = vld [vmem:[%s1] sm:$0x1]
  %v147 = vlaneseq
  %v148 = vshrl.u32 %v147, 7
  %v149 = vsub.s32 0, %v148
  %v150 = vrot.slane %v145, %v149
  %v152 = vmul.f32 %v81, %v150
  %v153 = vmul.f32 %v82, %v150
  %v154 = vmul.f32 %v83, %v150
  %v155 = vmul.f32 %v84, %v150
  %v156 = vmul.f32 %v85, %v150
  %v157 = vmul.f32 %v86, %v150
  %v158 = vmul.f32 %v87, %v150
  %v159 = vmul.f32 %v88, %v150
  %v160 = vmul.f32 %v89, %v150
  %v161 = vmul.f32 %v90, %v150
  %v162 = vmul.f32 %v91, %v150
  %v163 = vmul.f32 %v92, %v150
  %v164 = vmul.f32 %v93, %v150
  %v165 = vmul.f32 %v94, %v150
  %v166 = vmul.f32 %v95, %v150
  %v167 = vmul.f32 %v96, %v150
  %v168 = vmul.f32 %v97, %v150
  %v169 = vmul.f32 %v98, %v150
  %v170 = vmul.f32 %v99, %v150
  %v171 = vmul.f32 %v100, %v150
  %v172 = vmul.f32 %v101, %v150
  %v173 = vmul.f32 %v102, %v150
  %v174 = vmul.f32 %v103, %v150
  %v175 = vmul.f32 %v104, %v150
  %v176 = vmul.f32 %v105, %v150
  %v177 = vmul.f32 %v106, %v150
  %v178 = vmul.f32 %v107, %v150
  %v179 = vmul.f32 %v108, %v150
  %v180 = vmul.f32 %v109, %v150
  %v181 = vmul.f32 %v110, %v150
  %v182 = vmul.f32 %v111, %v150
  %v183 = vmul.f32 %v112, %v150
  %v184 = vmul.f32 %v113, %v150
  %v185 = vmul.f32 %v114, %v150
  %v186 = vmul.f32 %v115, %v150
  %v187 = vmul.f32 %v116, %v150
  %v188 = vmul.f32 %v117, %v150
  %v189 = vmul.f32 %v118, %v150
  %v190 = vmul.f32 %v119, %v150
  %v191 = vmul.f32 %v120, %v150
  %v192 = vmul.f32 %v121, %v150
  %v193 = vmul.f32 %v122, %v150
  %v194 = vmul.f32 %v123, %v150
  %v195 = vmul.f32 %v124, %v150
  %v196 = vmul.f32 %v125, %v150
  %v197 = vmul.f32 %v126, %v150
  %v198 = vmul.f32 %v127, %v150
  %v199 = vmul.f32 %v128, %v150
  %v200 = vmul.f32 %v129, %v150
  %v201 = vmul.f32 %v130, %v150
  %v202 = vmul.f32 %v131, %v150
  %v203 = vmul.f32 %v132, %v150
  %v204 = vmul.f32 %v133, %v150
  %v205 = vmul.f32 %v134, %v150
  %v206 = vmul.f32 %v135, %v150
  %v207 = vmul.f32 %v136, %v150
  %v208 = vmul.f32 %v137, %v150
  %v209 = vmul.f32 %v138, %v150
  %v210 = vmul.f32 %v139, %v150
  %v211 = vmul.f32 %v140, %v150
  %v212 = vmul.f32 %v141, %v150
  %v213 = vmul.f32 %v142, %v150
  %v214 = vmul.f32 %v143, %v150
  %v215 = vmul.f32 %v144, %v150
  %v216 = vld [vmem:[%s2] sm:$0x1]
  %v218 = vlaneseq
  %v219 = vshrl.u32 %v218, 7
  %v220 = vsub.s32 0, %v219
  %v221 = vrot.slane %v216, %v220
  %v223 = vadd.f32 %v152, %v221
  %v224 = vadd.f32 %v153, %v221
  %v225 = vadd.f32 %v154, %v221
  %v226 = vadd.f32 %v155, %v221
  %v227 = vadd.f32 %v156, %v221
  %v228 = vadd.f32 %v157, %v221
  %v229 = vadd.f32 %v158, %v221
  %v230 = vadd.f32 %v159, %v221
  %v231 = vadd.f32 %v160, %v221
  %v232 = vadd.f32 %v161, %v221
  %v233 = vadd.f32 %v162, %v221
  %v234 = vadd.f32 %v163, %v221
  %v235 = vadd.f32 %v164, %v221
  %v236 = vadd.f32 %v165, %v221
  %v237 = vadd.f32 %v166, %v221
  %v238 = vadd.f32 %v167, %v221
  %v239 = vadd.f32 %v168, %v221
  %v240 = vadd.f32 %v169, %v221
  %v241 = vadd.f32 %v170, %v221
  %v242 = vadd.f32 %v171, %v221
  %v243 = vadd.f32 %v172, %v221
  %v244 = vadd.f32 %v173, %v221
  %v245 = vadd.f32 %v174, %v221
  %v246 = vadd.f32 %v175, %v221
  %v247 = vadd.f32 %v176, %v221
  %v248 = vadd.f32 %v177, %v221
  %v249 = vadd.f32 %v178, %v221
  %v250 = vadd.f32 %v179, %v221
  %v251 = vadd.f32 %v180, %v221
  %v252 = vadd.f32 %v181, %v221
  %v253 = vadd.f32 %v182, %v221
  %v254 = vadd.f32 %v183, %v221
  %v255 = vadd.f32 %v184, %v221
  %v256 = vadd.f32 %v185, %v221
  %v257 = vadd.f32 %v186, %v221
  %v258 = vadd.f32 %v187, %v221
  %v259 = vadd.f32 %v188, %v221
  %v260 = vadd.f32 %v189, %v221
  %v261 = vadd.f32 %v190, %v221
  %v262 = vadd.f32 %v191, %v221
  %v263 = vadd.f32 %v192, %v221
  %v264 = vadd.f32 %v193, %v221
  %v265 = vadd.f32 %v194, %v221
  %v266 = vadd.f32 %v195, %v221
  %v267 = vadd.f32 %v196, %v221
  %v268 = vadd.f32 %v197, %v221
  %v269 = vadd.f32 %v198, %v221
  %v270 = vadd.f32 %v199, %v221
  %v271 = vadd.f32 %v200, %v221
  %v272 = vadd.f32 %v201, %v221
  %v273 = vadd.f32 %v202, %v221
  %v274 = vadd.f32 %v203, %v221
  %v275 = vadd.f32 %v204, %v221
  %v276 = vadd.f32 %v205, %v221
  %v277 = vadd.f32 %v206, %v221
  %v278 = vadd.f32 %v207, %v221
  %v279 = vadd.f32 %v208, %v221
  %v280 = vadd.f32 %v209, %v221
  %v281 = vadd.f32 %v210, %v221
  %v282 = vadd.f32 %v211, %v221
  %v283 = vadd.f32 %v212, %v221
  %v284 = vadd.f32 %v213, %v221
  %v285 = vadd.f32 %v214, %v221
  %v286 = vadd.f32 %v215, %v221
  %v287 = vld [vmem:[%s3] sm:$0xff]
  %v288 = vld [vmem:[%s3 + $0x8] sm:$0xff]
  %v289 = vld [vmem:[%s3 + $0x10] sm:$0xff]
  %v290 = vld [vmem:[%s3 + $0x18] sm:$0xff]
  %v291 = vld [vmem:[%s3 + $0x20] sm:$0xff]
  %v292 = vld [vmem:[%s3 + $0x28] sm:$0xff]
  %v293 = vld [vmem:[%s3 + $0x30] sm:$0xff]
  %v294 = vld [vmem:[%s3 + $0x38] sm:$0xff]
  %v295 = vld [vmem:[%s3 + $0x40] sm:$0xff]
  %v296 = vld [vmem:[%s3 + $0x48] sm:$0xff]
  %v297 = vld [vmem:[%s3 + $0x50] sm:$0xff]
  %v298 = vld [vmem:[%s3 + $0x58] sm:$0xff]
  %v299 = vld [vmem:[%s3 + $0x60] sm:$0xff]
  %v300 = vld [vmem:[%s3 + $0x68] sm:$0xff]
  %v301 = vld [vmem:[%s3 + $0x70] sm:$0xff]
  %v302 = vld [vmem:[%s3 + $0x78] sm:$0xff]
  %v303 = vld [vmem:[%s3 + $0x80] sm:$0xff]
  %v304 = vld [vmem:[%s3 + $0x88] sm:$0xff]
  %v305 = vld [vmem:[%s3 + $0x90] sm:$0xff]
  %v306 = vld [vmem:[%s3 + $0x98] sm:$0xff]
  %v307 = vld [vmem:[%s3 + $0xa0] sm:$0xff]
  %v308 = vld [vmem:[%s3 + $0xa8] sm:$0xff]
  %v309 = vld [vmem:[%s3 + $0xb0] sm:$0xff]
  %v310 = vld [vmem:[%s3 + $0xb8] sm:$0xff]
  %v311 = vld [vmem:[%s3 + $0xc0] sm:$0xff]
  %v312 = vld [vmem:[%s3 + $0xc8] sm:$0xff]
  %v313 = vld [vmem:[%s3 + $0xd0] sm:$0xff]
  %v314 = vld [vmem:[%s3 + $0xd8] sm:$0xff]
  %v315 = vld [vmem:[%s3 + $0xe0] sm:$0xff]
  %v316 = vld [vmem:[%s3 + $0xe8] sm:$0xff]
  %v317 = vld [vmem:[%s3 + $0xf0] sm:$0xff]
  %v318 = vld [vmem:[%s3 + $0xf8] sm:$0xff]
  %v319 = vld [vmem:[%s3 + $0x100] sm:$0xff]
  %v320 = vld [vmem:[%s3 + $0x108] sm:$0xff]
  %v321 = vld [vmem:[%s3 + $0x110] sm:$0xff]
  %v322 = vld [vmem:[%s3 + $0x118] sm:$0xff]
  %v323 = vld [vmem:[%s3 + $0x120] sm:$0xff]
  %v324 = vld [vmem:[%s3 + $0x128] sm:$0xff]
  %v325 = vld [vmem:[%s3 + $0x130] sm:$0xff]
  %v326 = vld [vmem:[%s3 + $0x138] sm:$0xff]
  %v327 = vld [vmem:[%s3 + $0x140] sm:$0xff]
  %v328 = vld [vmem:[%s3 + $0x148] sm:$0xff]
  %v329 = vld [vmem:[%s3 + $0x150] sm:$0xff]
  %v330 = vld [vmem:[%s3 + $0x158] sm:$0xff]
  %v331 = vld [vmem:[%s3 + $0x160] sm:$0xff]
  %v332 = vld [vmem:[%s3 + $0x168] sm:$0xff]
  %v333 = vld [vmem:[%s3 + $0x170] sm:$0xff]
  %v334 = vld [vmem:[%s3 + $0x178] sm:$0xff]
  %v335 = vld [vmem:[%s3 + $0x180] sm:$0xff]
  %v336 = vld [vmem:[%s3 + $0x188] sm:$0xff]
  %v337 = vld [vmem:[%s3 + $0x190] sm:$0xff]
  %v338 = vld [vmem:[%s3 + $0x198] sm:$0xff]
  %v339 = vld [vmem:[%s3 + $0x1a0] sm:$0xff]
  %v340 = vld [vmem:[%s3 + $0x1a8] sm:$0xff]
  %v341 = vld [vmem:[%s3 + $0x1b0] sm:$0xff]
  %v342 = vld [vmem:[%s3 + $0x1b8] sm:$0xff]
  %v343 = vld [vmem:[%s3 + $0x1c0] sm:$0xff]
  %v344 = vld [vmem:[%s3 + $0x1c8] sm:$0xff]
  %v345 = vld [vmem:[%s3 + $0x1d0] sm:$0xff]
  %v346 = vld [vmem:[%s3 + $0x1d8] sm:$0xff]
  %v347 = vld [vmem:[%s3 + $0x1e0] sm:$0xff]
  %v348 = vld [vmem:[%s3 + $0x1e8] sm:$0xff]
  %v349 = vld [vmem:[%s3 + $0x1f0] sm:$0xff]
  %v350 = vld [vmem:[%s3 + $0x1f8] sm:$0xff]
  %v351 = vadd.f32 %v223, %v287
  %v352 = vadd.f32 %v224, %v288
  %v353 = vadd.f32 %v225, %v289
  %v354 = vadd.f32 %v226, %v290
  %v355 = vadd.f32 %v227, %v291
  %v356 = vadd.f32 %v228, %v292
  %v357 = vadd.f32 %v229, %v293
  %v358 = vadd.f32 %v230, %v294
  %v359 = vadd.f32 %v231, %v295
  %v360 = vadd.f32 %v232, %v296
  %v361 = vadd.f32 %v233, %v297
  %v362 = vadd.f32 %v234, %v298
  %v363 = vadd.f32 %v235, %v299
  %v364 = vadd.f32 %v236, %v300
  %v365 = vadd.f32 %v237, %v301
  %v366 = vadd.f32 %v238, %v302
  %v367 = vadd.f32 %v239, %v303
  %v368 = vadd.f32 %v240, %v304
  %v369 = vadd.f32 %v241, %v305
  %v370 = vadd.f32 %v242, %v306
  %v371 = vadd.f32 %v243, %v307
  %v372 = vadd.f32 %v244, %v308
  %v373 = vadd.f32 %v245, %v309
  %v374 = vadd.f32 %v246, %v310
  %v375 = vadd.f32 %v247, %v311
  %v376 = vadd.f32 %v248, %v312
  %v377 = vadd.f32 %v249, %v313
  %v378 = vadd.f32 %v250, %v314
  %v379 = vadd.f32 %v251, %v315
  %v380 = vadd.f32 %v252, %v316
  %v381 = vadd.f32 %v253, %v317
  %v382 = vadd.f32 %v254, %v318
  %v383 = vadd.f32 %v255, %v319
  %v384 = vadd.f32 %v256, %v320
  %v385 = vadd.f32 %v257, %v321
  %v386 = vadd.f32 %v258, %v322
  %v387 = vadd.f32 %v259, %v323
  %v388 = vadd.f32 %v260, %v324
  %v389 = vadd.f32 %v261, %v325
  %v390 = vadd.f32 %v262, %v326
  %v391 = vadd.f32 %v263, %v327
  %v392 = vadd.f32 %v264, %v328
  %v393 = vadd.f32 %v265, %v329
  %v394 = vadd.f32 %v266, %v330
  %v395 = vadd.f32 %v267, %v331
  %v396 = vadd.f32 %v268, %v332
  %v397 = vadd.f32 %v269, %v333
  %v398 = vadd.f32 %v270, %v334
  %v399 = vadd.f32 %v271, %v335
  %v400 = vadd.f32 %v272, %v336
  %v401 = vadd.f32 %v273, %v337
  %v402 = vadd.f32 %v274, %v338
  %v403 = vadd.f32 %v275, %v339
  %v404 = vadd.f32 %v276, %v340
  %v405 = vadd.f32 %v277, %v341
  %v406 = vadd.f32 %v278, %v342
  %v407 = vadd.f32 %v279, %v343
  %v408 = vadd.f32 %v280, %v344
  %v409 = vadd.f32 %v281, %v345
  %v410 = vadd.f32 %v282, %v346
  %v411 = vadd.f32 %v283, %v347
  %v412 = vadd.f32 %v284, %v348
  %v413 = vadd.f32 %v285, %v349
  %v414 = vadd.f32 %v286, %v350
  %v415 = vmax.f32 %v351, 0.0
  %v416 = vmax.f32 %v352, 0.0
  %v417 = vmax.f32 %v353, 0.0
  %v418 = vmax.f32 %v354, 0.0
  %v419 = vmax.f32 %v355, 0.0
  %v420 = vmax.f32 %v356, 0.0
  %v421 = vmax.f32 %v357, 0.0
  %v422 = vmax.f32 %v358, 0.0
  %v423 = vmax.f32 %v359, 0.0
  %v424 = vmax.f32 %v360, 0.0
  %v425 = vmax.f32 %v361, 0.0
  %v426 = vmax.f32 %v362, 0.0
  %v427 = vmax.f32 %v363, 0.0
  %v428 = vmax.f32 %v364, 0.0
  %v429 = vmax.f32 %v365, 0.0
  %v430 = vmax.f32 %v366, 0.0
  %v431 = vmax.f32 %v367, 0.0
  %v432 = vmax.f32 %v368, 0.0
  %v433 = vmax.f32 %v369, 0.0
  %v434 = vmax.f32 %v370, 0.0
  %v435 = vmax.f32 %v371, 0.0
  %v436 = vmax.f32 %v372, 0.0
  %v437 = vmax.f32 %v373, 0.0
  %v438 = vmax.f32 %v374, 0.0
  %v439 = vmax.f32 %v375, 0.0
  %v440 = vmax.f32 %v376, 0.0
  %v441 = vmax.f32 %v377, 0.0
  %v442 = vmax.f32 %v378, 0.0
  %v443 = vmax.f32 %v379, 0.0
  %v444 = vmax.f32 %v380, 0.0
  %v445 = vmax.f32 %v381, 0.0
  %v446 = vmax.f32 %v382, 0.0
  %v447 = vmax.f32 %v383, 0.0
  %v448 = vmax.f32 %v384, 0.0
  %v449 = vmax.f32 %v385, 0.0
  %v450 = vmax.f32 %v386, 0.0
  %v451 = vmax.f32 %v387, 0.0
  %v452 = vmax.f32 %v388, 0.0
  %v453 = vmax.f32 %v389, 0.0
  %v454 = vmax.f32 %v390, 0.0
  %v455 = vmax.f32 %v391, 0.0
  %v456 = vmax.f32 %v392, 0.0
  %v457 = vmax.f32 %v393, 0.0
  %v458 = vmax.f32 %v394, 0.0
  %v459 = vmax.f32 %v395, 0.0
  %v460 = vmax.f32 %v396, 0.0
  %v461 = vmax.f32 %v397, 0.0
  %v462 = vmax.f32 %v398, 0.0
  %v463 = vmax.f32 %v399, 0.0
  %v464 = vmax.f32 %v400, 0.0
  %v465 = vmax.f32 %v401, 0.0
  %v466 = vmax.f32 %v402, 0.0
  %v467 = vmax.f32 %v403, 0.0
  %v468 = vmax.f32 %v404, 0.0
  %v469 = vmax.f32 %v405, 0.0
  %v470 = vmax.f32 %v406, 0.0
  %v471 = vmax.f32 %v407, 0.0
  %v472 = vmax.f32 %v408, 0.0
  %v473 = vmax.f32 %v409, 0.0
  %v474 = vmax.f32 %v410, 0.0
  %v475 = vmax.f32 %v411, 0.0
  %v476 = vmax.f32 %v412, 0.0
  %v477 = vmax.f32 %v413, 0.0
  %v478 = vmax.f32 %v414, 0.0
  %479 = vst [vmem:[%s4] sm:$0xff] %v415
  %480 = vst [vmem:[%s4 + $0x8] sm:$0xff] %v416
  %481 = vst [vmem:[%s4 + $0x10] sm:$0xff] %v417
  %482 = vst [vmem:[%s4 + $0x18] sm:$0xff] %v418
  %483 = vst [vmem:[%s4 + $0x20] sm:$0xff] %v419
  %484 = vst [vmem:[%s4 + $0x28] sm:$0xff] %v420
  %485 = vst [vmem:[%s4 + $0x30] sm:$0xff] %v421
  %486 = vst [vmem:[%s4 + $0x38] sm:$0xff] %v422
  %487 = vst [vmem:[%s4 + $0x40] sm:$0xff] %v423
  %488 = vst [vmem:[%s4 + $0x48] sm:$0xff] %v424
  %489 = vst [vmem:[%s4 + $0x50] sm:$0xff] %v425
  %490 = vst [vmem:[%s4 + $0x58] sm:$0xff] %v426
  %491 = vst [vmem:[%s4 + $0x60] sm:$0xff] %v427
  %492 = vst [vmem:[%s4 + $0x68] sm:$0xff] %v428
  %493 = vst [vmem:[%s4 + $0x70] sm:$0xff] %v429
  %494 = vst [vmem:[%s4 + $0x78] sm:$0xff] %v430
  %495 = vst [vmem:[%s4 + $0x80] sm:$0xff] %v431
  %496 = vst [vmem:[%s4 + $0x88] sm:$0xff] %v432
  %497 = vst [vmem:[%s4 + $0x90] sm:$0xff] %v433
  %498 = vst [vmem:[%s4 + $0x98] sm:$0xff] %v434
  %499 = vst [vmem:[%s4 + $0xa0] sm:$0xff] %v435
  %500 = vst [vmem:[%s4 + $0xa8] sm:$0xff] %v436
  %501 = vst [vmem:[%s4 + $0xb0] sm:$0xff] %v437
  %502 = vst [vmem:[%s4 + $0xb8] sm:$0xff] %v438
  %503 = vst [vmem:[%s4 + $0xc0] sm:$0xff] %v439
  %504 = vst [vmem:[%s4 + $0xc8] sm:$0xff] %v440
  %505 = vst [vmem:[%s4 + $0xd0] sm:$0xff] %v441
  %506 = vst [vmem:[%s4 + $0xd8] sm:$0xff] %v442
  %507 = vst [vmem:[%s4 + $0xe0] sm:$0xff] %v443
  %508 = vst [vmem:[%s4 + $0xe8] sm:$0xff] %v444
  %509 = vst [vmem:[%s4 + $0xf0] sm:$0xff] %v445
  %510 = vst [vmem:[%s4 + $0xf8] sm:$0xff] %v446
  %511 = vst [vmem:[%s4 + $0x100] sm:$0xff] %v447
  %512 = vst [vmem:[%s4 + $0x108] sm:$0xff] %v448
  %513 = vst [vmem:[%s4 + $0x110] sm:$0xff] %v449
  %514 = vst [vmem:[%s4 + $0x118] sm:$0xff] %v450
  %515 = vst [vmem:[%s4 + $0x120] sm:$0xff] %v451
  %516 = vst [vmem:[%s4 + $0x128] sm:$0xff] %v452
  %517 = vst [vmem:[%s4 + $0x130] sm:$0xff] %v453
  %518 = vst [vmem:[%s4 + $0x138] sm:$0xff] %v454
  %519 = vst [vmem:[%s4 + $0x140] sm:$0xff] %v455
  %520 = vst [vmem:[%s4 + $0x148] sm:$0xff] %v456
  %521 = vst [vmem:[%s4 + $0x150] sm:$0xff] %v457
  %522 = vst [vmem:[%s4 + $0x158] sm:$0xff] %v458
  %523 = vst [vmem:[%s4 + $0x160] sm:$0xff] %v459
  %524 = vst [vmem:[%s4 + $0x168] sm:$0xff] %v460
  %525 = vst [vmem:[%s4 + $0x170] sm:$0xff] %v461
  %526 = vst [vmem:[%s4 + $0x178] sm:$0xff] %v462
  %527 = vst [vmem:[%s4 + $0x180] sm:$0xff] %v463
  %528 = vst [vmem:[%s4 + $0x188] sm:$0xff] %v464
  %529 = vst [vmem:[%s4 + $0x190] sm:$0xff] %v465
  %530 = vst [vmem:[%s4 + $0x198] sm:$0xff] %v466
  %531 = vst [vmem:[%s4 + $0x1a0] sm:$0xff] %v467
  %532 = vst [vmem:[%s4 + $0x1a8] sm:$0xff] %v468
  %533 = vst [vmem:[%s4 + $0x1b0] sm:$0xff] %v469
  %534 = vst [vmem:[%s4 + $0x1b8] sm:$0xff] %v470
  %535 = vst [vmem:[%s4 + $0x1c0] sm:$0xff] %v471
  %536 = vst [vmem:[%s4 + $0x1c8] sm:$0xff] %v472
  %537 = vst [vmem:[%s4 + $0x1d0] sm:$0xff] %v473
  %538 = vst [vmem:[%s4 + $0x1d8] sm:$0xff] %v474
  %539 = vst [vmem:[%s4 + $0x1e0] sm:$0xff] %v475
  %540 = vst [vmem:[%s4 + $0x1e8] sm:$0xff] %v476
  %541 = vst [vmem:[%s4 + $0x1f0] sm:$0xff] %v477
  %542 = vst [vmem:[%s4 + $0x1f8] sm:$0xff] %v478
  // Predicated region
  $region18: #{bottleneck_forward.7} parent=0 // pred_check
    _
  $region19: #{bottleneck_forward.7} parent=0 // pred_check_branch
    %544 = sbr.rel (0) target = $region21
  $region20: #{bottleneck_forward.7} parent=0 // pred_region
    _
  $region21: #{bottleneck_forward.7} parent=0 // pred_fallthru
    _
  // Predicated region
  $region22: #{bottleneck_forward.7} parent=0 // pred_check
    _
  $region23: #{bottleneck_forward.7} parent=0 // pred_check_branch
    %546 = sbr.rel (0) target = $region25
  $region24: #{bottleneck_forward.7} parent=0 // pred_region
    _
  $region25: #{bottleneck_forward.7} parent=0 // pred_fallthru
    _

// kernel: bottleneck_forward.6
$region0: #{bottleneck_forward.6}
  #allocation0 [shape = 'u32[]', space=smem, size = 0x4, offset = 0x4, fixed_abs, tag = 'smem constant byte address 0x4 - core index']
  #allocation1 [shape = 'u32[144,128]{1,0:T(1,128)}', space=vmem, size = 0x12000, scoped, tag = 'internal scratch']
  %s0 = inlined_call_operand.vmem [shape: bf16[512,128], index: 0, kind: input, shape index: {}]
  %s1 = inlined_call_operand.vmem [shape: f32[1,128], index: 1, kind: input, shape index: {}]
  %s2 = inlined_call_operand.vmem [shape: f32[1,128], index: 2, kind: input, shape index: {}]
  %s3 = inlined_call_operand.vmem [shape: bf16[128,128], index: 3, kind: input, shape index: {}]
  %s4 = inlined_call_operand.vmem [shape: bf16[512,128], index: 4, kind: output, shape index: {0}]
  %s5 = inlined_call_operand.vmem [shape: f32[1,1,128], index: 5, kind: output, shape index: {1}]
  %s6 = inlined_call_operand.vmem [shape: f32[1,1,128], index: 6, kind: output, shape index: {2}]
  %7 = xla_tuple %s4, %s5, %s6
  %s8 = sld [smem:[#allocation0]]
  $region42: #{bottleneck_forward.6} parent=0
    _
  %s10 = ssub.s32 1, %s8
  %s11 = scalar_select 0, %s10, %s8
  // Predicated region
  $region2: #{bottleneck_forward.6} parent=0 // pred_check
    _
  $region3: #{bottleneck_forward.6} parent=0 // pred_check_branch
    %13 = sbr.rel (0) target = $region5
  $region4: #{bottleneck_forward.6} parent=0 // pred_region
    _
  $region5: #{bottleneck_forward.6} parent=0 // pred_fallthru
    _
  // Predicated region
  $region6: #{bottleneck_forward.6} parent=0 // pred_check
    _
  $region7: #{bottleneck_forward.6} parent=0 // pred_check_branch
    %15 = sbr.rel (0) target = $region9
  $region8: #{bottleneck_forward.6} parent=0 // pred_region
    _
  $region9: #{bottleneck_forward.6} parent=0 // pred_fallthru
    _
  // Predicated region
  $region10: #{bottleneck_forward.6} parent=0 // pred_check
    _
  $region11: #{bottleneck_forward.6} parent=0 // pred_check_branch
    %17 = sbr.rel (0) target = $region13
  $region12: #{bottleneck_forward.6} parent=0 // pred_region
    _
  $region13: #{bottleneck_forward.6} parent=0 // pred_fallthru
    _
  // Predicated region
  $region14: #{bottleneck_forward.6} parent=0 // pred_check
    _
  $region15: #{bottleneck_forward.6} parent=0 // pred_check_branch
    %19 = sbr.rel (0) target = $region17
  $region16: #{bottleneck_forward.6} parent=0 // pred_region
    _
  $region17: #{bottleneck_forward.6} parent=0 // pred_fallthru
    _
  %v21 = vld [vmem:[%s0] sm:$0xf]
  %v22 = vld [vmem:[%s0 + $0x4] sm:$0xf]
  %v23 = vld [vmem:[%s0 + $0x8] sm:$0xf]
  %v24 = vld [vmem:[%s0 + $0xc] sm:$0xf]
  %v25 = vld [vmem:[%s0 + $0x10] sm:$0xf]
  %v26 = vld [vmem:[%s0 + $0x14] sm:$0xf]
  %v27 = vld [vmem:[%s0 + $0x18] sm:$0xf]
  %v28 = vld [vmem:[%s0 + $0x1c] sm:$0xf]
  %v29 = vld [vmem:[%s0 + $0x20] sm:$0xf]
  %v30 = vld [vmem:[%s0 + $0x24] sm:$0xf]
  %v31 = vld [vmem:[%s0 + $0x28] sm:$0xf]
  %v32 = vld [vmem:[%s0 + $0x2c] sm:$0xf]
  %v33 = vld [vmem:[%s0 + $0x30] sm:$0xf]
  %v34 = vld [vmem:[%s0 + $0x34] sm:$0xf]
  %v35 = vld [vmem:[%s0 + $0x38] sm:$0xf]
  %v36 = vld [vmem:[%s0 + $0x3c] sm:$0xf]
  %v37 = vld [vmem:[%s0 + $0x40] sm:$0xf]
  %v38 = vld [vmem:[%s0 + $0x44] sm:$0xf]
  %v39 = vld [vmem:[%s0 + $0x48] sm:$0xf]
  %v40 = vld [vmem:[%s0 + $0x4c] sm:$0xf]
  %v41 = vld [vmem:[%s0 + $0x50] sm:$0xf]
  %v42 = vld [vmem:[%s0 + $0x54] sm:$0xf]
  %v43 = vld [vmem:[%s0 + $0x58] sm:$0xf]
  %v44 = vld [vmem:[%s0 + $0x5c] sm:$0xf]
  %v45 = vld [vmem:[%s0 + $0x60] sm:$0xf]
  %v46 = vld [vmem:[%s0 + $0x64] sm:$0xf]
  %v47 = vld [vmem:[%s0 + $0x68] sm:$0xf]
  %v48 = vld [vmem:[%s0 + $0x6c] sm:$0xf]
  %v49 = vld [vmem:[%s0 + $0x70] sm:$0xf]
  %v50 = vld [vmem:[%s0 + $0x74] sm:$0xf]
  %v51 = vld [vmem:[%s0 + $0x78] sm:$0xf]
  %v52 = vld [vmem:[%s0 + $0x7c] sm:$0xf]
  %v53 = vld [vmem:[%s0 + $0x80] sm:$0xf]
  %v54 = vld [vmem:[%s0 + $0x84] sm:$0xf]
  %v55 = vld [vmem:[%s0 + $0x88] sm:$0xf]
  %v56 = vld [vmem:[%s0 + $0x8c] sm:$0xf]
  %v57 = vld [vmem:[%s0 + $0x90] sm:$0xf]
  %v58 = vld [vmem:[%s0 + $0x94] sm:$0xf]
  %v59 = vld [vmem:[%s0 + $0x98] sm:$0xf]
  %v60 = vld [vmem:[%s0 + $0x9c] sm:$0xf]
  %v61 = vld [vmem:[%s0 + $0xa0] sm:$0xf]
  %v62 = vld [vmem:[%s0 + $0xa4] sm:$0xf]
  %v63 = vld [vmem:[%s0 + $0xa8] sm:$0xf]
  %v64 = vld [vmem:[%s0 + $0xac] sm:$0xf]
  %v65 = vld [vmem:[%s0 + $0xb0] sm:$0xf]
  %v66 = vld [vmem:[%s0 + $0xb4] sm:$0xf]
  %v67 = vld [vmem:[%s0 + $0xb8] sm:$0xf]
  %v68 = vld [vmem:[%s0 + $0xbc] sm:$0xf]
  %v69 = vld [vmem:[%s0 + $0xc0] sm:$0xf]
  %v70 = vld [vmem:[%s0 + $0xc4] sm:$0xf]
  %v71 = vld [vmem:[%s0 + $0xc8] sm:$0xf]
  %v72 = vld [vmem:[%s0 + $0xcc] sm:$0xf]
  %v73 = vld [vmem:[%s0 + $0xd0] sm:$0xf]
  %v74 = vld [vmem:[%s0 + $0xd4] sm:$0xf]
  %v75 = vld [vmem:[%s0 + $0xd8] sm:$0xf]
  %v76 = vld [vmem:[%s0 + $0xdc] sm:$0xf]
  %v77 = vld [vmem:[%s0 + $0xe0] sm:$0xf]
  %v78 = vld [vmem:[%s0 + $0xe4] sm:$0xf]
  %v79 = vld [vmem:[%s0 + $0xe8] sm:$0xf]
  %v80 = vld [vmem:[%s0 + $0xec] sm:$0xf]
  %v81 = vld [vmem:[%s0 + $0xf0] sm:$0xf]
  %v82 = vld [vmem:[%s0 + $0xf4] sm:$0xf]
  %v83 = vld [vmem:[%s0 + $0xf8] sm:$0xf]
  %v84 = vld [vmem:[%s0 + $0xfc] sm:$0xf]
  %v85 = vunpack.c.l.bf16 %v21
  %v86 = vunpack.c.l.bf16 %v22
  %v87 = vunpack.c.l.bf16 %v23
  %v88 = vunpack.c.l.bf16 %v24
  %v89 = vunpack.c.l.bf16 %v25
  %v90 = vunpack.c.l.bf16 %v26
  %v91 = vunpack.c.l.bf16 %v27
  %v92 = vunpack.c.l.bf16 %v28
  %v93 = vunpack.c.l.bf16 %v29
  %v94 = vunpack.c.l.bf16 %v30
  %v95 = vunpack.c.l.bf16 %v31
  %v96 = vunpack.c.l.bf16 %v32
  %v97 = vunpack.c.l.bf16 %v33
  %v98 = vunpack.c.l.bf16 %v34
  %v99 = vunpack.c.l.bf16 %v35
  %v100 = vunpack.c.l.bf16 %v36
  %v101 = vunpack.c.l.bf16 %v37
  %v102 = vunpack.c.l.bf16 %v38
  %v103 = vunpack.c.l.bf16 %v39
  %v104 = vunpack.c.l.bf16 %v40
  %v105 = vunpack.c.l.bf16 %v41
  %v106 = vunpack.c.l.bf16 %v42
  %v107 = vunpack.c.l.bf16 %v43
  %v108 = vunpack.c.l.bf16 %v44
  %v109 = vunpack.c.l.bf16 %v45
  %v110 = vunpack.c.l.bf16 %v46
  %v111 = vunpack.c.l.bf16 %v47
  %v112 = vunpack.c.l.bf16 %v48
  %v113 = vunpack.c.l.bf16 %v49
  %v114 = vunpack.c.l.bf16 %v50
  %v115 = vunpack.c.l.bf16 %v51
  %v116 = vunpack.c.l.bf16 %v52
  %v117 = vunpack.c.l.bf16 %v53
  %v118 = vunpack.c.l.bf16 %v54
  %v119 = vunpack.c.l.bf16 %v55
  %v120 = vunpack.c.l.bf16 %v56
  %v121 = vunpack.c.l.bf16 %v57
  %v122 = vunpack.c.l.bf16 %v58
  %v123 = vunpack.c.l.bf16 %v59
  %v124 = vunpack.c.l.bf16 %v60
  %v125 = vunpack.c.l.bf16 %v61
  %v126 = vunpack.c.l.bf16 %v62
  %v127 = vunpack.c.l.bf16 %v63
  %v128 = vunpack.c.l.bf16 %v64
  %v129 = vunpack.c.l.bf16 %v65
  %v130 = vunpack.c.l.bf16 %v66
  %v131 = vunpack.c.l.bf16 %v67
  %v132 = vunpack.c.l.bf16 %v68
  %v133 = vunpack.c.l.bf16 %v69
  %v134 = vunpack.c.l.bf16 %v70
  %v135 = vunpack.c.l.bf16 %v71
  %v136 = vunpack.c.l.bf16 %v72
  %v137 = vunpack.c.l.bf16 %v73
  %v138 = vunpack.c.l.bf16 %v74
  %v139 = vunpack.c.l.bf16 %v75
  %v140 = vunpack.c.l.bf16 %v76
  %v141 = vunpack.c.l.bf16 %v77
  %v142 = vunpack.c.l.bf16 %v78
  %v143 = vunpack.c.l.bf16 %v79
  %v144 = vunpack.c.l.bf16 %v80
  %v145 = vunpack.c.l.bf16 %v81
  %v146 = vunpack.c.l.bf16 %v82
  %v147 = vunpack.c.l.bf16 %v83
  %v148 = vunpack.c.l.bf16 %v84
  %v149 = vld [vmem:[%s1] sm:$0x1]
  %v151 = vlaneseq
  %v152 = vshrl.u32 %v151, 7
  %v153 = vsub.s32 0, %v152
  %v154 = vrot.slane %v149, %v153
  %v156 = vmul.f32 %v85, %v154
  %v157 = vmul.f32 %v86, %v154
  %v158 = vmul.f32 %v87, %v154
  %v159 = vmul.f32 %v88, %v154
  %v160 = vmul.f32 %v89, %v154
  %v161 = vmul.f32 %v90, %v154
  %v162 = vmul.f32 %v91, %v154
  %v163 = vmul.f32 %v92, %v154
  %v164 = vmul.f32 %v93, %v154
  %v165 = vmul.f32 %v94, %v154
  %v166 = vmul.f32 %v95, %v154
  %v167 = vmul.f32 %v96, %v154
  %v168 = vmul.f32 %v97, %v154
  %v169 = vmul.f32 %v98, %v154
  %v170 = vmul.f32 %v99, %v154
  %v171 = vmul.f32 %v100, %v154
  %v172 = vmul.f32 %v101, %v154
  %v173 = vmul.f32 %v102, %v154
  %v174 = vmul.f32 %v103, %v154
  %v175 = vmul.f32 %v104, %v154
  %v176 = vmul.f32 %v105, %v154
  %v177 = vmul.f32 %v106, %v154
  %v178 = vmul.f32 %v107, %v154
  %v179 = vmul.f32 %v108, %v154
  %v180 = vmul.f32 %v109, %v154
  %v181 = vmul.f32 %v110, %v154
  %v182 = vmul.f32 %v111, %v154
  %v183 = vmul.f32 %v112, %v154
  %v184 = vmul.f32 %v113, %v154
  %v185 = vmul.f32 %v114, %v154
  %v186 = vmul.f32 %v115, %v154
  %v187 = vmul.f32 %v116, %v154
  %v188 = vmul.f32 %v117, %v154
  %v189 = vmul.f32 %v118, %v154
  %v190 = vmul.f32 %v119, %v154
  %v191 = vmul.f32 %v120, %v154
  %v192 = vmul.f32 %v121, %v154
  %v193 = vmul.f32 %v122, %v154
  %v194 = vmul.f32 %v123, %v154
  %v195 = vmul.f32 %v124, %v154
  %v196 = vmul.f32 %v125, %v154
  %v197 = vmul.f32 %v126, %v154
  %v198 = vmul.f32 %v127, %v154
  %v199 = vmul.f32 %v128, %v154
  %v200 = vmul.f32 %v129, %v154
  %v201 = vmul.f32 %v130, %v154
  %v202 = vmul.f32 %v131, %v154
  %v203 = vmul.f32 %v132, %v154
  %v204 = vmul.f32 %v133, %v154
  %v205 = vmul.f32 %v134, %v154
  %v206 = vmul.f32 %v135, %v154
  %v207 = vmul.f32 %v136, %v154
  %v208 = vmul.f32 %v137, %v154
  %v209 = vmul.f32 %v138, %v154
  %v210 = vmul.f32 %v139, %v154
  %v211 = vmul.f32 %v140, %v154
  %v212 = vmul.f32 %v141, %v154
  %v213 = vmul.f32 %v142, %v154
  %v214 = vmul.f32 %v143, %v154
  %v215 = vmul.f32 %v144, %v154
  %v216 = vmul.f32 %v145, %v154
  %v217 = vmul.f32 %v146, %v154
  %v218 = vmul.f32 %v147, %v154
  %v219 = vmul.f32 %v148, %v154
  %v220 = vld [vmem:[%s2] sm:$0x1]
  %v222 = vlaneseq
  %v223 = vshrl.u32 %v222, 7
  %v224 = vsub.s32 0, %v223
  %v225 = vrot.slane %v220, %v224
  %v227 = vadd.f32 %v156, %v225
  %v228 = vadd.f32 %v157, %v225
  %v229 = vadd.f32 %v158, %v225
  %v230 = vadd.f32 %v159, %v225
  %v231 = vadd.f32 %v160, %v225
  %v232 = vadd.f32 %v161, %v225
  %v233 = vadd.f32 %v162, %v225
  %v234 = vadd.f32 %v163, %v225
  %v235 = vadd.f32 %v164, %v225
  %v236 = vadd.f32 %v165, %v225
  %v237 = vadd.f32 %v166, %v225
  %v238 = vadd.f32 %v167, %v225
  %v239 = vadd.f32 %v168, %v225
  %v240 = vadd.f32 %v169, %v225
  %v241 = vadd.f32 %v170, %v225
  %v242 = vadd.f32 %v171, %v225
  %v243 = vadd.f32 %v172, %v225
  %v244 = vadd.f32 %v173, %v225
  %v245 = vadd.f32 %v174, %v225
  %v246 = vadd.f32 %v175, %v225
  %v247 = vadd.f32 %v176, %v225
  %v248 = vadd.f32 %v177, %v225
  %v249 = vadd.f32 %v178, %v225
  %v250 = vadd.f32 %v179, %v225
  %v251 = vadd.f32 %v180, %v225
  %v252 = vadd.f32 %v181, %v225
  %v253 = vadd.f32 %v182, %v225
  %v254 = vadd.f32 %v183, %v225
  %v255 = vadd.f32 %v184, %v225
  %v256 = vadd.f32 %v185, %v225
  %v257 = vadd.f32 %v186, %v225
  %v258 = vadd.f32 %v187, %v225
  %v259 = vadd.f32 %v188, %v225
  %v260 = vadd.f32 %v189, %v225
  %v261 = vadd.f32 %v190, %v225
  %v262 = vadd.f32 %v191, %v225
  %v263 = vadd.f32 %v192, %v225
  %v264 = vadd.f32 %v193, %v225
  %v265 = vadd.f32 %v194, %v225
  %v266 = vadd.f32 %v195, %v225
  %v267 = vadd.f32 %v196, %v225
  %v268 = vadd.f32 %v197, %v225
  %v269 = vadd.f32 %v198, %v225
  %v270 = vadd.f32 %v199, %v225
  %v271 = vadd.f32 %v200, %v225
  %v272 = vadd.f32 %v201, %v225
  %v273 = vadd.f32 %v202, %v225
  %v274 = vadd.f32 %v203, %v225
  %v275 = vadd.f32 %v204, %v225
  %v276 = vadd.f32 %v205, %v225
  %v277 = vadd.f32 %v206, %v225
  %v278 = vadd.f32 %v207, %v225
  %v279 = vadd.f32 %v208, %v225
  %v280 = vadd.f32 %v209, %v225
  %v281 = vadd.f32 %v210, %v225
  %v282 = vadd.f32 %v211, %v225
  %v283 = vadd.f32 %v212, %v225
  %v284 = vadd.f32 %v213, %v225
  %v285 = vadd.f32 %v214, %v225
  %v286 = vadd.f32 %v215, %v225
  %v287 = vadd.f32 %v216, %v225
  %v288 = vadd.f32 %v217, %v225
  %v289 = vadd.f32 %v218, %v225
  %v290 = vadd.f32 %v219, %v225
  %v291 = vmax.f32 %v227, 0.0
  %v292 = vmax.f32 %v228, 0.0
  %v293 = vmax.f32 %v229, 0.0
  %v294 = vmax.f32 %v230, 0.0
  %v295 = vmax.f32 %v231, 0.0
  %v296 = vmax.f32 %v232, 0.0
  %v297 = vmax.f32 %v233, 0.0
  %v298 = vmax.f32 %v234, 0.0
  %v299 = vmax.f32 %v235, 0.0
  %v300 = vmax.f32 %v236, 0.0
  %v301 = vmax.f32 %v237, 0.0
  %v302 = vmax.f32 %v238, 0.0
  %v303 = vmax.f32 %v239, 0.0
  %v304 = vmax.f32 %v240, 0.0
  %v305 = vmax.f32 %v241, 0.0
  %v306 = vmax.f32 %v242, 0.0
  %v307 = vmax.f32 %v243, 0.0
  %v308 = vmax.f32 %v244, 0.0
  %v309 = vmax.f32 %v245, 0.0
  %v310 = vmax.f32 %v246, 0.0
  %v311 = vmax.f32 %v247, 0.0
  %v312 = vmax.f32 %v248, 0.0
  %v313 = vmax.f32 %v249, 0.0
  %v314 = vmax.f32 %v250, 0.0
  %v315 = vmax.f32 %v251, 0.0
  %v316 = vmax.f32 %v252, 0.0
  %v317 = vmax.f32 %v253, 0.0
  %v318 = vmax.f32 %v254, 0.0
  %v319 = vmax.f32 %v255, 0.0
  %v320 = vmax.f32 %v256, 0.0
  %v321 = vmax.f32 %v257, 0.0
  %v322 = vmax.f32 %v258, 0.0
  %v323 = vmax.f32 %v259, 0.0
  %v324 = vmax.f32 %v260, 0.0
  %v325 = vmax.f32 %v261, 0.0
  %v326 = vmax.f32 %v262, 0.0
  %v327 = vmax.f32 %v263, 0.0
  %v328 = vmax.f32 %v264, 0.0
  %v329 = vmax.f32 %v265, 0.0
  %v330 = vmax.f32 %v266, 0.0
  %v331 = vmax.f32 %v267, 0.0
  %v332 = vmax.f32 %v268, 0.0
  %v333 = vmax.f32 %v269, 0.0
  %v334 = vmax.f32 %v270, 0.0
  %v335 = vmax.f32 %v271, 0.0
  %v336 = vmax.f32 %v272, 0.0
  %v337 = vmax.f32 %v273, 0.0
  %v338 = vmax.f32 %v274, 0.0
  %v339 = vmax.f32 %v275, 0.0
  %v340 = vmax.f32 %v276, 0.0
  %v341 = vmax.f32 %v277, 0.0
  %v342 = vmax.f32 %v278, 0.0
  %v343 = vmax.f32 %v279, 0.0
  %v344 = vmax.f32 %v280, 0.0
  %v345 = vmax.f32 %v281, 0.0
  %v346 = vmax.f32 %v282, 0.0
  %v347 = vmax.f32 %v283, 0.0
  %v348 = vmax.f32 %v284, 0.0
  %v349 = vmax.f32 %v285, 0.0
  %v350 = vmax.f32 %v286, 0.0
  %v351 = vmax.f32 %v287, 0.0
  %v352 = vmax.f32 %v288, 0.0
  %v353 = vmax.f32 %v289, 0.0
  %v354 = vmax.f32 %v290, 0.0
  %v355 = vpack.c.bf16 %v292, %v291
  %v356 = vpack.c.bf16 %v294, %v293
  %v357 = vpack.c.bf16 %v296, %v295
  %v358 = vpack.c.bf16 %v298, %v297
  %v359 = vpack.c.bf16 %v300, %v299
  %v360 = vpack.c.bf16 %v302, %v301
  %v361 = vpack.c.bf16 %v304, %v303
  %v362 = vpack.c.bf16 %v306, %v305
  %v363 = vpack.c.bf16 %v308, %v307
  %v364 = vpack.c.bf16 %v310, %v309
  %v365 = vpack.c.bf16 %v312, %v311
  %v366 = vpack.c.bf16 %v314, %v313
  %v367 = vpack.c.bf16 %v316, %v315
  %v368 = vpack.c.bf16 %v318, %v317
  %v369 = vpack.c.bf16 %v320, %v319
  %v370 = vpack.c.bf16 %v322, %v321
  %v371 = vpack.c.bf16 %v324, %v323
  %v372 = vpack.c.bf16 %v326, %v325
  %v373 = vpack.c.bf16 %v328, %v327
  %v374 = vpack.c.bf16 %v330, %v329
  %v375 = vpack.c.bf16 %v332, %v331
  %v376 = vpack.c.bf16 %v334, %v333
  %v377 = vpack.c.bf16 %v336, %v335
  %v378 = vpack.c.bf16 %v338, %v337
  %v379 = vpack.c.bf16 %v340, %v339
  %v380 = vpack.c.bf16 %v342, %v341
  %v381 = vpack.c.bf16 %v344, %v343
  %v382 = vpack.c.bf16 %v346, %v345
  %v383 = vpack.c.bf16 %v348, %v347
  %v384 = vpack.c.bf16 %v350, %v349
  %v385 = vpack.c.bf16 %v352, %v351
  %v386 = vpack.c.bf16 %v354, %v353
  %v387 = vld [vmem:[%s3] sm:$0xf]
  %v388 = vld [vmem:[%s3 + $0x4] sm:$0xf]
  %v389 = vld [vmem:[%s3 + $0x8] sm:$0xf]
  %v390 = vld [vmem:[%s3 + $0xc] sm:$0xf]
  %v391 = vld [vmem:[%s3 + $0x10] sm:$0xf]
  %v392 = vld [vmem:[%s3 + $0x14] sm:$0xf]
  %v393 = vld [vmem:[%s3 + $0x18] sm:$0xf]
  %v394 = vld [vmem:[%s3 + $0x1c] sm:$0xf]
  %v395 = vld [vmem:[%s3 + $0x20] sm:$0xf]
  %v396 = vld [vmem:[%s3 + $0x24] sm:$0xf]
  %v397 = vld [vmem:[%s3 + $0x28] sm:$0xf]
  %v398 = vld [vmem:[%s3 + $0x2c] sm:$0xf]
  %v399 = vld [vmem:[%s3 + $0x30] sm:$0xf]
  %v400 = vld [vmem:[%s3 + $0x34] sm:$0xf]
  %v401 = vld [vmem:[%s3 + $0x38] sm:$0xf]
  %v402 = vld [vmem:[%s3 + $0x3c] sm:$0xf]
  %v419 = vunpack.c.l.b16 %v387
  %v420 = vunpack.c.l.b16 %v388
  %v421 = vunpack.c.l.b16 %v389
  %v422 = vunpack.c.l.b16 %v390
  %v423 = vunpack.c.l.b16 %v391
  %v424 = vunpack.c.l.b16 %v392
  %v425 = vunpack.c.l.b16 %v393
  %v426 = vunpack.c.l.b16 %v394
  %v427 = vunpack.c.l.b16 %v395
  %v428 = vunpack.c.l.b16 %v396
  %v429 = vunpack.c.l.b16 %v397
  %v430 = vunpack.c.l.b16 %v398
  %v431 = vunpack.c.l.b16 %v399
  %v432 = vunpack.c.l.b16 %v400
  %v433 = vunpack.c.l.b16 %v401
  %v434 = vunpack.c.l.b16 %v402
  %v435 = vpack.c.b16 %v420, %v419
  %v436 = vpack.c.b16 %v422, %v421
  %v437 = vpack.c.b16 %v424, %v423
  %v438 = vpack.c.b16 %v426, %v425
  %v439 = vpack.c.b16 %v428, %v427
  %v440 = vpack.c.b16 %v430, %v429
  %v441 = vpack.c.b16 %v432, %v431
  %v442 = vpack.c.b16 %v434, %v433
  %451 = vmatprep.subr.bf16.mxu0 0
  %452 = vmatpush1.bf16.msra.mxu0 %v435
  %453 = vmatprep.subr.bf16.mxu0 0
  %454 = vmatpush1.bf16.msra.mxu0 %v436
  %455 = vmatprep.subr.bf16.mxu0 0
  %456 = vmatpush1.bf16.msra.mxu0 %v437
  %457 = vmatprep.subr.bf16.mxu0 0
  %458 = vmatpush1.bf16.msra.mxu0 %v438
  %459 = vmatprep.subr.bf16.mxu0 0
  %460 = vmatpush1.bf16.msra.mxu0 %v439
  %461 = vmatprep.subr.bf16.mxu0 0
  %462 = vmatpush1.bf16.msra.mxu0 %v440
  %463 = vmatprep.subr.bf16.mxu0 0
  %464 = vmatpush1.bf16.msra.mxu0 %v441
  %465 = vmatprep.subr.bf16.mxu0 0
  %466 = vmatpush1.bf16.msra.mxu0 %v442
  %467 = vmatprep.subr.bf16.mxu0 0
  %468 = vmatpush1.bf16.msra.mxu0 0
  %469 = vmatprep.subr.bf16.mxu0 0
  %470 = vmatpush1.bf16.msra.mxu0 0
  %471 = vmatprep.subr.bf16.mxu0 0
  %472 = vmatpush1.bf16.msra.mxu0 0
  %473 = vmatprep.subr.bf16.mxu0 0
  %474 = vmatpush1.bf16.msra.mxu0 0
  %475 = vmatprep.subr.bf16.mxu0 0
  %476 = vmatpush1.bf16.msra.mxu0 0
  %477 = vmatprep.subr.bf16.mxu0 0
  %478 = vmatpush1.bf16.msra.mxu0 0
  %479 = vmatprep.subr.bf16.mxu0 0
  %480 = vmatpush1.bf16.msra.mxu0 0
  %481 = vmatprep.subr.bf16.mxu0 0
  %482 = vmatpush1.bf16.msra.mxu0 0
  %483 = vmatprep.mubr.bf16.mxu0 0
  %484 = vmatmul.mubr.bf16.gmra.mrb[0].mxu0 %v355
  %v485 = vpop.f32.mrb[0].mxu0
  %v486 = vadd.f32 0.0, %v485
  %v487 = vpop.f32.mrb[0].mxu0
  %v488 = vpop.f32.mrb[0].mxu0
  %v489 = vadd.f32 0.0, %v488
  %v490 = vpop.f32.mrb[0].mxu0
  %491 = vmatprep.mubr.bf16.mxu0 0
  %492 = vmatmul.mubr.bf16.gmra.mrb[0].mxu0 %v356
  %v493 = vpop.f32.mrb[0].mxu0
  %v494 = vadd.f32 0.0, %v493
  %v495 = vpop.f32.mrb[0].mxu0
  %v496 = vpop.f32.mrb[0].mxu0
  %v497 = vadd.f32 0.0, %v496
  %v498 = vpop.f32.mrb[0].mxu0
  %499 = vmatprep.mubr.bf16.mxu0 0
  %500 = vmatmul.mubr.bf16.gmra.mrb[0].mxu0 %v357
  %v501 = vpop.f32.mrb[0].mxu0
  %v502 = vadd.f32 0.0, %v501
  %v503 = vpop.f32.mrb[0].mxu0
  %v504 = vpop.f32.mrb[0].mxu0
  %v505 = vadd.f32 0.0, %v504
  %v506 = vpop.f32.mrb[0].mxu0
  %507 = vmatprep.mubr.bf16.mxu0 0
  %508 = vmatmul.mubr.bf16.gmra.mrb[0].mxu0 %v358
  %v509 = vpop.f32.mrb[0].mxu0
  %v510 = vadd.f32 0.0, %v509
  %v511 = vpop.f32.mrb[0].mxu0
  %v512 = vpop.f32.mrb[0].mxu0
  %v513 = vadd.f32 0.0, %v512
  %v514 = vpop.f32.mrb[0].mxu0
  %515 = vmatprep.mubr.bf16.mxu0 0
  %516 = vmatmul.mubr.bf16.gmra.mrb[0].mxu0 %v359
  %v517 = vpop.f32.mrb[0].mxu0
  %v518 = vadd.f32 0.0, %v517
  %v519 = vpop.f32.mrb[0].mxu0
  %v520 = vpop.f32.mrb[0].mxu0
  %v521 = vadd.f32 0.0, %v520
  %v522 = vpop.f32.mrb[0].mxu0
  %523 = vmatprep.mubr.bf16.mxu0 0
  %524 = vmatmul.mubr.bf16.gmra.mrb[0].mxu0 %v360
  %v525 = vpop.f32.mrb[0].mxu0
  %v526 = vadd.f32 0.0, %v525
  %v527 = vpop.f32.mrb[0].mxu0
  %v528 = vpop.f32.mrb[0].mxu0
  %v529 = vadd.f32 0.0, %v528
  %v530 = vpop.f32.mrb[0].mxu0
  %531 = vmatprep.mubr.bf16.mxu0 0
  %532 = vmatmul.mubr.bf16.gmra.mrb[0].mxu0 %v361
  %v533 = vpop.f32.mrb[0].mxu0
  %v534 = vadd.f32 0.0, %v533
  %v535 = vpop.f32.mrb[0].mxu0
  %v536 = vpop.f32.mrb[0].mxu0
  %v537 = vadd.f32 0.0, %v536
  %v538 = vpop.f32.mrb[0].mxu0
  %539 = vmatprep.mubr.bf16.mxu0 0
  %540 = vmatmul.mubr.bf16.gmra.mrb[0].mxu0 %v362
  %v541 = vpop.f32.mrb[0].mxu0
  %v542 = vadd.f32 0.0, %v541
  %v543 = vpop.f32.mrb[0].mxu0
  %v544 = vpop.f32.mrb[0].mxu0
  %v545 = vadd.f32 0.0, %v544
  %v546 = vpop.f32.mrb[0].mxu0
  %547 = vmatprep.mubr.bf16.mxu0 0
  %548 = vmatmul.mubr.bf16.gmra.mrb[0].mxu0 %v363
  %v549 = vpop.f32.mrb[0].mxu0
  %v550 = vadd.f32 0.0, %v549
  %v551 = vpop.f32.mrb[0].mxu0
  %v552 = vpop.f32.mrb[0].mxu0
  %v553 = vadd.f32 0.0, %v552
  %v554 = vpop.f32.mrb[0].mxu0
  %555 = vmatprep.mubr.bf16.mxu0 0
  %556 = vmatmul.mubr.bf16.gmra.mrb[0].mxu0 %v364
  %v557 = vpop.f32.mrb[0].mxu0
  %v558 = vadd.f32 0.0, %v557
  %v559 = vpop.f32.mrb[0].mxu0
  %v560 = vpop.f32.mrb[0].mxu0
  %v561 = vadd.f32 0.0, %v560
  %v562 = vpop.f32.mrb[0].mxu0
  %563 = vmatprep.mubr.bf16.mxu0 0
  %564 = vmatmul.mubr.bf16.gmra.mrb[0].mxu0 %v365
  %v565 = vpop.f32.mrb[0].mxu0
  %v566 = vadd.f32 0.0, %v565
  %v567 = vpop.f32.mrb[0].mxu0
  %v568 = vpop.f32.mrb[0].mxu0
  %v569 = vadd.f32 0.0, %v568
  %v570 = vpop.f32.mrb[0].mxu0
  %571 = vmatprep.mubr.bf16.mxu0 0
  %572 = vmatmul.mubr.bf16.gmra.mrb[0].mxu0 %v366
  %v573 = vpop.f32.mrb[0].mxu0
  %v574 = vadd.f32 0.0, %v573
  %v575 = vpop.f32.mrb[0].mxu0
  %v576 = vpop.f32.mrb[0].mxu0
  %v577 = vadd.f32 0.0, %v576
  %v578 = vpop.f32.mrb[0].mxu0
  %579 = vmatprep.mubr.bf16.mxu0 0
  %580 = vmatmul.mubr.bf16.gmra.mrb[0].mxu0 %v367
  %v581 = vpop.f32.mrb[0].mxu0
  %v582 = vadd.f32 0.0, %v581
  %v583 = vpop.f32.mrb[0].mxu0
  %v584 = vpop.f32.mrb[0].mxu0
  %v585 = vadd.f32 0.0, %v584
  %v586 = vpop.f32.mrb[0].mxu0
  %587 = vmatprep.mubr.bf16.mxu0 0
  %588 = vmatmul.mubr.bf16.gmra.mrb[0].mxu0 %v368
  %v589 = vpop.f32.mrb[0].mxu0
  %v590 = vadd.f32 0.0, %v589
  %v591 = vpop.f32.mrb[0].mxu0
  %v592 = vpop.f32.mrb[0].mxu0
  %v593 = vadd.f32 0.0, %v592
  %v594 = vpop.f32.mrb[0].mxu0
  %595 = vmatprep.mubr.bf16.mxu0 0
  %596 = vmatmul.mubr.bf16.gmra.mrb[0].mxu0 %v369
  %v597 = vpop.f32.mrb[0].mxu0
  %v598 = vadd.f32 0.0, %v597
  %v599 = vpop.f32.mrb[0].mxu0
  %v600 = vpop.f32.mrb[0].mxu0
  %v601 = vadd.f32 0.0, %v600
  %v602 = vpop.f32.mrb[0].mxu0
  %603 = vmatprep.mubr.bf16.mxu0 0
  %604 = vmatmul.mubr.bf16.gmra.mrb[0].mxu0 %v370
  %v605 = vpop.f32.mrb[0].mxu0
  %v606 = vadd.f32 0.0, %v605
  %v607 = vpop.f32.mrb[0].mxu0
  %v608 = vpop.f32.mrb[0].mxu0
  %v609 = vadd.f32 0.0, %v608
  %v610 = vpop.f32.mrb[0].mxu0
  %611 = vmatprep.mubr.bf16.mxu0 0
  %612 = vmatmul.mubr.bf16.gmra.mrb[0].mxu0 %v371
  %v613 = vpop.f32.mrb[0].mxu0
  %v614 = vadd.f32 0.0, %v613
  %v615 = vpop.f32.mrb[0].mxu0
  %v616 = vpop.f32.mrb[0].mxu0
  %v617 = vadd.f32 0.0, %v616
  %v618 = vpop.f32.mrb[0].mxu0
  %619 = vmatprep.mubr.bf16.mxu0 0
  %620 = vmatmul.mubr.bf16.gmra.mrb[0].mxu0 %v372
  %v621 = vpop.f32.mrb[0].mxu0
  %v622 = vadd.f32 0.0, %v621
  %v623 = vpop.f32.mrb[0].mxu0
  %v624 = vpop.f32.mrb[0].mxu0
  %v625 = vadd.f32 0.0, %v624
  %v626 = vpop.f32.mrb[0].mxu0
  %627 = vmatprep.mubr.bf16.mxu0 0
  %628 = vmatmul.mubr.bf16.gmra.mrb[0].mxu0 %v373
  %v629 = vpop.f32.mrb[0].mxu0
  %v630 = vadd.f32 0.0, %v629
  %v631 = vpop.f32.mrb[0].mxu0
  %v632 = vpop.f32.mrb[0].mxu0
  %v633 = vadd.f32 0.0, %v632
  %v634 = vpop.f32.mrb[0].mxu0
  %635 = vmatprep.mubr.bf16.mxu0 0
  %636 = vmatmul.mubr.bf16.gmra.mrb[0].mxu0 %v374
  %v637 = vpop.f32.mrb[0].mxu0
  %v638 = vadd.f32 0.0, %v637
  %v639 = vpop.f32.mrb[0].mxu0
  %v640 = vpop.f32.mrb[0].mxu0
  %v641 = vadd.f32 0.0, %v640
  %v642 = vpop.f32.mrb[0].mxu0
  %643 = vmatprep.mubr.bf16.mxu0 0
  %644 = vmatmul.mubr.bf16.gmra.mrb[0].mxu0 %v375
  %v645 = vpop.f32.mrb[0].mxu0
  %v646 = vadd.f32 0.0, %v645
  %v647 = vpop.f32.mrb[0].mxu0
  %v648 = vpop.f32.mrb[0].mxu0
  %v649 = vadd.f32 0.0, %v648
  %v650 = vpop.f32.mrb[0].mxu0
  %651 = vmatprep.mubr.bf16.mxu0 0
  %652 = vmatmul.mubr.bf16.gmra.mrb[0].mxu0 %v376
  %v653 = vpop.f32.mrb[0].mxu0
  %v654 = vadd.f32 0.0, %v653
  %v655 = vpop.f32.mrb[0].mxu0
  %v656 = vpop.f32.mrb[0].mxu0
  %v657 = vadd.f32 0.0, %v656
  %v658 = vpop.f32.mrb[0].mxu0
  %659 = vmatprep.mubr.bf16.mxu0 0
  %660 = vmatmul.mubr.bf16.gmra.mrb[0].mxu0 %v377
  %v661 = vpop.f32.mrb[0].mxu0
  %v662 = vadd.f32 0.0, %v661
  %v663 = vpop.f32.mrb[0].mxu0
  %v664 = vpop.f32.mrb[0].mxu0
  %v665 = vadd.f32 0.0, %v664
  %v666 = vpop.f32.mrb[0].mxu0
  %667 = vmatprep.mubr.bf16.mxu0 0
  %668 = vmatmul.mubr.bf16.gmra.mrb[0].mxu0 %v378
  %v669 = vpop.f32.mrb[0].mxu0
  %v670 = vadd.f32 0.0, %v669
  %v671 = vpop.f32.mrb[0].mxu0
  %v672 = vpop.f32.mrb[0].mxu0
  %v673 = vadd.f32 0.0, %v672
  %v674 = vpop.f32.mrb[0].mxu0
  %675 = vmatprep.mubr.bf16.mxu0 0
  %676 = vmatmul.mubr.bf16.gmra.mrb[0].mxu0 %v379
  %v677 = vpop.f32.mrb[0].mxu0
  %v678 = vadd.f32 0.0, %v677
  %v679 = vpop.f32.mrb[0].mxu0
  %v680 = vpop.f32.mrb[0].mxu0
  %v681 = vadd.f32 0.0, %v680
  %v682 = vpop.f32.mrb[0].mxu0
  %683 = vmatprep.mubr.bf16.mxu0 0
  %684 = vmatmul.mubr.bf16.gmra.mrb[0].mxu0 %v380
  %v685 = vpop.f32.mrb[0].mxu0
  %v686 = vadd.f32 0.0, %v685
  %v687 = vpop.f32.mrb[0].mxu0
  %v688 = vpop.f32.mrb[0].mxu0
  %v689 = vadd.f32 0.0, %v688
  %v690 = vpop.f32.mrb[0].mxu0
  %691 = vmatprep.mubr.bf16.mxu0 0
  %692 = vmatmul.mubr.bf16.gmra.mrb[0].mxu0 %v381
  %v693 = vpop.f32.mrb[0].mxu0
  %v694 = vadd.f32 0.0, %v693
  %v695 = vpop.f32.mrb[0].mxu0
  %v696 = vpop.f32.mrb[0].mxu0
  %v697 = vadd.f32 0.0, %v696
  %v698 = vpop.f32.mrb[0].mxu0
  %699 = vmatprep.mubr.bf16.mxu0 0
  %700 = vmatmul.mubr.bf16.gmra.mrb[0].mxu0 %v382
  %v701 = vpop.f32.mrb[0].mxu0
  %v702 = vadd.f32 0.0, %v701
  %v703 = vpop.f32.mrb[0].mxu0
  %v704 = vpop.f32.mrb[0].mxu0
  %v705 = vadd.f32 0.0, %v704
  %v706 = vpop.f32.mrb[0].mxu0
  %707 = vmatprep.mubr.bf16.mxu0 0
  %708 = vmatmul.mubr.bf16.gmra.mrb[0].mxu0 %v383
  %v709 = vpop.f32.mrb[0].mxu0
  %v710 = vadd.f32 0.0, %v709
  %v711 = vpop.f32.mrb[0].mxu0
  %v712 = vpop.f32.mrb[0].mxu0
  %v713 = vadd.f32 0.0, %v712
  %v714 = vpop.f32.mrb[0].mxu0
  %715 = vmatprep.mubr.bf16.mxu0 0
  %716 = vmatmul.mubr.bf16.gmra.mrb[0].mxu0 %v384
  %v717 = vpop.f32.mrb[0].mxu0
  %v718 = vadd.f32 0.0, %v717
  %v719 = vpop.f32.mrb[0].mxu0
  %v720 = vpop.f32.mrb[0].mxu0
  %v721 = vadd.f32 0.0, %v720
  %v722 = vpop.f32.mrb[0].mxu0
  %723 = vmatprep.mubr.bf16.mxu0 0
  %724 = vmatmul.mubr.bf16.gmra.mrb[0].mxu0 %v385
  %v725 = vpop.f32.mrb[0].mxu0
  %v726 = vadd.f32 0.0, %v725
  %v727 = vpop.f32.mrb[0].mxu0
  %v728 = vpop.f32.mrb[0].mxu0
  %v729 = vadd.f32 0.0, %v728
  %v730 = vpop.f32.mrb[0].mxu0
  %731 = vmatprep.mubr.bf16.mxu0 0
  %732 = vmatmul.mubr.bf16.gmra.mrb[0].mxu0 %v386
  %v733 = vpop.f32.mrb[0].mxu0
  %v734 = vadd.f32 0.0, %v733
  %v735 = vpop.f32.mrb[0].mxu0
  %v736 = vpop.f32.mrb[0].mxu0
  %v737 = vadd.f32 0.0, %v736
  %v738 = vpop.f32.mrb[0].mxu0
  %739 = vdwg.mxu0
  %v740 = vpack.c.bf16 %v489, %v486
  %v741 = vpack.c.bf16 %v497, %v494
  %v742 = vpack.c.bf16 %v505, %v502
  %v743 = vpack.c.bf16 %v513, %v510
  %v744 = vpack.c.bf16 %v521, %v518
  %v745 = vpack.c.bf16 %v529, %v526
  %v746 = vpack.c.bf16 %v537, %v534
  %v747 = vpack.c.bf16 %v545, %v542
  %v748 = vpack.c.bf16 %v553, %v550
  %v749 = vpack.c.bf16 %v561, %v558
  %v750 = vpack.c.bf16 %v569, %v566
  %v751 = vpack.c.bf16 %v577, %v574
  %v752 = vpack.c.bf16 %v585, %v582
  %v753 = vpack.c.bf16 %v593, %v590
  %v754 = vpack.c.bf16 %v601, %v598
  %v755 = vpack.c.bf16 %v609, %v606
  %v756 = vpack.c.bf16 %v617, %v614
  %v757 = vpack.c.bf16 %v625, %v622
  %v758 = vpack.c.bf16 %v633, %v630
  %v759 = vpack.c.bf16 %v641, %v638
  %v760 = vpack.c.bf16 %v649, %v646
  %v761 = vpack.c.bf16 %v657, %v654
  %v762 = vpack.c.bf16 %v665, %v662
  %v763 = vpack.c.bf16 %v673, %v670
  %v764 = vpack.c.bf16 %v681, %v678
  %v765 = vpack.c.bf16 %v689, %v686
  %v766 = vpack.c.bf16 %v697, %v694
  %v767 = vpack.c.bf16 %v705, %v702
  %v768 = vpack.c.bf16 %v713, %v710
  %v769 = vpack.c.bf16 %v721, %v718
  %v770 = vpack.c.bf16 %v729, %v726
  %v771 = vpack.c.bf16 %v737, %v734
  %v804 = vunpack.c.l.b16 %v740
  %v805 = vunpack.c.h.b16 %v740
  %v806 = vunpack.c.l.b16 %v741
  %v807 = vunpack.c.h.b16 %v741
  %v808 = vunpack.c.l.b16 %v742
  %v809 = vunpack.c.h.b16 %v742
  %v810 = vunpack.c.l.b16 %v743
  %v811 = vunpack.c.h.b16 %v743
  %v812 = vunpack.c.l.b16 %v744
  %v813 = vunpack.c.h.b16 %v744
  %v814 = vunpack.c.l.b16 %v745
  %v815 = vunpack.c.h.b16 %v745
  %v816 = vunpack.c.l.b16 %v746
  %v817 = vunpack.c.h.b16 %v746
  %v818 = vunpack.c.l.b16 %v747
  %v819 = vunpack.c.h.b16 %v747
  %v820 = vunpack.c.l.b16 %v748
  %v821 = vunpack.c.h.b16 %v748
  %v822 = vunpack.c.l.b16 %v749
  %v823 = vunpack.c.h.b16 %v749
  %v824 = vunpack.c.l.b16 %v750
  %v825 = vunpack.c.h.b16 %v750
  %v826 = vunpack.c.l.b16 %v751
  %v827 = vunpack.c.h.b16 %v751
  %v828 = vunpack.c.l.b16 %v752
  %v829 = vunpack.c.h.b16 %v752
  %v830 = vunpack.c.l.b16 %v753
  %v831 = vunpack.c.h.b16 %v753
  %v832 = vunpack.c.l.b16 %v754
  %v833 = vunpack.c.h.b16 %v754
  %v834 = vunpack.c.l.b16 %v755
  %v835 = vunpack.c.h.b16 %v755
  %v836 = vunpack.c.l.b16 %v756
  %v837 = vunpack.c.h.b16 %v756
  %v838 = vunpack.c.l.b16 %v757
  %v839 = vunpack.c.h.b16 %v757
  %v840 = vunpack.c.l.b16 %v758
  %v841 = vunpack.c.h.b16 %v758
  %v842 = vunpack.c.l.b16 %v759
  %v843 = vunpack.c.h.b16 %v759
  %v844 = vunpack.c.l.b16 %v760
  %v845 = vunpack.c.h.b16 %v760
  %v846 = vunpack.c.l.b16 %v761
  %v847 = vunpack.c.h.b16 %v761
  %v848 = vunpack.c.l.b16 %v762
  %v849 = vunpack.c.h.b16 %v762
  %v850 = vunpack.c.l.b16 %v763
  %v851 = vunpack.c.h.b16 %v763
  %v852 = vunpack.c.l.b16 %v764
  %v853 = vunpack.c.h.b16 %v764
  %v854 = vunpack.c.l.b16 %v765
  %v855 = vunpack.c.h.b16 %v765
  %v856 = vunpack.c.l.b16 %v766
  %v857 = vunpack.c.h.b16 %v766
  %v858 = vunpack.c.l.b16 %v767
  %v859 = vunpack.c.h.b16 %v767
  %v860 = vunpack.c.l.b16 %v768
  %v861 = vunpack.c.h.b16 %v768
  %v862 = vunpack.c.l.b16 %v769
  %v863 = vunpack.c.h.b16 %v769
  %v864 = vunpack.c.l.b16 %v770
  %v865 = vunpack.c.h.b16 %v770
  %v866 = vunpack.c.l.b16 %v771
  %v867 = vunpack.c.h.b16 %v771
  %v868 = vpack.c.b16 %v804, %v804
  %v869 = vpack.c.b16 %v805, %v805
  %v870 = vpack.c.b16 %v806, %v806
  %v871 = vpack.c.b16 %v807, %v807
  %v872 = vpack.c.b16 %v808, %v808
  %v873 = vpack.c.b16 %v809, %v809
  %v874 = vpack.c.b16 %v810, %v810
  %v875 = vpack.c.b16 %v811, %v811
  %v876 = vpack.c.b16 %v812, %v812
  %v877 = vpack.c.b16 %v813, %v813
  %v878 = vpack.c.b16 %v814, %v814
  %v879 = vpack.c.b16 %v815, %v815
  %v880 = vpack.c.b16 %v816, %v816
  %v881 = vpack.c.b16 %v817, %v817
  %v882 = vpack.c.b16 %v818, %v818
  %v883 = vpack.c.b16 %v819, %v819
  %v884 = vpack.c.b16 %v820, %v820
  %v885 = vpack.c.b16 %v821, %v821
  %v886 = vpack.c.b16 %v822, %v822
  %v887 = vpack.c.b16 %v823, %v823
  %v888 = vpack.c.b16 %v824, %v824
  %v889 = vpack.c.b16 %v825, %v825
  %v890 = vpack.c.b16 %v826, %v826
  %v891 = vpack.c.b16 %v827, %v827
  %v892 = vpack.c.b16 %v828, %v828
  %v893 = vpack.c.b16 %v829, %v829
  %v894 = vpack.c.b16 %v830, %v830
  %v895 = vpack.c.b16 %v831, %v831
  %v896 = vpack.c.b16 %v832, %v832
  %v897 = vpack.c.b16 %v833, %v833
  %v898 = vpack.c.b16 %v834, %v834
  %v899 = vpack.c.b16 %v835, %v835
  %v900 = vpack.c.b16 %v836, %v836
  %v901 = vpack.c.b16 %v837, %v837
  %v902 = vpack.c.b16 %v838, %v838
  %v903 = vpack.c.b16 %v839, %v839
  %v904 = vpack.c.b16 %v840, %v840
  %v905 = vpack.c.b16 %v841, %v841
  %v906 = vpack.c.b16 %v842, %v842
  %v907 = vpack.c.b16 %v843, %v843
  %v908 = vpack.c.b16 %v844, %v844
  %v909 = vpack.c.b16 %v845, %v845
  %v910 = vpack.c.b16 %v846, %v846
  %v911 = vpack.c.b16 %v847, %v847
  %v912 = vpack.c.b16 %v848, %v848
  %v913 = vpack.c.b16 %v849, %v849
  %v914 = vpack.c.b16 %v850, %v850
  %v915 = vpack.c.b16 %v851, %v851
  %v916 = vpack.c.b16 %v852, %v852
  %v917 = vpack.c.b16 %v853, %v853
  %v918 = vpack.c.b16 %v854, %v854
  %v919 = vpack.c.b16 %v855, %v855
  %v920 = vpack.c.b16 %v856, %v856
  %v921 = vpack.c.b16 %v857, %v857
  %v922 = vpack.c.b16 %v858, %v858
  %v923 = vpack.c.b16 %v859, %v859
  %v924 = vpack.c.b16 %v860, %v860
  %v925 = vpack.c.b16 %v861, %v861
  %v926 = vpack.c.b16 %v862, %v862
  %v927 = vpack.c.b16 %v863, %v863
  %v928 = vpack.c.b16 %v864, %v864
  %v929 = vpack.c.b16 %v865, %v865
  %v930 = vpack.c.b16 %v866, %v866
  %v931 = vpack.c.b16 %v867, %v867
  %996 = vst [vmem:[%s4] sm:$0xf] %v868
  %997 = vst [vmem:[%s4 + $0x4] sm:$0xf] %v869
  %998 = vst [vmem:[%s4 + $0x8] sm:$0xf] %v870
  %999 = vst [vmem:[%s4 + $0xc] sm:$0xf] %v871
  %1000 = vst [vmem:[%s4 + $0x10] sm:$0xf] %v872
  %1001 = vst [vmem:[%s4 + $0x14] sm:$0xf] %v873
  %1002 = vst [vmem:[%s4 + $0x18] sm:$0xf] %v874
  %1003 = vst [vmem:[%s4 + $0x1c] sm:$0xf] %v875
  %1004 = vst [vmem:[%s4 + $0x20] sm:$0xf] %v876
  %1005 = vst [vmem:[%s4 + $0x24] sm:$0xf] %v877
  %1006 = vst [vmem:[%s4 + $0x28] sm:$0xf] %v878
  %1007 = vst [vmem:[%s4 + $0x2c] sm:$0xf] %v879
  %1008 = vst [vmem:[%s4 + $0x30] sm:$0xf] %v880
  %1009 = vst [vmem:[%s4 + $0x34] sm:$0xf] %v881
  %1010 = vst [vmem:[%s4 + $0x38] sm:$0xf] %v882
  %1011 = vst [vmem:[%s4 + $0x3c] sm:$0xf] %v883
  %1012 = vst [vmem:[%s4 + $0x40] sm:$0xf] %v884
  %1013 = vst [vmem:[%s4 + $0x44] sm:$0xf] %v885
  %1014 = vst [vmem:[%s4 + $0x48] sm:$0xf] %v886
  %1015 = vst [vmem:[%s4 + $0x4c] sm:$0xf] %v887
  %1016 = vst [vmem:[%s4 + $0x50] sm:$0xf] %v888
  %1017 = vst [vmem:[%s4 + $0x54] sm:$0xf] %v889
  %1018 = vst [vmem:[%s4 + $0x58] sm:$0xf] %v890
  %1019 = vst [vmem:[%s4 + $0x5c] sm:$0xf] %v891
  %1020 = vst [vmem:[%s4 + $0x60] sm:$0xf] %v892
  %1021 = vst [vmem:[%s4 + $0x64] sm:$0xf] %v893
  %1022 = vst [vmem:[%s4 + $0x68] sm:$0xf] %v894
  %1023 = vst [vmem:[%s4 + $0x6c] sm:$0xf] %v895
  %1024 = vst [vmem:[%s4 + $0x70] sm:$0xf] %v896
  %1025 = vst [vmem:[%s4 + $0x74] sm:$0xf] %v897
  %1026 = vst [vmem:[%s4 + $0x78] sm:$0xf] %v898
  %1027 = vst [vmem:[%s4 + $0x7c] sm:$0xf] %v899
  %1028 = vst [vmem:[%s4 + $0x80] sm:$0xf] %v900
  %1029 = vst [vmem:[%s4 + $0x84] sm:$0xf] %v901
  %1030 = vst [vmem:[%s4 + $0x88] sm:$0xf] %v902
  %1031 = vst [vmem:[%s4 + $0x8c] sm:$0xf] %v903
  %1032 = vst [vmem:[%s4 + $0x90] sm:$0xf] %v904
  %1033 = vst [vmem:[%s4 + $0x94] sm:$0xf] %v905
  %1034 = vst [vmem:[%s4 + $0x98] sm:$0xf] %v906
  %1035 = vst [vmem:[%s4 + $0x9c] sm:$0xf] %v907
  %1036 = vst [vmem:[%s4 + $0xa0] sm:$0xf] %v908
  %1037 = vst [vmem:[%s4 + $0xa4] sm:$0xf] %v909
  %1038 = vst [vmem:[%s4 + $0xa8] sm:$0xf] %v910
  %1039 = vst [vmem:[%s4 + $0xac] sm:$0xf] %v911
  %1040 = vst [vmem:[%s4 + $0xb0] sm:$0xf] %v912
  %1041 = vst [vmem:[%s4 + $0xb4] sm:$0xf] %v913
  %1042 = vst [vmem:[%s4 + $0xb8] sm:$0xf] %v914
  %1043 = vst [vmem:[%s4 + $0xbc] sm:$0xf] %v915
  %1044 = vst [vmem:[%s4 + $0xc0] sm:$0xf] %v916
  %1045 = vst [vmem:[%s4 + $0xc4] sm:$0xf] %v917
  %1046 = vst [vmem:[%s4 + $0xc8] sm:$0xf] %v918
  %1047 = vst [vmem:[%s4 + $0xcc] sm:$0xf] %v919
  %1048 = vst [vmem:[%s4 + $0xd0] sm:$0xf] %v920
  %1049 = vst [vmem:[%s4 + $0xd4] sm:$0xf] %v921
  %1050 = vst [vmem:[%s4 + $0xd8] sm:$0xf] %v922
  %1051 = vst [vmem:[%s4 + $0xdc] sm:$0xf] %v923
  %1052 = vst [vmem:[%s4 + $0xe0] sm:$0xf] %v924
  %1053 = vst [vmem:[%s4 + $0xe4] sm:$0xf] %v925
  %1054 = vst [vmem:[%s4 + $0xe8] sm:$0xf] %v926
  %1055 = vst [vmem:[%s4 + $0xec] sm:$0xf] %v927
  %1056 = vst [vmem:[%s4 + $0xf0] sm:$0xf] %v928
  %1057 = vst [vmem:[%s4 + $0xf4] sm:$0xf] %v929
  %1058 = vst [vmem:[%s4 + $0xf8] sm:$0xf] %v930
  %1059 = vst [vmem:[%s4 + $0xfc] sm:$0xf] %v931
  %v1060 = vadd.f32 %v486, %v489
  %v1061 = vadd.f32 %v1060, %v494
  %v1062 = vadd.f32 %v1061, %v497
  %v1063 = vadd.f32 %v1062, %v502
  %v1064 = vadd.f32 %v1063, %v505
  %v1065 = vadd.f32 %v1064, %v510
  %v1066 = vadd.f32 %v1065, %v513
  %v1067 = vadd.f32 %v1066, %v518
  %v1068 = vadd.f32 %v1067, %v521
  %v1069 = vadd.f32 %v1068, %v526
  %v1070 = vadd.f32 %v1069, %v529
  %v1071 = vadd.f32 %v1070, %v534
  %v1072 = vadd.f32 %v1071, %v537
  %v1073 = vadd.f32 %v1072, %v542
  %v1074 = vadd.f32 %v1073, %v545
  %v1075 = vadd.f32 %v1074, %v550
  %v1076 = vadd.f32 %v1075, %v553
  %v1077 = vadd.f32 %v1076, %v558
  %v1078 = vadd.f32 %v1077, %v561
  %v1079 = vadd.f32 %v1078, %v566
  %v1080 = vadd.f32 %v1079, %v569
  %v1081 = vadd.f32 %v1080, %v574
  %v1082 = vadd.f32 %v1081, %v577
  %v1083 = vadd.f32 %v1082, %v582
  %v1084 = vadd.f32 %v1083, %v585
  %v1085 = vadd.f32 %v1084, %v590
  %v1086 = vadd.f32 %v1085, %v593
  %v1087 = vadd.f32 %v1086, %v598
  %v1088 = vadd.f32 %v1087, %v601
  %v1089 = vadd.f32 %v1088, %v606
  %v1090 = vadd.f32 %v1089, %v609
  %v1091 = vadd.f32 %v1090, %v614
  %v1092 = vadd.f32 %v1091, %v617
  %v1093 = vadd.f32 %v1092, %v622
  %v1094 = vadd.f32 %v1093, %v625
  %v1095 = vadd.f32 %v1094, %v630
  %v1096 = vadd.f32 %v1095, %v633
  %v1097 = vadd.f32 %v1096, %v638
  %v1098 = vadd.f32 %v1097, %v641
  %v1099 = vadd.f32 %v1098, %v646
  %v1100 = vadd.f32 %v1099, %v649
  %v1101 = vadd.f32 %v1100, %v654
  %v1102 = vadd.f32 %v1101, %v657
  %v1103 = vadd.f32 %v1102, %v662
  %v1104 = vadd.f32 %v1103, %v665
  %v1105 = vadd.f32 %v1104, %v670
  %v1106 = vadd.f32 %v1105, %v673
  %v1107 = vadd.f32 %v1106, %v678
  %v1108 = vadd.f32 %v1107, %v681
  %v1109 = vadd.f32 %v1108, %v686
  %v1110 = vadd.f32 %v1109, %v689
  %v1111 = vadd.f32 %v1110, %v694
  %v1112 = vadd.f32 %v1111, %v697
  %v1113 = vadd.f32 %v1112, %v702
  %v1114 = vadd.f32 %v1113, %v705
  %v1115 = vadd.f32 %v1114, %v710
  %v1116 = vadd.f32 %v1115, %v713
  %v1117 = vadd.f32 %v1116, %v718
  %v1118 = vadd.f32 %v1117, %v721
  %v1119 = vadd.f32 %v1118, %v726
  %v1120 = vadd.f32 %v1119, %v729
  %v1121 = vadd.f32 %v1120, %v734
  %v1122 = vadd.f32 %v1121, %v737
  %v1123 = vrot.slane %v1122, 4
  %v1124 = vadd.f32 %v1122, %v1123
  %v1125 = vrot.slane %v1124, 2
  %v1126 = vadd.f32 %v1124, %v1125
  %v1127 = vrot.slane %v1126, 1
  %v1128 = vadd.f32 %v1126, %v1127
  %1129 = vst [vmem:[%s5] sm:$0x1] %v1128
  %v1130 = vmul.f32 %v486, %v486
  %v1131 = vmul.f32 %v489, %v489
  %v1132 = vmul.f32 %v494, %v494
  %v1133 = vmul.f32 %v497, %v497
  %v1134 = vmul.f32 %v502, %v502
  %v1135 = vmul.f32 %v505, %v505
  %v1136 = vmul.f32 %v510, %v510
  %v1137 = vmul.f32 %v513, %v513
  %v1138 = vmul.f32 %v518, %v518
  %v1139 = vmul.f32 %v521, %v521
  %v1140 = vmul.f32 %v526, %v526
  %v1141 = vmul.f32 %v529, %v529
  %v1142 = vmul.f32 %v534, %v534
  %v1143 = vmul.f32 %v537, %v537
  %v1144 = vmul.f32 %v542, %v542
  %v1145 = vmul.f32 %v545, %v545
  %v1146 = vmul.f32 %v550, %v550
  %v1147 = vmul.f32 %v553, %v553
  %v1148 = vmul.f32 %v558, %v558
  %v1149 = vmul.f32 %v561, %v561
  %v1150 = vmul.f32 %v566, %v566
  %v1151 = vmul.f32 %v569, %v569
  %v1152 = vmul.f32 %v574, %v574
  %v1153 = vmul.f32 %v577, %v577
  %v1154 = vmul.f32 %v582, %v582
  %v1155 = vmul.f32 %v585, %v585
  %v1156 = vmul.f32 %v590, %v590
  %v1157 = vmul.f32 %v593, %v593
  %v1158 = vmul.f32 %v598, %v598
  %v1159 = vmul.f32 %v601, %v601
  %v1160 = vmul.f32 %v606, %v606
  %v1161 = vmul.f32 %v609, %v609
  %v1162 = vmul.f32 %v614, %v614
  %v1163 = vmul.f32 %v617, %v617
  %v1164 = vmul.f32 %v622, %v622
  %v1165 = vmul.f32 %v625, %v625
  %v1166 = vmul.f32 %v630, %v630
  %v1167 = vmul.f32 %v633, %v633
  %v1168 = vmul.f32 %v638, %v638
  %v1169 = vmul.f32 %v641, %v641
  %v1170 = vmul.f32 %v646, %v646
  %v1171 = vmul.f32 %v649, %v649
  %v1172 = vmul.f32 %v654, %v654
  %v1173 = vmul.f32 %v657, %v657
  %v1174 = vmul.f32 %v662, %v662
  %v1175 = vmul.f32 %v665, %v665
  %v1176 = vmul.f32 %v670, %v670
  %v1177 = vmul.f32 %v673, %v673
  %v1178 = vmul.f32 %v678, %v678
  %v1179 = vmul.f32 %v681, %v681
  %v1180 = vmul.f32 %v686, %v686
  %v1181 = vmul.f32 %v689, %v689
  %v1182 = vmul.f32 %v694, %v694
  %v1183 = vmul.f32 %v697, %v697
  %v1184 = vmul.f32 %v702, %v702
  %v1185 = vmul.f32 %v705, %v705
  %v1186 = vmul.f32 %v710, %v710
  %v1187 = vmul.f32 %v713, %v713
  %v1188 = vmul.f32 %v718, %v718
  %v1189 = vmul.f32 %v721, %v721
  %v1190 = vmul.f32 %v726, %v726
  %v1191 = vmul.f32 %v729, %v729
  %v1192 = vmul.f32 %v734, %v734
  %v1193 = vmul.f32 %v737, %v737
  %v1194 = vadd.f32 %v1130, %v1131
  %v1195 = vadd.f32 %v1194, %v1132
  %v1196 = vadd.f32 %v1195, %v1133
  %v1197 = vadd.f32 %v1196, %v1134
  %v1198 = vadd.f32 %v1197, %v1135
  %v1199 = vadd.f32 %v1198, %v1136
  %v1200 = vadd.f32 %v1199, %v1137
  %v1201 = vadd.f32 %v1200, %v1138
  %v1202 = vadd.f32 %v1201, %v1139
  %v1203 = vadd.f32 %v1202, %v1140
  %v1204 = vadd.f32 %v1203, %v1141
  %v1205 = vadd.f32 %v1204, %v1142
  %v1206 = vadd.f32 %v1205, %v1143
  %v1207 = vadd.f32 %v1206, %v1144
  %v1208 = vadd.f32 %v1207, %v1145
  %v1209 = vadd.f32 %v1208, %v1146
  %v1210 = vadd.f32 %v1209, %v1147
  %v1211 = vadd.f32 %v1210, %v1148
  %v1212 = vadd.f32 %v1211, %v1149
  %v1213 = vadd.f32 %v1212, %v1150
  %v1214 = vadd.f32 %v1213, %v1151
  %v1215 = vadd.f32 %v1214, %v1152
  %v1216 = vadd.f32 %v1215, %v1153
  %v1217 = vadd.f32 %v1216, %v1154
  %v1218 = vadd.f32 %v1217, %v1155
  %v1219 = vadd.f32 %v1218, %v1156
  %v1220 = vadd.f32 %v1219, %v1157
  %v1221 = vadd.f32 %v1220, %v1158
  %v1222 = vadd.f32 %v1221, %v1159
  %v1223 = vadd.f32 %v1222, %v1160
  %v1224 = vadd.f32 %v1223, %v1161
  %v1225 = vadd.f32 %v1224, %v1162
  %v1226 = vadd.f32 %v1225, %v1163
  %v1227 = vadd.f32 %v1226, %v1164
  %v1228 = vadd.f32 %v1227, %v1165
  %v1229 = vadd.f32 %v1228, %v1166
  %v1230 = vadd.f32 %v1229, %v1167
  %v1231 = vadd.f32 %v1230, %v1168
  %v1232 = vadd.f32 %v1231, %v1169
  %v1233 = vadd.f32 %v1232, %v1170
  %v1234 = vadd.f32 %v1233, %v1171
  %v1235 = vadd.f32 %v1234, %v1172
  %v1236 = vadd.f32 %v1235, %v1173
  %v1237 = vadd.f32 %v1236, %v1174
  %v1238 = vadd.f32 %v1237, %v1175
  %v1239 = vadd.f32 %v1238, %v1176
  %v1240 = vadd.f32 %v1239, %v1177
  %v1241 = vadd.f32 %v1240, %v1178
  %v1242 = vadd.f32 %v1241, %v1179
  %v1243 = vadd.f32 %v1242, %v1180
  %v1244 = vadd.f32 %v1243, %v1181
  %v1245 = vadd.f32 %v1244, %v1182
  %v1246 = vadd.f32 %v1245, %v1183
  %v1247 = vadd.f32 %v1246, %v1184
  %v1248 = vadd.f32 %v1247, %v1185
  %v1249 = vadd.f32 %v1248, %v1186
  %v1250 = vadd.f32 %v1249, %v1187
  %v1251 = vadd.f32 %v1250, %v1188
  %v1252 = vadd.f32 %v1251, %v1189
  %v1253 = vadd.f32 %v1252, %v1190
  %v1254 = vadd.f32 %v1253, %v1191
  %v1255 = vadd.f32 %v1254, %v1192
  %v1256 = vadd.f32 %v1255, %v1193
  %v1257 = vrot.slane %v1256, 4
  %v1258 = vadd.f32 %v1256, %v1257
  %v1259 = vrot.slane %v1258, 2
  %v1260 = vadd.f32 %v1258, %v1259
  %v1261 = vrot.slane %v1260, 1
  %v1262 = vadd.f32 %v1260, %v1261
  %1263 = vst [vmem:[%s6] sm:$0x1] %v1262
  // Predicated region
  $region18: #{bottleneck_forward.6} parent=0 // pred_check
    _
  $region19: #{bottleneck_forward.6} parent=0 // pred_check_branch
    %1265 = sbr.rel (0) target = $region21
  $region20: #{bottleneck_forward.6} parent=0 // pred_region
    _
  $region21: #{bottleneck_forward.6} parent=0 // pred_fallthru
    _
  // Predicated region
  $region22: #{bottleneck_forward.6} parent=0 // pred_check
    _
  $region23: #{bottleneck_forward.6} parent=0 // pred_check_branch
    %1267 = sbr.rel (0) target = $region25
  $region24: #{bottleneck_forward.6} parent=0 // pred_region
    _
  $region25: #{bottleneck_forward.6} parent=0 // pred_fallthru
    _
  // Predicated region
  $region26: #{bottleneck_forward.6} parent=0 // pred_check
    _
  $region27: #{bottleneck_forward.6} parent=0 // pred_check_branch
    %1269 = sbr.rel (0) target = $region29
  $region28: #{bottleneck_forward.6} parent=0 // pred_region
    _
  $region29: #{bottleneck_forward.6} parent=0 // pred_fallthru
    _
  // Predicated region
  $region30: #{bottleneck_forward.6} parent=0 // pred_check
    _
  $region31: #{bottleneck_forward.6} parent=0 // pred_check_branch
    %1271 = sbr.rel (0) target = $region33
  $region32: #{bottleneck_forward.6} parent=0 // pred_region
    _
  $region33: #{bottleneck_forward.6} parent=0 // pred_fallthru
    _
  // Predicated region
  $region34: #{bottleneck_forward.6} parent=0 // pred_check
    _
  $region35: #{bottleneck_forward.6} parent=0 // pred_check_branch
    %1273 = sbr.rel (0) target = $region37
  $region36: #{bottleneck_forward.6} parent=0 // pred_region
    _
  $region37: #{bottleneck_forward.6} parent=0 // pred_fallthru
    _
  // Predicated region
  $region38: #{bottleneck_forward.6} parent=0 // pred_check
    _
  $region39: #{bottleneck_forward.6} parent=0 // pred_check_branch
    %1275 = sbr.rel (0) target = $region41
  $region40: #{bottleneck_forward.6} parent=0 // pred_region
    _
  $region41: #{bottleneck_forward.6} parent=0 // pred_fallthru
    _

// kernel: bottleneck_forward.5
$region0: #{bottleneck_forward.5}
  #allocation0 [shape = 'u32[]', space=smem, size = 0x4, offset = 0x4, fixed_abs, tag = 'smem constant byte address 0x4 - core index']
  #allocation1 [shape = 'u32[144,128]{1,0:T(1,128)}', space=vmem, size = 0x12000, scoped, tag = 'internal scratch']
  #allocation2 [shape = 'f32[304,128]{1,0:T(8,128)}', space=vmem, size = 0x26000, scoped, tag = 'scratch operand']
  %s0 = inlined_call_operand.vmem [shape: bf16[2,256,128], index: 0, kind: input, shape index: {}]
  %s1 = inlined_call_operand.vmem [shape: f32[1,128], index: 1, kind: input, shape index: {}]
  %s2 = inlined_call_operand.vmem [shape: f32[1,128], index: 2, kind: input, shape index: {}]
  %s3 = inlined_call_operand.vmem [shape: bf16[3,384,128], index: 3, kind: input, shape index: {}]
  %s4 = inlined_call_operand.vmem [shape: bf16[2,256,128], index: 4, kind: output, shape index: {0}]
  %s5 = inlined_call_operand.vmem [shape: f32[2,1,128], index: 5, kind: output, shape index: {1}]
  %s6 = inlined_call_operand.vmem [shape: f32[2,1,128], index: 6, kind: output, shape index: {2}]
  %7 = xla_tuple %s4, %s5, %s6
  %s8 = sld [smem:[#allocation0]]
  $region69: #{bottleneck_forward.5} parent=0
    _
  %s10 = ssub.s32 1, %s8
  %s11 = scalar_select 0, %s10, %s8
  loop: start=0, step=1, limit=4
  $region2: #{bottleneck_forward.5} parent=0 // loop_pre_header
    _
  $region3: #{bottleneck_forward.5} parent=0 // loop_header
    %s13 = sphi 0, %s17
    %p14 = scmp.ge.s32.totalorder %s13, 4
    %s23 = sphi 0, %s25
    %s26 = sphi 0, %s23
    %s27 = sphi 0, %s26
    %s43 = sphi 0, %s27
    %s47 = sphi 0, %s47
    %s49 = sphi 0, %s47
    %s50 = sphi 0, %s49
    %s64 = sphi 0, %s50
    %s68 = sphi 0, %s68
    %s70 = sphi 0, %s68
    %s71 = sphi 0, %s70
    %s85 = sphi 0, %s71
    %s89 = sphi 0, %s89
    %s91 = sphi 0, %s89
    %s92 = sphi 0, %s91
    %s106 = sphi 0, %s92
    %s112 = sphi 0, %s114
    %s115 = sphi 0, %s112
    %s116 = sphi 0, %s115
    %s132 = sphi 0, %s116
    %s138 = sphi 0, %s140
    %s141 = sphi 0, %s138
    %s142 = sphi 0, %s141
    %s158 = sphi 0, %s142
    %s164 = sphi 0, %s166
    %s167 = sphi 0, %s164
    %s168 = sphi 0, %s167
    %s184 = sphi 0, %s168
  $region4: #{bottleneck_forward.5} parent=0 // loop_header_branch
    %16 = sbr.rel (%p14) target = $region8
  $region5: #{bottleneck_forward.5} parent=0 // loop_body
    %s18 = ssub.s32 %s13, 1
    %s19 = ssub.s32 %s13, 2
    %s20 = sadd.s32 %s13, 1
    %s21 = ssub.s32 %s13, %s20
    %p22 = scmp.eq.s32.totalorder %s21, 0
    %s24 = sadd.s32 %s23, 1
    %s25 = scalar_select %p22, %s23, %s24
    %p28 = pneg %p22
    %p29 = scmp.eq.s32.totalorder %s13, 1
    %p30 = por %p28, %p29
    %p31 = scmp.ne.s32.totalorder %s23, %s26
    %p32 = scmp.eq.s32.totalorder %s13, 0
    %p33 = por %p31, %p32
    %p34 = scmp.ne.s32.totalorder %s23, %s26
    %p35 = scmp.eq.s32.totalorder %s18, 1
    %p36 = por %p34, %p35
    %p37 = scmp.ne.s32.totalorder %s26, %s27
    %p38 = scmp.eq.s32.totalorder %s18, 0
    %p39 = por %p37, %p38
    %p40 = scmp.ne.s32.totalorder %s26, %s27
    %p41 = scmp.eq.s32.totalorder %s19, 1
    %p42 = por %p40, %p41
    %p44 = scmp.ne.s32.totalorder %s27, %s43
    %p45 = scmp.eq.s32.totalorder %s19, 0
    %p46 = por %p44, %p45
    %s48 = sadd.s32 %s47, 1
    %p51 = scmp.eq.s32.totalorder %s13, 1
    %p52 = scmp.ne.s32.totalorder %s47, %s49
    %p53 = scmp.eq.s32.totalorder %s13, 0
    %p54 = por %p52, %p53
    %p55 = scmp.ne.s32.totalorder %s47, %s49
    %p56 = scmp.eq.s32.totalorder %s18, 1
    %p57 = por %p55, %p56
    %p58 = scmp.ne.s32.totalorder %s49, %s50
    %p59 = scmp.eq.s32.totalorder %s18, 0
    %p60 = por %p58, %p59
    %p61 = scmp.ne.s32.totalorder %s49, %s50
    %p62 = scmp.eq.s32.totalorder %s19, 1
    %p63 = por %p61, %p62
    %p65 = scmp.ne.s32.totalorder %s50, %s64
    %p66 = scmp.eq.s32.totalorder %s19, 0
    %p67 = por %p65, %p66
    %s69 = sadd.s32 %s68, 1
    %p72 = scmp.eq.s32.totalorder %s13, 1
    %p73 = scmp.ne.s32.totalorder %s68, %s70
    %p74 = scmp.eq.s32.totalorder %s13, 0
    %p75 = por %p73, %p74
    %p76 = scmp.ne.s32.totalorder %s68, %s70
    %p77 = scmp.eq.s32.totalorder %s18, 1
    %p78 = por %p76, %p77
    %p79 = scmp.ne.s32.totalorder %s70, %s71
    %p80 = scmp.eq.s32.totalorder %s18, 0
    %p81 = por %p79, %p80
    %p82 = scmp.ne.s32.totalorder %s70, %s71
    %p83 = scmp.eq.s32.totalorder %s19, 1
    %p84 = por %p82, %p83
    %p86 = scmp.ne.s32.totalorder %s71, %s85
    %p87 = scmp.eq.s32.totalorder %s19, 0
    %p88 = por %p86, %p87
    %s90 = sadd.s32 %s89, 1
    %p93 = scmp.eq.s32.totalorder %s13, 1
    %p94 = scmp.ne.s32.totalorder %s89, %s91
    %p95 = scmp.eq.s32.totalorder %s13, 0
    %p96 = por %p94, %p95
    %p97 = scmp.ne.s32.totalorder %s89, %s91
    %p98 = scmp.eq.s32.totalorder %s18, 1
    %p99 = por %p97, %p98
    %p100 = scmp.ne.s32.totalorder %s91, %s92
    %p101 = scmp.eq.s32.totalorder %s18, 0
    %p102 = por %p100, %p101
    %p103 = scmp.ne.s32.totalorder %s91, %s92
    %p104 = scmp.eq.s32.totalorder %s19, 1
    %p105 = por %p103, %p104
    %p107 = scmp.ne.s32.totalorder %s92, %s106
    %p108 = scmp.eq.s32.totalorder %s19, 0
    %p109 = por %p107, %p108
    %s110 = ssub.s32 %s13, %s20
    %p111 = scmp.eq.s32.totalorder %s110, 0
    %s113 = sadd.s32 %s112, 1
    %s114 = scalar_select %p111, %s112, %s113
    %p117 = pneg %p111
    %p118 = scmp.eq.s32.totalorder %s13, 1
    %p119 = por %p117, %p118
    %p120 = scmp.ne.s32.totalorder %s112, %s115
    %p121 = scmp.eq.s32.totalorder %s13, 0
    %p122 = por %p120, %p121
    %p123 = scmp.ne.s32.totalorder %s112, %s115
    %p124 = scmp.eq.s32.totalorder %s18, 1
    %p125 = por %p123, %p124
    %p126 = scmp.ne.s32.totalorder %s115, %s116
    %p127 = scmp.eq.s32.totalorder %s18, 0
    %p128 = por %p126, %p127
    %p129 = scmp.ne.s32.totalorder %s115, %s116
    %p130 = scmp.eq.s32.totalorder %s19, 1
    %p131 = por %p129, %p130
    %p133 = scmp.ne.s32.totalorder %s116, %s132
    %p134 = scmp.eq.s32.totalorder %s19, 0
    %p135 = por %p133, %p134
    %s136 = ssub.s32 %s13, %s20
    %p137 = scmp.eq.s32.totalorder %s136, 0
    %s139 = sadd.s32 %s138, 1
    %s140 = scalar_select %p137, %s138, %s139
    %p143 = pneg %p137
    %p144 = scmp.eq.s32.totalorder %s13, 1
    %p145 = por %p143, %p144
    %p146 = scmp.ne.s32.totalorder %s138, %s141
    %p147 = scmp.eq.s32.totalorder %s13, 0
    %p148 = por %p146, %p147
    %p149 = scmp.ne.s32.totalorder %s138, %s141
    %p150 = scmp.eq.s32.totalorder %s18, 1
    %p151 = por %p149, %p150
    %p152 = scmp.ne.s32.totalorder %s141, %s142
    %p153 = scmp.eq.s32.totalorder %s18, 0
    %p154 = por %p152, %p153
    %p155 = scmp.ne.s32.totalorder %s141, %s142
    %p156 = scmp.eq.s32.totalorder %s19, 1
    %p157 = por %p155, %p156
    %p159 = scmp.ne.s32.totalorder %s142, %s158
    %p160 = scmp.eq.s32.totalorder %s19, 0
    %p161 = por %p159, %p160
    %s162 = ssub.s32 %s13, %s20
    %p163 = scmp.eq.s32.totalorder %s162, 0
    %s165 = sadd.s32 %s164, 1
    %s166 = scalar_select %p163, %s164, %s165
    %p169 = pneg %p163
    %p170 = scmp.eq.s32.totalorder %s13, 1
    %p171 = por %p169, %p170
    %p172 = scmp.ne.s32.totalorder %s164, %s167
    %p173 = scmp.eq.s32.totalorder %s13, 0
    %p174 = por %p172, %p173
    %p175 = scmp.ne.s32.totalorder %s164, %s167
    %p176 = scmp.eq.s32.totalorder %s18, 1
    %p177 = por %p175, %p176
    %p178 = scmp.ne.s32.totalorder %s167, %s168
    %p179 = scmp.eq.s32.totalorder %s18, 0
    %p180 = por %p178, %p179
    %p181 = scmp.ne.s32.totalorder %s167, %s168
    %p182 = scmp.eq.s32.totalorder %s19, 1
    %p183 = por %p181, %p182
    %p185 = scmp.ne.s32.totalorder %s168, %s184
    %p186 = scmp.eq.s32.totalorder %s19, 0
    %p187 = por %p185, %p186
    %p188 = scmp.le.s32.totalorder 1, %s13
    %p189 = scmp.lt.s32.totalorder %s13, 3
    %p190 = pnand %p188, %p189
    %p191 = pneg %p190
    // Predicated region
    $region9: #{bottleneck_forward.5} parent=5 // pred_check
      _
    $region10: #{bottleneck_forward.5} parent=5 // pred_check_branch
      %193 = sbr.rel (%p190) target = $region12
    $region11: #{bottleneck_forward.5} parent=5 // pred_region
      %s194 = ssub.s32 %s13, 1
      // Predicated region
      $region13: #{bottleneck_forward.5} parent=11 // pred_check
        %p195 = pneg %p60
      $region14: #{bottleneck_forward.5} parent=11 // pred_check_branch
        %197 = sbr.rel (%p195) target = $region16
      $region15: #{bottleneck_forward.5} parent=11 // pred_region
        _
      $region16: #{bottleneck_forward.5} parent=11 // pred_fallthru
        _
      // Predicated region
      $region17: #{bottleneck_forward.5} parent=11 // pred_check
        %p198 = pneg %p81
      $region18: #{bottleneck_forward.5} parent=11 // pred_check_branch
        %200 = sbr.rel (%p198) target = $region20
      $region19: #{bottleneck_forward.5} parent=11 // pred_region
        _
      $region20: #{bottleneck_forward.5} parent=11 // pred_fallthru
        _
      // Predicated region
      $region21: #{bottleneck_forward.5} parent=11 // pred_check
        %p201 = pneg %p102
      $region22: #{bottleneck_forward.5} parent=11 // pred_check_branch
        %203 = sbr.rel (%p201) target = $region24
      $region23: #{bottleneck_forward.5} parent=11 // pred_region
        _
      $region24: #{bottleneck_forward.5} parent=11 // pred_fallthru
        _
    $region12: #{bottleneck_forward.5} parent=5 // pred_fallthru
      _
    %p204 = scmp.lt.s32.totalorder %s13, 2
    // Predicated region
    $region25: #{bottleneck_forward.5} parent=5 // pred_check
      %p205 = pneg %p204
    $region26: #{bottleneck_forward.5} parent=5 // pred_check_branch
      %207 = sbr.rel (%p205) target = $region28
    $region27: #{bottleneck_forward.5} parent=5 // pred_region
      // Predicated region
      $region29: #{bottleneck_forward.5} parent=27 // pred_check
        %p208 = pneg %p33
      $region30: #{bottleneck_forward.5} parent=27 // pred_check_branch
        %210 = sbr.rel (%p208) target = $region32
      $region31: #{bottleneck_forward.5} parent=27 // pred_region
        %p211 = scmp.lt.s32.totalorder %s13, 1
        %s212 = scalar_select %p211, %s13, 1
        %s213 = smul.addr %s212, 32
        %s214 = smul.addr %s213, 4
        %s215 = scalar_lea.vmem %s0, %s214
      $region32: #{bottleneck_forward.5} parent=27 // pred_fallthru
        _
    $region28: #{bottleneck_forward.5} parent=5 // pred_fallthru
      _
    %p216 = scmp.le.s32.totalorder 1, %s13
    %p217 = scmp.lt.s32.totalorder %s13, 3
    %p218 = pnand %p216, %p217
    %p219 = pneg %p218
    // Predicated region
    $region33: #{bottleneck_forward.5} parent=5 // pred_check
      _
    $region34: #{bottleneck_forward.5} parent=5 // pred_check_branch
      %221 = sbr.rel (%p218) target = $region36
    $region35: #{bottleneck_forward.5} parent=5 // pred_region
      %s222 = ssub.s32 %s13, 1
      %p223 = scmp.lt.s32.totalorder %s18, 1
      %s224 = scalar_select %p223, %s18, 1
      %s225 = smul.addr %s224, 32
      %s226 = smul.addr %s225, 4
      %s227 = scalar_lea.vmem %s0, %s226
      %p228 = pneg %p39
      %p229 = pneg %p36
      %p230 = pneg %p60
      %p231 = pneg %p57
      %p232 = pneg %p81
      %p233 = pneg %p78
      %p234 = pneg %p102
      %p235 = pneg %p99
      %p236 = pneg %p128
      %p237 = pneg %p125
      %p238 = scmp.lt.s32.totalorder %s18, 1
      %s239 = scalar_select %p238, %s18, 1
      %s240 = smul.addr %s239, 32
      %s241 = smul.addr %s240, 4
      %s242 = scalar_lea.vmem %s4, %s241
      %p243 = pneg %p154
      %p244 = pneg %p151
      %p245 = scmp.lt.s32.totalorder %s18, 1
      %s246 = scalar_select %p245, %s18, 1
      %s247 = scalar_lea.vmem %s5, %s246
      %p248 = pneg %p180
      %p249 = pneg %p177
      %p250 = scmp.lt.s32.totalorder %s18, 1
      %s251 = scalar_select %p250, %s18, 1
      %s252 = scalar_lea.vmem %s6, %s251
      %p253 = scmp.lt.s32.totalorder %s18, 1
      %s254 = scalar_select %p253, %s18, 1
      %s255 = smul.addr %s254, 32
      %s256 = smul.addr %s255, 4
      %s257 = scalar_lea.vmem %s0, %s256
      %p258 = scmp.lt.s32.totalorder %s18, 1
      %s259 = scalar_select %p258, %s18, 1
      %s260 = smul.addr %s259, 32
      %s261 = smul.addr %s260, 4
      %s262 = scalar_lea.vmem %s4, %s261
      %p263 = scmp.lt.s32.totalorder %s18, 1
      %s264 = scalar_select %p263, %s18, 1
      %s265 = scalar_lea.vmem %s5, %s264
      %p266 = scmp.lt.s32.totalorder %s18, 1
      %s267 = scalar_select %p266, %s18, 1
      %s268 = scalar_lea.vmem %s6, %s267
      %p270 = scmp.eq.s32.totalorder %s18, 0
      // Predicated region
      $region37: #{bottleneck_forward.5} parent=35 // pred_check
        %p271 = pneg %p270
      $region38: #{bottleneck_forward.5} parent=35 // pred_check_branch
        %273 = sbr.rel (%p271) target = $region40
      $region39: #{bottleneck_forward.5} parent=35 // pred_region
        %274 = vst [vmem:[#allocation2] sm:$0xff] 0.0
        %275 = vst [vmem:[#allocation2 + $0x8] sm:$0xff] 0.0
        %276 = vst [vmem:[#allocation2 + $0x10] sm:$0xff] 0.0
        %277 = vst [vmem:[#allocation2 + $0x18] sm:$0xff] 0.0
        %278 = vst [vmem:[#allocation2 + $0x20] sm:$0xff] 0.0
        %279 = vst [vmem:[#allocation2 + $0x28] sm:$0xff] 0.0
        %280 = vst [vmem:[#allocation2 + $0x30] sm:$0xff] 0.0
        %281 = vst [vmem:[#allocation2 + $0x38] sm:$0xff] 0.0
        %282 = vst [vmem:[#allocation2 + $0x40] sm:$0xff] 0.0
        %283 = vst [vmem:[#allocation2 + $0x48] sm:$0xff] 0.0
        %284 = vst [vmem:[#allocation2 + $0x50] sm:$0xff] 0.0
        %285 = vst [vmem:[#allocation2 + $0x58] sm:$0xff] 0.0
        %286 = vst [vmem:[#allocation2 + $0x60] sm:$0xff] 0.0
        %287 = vst [vmem:[#allocation2 + $0x68] sm:$0xff] 0.0
        %288 = vst [vmem:[#allocation2 + $0x70] sm:$0xff] 0.0
        %289 = vst [vmem:[#allocation2 + $0x78] sm:$0xff] 0.0
        %290 = vst [vmem:[#allocation2 + $0x80] sm:$0xff] 0.0
        %291 = vst [vmem:[#allocation2 + $0x88] sm:$0xff] 0.0
        %292 = vst [vmem:[#allocation2 + $0x90] sm:$0xff] 0.0
        %293 = vst [vmem:[#allocation2 + $0x98] sm:$0xff] 0.0
        %294 = vst [vmem:[#allocation2 + $0xa0] sm:$0xff] 0.0
        %295 = vst [vmem:[#allocation2 + $0xa8] sm:$0xff] 0.0
        %296 = vst [vmem:[#allocation2 + $0xb0] sm:$0xff] 0.0
        %297 = vst [vmem:[#allocation2 + $0xb8] sm:$0xff] 0.0
        %298 = vst [vmem:[#allocation2 + $0xc0] sm:$0xff] 0.0
        %299 = vst [vmem:[#allocation2 + $0xc8] sm:$0xff] 0.0
        %300 = vst [vmem:[#allocation2 + $0xd0] sm:$0xff] 0.0
        %301 = vst [vmem:[#allocation2 + $0xd8] sm:$0xff] 0.0
        %302 = vst [vmem:[#allocation2 + $0xe0] sm:$0xff] 0.0
        %303 = vst [vmem:[#allocation2 + $0xe8] sm:$0xff] 0.0
        %304 = vst [vmem:[#allocation2 + $0xf0] sm:$0xff] 0.0
        %305 = vst [vmem:[#allocation2 + $0xf8] sm:$0xff] 0.0
        %306 = vst [vmem:[#allocation2 + $0x100] sm:$0xff] 0.0
        %307 = vst [vmem:[#allocation2 + $0x108] sm:$0xff] 0.0
        %308 = vst [vmem:[#allocation2 + $0x110] sm:$0xff] 0.0
        %309 = vst [vmem:[#allocation2 + $0x118] sm:$0xff] 0.0
        %310 = vst [vmem:[#allocation2 + $0x120] sm:$0xff] 0.0
        %311 = vst [vmem:[#allocation2 + $0x128] sm:$0xff] 0.0
      $region40: #{bottleneck_forward.5} parent=35 // pred_fallthru
        _
      %v312 = vld [vmem:[%s257] sm:$0xf]
      %v313 = vld [vmem:[%s257 + $0x4] sm:$0xf]
      %v314 = vld [vmem:[%s257 + $0x8] sm:$0xf]
      %v315 = vld [vmem:[%s257 + $0xc] sm:$0xf]
      %v316 = vld [vmem:[%s257 + $0x10] sm:$0xf]
      %v317 = vld [vmem:[%s257 + $0x14] sm:$0xf]
      %v318 = vld [vmem:[%s257 + $0x18] sm:$0xf]
      %v319 = vld [vmem:[%s257 + $0x1c] sm:$0xf]
      %v320 = vld [vmem:[%s257 + $0x20] sm:$0xf]
      %v321 = vld [vmem:[%s257 + $0x24] sm:$0xf]
      %v322 = vld [vmem:[%s257 + $0x28] sm:$0xf]
      %v323 = vld [vmem:[%s257 + $0x2c] sm:$0xf]
      %v324 = vld [vmem:[%s257 + $0x30] sm:$0xf]
      %v325 = vld [vmem:[%s257 + $0x34] sm:$0xf]
      %v326 = vld [vmem:[%s257 + $0x38] sm:$0xf]
      %v327 = vld [vmem:[%s257 + $0x3c] sm:$0xf]
      %v328 = vld [vmem:[%s257 + $0x40] sm:$0xf]
      %v329 = vld [vmem:[%s257 + $0x44] sm:$0xf]
      %v330 = vld [vmem:[%s257 + $0x48] sm:$0xf]
      %v331 = vld [vmem:[%s257 + $0x4c] sm:$0xf]
      %v332 = vld [vmem:[%s257 + $0x50] sm:$0xf]
      %v333 = vld [vmem:[%s257 + $0x54] sm:$0xf]
      %v334 = vld [vmem:[%s257 + $0x58] sm:$0xf]
      %v335 = vld [vmem:[%s257 + $0x5c] sm:$0xf]
      %v336 = vld [vmem:[%s257 + $0x60] sm:$0xf]
      %v337 = vld [vmem:[%s257 + $0x64] sm:$0xf]
      %v338 = vld [vmem:[%s257 + $0x68] sm:$0xf]
      %v339 = vld [vmem:[%s257 + $0x6c] sm:$0xf]
      %v340 = vld [vmem:[%s257 + $0x70] sm:$0xf]
      %v341 = vld [vmem:[%s257 + $0x74] sm:$0xf]
      %v342 = vld [vmem:[%s257 + $0x78] sm:$0xf]
      %v343 = vld [vmem:[%s257 + $0x7c] sm:$0xf]
      %v344 = vunpack.c.l.bf16 %v312
      %v345 = vunpack.c.l.bf16 %v313
      %v346 = vunpack.c.l.bf16 %v314
      %v347 = vunpack.c.l.bf16 %v315
      %v348 = vunpack.c.l.bf16 %v316
      %v349 = vunpack.c.l.bf16 %v317
      %v350 = vunpack.c.l.bf16 %v318
      %v351 = vunpack.c.l.bf16 %v319
      %v352 = vunpack.c.l.bf16 %v320
      %v353 = vunpack.c.l.bf16 %v321
      %v354 = vunpack.c.l.bf16 %v322
      %v355 = vunpack.c.l.bf16 %v323
      %v356 = vunpack.c.l.bf16 %v324
      %v357 = vunpack.c.l.bf16 %v325
      %v358 = vunpack.c.l.bf16 %v326
      %v359 = vunpack.c.l.bf16 %v327
      %v360 = vunpack.c.l.bf16 %v328
      %v361 = vunpack.c.l.bf16 %v329
      %v362 = vunpack.c.l.bf16 %v330
      %v363 = vunpack.c.l.bf16 %v331
      %v364 = vunpack.c.l.bf16 %v332
      %v365 = vunpack.c.l.bf16 %v333
      %v366 = vunpack.c.l.bf16 %v334
      %v367 = vunpack.c.l.bf16 %v335
      %v368 = vunpack.c.l.bf16 %v336
      %v369 = vunpack.c.l.bf16 %v337
      %v370 = vunpack.c.l.bf16 %v338
      %v371 = vunpack.c.l.bf16 %v339
      %v372 = vunpack.c.l.bf16 %v340
      %v373 = vunpack.c.l.bf16 %v341
      %v374 = vunpack.c.l.bf16 %v342
      %v375 = vunpack.c.l.bf16 %v343
      %v376 = vld [vmem:[%s1] sm:$0x1]
      %v378 = vlaneseq
      %v379 = vshrl.u32 %v378, 7
      %v380 = vsub.s32 0, %v379
      %v381 = vrot.slane %v376, %v380
      %v383 = vmul.f32 %v344, %v381
      %v384 = vmul.f32 %v345, %v381
      %v385 = vmul.f32 %v346, %v381
      %v386 = vmul.f32 %v347, %v381
      %v387 = vmul.f32 %v348, %v381
      %v388 = vmul.f32 %v349, %v381
      %v389 = vmul.f32 %v350, %v381
      %v390 = vmul.f32 %v351, %v381
      %v391 = vmul.f32 %v352, %v381
      %v392 = vmul.f32 %v353, %v381
      %v393 = vmul.f32 %v354, %v381
      %v394 = vmul.f32 %v355, %v381
      %v395 = vmul.f32 %v356, %v381
      %v396 = vmul.f32 %v357, %v381
      %v397 = vmul.f32 %v358, %v381
      %v398 = vmul.f32 %v359, %v381
      %v399 = vmul.f32 %v360, %v381
      %v400 = vmul.f32 %v361, %v381
      %v401 = vmul.f32 %v362, %v381
      %v402 = vmul.f32 %v363, %v381
      %v403 = vmul.f32 %v364, %v381
      %v404 = vmul.f32 %v365, %v381
      %v405 = vmul.f32 %v366, %v381
      %v406 = vmul.f32 %v367, %v381
      %v407 = vmul.f32 %v368, %v381
      %v408 = vmul.f32 %v369, %v381
      %v409 = vmul.f32 %v370, %v381
      %v410 = vmul.f32 %v371, %v381
      %v411 = vmul.f32 %v372, %v381
      %v412 = vmul.f32 %v373, %v381
      %v413 = vmul.f32 %v374, %v381
      %v414 = vmul.f32 %v375, %v381
      %v415 = vld [vmem:[%s2] sm:$0x1]
      %v417 = vlaneseq
      %v418 = vshrl.u32 %v417, 7
      %v419 = vsub.s32 0, %v418
      %v420 = vrot.slane %v415, %v419
      %v422 = vadd.f32 %v383, %v420
      %v423 = vadd.f32 %v384, %v420
      %v424 = vadd.f32 %v385, %v420
      %v425 = vadd.f32 %v386, %v420
      %v426 = vadd.f32 %v387, %v420
      %v427 = vadd.f32 %v388, %v420
      %v428 = vadd.f32 %v389, %v420
      %v429 = vadd.f32 %v390, %v420
      %v430 = vadd.f32 %v391, %v420
      %v431 = vadd.f32 %v392, %v420
      %v432 = vadd.f32 %v393, %v420
      %v433 = vadd.f32 %v394, %v420
      %v434 = vadd.f32 %v395, %v420
      %v435 = vadd.f32 %v396, %v420
      %v436 = vadd.f32 %v397, %v420
      %v437 = vadd.f32 %v398, %v420
      %v438 = vadd.f32 %v399, %v420
      %v439 = vadd.f32 %v400, %v420
      %v440 = vadd.f32 %v401, %v420
      %v441 = vadd.f32 %v402, %v420
      %v442 = vadd.f32 %v403, %v420
      %v443 = vadd.f32 %v404, %v420
      %v444 = vadd.f32 %v405, %v420
      %v445 = vadd.f32 %v406, %v420
      %v446 = vadd.f32 %v407, %v420
      %v447 = vadd.f32 %v408, %v420
      %v448 = vadd.f32 %v409, %v420
      %v449 = vadd.f32 %v410, %v420
      %v450 = vadd.f32 %v411, %v420
      %v451 = vadd.f32 %v412, %v420
      %v452 = vadd.f32 %v413, %v420
      %v453 = vadd.f32 %v414, %v420
      %v454 = vmax.f32 %v422, 0.0
      %v455 = vmax.f32 %v423, 0.0
      %v456 = vmax.f32 %v424, 0.0
      %v457 = vmax.f32 %v425, 0.0
      %v458 = vmax.f32 %v426, 0.0
      %v459 = vmax.f32 %v427, 0.0
      %v460 = vmax.f32 %v428, 0.0
      %v461 = vmax.f32 %v429, 0.0
      %v462 = vmax.f32 %v430, 0.0
      %v463 = vmax.f32 %v431, 0.0
      %v464 = vmax.f32 %v432, 0.0
      %v465 = vmax.f32 %v433, 0.0
      %v466 = vmax.f32 %v434, 0.0
      %v467 = vmax.f32 %v435, 0.0
      %v468 = vmax.f32 %v436, 0.0
      %v469 = vmax.f32 %v437, 0.0
      %v470 = vmax.f32 %v438, 0.0
      %v471 = vmax.f32 %v439, 0.0
      %v472 = vmax.f32 %v440, 0.0
      %v473 = vmax.f32 %v441, 0.0
      %v474 = vmax.f32 %v442, 0.0
      %v475 = vmax.f32 %v443, 0.0
      %v476 = vmax.f32 %v444, 0.0
      %v477 = vmax.f32 %v445, 0.0
      %v478 = vmax.f32 %v446, 0.0
      %v479 = vmax.f32 %v447, 0.0
      %v480 = vmax.f32 %v448, 0.0
      %v481 = vmax.f32 %v449, 0.0
      %v482 = vmax.f32 %v450, 0.0
      %v483 = vmax.f32 %v451, 0.0
      %v484 = vmax.f32 %v452, 0.0
      %v485 = vmax.f32 %v453, 0.0
      %486 = vst [vmem:[#allocation2 + $0x18] sm:$0xff] %v454
      %487 = vst [vmem:[#allocation2 + $0x20] sm:$0xff] %v455
      %488 = vst [vmem:[#allocation2 + $0x28] sm:$0xff] %v456
      %489 = vst [vmem:[#allocation2 + $0x30] sm:$0xff] %v457
      %490 = vst [vmem:[#allocation2 + $0x38] sm:$0xff] %v458
      %491 = vst [vmem:[#allocation2 + $0x40] sm:$0xff] %v459
      %492 = vst [vmem:[#allocation2 + $0x48] sm:$0xff] %v460
      %493 = vst [vmem:[#allocation2 + $0x50] sm:$0xff] %v461
      %494 = vst [vmem:[#allocation2 + $0x58] sm:$0xff] %v462
      %495 = vst [vmem:[#allocation2 + $0x60] sm:$0xff] %v463
      %496 = vst [vmem:[#allocation2 + $0x68] sm:$0xff] %v464
      %497 = vst [vmem:[#allocation2 + $0x70] sm:$0xff] %v465
      %498 = vst [vmem:[#allocation2 + $0x78] sm:$0xff] %v466
      %499 = vst [vmem:[#allocation2 + $0x80] sm:$0xff] %v467
      %500 = vst [vmem:[#allocation2 + $0x88] sm:$0xff] %v468
      %501 = vst [vmem:[#allocation2 + $0x90] sm:$0xff] %v469
      %502 = vst [vmem:[#allocation2 + $0x98] sm:$0xff] %v470
      %503 = vst [vmem:[#allocation2 + $0xa0] sm:$0xff] %v471
      %504 = vst [vmem:[#allocation2 + $0xa8] sm:$0xff] %v472
      %505 = vst [vmem:[#allocation2 + $0xb0] sm:$0xff] %v473
      %506 = vst [vmem:[#allocation2 + $0xb8] sm:$0xff] %v474
      %507 = vst [vmem:[#allocation2 + $0xc0] sm:$0xff] %v475
      %508 = vst [vmem:[#allocation2 + $0xc8] sm:$0xff] %v476
      %509 = vst [vmem:[#allocation2 + $0xd0] sm:$0xff] %v477
      %510 = vst [vmem:[#allocation2 + $0xd8] sm:$0xff] %v478
      %511 = vst [vmem:[#allocation2 + $0xe0] sm:$0xff] %v479
      %512 = vst [vmem:[#allocation2 + $0xe8] sm:$0xff] %v480
      %513 = vst [vmem:[#allocation2 + $0xf0] sm:$0xff] %v481
      %514 = vst [vmem:[#allocation2 + $0xf8] sm:$0xff] %v482
      %515 = vst [vmem:[#allocation2 + $0x100] sm:$0xff] %v483
      %516 = vst [vmem:[#allocation2 + $0x108] sm:$0xff] %v484
      %517 = vst [vmem:[#allocation2 + $0x110] sm:$0xff] %v485
      %v518 = vlaneseq
      %v519 = vshrl.u32 %v518, 7
      %v520 = vadd.s32 %v519, 8
      %v521 = vadd.s32 %v519, 16
      %v522 = vadd.s32 %v519, 24
      %v523 = vadd.s32 %v519, 32
      %v524 = vadd.s32 %v519, 40
      %v525 = vadd.s32 %v519, 48
      %v526 = vadd.s32 %v519, 56
      %v527 = vadd.s32 %v519, 64
      %v528 = vadd.s32 %v519, 72
      %v529 = vadd.s32 %v519, 80
      %v530 = vadd.s32 %v519, 88
      %v531 = vadd.s32 %v519, 96
      %v532 = vadd.s32 %v519, 104
      %v533 = vadd.s32 %v519, 112
      %v534 = vadd.s32 %v519, 120
      %v535 = vadd.s32 %v519, 128
      %v536 = vadd.s32 %v519, 136
      %v537 = vadd.s32 %v519, 144
      %v538 = vadd.s32 %v519, 152
      %v539 = vadd.s32 %v519, 160
      %v540 = vadd.s32 %v519, 168
      %v541 = vadd.s32 %v519, 176
      %v542 = vadd.s32 %v519, 184
      %v543 = vadd.s32 %v519, 192
      %v544 = vadd.s32 %v519, 200
      %v545 = vadd.s32 %v519, 208
      %v546 = vadd.s32 %v519, 216
      %v547 = vadd.s32 %v519, 224
      %v548 = vadd.s32 %v519, 232
      %v549 = vadd.s32 %v519, 240
      %v550 = vadd.s32 %v519, 248
      %vm551 = vcmp.lt.s32.totalorder %v519, 0
      %v552 = vsub.s32 0, %v519
      %v553 = vsel %vm551, %v552, %v519
      %v554 = vshrl.u32 %v553, 4
      %v555 = vand.u32 %v553, 15
      %v556 = vsub.s32 0, %v555
      %v557 = vsel %vm551, %v556, %v555
      %vm558 = vcmp.lt.s32.totalorder %v520, 0
      %v559 = vsub.s32 0, %v520
      %v560 = vsel %vm558, %v559, %v520
      %v561 = vshrl.u32 %v560, 4
      %v562 = vand.u32 %v560, 15
      %v563 = vsub.s32 0, %v562
      %v564 = vsel %vm558, %v563, %v562
      %vm565 = vcmp.lt.s32.totalorder %v521, 0
      %v566 = vsub.s32 0, %v521
      %v567 = vsel %vm565, %v566, %v521
      %v568 = vshrl.u32 %v567, 4
      %v569 = vand.u32 %v567, 15
      %v570 = vsub.s32 0, %v569
      %v571 = vsel %vm565, %v570, %v569
      %vm572 = vcmp.lt.s32.totalorder %v522, 0
      %v573 = vsub.s32 0, %v522
      %v574 = vsel %vm572, %v573, %v522
      %v575 = vshrl.u32 %v574, 4
      %v576 = vand.u32 %v574, 15
      %v577 = vsub.s32 0, %v576
      %v578 = vsel %vm572, %v577, %v576
      %vm579 = vcmp.lt.s32.totalorder %v523, 0
      %v580 = vsub.s32 0, %v523
      %v581 = vsel %vm579, %v580, %v523
      %v582 = vshrl.u32 %v581, 4
      %v583 = vand.u32 %v581, 15
      %v584 = vsub.s32 0, %v583
      %v585 = vsel %vm579, %v584, %v583
      %vm586 = vcmp.lt.s32.totalorder %v524, 0
      %v587 = vsub.s32 0, %v524
      %v588 = vsel %vm586, %v587, %v524
      %v589 = vshrl.u32 %v588, 4
      %v590 = vand.u32 %v588, 15
      %v591 = vsub.s32 0, %v590
      %v592 = vsel %vm586, %v591, %v590
      %vm593 = vcmp.lt.s32.totalorder %v525, 0
      %v594 = vsub.s32 0, %v525
      %v595 = vsel %vm593, %v594, %v525
      %v596 = vshrl.u32 %v595, 4
      %v597 = vand.u32 %v595, 15
      %v598 = vsub.s32 0, %v597
      %v599 = vsel %vm593, %v598, %v597
      %vm600 = vcmp.lt.s32.totalorder %v526, 0
      %v601 = vsub.s32 0, %v526
      %v602 = vsel %vm600, %v601, %v526
      %v603 = vshrl.u32 %v602, 4
      %v604 = vand.u32 %v602, 15
      %v605 = vsub.s32 0, %v604
      %v606 = vsel %vm600, %v605, %v604
      %vm607 = vcmp.lt.s32.totalorder %v527, 0
      %v608 = vsub.s32 0, %v527
      %v609 = vsel %vm607, %v608, %v527
      %v610 = vshrl.u32 %v609, 4
      %v611 = vand.u32 %v609, 15
      %v612 = vsub.s32 0, %v611
      %v613 = vsel %vm607, %v612, %v611
      %vm614 = vcmp.lt.s32.totalorder %v528, 0
      %v615 = vsub.s32 0, %v528
      %v616 = vsel %vm614, %v615, %v528
      %v617 = vshrl.u32 %v616, 4
      %v618 = vand.u32 %v616, 15
      %v619 = vsub.s32 0, %v618
      %v620 = vsel %vm614, %v619, %v618
      %vm621 = vcmp.lt.s32.totalorder %v529, 0
      %v622 = vsub.s32 0, %v529
      %v623 = vsel %vm621, %v622, %v529
      %v624 = vshrl.u32 %v623, 4
      %v625 = vand.u32 %v623, 15
      %v626 = vsub.s32 0, %v625
      %v627 = vsel %vm621, %v626, %v625
      %vm628 = vcmp.lt.s32.totalorder %v530, 0
      %v629 = vsub.s32 0, %v530
      %v630 = vsel %vm628, %v629, %v530
      %v631 = vshrl.u32 %v630, 4
      %v632 = vand.u32 %v630, 15
      %v633 = vsub.s32 0, %v632
      %v634 = vsel %vm628, %v633, %v632
      %vm635 = vcmp.lt.s32.totalorder %v531, 0
      %v636 = vsub.s32 0, %v531
      %v637 = vsel %vm635, %v636, %v531
      %v638 = vshrl.u32 %v637, 4
      %v639 = vand.u32 %v637, 15
      %v640 = vsub.s32 0, %v639
      %v641 = vsel %vm635, %v640, %v639
      %vm642 = vcmp.lt.s32.totalorder %v532, 0
      %v643 = vsub.s32 0, %v532
      %v644 = vsel %vm642, %v643, %v532
      %v645 = vshrl.u32 %v644, 4
      %v646 = vand.u32 %v644, 15
      %v647 = vsub.s32 0, %v646
      %v648 = vsel %vm642, %v647, %v646
      %vm649 = vcmp.lt.s32.totalorder %v533, 0
      %v650 = vsub.s32 0, %v533
      %v651 = vsel %vm649, %v650, %v533
      %v652 = vshrl.u32 %v651, 4
      %v653 = vand.u32 %v651, 15
      %v654 = vsub.s32 0, %v653
      %v655 = vsel %vm649, %v654, %v653
      %vm656 = vcmp.lt.s32.totalorder %v534, 0
      %v657 = vsub.s32 0, %v534
      %v658 = vsel %vm656, %v657, %v534
      %v659 = vshrl.u32 %v658, 4
      %v660 = vand.u32 %v658, 15
      %v661 = vsub.s32 0, %v660
      %v662 = vsel %vm656, %v661, %v660
      %vm663 = vcmp.lt.s32.totalorder %v535, 0
      %v664 = vsub.s32 0, %v535
      %v665 = vsel %vm663, %v664, %v535
      %v666 = vshrl.u32 %v665, 4
      %v667 = vand.u32 %v665, 15
      %v668 = vsub.s32 0, %v667
      %v669 = vsel %vm663, %v668, %v667
      %vm670 = vcmp.lt.s32.totalorder %v536, 0
      %v671 = vsub.s32 0, %v536
      %v672 = vsel %vm670, %v671, %v536
      %v673 = vshrl.u32 %v672, 4
      %v674 = vand.u32 %v672, 15
      %v675 = vsub.s32 0, %v674
      %v676 = vsel %vm670, %v675, %v674
      %vm677 = vcmp.lt.s32.totalorder %v537, 0
      %v678 = vsub.s32 0, %v537
      %v679 = vsel %vm677, %v678, %v537
      %v680 = vshrl.u32 %v679, 4
      %v681 = vand.u32 %v679, 15
      %v682 = vsub.s32 0, %v681
      %v683 = vsel %vm677, %v682, %v681
      %vm684 = vcmp.lt.s32.totalorder %v538, 0
      %v685 = vsub.s32 0, %v538
      %v686 = vsel %vm684, %v685, %v538
      %v687 = vshrl.u32 %v686, 4
      %v688 = vand.u32 %v686, 15
      %v689 = vsub.s32 0, %v688
      %v690 = vsel %vm684, %v689, %v688
      %vm691 = vcmp.lt.s32.totalorder %v539, 0
      %v692 = vsub.s32 0, %v539
      %v693 = vsel %vm691, %v692, %v539
      %v694 = vshrl.u32 %v693, 4
      %v695 = vand.u32 %v693, 15
      %v696 = vsub.s32 0, %v695
      %v697 = vsel %vm691, %v696, %v695
      %vm698 = vcmp.lt.s32.totalorder %v540, 0
      %v699 = vsub.s32 0, %v540
      %v700 = vsel %vm698, %v699, %v540
      %v701 = vshrl.u32 %v700, 4
      %v702 = vand.u32 %v700, 15
      %v703 = vsub.s32 0, %v702
      %v704 = vsel %vm698, %v703, %v702
      %vm705 = vcmp.lt.s32.totalorder %v541, 0
      %v706 = vsub.s32 0, %v541
      %v707 = vsel %vm705, %v706, %v541
      %v708 = vshrl.u32 %v707, 4
      %v709 = vand.u32 %v707, 15
      %v710 = vsub.s32 0, %v709
      %v711 = vsel %vm705, %v710, %v709
      %vm712 = vcmp.lt.s32.totalorder %v542, 0
      %v713 = vsub.s32 0, %v542
      %v714 = vsel %vm712, %v713, %v542
      %v715 = vshrl.u32 %v714, 4
      %v716 = vand.u32 %v714, 15
      %v717 = vsub.s32 0, %v716
      %v718 = vsel %vm712, %v717, %v716
      %vm719 = vcmp.lt.s32.totalorder %v543, 0
      %v720 = vsub.s32 0, %v543
      %v721 = vsel %vm719, %v720, %v543
      %v722 = vshrl.u32 %v721, 4
      %v723 = vand.u32 %v721, 15
      %v724 = vsub.s32 0, %v723
      %v725 = vsel %vm719, %v724, %v723
      %vm726 = vcmp.lt.s32.totalorder %v544, 0
      %v727 = vsub.s32 0, %v544
      %v728 = vsel %vm726, %v727, %v544
      %v729 = vshrl.u32 %v728, 4
      %v730 = vand.u32 %v728, 15
      %v731 = vsub.s32 0, %v730
      %v732 = vsel %vm726, %v731, %v730
      %vm733 = vcmp.lt.s32.totalorder %v545, 0
      %v734 = vsub.s32 0, %v545
      %v735 = vsel %vm733, %v734, %v545
      %v736 = vshrl.u32 %v735, 4
      %v737 = vand.u32 %v735, 15
      %v738 = vsub.s32 0, %v737
      %v739 = vsel %vm733, %v738, %v737
      %vm740 = vcmp.lt.s32.totalorder %v546, 0
      %v741 = vsub.s32 0, %v546
      %v742 = vsel %vm740, %v741, %v546
      %v743 = vshrl.u32 %v742, 4
      %v744 = vand.u32 %v742, 15
      %v745 = vsub.s32 0, %v744
      %v746 = vsel %vm740, %v745, %v744
      %vm747 = vcmp.lt.s32.totalorder %v547, 0
      %v748 = vsub.s32 0, %v547
      %v749 = vsel %vm747, %v748, %v547
      %v750 = vshrl.u32 %v749, 4
      %v751 = vand.u32 %v749, 15
      %v752 = vsub.s32 0, %v751
      %v753 = vsel %vm747, %v752, %v751
      %vm754 = vcmp.lt.s32.totalorder %v548, 0
      %v755 = vsub.s32 0, %v548
      %v756 = vsel %vm754, %v755, %v548
      %v757 = vshrl.u32 %v756, 4
      %v758 = vand.u32 %v756, 15
      %v759 = vsub.s32 0, %v758
      %v760 = vsel %vm754, %v759, %v758
      %vm761 = vcmp.lt.s32.totalorder %v549, 0
      %v762 = vsub.s32 0, %v549
      %v763 = vsel %vm761, %v762, %v549
      %v764 = vshrl.u32 %v763, 4
      %v765 = vand.u32 %v763, 15
      %v766 = vsub.s32 0, %v765
      %v767 = vsel %vm761, %v766, %v765
      %vm768 = vcmp.lt.s32.totalorder %v550, 0
      %v769 = vsub.s32 0, %v550
      %v770 = vsel %vm768, %v769, %v550
      %v771 = vshrl.u32 %v770, 4
      %v772 = vand.u32 %v770, 15
      %v773 = vsub.s32 0, %v772
      %v774 = vsel %vm768, %v773, %v772
      %vm775 = vcmp.ne.s32.totalorder %v557, 0
      %vm776 = vcmp.ne.s32.totalorder %v564, 0
      %vm777 = vcmp.ne.s32.totalorder %v571, 0
      %vm778 = vcmp.ne.s32.totalorder %v578, 0
      %vm779 = vcmp.ne.s32.totalorder %v585, 0
      %vm780 = vcmp.ne.s32.totalorder %v592, 0
      %vm781 = vcmp.ne.s32.totalorder %v599, 0
      %vm782 = vcmp.ne.s32.totalorder %v606, 0
      %vm783 = vcmp.ne.s32.totalorder %v613, 0
      %vm784 = vcmp.ne.s32.totalorder %v620, 0
      %vm785 = vcmp.ne.s32.totalorder %v627, 0
      %vm786 = vcmp.ne.s32.totalorder %v634, 0
      %vm787 = vcmp.ne.s32.totalorder %v641, 0
      %vm788 = vcmp.ne.s32.totalorder %v648, 0
      %vm789 = vcmp.ne.s32.totalorder %v655, 0
      %vm790 = vcmp.ne.s32.totalorder %v662, 0
      %vm791 = vcmp.ne.s32.totalorder %v669, 0
      %vm792 = vcmp.ne.s32.totalorder %v676, 0
      %vm793 = vcmp.ne.s32.totalorder %v683, 0
      %vm794 = vcmp.ne.s32.totalorder %v690, 0
      %vm795 = vcmp.ne.s32.totalorder %v697, 0
      %vm796 = vcmp.ne.s32.totalorder %v704, 0
      %vm797 = vcmp.ne.s32.totalorder %v711, 0
      %vm798 = vcmp.ne.s32.totalorder %v718, 0
      %vm799 = vcmp.ne.s32.totalorder %v725, 0
      %vm800 = vcmp.ne.s32.totalorder %v732, 0
      %vm801 = vcmp.ne.s32.totalorder %v739, 0
      %vm802 = vcmp.ne.s32.totalorder %v746, 0
      %vm803 = vcmp.ne.s32.totalorder %v753, 0
      %vm804 = vcmp.ne.s32.totalorder %v760, 0
      %vm805 = vcmp.ne.s32.totalorder %v767, 0
      %vm806 = vcmp.ne.s32.totalorder %v774, 0
      %vm807 = vcmp.lt.s32.totalorder %v557, 0
      %vm808 = vcmp.lt.s32.totalorder %v564, 0
      %vm809 = vcmp.lt.s32.totalorder %v571, 0
      %vm810 = vcmp.lt.s32.totalorder %v578, 0
      %vm811 = vcmp.lt.s32.totalorder %v585, 0
      %vm812 = vcmp.lt.s32.totalorder %v592, 0
      %vm813 = vcmp.lt.s32.totalorder %v599, 0
      %vm814 = vcmp.lt.s32.totalorder %v606, 0
      %vm815 = vcmp.lt.s32.totalorder %v613, 0
      %vm816 = vcmp.lt.s32.totalorder %v620, 0
      %vm817 = vcmp.lt.s32.totalorder %v627, 0
      %vm818 = vcmp.lt.s32.totalorder %v634, 0
      %vm819 = vcmp.lt.s32.totalorder %v641, 0
      %vm820 = vcmp.lt.s32.totalorder %v648, 0
      %vm821 = vcmp.lt.s32.totalorder %v655, 0
      %vm822 = vcmp.lt.s32.totalorder %v662, 0
      %vm823 = vcmp.lt.s32.totalorder %v669, 0
      %vm824 = vcmp.lt.s32.totalorder %v676, 0
      %vm825 = vcmp.lt.s32.totalorder %v683, 0
      %vm826 = vcmp.lt.s32.totalorder %v690, 0
      %vm827 = vcmp.lt.s32.totalorder %v697, 0
      %vm828 = vcmp.lt.s32.totalorder %v704, 0
      %vm829 = vcmp.lt.s32.totalorder %v711, 0
      %vm830 = vcmp.lt.s32.totalorder %v718, 0
      %vm831 = vcmp.lt.s32.totalorder %v725, 0
      %vm832 = vcmp.lt.s32.totalorder %v732, 0
      %vm833 = vcmp.lt.s32.totalorder %v739, 0
      %vm834 = vcmp.lt.s32.totalorder %v746, 0
      %vm835 = vcmp.lt.s32.totalorder %v753, 0
      %vm836 = vcmp.lt.s32.totalorder %v760, 0
      %vm837 = vcmp.lt.s32.totalorder %v767, 0
      %vm838 = vcmp.lt.s32.totalorder %v774, 0
      %vm839 = vmand %vm807, %vm775
      %vm840 = vmand %vm808, %vm776
      %vm841 = vmand %vm809, %vm777
      %vm842 = vmand %vm810, %vm778
      %vm843 = vmand %vm811, %vm779
      %vm844 = vmand %vm812, %vm780
      %vm845 = vmand %vm813, %vm781
      %vm846 = vmand %vm814, %vm782
      %vm847 = vmand %vm815, %vm783
      %vm848 = vmand %vm816, %vm784
      %vm849 = vmand %vm817, %vm785
      %vm850 = vmand %vm818, %vm786
      %vm851 = vmand %vm819, %vm787
      %vm852 = vmand %vm820, %vm788
      %vm853 = vmand %vm821, %vm789
      %vm854 = vmand %vm822, %vm790
      %vm855 = vmand %vm823, %vm791
      %vm856 = vmand %vm824, %vm792
      %vm857 = vmand %vm825, %vm793
      %vm858 = vmand %vm826, %vm794
      %vm859 = vmand %vm827, %vm795
      %vm860 = vmand %vm828, %vm796
      %vm861 = vmand %vm829, %vm797
      %vm862 = vmand %vm830, %vm798
      %vm863 = vmand %vm831, %vm799
      %vm864 = vmand %vm832, %vm800
      %vm865 = vmand %vm833, %vm801
      %vm866 = vmand %vm834, %vm802
      %vm867 = vmand %vm835, %vm803
      %vm868 = vmand %vm836, %vm804
      %vm869 = vmand %vm837, %vm805
      %vm870 = vmand %vm838, %vm806
      %v871 = vadd.s32 %v557, 16
      %v872 = vadd.s32 %v564, 16
      %v873 = vadd.s32 %v571, 16
      %v874 = vadd.s32 %v578, 16
      %v875 = vadd.s32 %v585, 16
      %v876 = vadd.s32 %v592, 16
      %v877 = vadd.s32 %v599, 16
      %v878 = vadd.s32 %v606, 16
      %v879 = vadd.s32 %v613, 16
      %v880 = vadd.s32 %v620, 16
      %v881 = vadd.s32 %v627, 16
      %v882 = vadd.s32 %v634, 16
      %v883 = vadd.s32 %v641, 16
      %v884 = vadd.s32 %v648, 16
      %v885 = vadd.s32 %v655, 16
      %v886 = vadd.s32 %v662, 16
      %v887 = vadd.s32 %v669, 16
      %v888 = vadd.s32 %v676, 16
      %v889 = vadd.s32 %v683, 16
      %v890 = vadd.s32 %v690, 16
      %v891 = vadd.s32 %v697, 16
      %v892 = vadd.s32 %v704, 16
      %v893 = vadd.s32 %v711, 16
      %v894 = vadd.s32 %v718, 16
      %v895 = vadd.s32 %v725, 16
      %v896 = vadd.s32 %v732, 16
      %v897 = vadd.s32 %v739, 16
      %v898 = vadd.s32 %v746, 16
      %v899 = vadd.s32 %v753, 16
      %v900 = vadd.s32 %v760, 16
      %v901 = vadd.s32 %v767, 16
      %v902 = vadd.s32 %v774, 16
      %v903 = vsel %vm839, %v871, %v557
      %v904 = vsel %vm840, %v872, %v564
      %v905 = vsel %vm841, %v873, %v571
      %v906 = vsel %vm842, %v874, %v578
      %v907 = vsel %vm843, %v875, %v585
      %v908 = vsel %vm844, %v876, %v592
      %v909 = vsel %vm845, %v877, %v599
      %v910 = vsel %vm846, %v878, %v606
      %v911 = vsel %vm847, %v879, %v613
      %v912 = vsel %vm848, %v880, %v620
      %v913 = vsel %vm849, %v881, %v627
      %v914 = vsel %vm850, %v882, %v634
      %v915 = vsel %vm851, %v883, %v641
      %v916 = vsel %vm852, %v884, %v648
      %v917 = vsel %vm853, %v885, %v655
      %v918 = vsel %vm854, %v886, %v662
      %v919 = vsel %vm855, %v887, %v669
      %v920 = vsel %vm856, %v888, %v676
      %v921 = vsel %vm857, %v889, %v683
      %v922 = vsel %vm858, %v890, %v690
      %v923 = vsel %vm859, %v891, %v697
      %v924 = vsel %vm860, %v892, %v704
      %v925 = vsel %vm861, %v893, %v711
      %v926 = vsel %vm862, %v894, %v718
      %v927 = vsel %vm863, %v895, %v725
      %v928 = vsel %vm864, %v896, %v732
      %v929 = vsel %vm865, %v897, %v739
      %v930 = vsel %vm866, %v898, %v746
      %v931 = vsel %vm867, %v899, %v753
      %v932 = vsel %vm868, %v900, %v760
      %v933 = vsel %vm869, %v901, %v767
      %v934 = vsel %vm870, %v902, %v774
      %vm935 = vcmp.ge.s32.totalorder %v903, 1
      %vm936 = vcmp.ge.s32.totalorder %v904, 1
      %vm937 = vcmp.ge.s32.totalorder %v905, 1
      %vm938 = vcmp.ge.s32.totalorder %v906, 1
      %vm939 = vcmp.ge.s32.totalorder %v907, 1
      %vm940 = vcmp.ge.s32.totalorder %v908, 1
      %vm941 = vcmp.ge.s32.totalorder %v909, 1
      %vm942 = vcmp.ge.s32.totalorder %v910, 1
      %vm943 = vcmp.ge.s32.totalorder %v911, 1
      %vm944 = vcmp.ge.s32.totalorder %v912, 1
      %vm945 = vcmp.ge.s32.totalorder %v913, 1
      %vm946 = vcmp.ge.s32.totalorder %v914, 1
      %vm947 = vcmp.ge.s32.totalorder %v915, 1
      %vm948 = vcmp.ge.s32.totalorder %v916, 1
      %vm949 = vcmp.ge.s32.totalorder %v917, 1
      %vm950 = vcmp.ge.s32.totalorder %v918, 1
      %vm951 = vcmp.ge.s32.totalorder %v919, 1
      %vm952 = vcmp.ge.s32.totalorder %v920, 1
      %vm953 = vcmp.ge.s32.totalorder %v921, 1
      %vm954 = vcmp.ge.s32.totalorder %v922, 1
      %vm955 = vcmp.ge.s32.totalorder %v923, 1
      %vm956 = vcmp.ge.s32.totalorder %v924, 1
      %vm957 = vcmp.ge.s32.totalorder %v925, 1
      %vm958 = vcmp.ge.s32.totalorder %v926, 1
      %vm959 = vcmp.ge.s32.totalorder %v927, 1
      %vm960 = vcmp.ge.s32.totalorder %v928, 1
      %vm961 = vcmp.ge.s32.totalorder %v929, 1
      %vm962 = vcmp.ge.s32.totalorder %v930, 1
      %vm963 = vcmp.ge.s32.totalorder %v931, 1
      %vm964 = vcmp.ge.s32.totalorder %v932, 1
      %vm965 = vcmp.ge.s32.totalorder %v933, 1
      %vm966 = vcmp.ge.s32.totalorder %v934, 1
      %v967 = vld [vmem:[#allocation2 + $0x7] sm:$0xff]
      %v968 = vld [vmem:[#allocation2 + $0xf] sm:$0xff]
      %v969 = vld [vmem:[#allocation2 + $0x17] sm:$0xff]
      %v970 = vld [vmem:[#allocation2 + $0x1f] sm:$0xff]
      %v971 = vld [vmem:[#allocation2 + $0x27] sm:$0xff]
      %v972 = vld [vmem:[#allocation2 + $0x2f] sm:$0xff]
      %v973 = vld [vmem:[#allocation2 + $0x37] sm:$0xff]
      %v974 = vld [vmem:[#allocation2 + $0x3f] sm:$0xff]
      %v975 = vld [vmem:[#allocation2 + $0x47] sm:$0xff]
      %v976 = vld [vmem:[#allocation2 + $0x4f] sm:$0xff]
      %v977 = vld [vmem:[#allocation2 + $0x57] sm:$0xff]
      %v978 = vld [vmem:[#allocation2 + $0x5f] sm:$0xff]
      %v979 = vld [vmem:[#allocation2 + $0x67] sm:$0xff]
      %v980 = vld [vmem:[#allocation2 + $0x6f] sm:$0xff]
      %v981 = vld [vmem:[#allocation2 + $0x77] sm:$0xff]
      %v982 = vld [vmem:[#allocation2 + $0x7f] sm:$0xff]
      %v983 = vld [vmem:[#allocation2 + $0x87] sm:$0xff]
      %v984 = vld [vmem:[#allocation2 + $0x8f] sm:$0xff]
      %v985 = vld [vmem:[#allocation2 + $0x97] sm:$0xff]
      %v986 = vld [vmem:[#allocation2 + $0x9f] sm:$0xff]
      %v987 = vld [vmem:[#allocation2 + $0xa7] sm:$0xff]
      %v988 = vld [vmem:[#allocation2 + $0xaf] sm:$0xff]
      %v989 = vld [vmem:[#allocation2 + $0xb7] sm:$0xff]
      %v990 = vld [vmem:[#allocation2 + $0xbf] sm:$0xff]
      %v991 = vld [vmem:[#allocation2 + $0xc7] sm:$0xff]
      %v992 = vld [vmem:[#allocation2 + $0xcf] sm:$0xff]
      %v993 = vld [vmem:[#allocation2 + $0xd7] sm:$0xff]
      %v994 = vld [vmem:[#allocation2 + $0xdf] sm:$0xff]
      %v995 = vld [vmem:[#allocation2 + $0xe7] sm:$0xff]
      %v996 = vld [vmem:[#allocation2 + $0xef] sm:$0xff]
      %v997 = vld [vmem:[#allocation2 + $0xf7] sm:$0xff]
      %v998 = vld [vmem:[#allocation2 + $0xff] sm:$0xff]
      %v999 = vld [vmem:[#allocation2 + $0x107] sm:$0xff]
      %v1000 = vld [vmem:[#allocation2 + $0x10f] sm:$0xff]
      %v1001 = vld [vmem:[#allocation2 + $0x117] sm:$0xff]
      %v1002 = vld [vmem:[#allocation2 + $0x11f] sm:$0xff]
      %v1003 = vpack.c.bf16 %v968, %v967
      %v1004 = vpack.c.bf16 %v970, %v969
      %v1005 = vpack.c.bf16 %v972, %v971
      %v1006 = vpack.c.bf16 %v974, %v973
      %v1007 = vpack.c.bf16 %v976, %v975
      %v1008 = vpack.c.bf16 %v978, %v977
      %v1009 = vpack.c.bf16 %v980, %v979
      %v1010 = vpack.c.bf16 %v982, %v981
      %v1011 = vpack.c.bf16 %v984, %v983
      %v1012 = vpack.c.bf16 %v986, %v985
      %v1013 = vpack.c.bf16 %v988, %v987
      %v1014 = vpack.c.bf16 %v990, %v989
      %v1015 = vpack.c.bf16 %v992, %v991
      %v1016 = vpack.c.bf16 %v994, %v993
      %v1017 = vpack.c.bf16 %v996, %v995
      %v1018 = vpack.c.bf16 %v998, %v997
      %v1019 = vpack.c.bf16 %v1000, %v999
      %v1020 = vpack.c.bf16 %v1002, %v1001
      %v1021 = vld [vmem:[%s3] sm:$0xf]
      %v1022 = vld [vmem:[%s3 + $0x4] sm:$0xf]
      %v1023 = vld [vmem:[%s3 + $0x8] sm:$0xf]
      %v1024 = vld [vmem:[%s3 + $0xc] sm:$0xf]
      %v1025 = vld [vmem:[%s3 + $0x10] sm:$0xf]
      %v1026 = vld [vmem:[%s3 + $0x14] sm:$0xf]
      %v1027 = vld [vmem:[%s3 + $0x18] sm:$0xf]
      %v1028 = vld [vmem:[%s3 + $0x1c] sm:$0xf]
      %v1029 = vld [vmem:[%s3 + $0x20] sm:$0xf]
      %v1030 = vld [vmem:[%s3 + $0x24] sm:$0xf]
      %v1031 = vld [vmem:[%s3 + $0x28] sm:$0xf]
      %v1032 = vld [vmem:[%s3 + $0x2c] sm:$0xf]
      %v1033 = vld [vmem:[%s3 + $0x30] sm:$0xf]
      %v1034 = vld [vmem:[%s3 + $0x34] sm:$0xf]
      %v1035 = vld [vmem:[%s3 + $0x38] sm:$0xf]
      %v1036 = vld [vmem:[%s3 + $0x3c] sm:$0xf]
      %v1037 = vld [vmem:[%s3 + $0x40] sm:$0xf]
      %v1038 = vld [vmem:[%s3 + $0x44] sm:$0xf]
      %v1039 = vld [vmem:[%s3 + $0x48] sm:$0xf]
      %v1040 = vld [vmem:[%s3 + $0x4c] sm:$0xf]
      %v1041 = vld [vmem:[%s3 + $0x50] sm:$0xf]
      %v1042 = vld [vmem:[%s3 + $0x54] sm:$0xf]
      %v1043 = vld [vmem:[%s3 + $0x58] sm:$0xf]
      %v1044 = vld [vmem:[%s3 + $0x5c] sm:$0xf]
      %v1045 = vld [vmem:[%s3 + $0x60] sm:$0xf]
      %v1046 = vld [vmem:[%s3 + $0x64] sm:$0xf]
      %v1047 = vld [vmem:[%s3 + $0x68] sm:$0xf]
      %v1048 = vld [vmem:[%s3 + $0x6c] sm:$0xf]
      %v1049 = vld [vmem:[%s3 + $0x70] sm:$0xf]
      %v1050 = vld [vmem:[%s3 + $0x74] sm:$0xf]
      %v1051 = vld [vmem:[%s3 + $0x78] sm:$0xf]
      %v1052 = vld [vmem:[%s3 + $0x7c] sm:$0xf]
      %v1053 = vld [vmem:[%s3 + $0x80] sm:$0xf]
      %v1054 = vld [vmem:[%s3 + $0x84] sm:$0xf]
      %v1055 = vld [vmem:[%s3 + $0x88] sm:$0xf]
      %v1056 = vld [vmem:[%s3 + $0x8c] sm:$0xf]
      %v1057 = vld [vmem:[%s3 + $0x90] sm:$0xf]
      %v1058 = vld [vmem:[%s3 + $0x94] sm:$0xf]
      %v1059 = vld [vmem:[%s3 + $0x98] sm:$0xf]
      %v1060 = vld [vmem:[%s3 + $0x9c] sm:$0xf]
      %v1061 = vld [vmem:[%s3 + $0xa0] sm:$0xf]
      %v1062 = vld [vmem:[%s3 + $0xa4] sm:$0xf]
      %v1063 = vld [vmem:[%s3 + $0xa8] sm:$0xf]
      %v1064 = vld [vmem:[%s3 + $0xac] sm:$0xf]
      %v1065 = vld [vmem:[%s3 + $0xb0] sm:$0xf]
      %v1066 = vld [vmem:[%s3 + $0xb4] sm:$0xf]
      %v1067 = vld [vmem:[%s3 + $0xb8] sm:$0xf]
      %v1068 = vld [vmem:[%s3 + $0xbc] sm:$0xf]
      %v1117 = vunpack.c.l.b16 %v1021
      %v1118 = vunpack.c.l.b16 %v1022
      %v1119 = vunpack.c.l.b16 %v1023
      %v1120 = vunpack.c.l.b16 %v1024
      %v1121 = vunpack.c.l.b16 %v1025
      %v1122 = vunpack.c.l.b16 %v1026
      %v1123 = vunpack.c.l.b16 %v1027
      %v1124 = vunpack.c.l.b16 %v1028
      %v1125 = vunpack.c.l.b16 %v1029
      %v1126 = vunpack.c.l.b16 %v1030
      %v1127 = vunpack.c.l.b16 %v1031
      %v1128 = vunpack.c.l.b16 %v1032
      %v1129 = vunpack.c.l.b16 %v1033
      %v1130 = vunpack.c.l.b16 %v1034
      %v1131 = vunpack.c.l.b16 %v1035
      %v1132 = vunpack.c.l.b16 %v1036
      %v1133 = vunpack.c.l.b16 %v1037
      %v1134 = vunpack.c.l.b16 %v1038
      %v1135 = vunpack.c.l.b16 %v1039
      %v1136 = vunpack.c.l.b16 %v1040
      %v1137 = vunpack.c.l.b16 %v1041
      %v1138 = vunpack.c.l.b16 %v1042
      %v1139 = vunpack.c.l.b16 %v1043
      %v1140 = vunpack.c.l.b16 %v1044
      %v1141 = vunpack.c.l.b16 %v1045
      %v1142 = vunpack.c.l.b16 %v1046
      %v1143 = vunpack.c.l.b16 %v1047
      %v1144 = vunpack.c.l.b16 %v1048
      %v1145 = vunpack.c.l.b16 %v1049
      %v1146 = vunpack.c.l.b16 %v1050
      %v1147 = vunpack.c.l.b16 %v1051
      %v1148 = vunpack.c.l.b16 %v1052
      %v1149 = vunpack.c.l.b16 %v1053
      %v1150 = vunpack.c.l.b16 %v1054
      %v1151 = vunpack.c.l.b16 %v1055
      %v1152 = vunpack.c.l.b16 %v1056
      %v1153 = vunpack.c.l.b16 %v1057
      %v1154 = vunpack.c.l.b16 %v1058
      %v1155 = vunpack.c.l.b16 %v1059
      %v1156 = vunpack.c.l.b16 %v1060
      %v1157 = vunpack.c.l.b16 %v1061
      %v1158 = vunpack.c.l.b16 %v1062
      %v1159 = vunpack.c.l.b16 %v1063
      %v1160 = vunpack.c.l.b16 %v1064
      %v1161 = vunpack.c.l.b16 %v1065
      %v1162 = vunpack.c.l.b16 %v1066
      %v1163 = vunpack.c.l.b16 %v1067
      %v1164 = vunpack.c.l.b16 %v1068
      %v1165 = vpack.c.b16 %v1118, %v1117
      %v1166 = vpack.c.b16 %v1120, %v1119
      %v1167 = vpack.c.b16 %v1122, %v1121
      %v1168 = vpack.c.b16 %v1124, %v1123
      %v1169 = vpack.c.b16 %v1126, %v1125
      %v1170 = vpack.c.b16 %v1128, %v1127
      %v1171 = vpack.c.b16 %v1130, %v1129
      %v1172 = vpack.c.b16 %v1132, %v1131
      %v1173 = vpack.c.b16 %v1134, %v1133
      %v1174 = vpack.c.b16 %v1136, %v1135
      %v1175 = vpack.c.b16 %v1138, %v1137
      %v1176 = vpack.c.b16 %v1140, %v1139
      %v1177 = vpack.c.b16 %v1142, %v1141
      %v1178 = vpack.c.b16 %v1144, %v1143
      %v1179 = vpack.c.b16 %v1146, %v1145
      %v1180 = vpack.c.b16 %v1148, %v1147
      %v1181 = vpack.c.b16 %v1150, %v1149
      %v1182 = vpack.c.b16 %v1152, %v1151
      %v1183 = vpack.c.b16 %v1154, %v1153
      %v1184 = vpack.c.b16 %v1156, %v1155
      %v1185 = vpack.c.b16 %v1158, %v1157
      %v1186 = vpack.c.b16 %v1160, %v1159
      %v1187 = vpack.c.b16 %v1162, %v1161
      %v1188 = vpack.c.b16 %v1164, %v1163
      %1213 = vmatprep.subr.bf16.mxu0 0
      %1214 = vmatpush1.bf16.msra.mxu0 %v1165
      %1215 = vmatprep.subr.bf16.mxu0 0
      %1216 = vmatpush1.bf16.msra.mxu0 %v1166
      %1217 = vmatprep.subr.bf16.mxu0 0
      %1218 = vmatpush1.bf16.msra.mxu0 %v1167
      %1219 = vmatprep.subr.bf16.mxu0 0
      %1220 = vmatpush1.bf16.msra.mxu0 %v1168
      %1221 = vmatprep.subr.bf16.mxu0 0
      %1222 = vmatpush1.bf16.msra.mxu0 %v1169
      %1223 = vmatprep.subr.bf16.mxu0 0
      %1224 = vmatpush1.bf16.msra.mxu0 %v1170
      %1225 = vmatprep.subr.bf16.mxu0 0
      %1226 = vmatpush1.bf16.msra.mxu0 %v1171
      %1227 = vmatprep.subr.bf16.mxu0 0
      %1228 = vmatpush1.bf16.msra.mxu0 %v1172
      %1229 = vmatprep.subr.bf16.mxu0 0
      %1230 = vmatpush1.bf16.msra.mxu0 %v1173
      %1231 = vmatprep.subr.bf16.mxu0 0
      %1232 = vmatpush1.bf16.msra.mxu0 %v1174
      %1233 = vmatprep.subr.bf16.mxu0 0
      %1234 = vmatpush1.bf16.msra.mxu0 %v1175
      %1235 = vmatprep.subr.bf16.mxu0 0
      %1236 = vmatpush1.bf16.msra.mxu0 %v1176
      %1237 = vmatprep.subr.bf16.mxu0 0
      %1238 = vmatpush1.bf16.msra.mxu0 %v1177
      %1239 = vmatprep.subr.bf16.mxu0 0
      %1240 = vmatpush1.bf16.msra.mxu0 %v1178
      %1241 = vmatprep.subr.bf16.mxu0 0
      %1242 = vmatpush1.bf16.msra.mxu0 %v1179
      %1243 = vmatprep.subr.bf16.mxu0 0
      %1244 = vmatpush1.bf16.msra.mxu0 %v1180
      %1245 = vmatprep.mubr.bf16.mxu0 %v1004
      %1246 = vmatmul.mubr.bf16.gmra.mrb[0].mxu0 %v1003
      %v1247 = vpop.f32.mrb[0].mxu0
      %v1248 = vadd.f32 0.0, %v1247
      %v1249 = vpop.f32.mrb[0].mxu0
      %v1250 = vpop.f32.mrb[0].mxu0
      %v1251 = vadd.f32 0.0, %v1250
      %v1252 = vpop.f32.mrb[0].mxu0
      %1253 = vmatprep.mubr.bf16.mxu0 %v1005
      %1254 = vmatmul.mubr.bf16.gmra.mrb[0].mxu0 %v1004
      %v1255 = vpop.f32.mrb[0].mxu0
      %v1256 = vadd.f32 0.0, %v1255
      %v1257 = vpop.f32.mrb[0].mxu0
      %v1258 = vpop.f32.mrb[0].mxu0
      %v1259 = vadd.f32 0.0, %v1258
      %v1260 = vpop.f32.mrb[0].mxu0
      %1261 = vmatprep.mubr.bf16.mxu0 %v1006
      %1262 = vmatmul.mubr.bf16.gmra.mrb[0].mxu0 %v1005
      %v1263 = vpop.f32.mrb[0].mxu0
      %v1264 = vadd.f32 0.0, %v1263
      %v1265 = vpop.f32.mrb[0].mxu0
      %v1266 = vpop.f32.mrb[0].mxu0
      %v1267 = vadd.f32 0.0, %v1266
      %v1268 = vpop.f32.mrb[0].mxu0
      %1269 = vmatprep.mubr.bf16.mxu0 %v1007
      %1270 = vmatmul.mubr.bf16.gmra.mrb[0].mxu0 %v1006
      %v1271 = vpop.f32.mrb[0].mxu0
      %v1272 = vadd.f32 0.0, %v1271
      %v1273 = vpop.f32.mrb[0].mxu0
      %v1274 = vpop.f32.mrb[0].mxu0
      %v1275 = vadd.f32 0.0, %v1274
      %v1276 = vpop.f32.mrb[0].mxu0
      %1277 = vmatprep.mubr.bf16.mxu0 %v1008
      %1278 = vmatmul.mubr.bf16.gmra.mrb[0].mxu0 %v1007
      %v1279 = vpop.f32.mrb[0].mxu0
      %v1280 = vadd.f32 0.0, %v1279
      %v1281 = vpop.f32.mrb[0].mxu0
      %v1282 = vpop.f32.mrb[0].mxu0
      %v1283 = vadd.f32 0.0, %v1282
      %v1284 = vpop.f32.mrb[0].mxu0
      %1285 = vmatprep.mubr.bf16.mxu0 %v1009
      %1286 = vmatmul.mubr.bf16.gmra.mrb[0].mxu0 %v1008
      %v1287 = vpop.f32.mrb[0].mxu0
      %v1288 = vadd.f32 0.0, %v1287
      %v1289 = vpop.f32.mrb[0].mxu0
      %v1290 = vpop.f32.mrb[0].mxu0
      %v1291 = vadd.f32 0.0, %v1290
      %v1292 = vpop.f32.mrb[0].mxu0
      %1293 = vmatprep.mubr.bf16.mxu0 %v1010
      %1294 = vmatmul.mubr.bf16.gmra.mrb[0].mxu0 %v1009
      %v1295 = vpop.f32.mrb[0].mxu0
      %v1296 = vadd.f32 0.0, %v1295
      %v1297 = vpop.f32.mrb[0].mxu0
      %v1298 = vpop.f32.mrb[0].mxu0
      %v1299 = vadd.f32 0.0, %v1298
      %v1300 = vpop.f32.mrb[0].mxu0
      %1301 = vmatprep.mubr.bf16.mxu0 %v1011
      %1302 = vmatmul.mubr.bf16.gmra.mrb[0].mxu0 %v1010
      %v1303 = vpop.f32.mrb[0].mxu0
      %v1304 = vadd.f32 0.0, %v1303
      %v1305 = vpop.f32.mrb[0].mxu0
      %v1306 = vpop.f32.mrb[0].mxu0
      %v1307 = vadd.f32 0.0, %v1306
      %v1308 = vpop.f32.mrb[0].mxu0
      %1309 = vmatprep.mubr.bf16.mxu0 %v1012
      %1310 = vmatmul.mubr.bf16.gmra.mrb[0].mxu0 %v1011
      %v1311 = vpop.f32.mrb[0].mxu0
      %v1312 = vadd.f32 0.0, %v1311
      %v1313 = vpop.f32.mrb[0].mxu0
      %v1314 = vpop.f32.mrb[0].mxu0
      %v1315 = vadd.f32 0.0, %v1314
      %v1316 = vpop.f32.mrb[0].mxu0
      %1317 = vmatprep.mubr.bf16.mxu0 %v1013
      %1318 = vmatmul.mubr.bf16.gmra.mrb[0].mxu0 %v1012
      %v1319 = vpop.f32.mrb[0].mxu0
      %v1320 = vadd.f32 0.0, %v1319
      %v1321 = vpop.f32.mrb[0].mxu0
      %v1322 = vpop.f32.mrb[0].mxu0
      %v1323 = vadd.f32 0.0, %v1322
      %v1324 = vpop.f32.mrb[0].mxu0
      %1325 = vmatprep.mubr.bf16.mxu0 %v1014
      %1326 = vmatmul.mubr.bf16.gmra.mrb[0].mxu0 %v1013
      %v1327 = vpop.f32.mrb[0].mxu0
      %v1328 = vadd.f32 0.0, %v1327
      %v1329 = vpop.f32.mrb[0].mxu0
      %v1330 = vpop.f32.mrb[0].mxu0
      %v1331 = vadd.f32 0.0, %v1330
      %v1332 = vpop.f32.mrb[0].mxu0
      %1333 = vmatprep.mubr.bf16.mxu0 %v1015
      %1334 = vmatmul.mubr.bf16.gmra.mrb[0].mxu0 %v1014
      %v1335 = vpop.f32.mrb[0].mxu0
      %v1336 = vadd.f32 0.0, %v1335
      %v1337 = vpop.f32.mrb[0].mxu0
      %v1338 = vpop.f32.mrb[0].mxu0
      %v1339 = vadd.f32 0.0, %v1338
      %v1340 = vpop.f32.mrb[0].mxu0
      %1341 = vmatprep.mubr.bf16.mxu0 %v1016
      %1342 = vmatmul.mubr.bf16.gmra.mrb[0].mxu0 %v1015
      %v1343 = vpop.f32.mrb[0].mxu0
      %v1344 = vadd.f32 0.0, %v1343
      %v1345 = vpop.f32.mrb[0].mxu0
      %v1346 = vpop.f32.mrb[0].mxu0
      %v1347 = vadd.f32 0.0, %v1346
      %v1348 = vpop.f32.mrb[0].mxu0
      %1349 = vmatprep.mubr.bf16.mxu0 %v1017
      %1350 = vmatmul.mubr.bf16.gmra.mrb[0].mxu0 %v1016
      %v1351 = vpop.f32.mrb[0].mxu0
      %v1352 = vadd.f32 0.0, %v1351
      %v1353 = vpop.f32.mrb[0].mxu0
      %v1354 = vpop.f32.mrb[0].mxu0
      %v1355 = vadd.f32 0.0, %v1354
      %v1356 = vpop.f32.mrb[0].mxu0
      %1357 = vmatprep.mubr.bf16.mxu0 %v1018
      %1358 = vmatmul.mubr.bf16.gmra.mrb[0].mxu0 %v1017
      %v1359 = vpop.f32.mrb[0].mxu0
      %v1360 = vadd.f32 0.0, %v1359
      %v1361 = vpop.f32.mrb[0].mxu0
      %v1362 = vpop.f32.mrb[0].mxu0
      %v1363 = vadd.f32 0.0, %v1362
      %v1364 = vpop.f32.mrb[0].mxu0
      %1365 = vmatprep.mubr.bf16.mxu0 %v1019
      %1366 = vmatmul.mubr.bf16.gmra.mrb[0].mxu0 %v1018
      %v1367 = vpop.f32.mrb[0].mxu0
      %v1368 = vadd.f32 0.0, %v1367
      %v1369 = vpop.f32.mrb[0].mxu0
      %v1370 = vpop.f32.mrb[0].mxu0
      %v1371 = vadd.f32 0.0, %v1370
      %v1372 = vpop.f32.mrb[0].mxu0
      %1373 = vdwg.mxu0
      %1374 = vmatprep.subr.bf16.mxu0 0
      %1375 = vmatpush1.bf16.msra.mxu0 %v1181
      %1376 = vmatprep.subr.bf16.mxu0 0
      %1377 = vmatpush1.bf16.msra.mxu0 %v1182
      %1378 = vmatprep.subr.bf16.mxu0 0
      %1379 = vmatpush1.bf16.msra.mxu0 %v1183
      %1380 = vmatprep.subr.bf16.mxu0 0
      %1381 = vmatpush1.bf16.msra.mxu0 %v1184
      %1382 = vmatprep.subr.bf16.mxu0 0
      %1383 = vmatpush1.bf16.msra.mxu0 %v1185
      %1384 = vmatprep.subr.bf16.mxu0 0
      %1385 = vmatpush1.bf16.msra.mxu0 %v1186
      %1386 = vmatprep.subr.bf16.mxu0 0
      %1387 = vmatpush1.bf16.msra.mxu0 %v1187
      %1388 = vmatprep.subr.bf16.mxu0 0
      %1389 = vmatpush1.bf16.msra.mxu0 %v1188
      %1390 = vmatprep.subr.bf16.mxu0 0
      %1391 = vmatpush1.bf16.msra.mxu0 0
      %1392 = vmatprep.subr.bf16.mxu0 0
      %1393 = vmatpush1.bf16.msra.mxu0 0
      %1394 = vmatprep.subr.bf16.mxu0 0
      %1395 = vmatpush1.bf16.msra.mxu0 0
      %1396 = vmatprep.subr.bf16.mxu0 0
      %1397 = vmatpush1.bf16.msra.mxu0 0
      %1398 = vmatprep.subr.bf16.mxu0 0
      %1399 = vmatpush1.bf16.msra.mxu0 0
      %1400 = vmatprep.subr.bf16.mxu0 0
      %1401 = vmatpush1.bf16.msra.mxu0 0
      %1402 = vmatprep.subr.bf16.mxu0 0
      %1403 = vmatpush1.bf16.msra.mxu0 0
      %1404 = vmatprep.subr.bf16.mxu0 0
      %1405 = vmatpush1.bf16.msra.mxu0 0
      %1406 = vmatprep.mubr.bf16.mxu0 0
      %1407 = vmatmul.mubr.bf16.gmra.mrb[0].mxu0 %v1005
      %v1408 = vpop.f32.mrb[0].mxu0
      %v1409 = vadd.f32 %v1248, %v1408
      %v1410 = vpop.f32.mrb[0].mxu0
      %v1411 = vpop.f32.mrb[0].mxu0
      %v1412 = vadd.f32 %v1251, %v1411
      %v1413 = vpop.f32.mrb[0].mxu0
      %1414 = vmatprep.mubr.bf16.mxu0 0
      %1415 = vmatmul.mubr.bf16.gmra.mrb[0].mxu0 %v1006
      %v1416 = vpop.f32.mrb[0].mxu0
      %v1417 = vadd.f32 %v1256, %v1416
      %v1418 = vpop.f32.mrb[0].mxu0
      %v1419 = vpop.f32.mrb[0].mxu0
      %v1420 = vadd.f32 %v1259, %v1419
      %v1421 = vpop.f32.mrb[0].mxu0
      %1422 = vmatprep.mubr.bf16.mxu0 0
      %1423 = vmatmul.mubr.bf16.gmra.mrb[0].mxu0 %v1007
      %v1424 = vpop.f32.mrb[0].mxu0
      %v1425 = vadd.f32 %v1264, %v1424
      %v1426 = vpop.f32.mrb[0].mxu0
      %v1427 = vpop.f32.mrb[0].mxu0
      %v1428 = vadd.f32 %v1267, %v1427
      %v1429 = vpop.f32.mrb[0].mxu0
      %1430 = vmatprep.mubr.bf16.mxu0 0
      %1431 = vmatmul.mubr.bf16.gmra.mrb[0].mxu0 %v1008
      %v1432 = vpop.f32.mrb[0].mxu0
      %v1433 = vadd.f32 %v1272, %v1432
      %v1434 = vpop.f32.mrb[0].mxu0
      %v1435 = vpop.f32.mrb[0].mxu0
      %v1436 = vadd.f32 %v1275, %v1435
      %v1437 = vpop.f32.mrb[0].mxu0
      %1438 = vmatprep.mubr.bf16.mxu0 0
      %1439 = vmatmul.mubr.bf16.gmra.mrb[0].mxu0 %v1009
      %v1440 = vpop.f32.mrb[0].mxu0
      %v1441 = vadd.f32 %v1280, %v1440
      %v1442 = vpop.f32.mrb[0].mxu0
      %v1443 = vpop.f32.mrb[0].mxu0
      %v1444 = vadd.f32 %v1283, %v1443
      %v1445 = vpop.f32.mrb[0].mxu0
      %1446 = vmatprep.mubr.bf16.mxu0 0
      %1447 = vmatmul.mubr.bf16.gmra.mrb[0].mxu0 %v1010
      %v1448 = vpop.f32.mrb[0].mxu0
      %v1449 = vadd.f32 %v1288, %v1448
      %v1450 = vpop.f32.mrb[0].mxu0
      %v1451 = vpop.f32.mrb[0].mxu0
      %v1452 = vadd.f32 %v1291, %v1451
      %v1453 = vpop.f32.mrb[0].mxu0
      %1454 = vmatprep.mubr.bf16.mxu0 0
      %1455 = vmatmul.mubr.bf16.gmra.mrb[0].mxu0 %v1011
      %v1456 = vpop.f32.mrb[0].mxu0
      %v1457 = vadd.f32 %v1296, %v1456
      %v1458 = vpop.f32.mrb[0].mxu0
      %v1459 = vpop.f32.mrb[0].mxu0
      %v1460 = vadd.f32 %v1299, %v1459
      %v1461 = vpop.f32.mrb[0].mxu0
      %1462 = vmatprep.mubr.bf16.mxu0 0
      %1463 = vmatmul.mubr.bf16.gmra.mrb[0].mxu0 %v1012
      %v1464 = vpop.f32.mrb[0].mxu0
      %v1465 = vadd.f32 %v1304, %v1464
      %v1466 = vpop.f32.mrb[0].mxu0
      %v1467 = vpop.f32.mrb[0].mxu0
      %v1468 = vadd.f32 %v1307, %v1467
      %v1469 = vpop.f32.mrb[0].mxu0
      %1470 = vmatprep.mubr.bf16.mxu0 0
      %1471 = vmatmul.mubr.bf16.gmra.mrb[0].mxu0 %v1013
      %v1472 = vpop.f32.mrb[0].mxu0
      %v1473 = vadd.f32 %v1312, %v1472
      %v1474 = vpop.f32.mrb[0].mxu0
      %v1475 = vpop.f32.mrb[0].mxu0
      %v1476 = vadd.f32 %v1315, %v1475
      %v1477 = vpop.f32.mrb[0].mxu0
      %1478 = vmatprep.mubr.bf16.mxu0 0
      %1479 = vmatmul.mubr.bf16.gmra.mrb[0].mxu0 %v1014
      %v1480 = vpop.f32.mrb[0].mxu0
      %v1481 = vadd.f32 %v1320, %v1480
      %v1482 = vpop.f32.mrb[0].mxu0
      %v1483 = vpop.f32.mrb[0].mxu0
      %v1484 = vadd.f32 %v1323, %v1483
      %v1485 = vpop.f32.mrb[0].mxu0
      %1486 = vmatprep.mubr.bf16.mxu0 0
      %1487 = vmatmul.mubr.bf16.gmra.mrb[0].mxu0 %v1015
      %v1488 = vpop.f32.mrb[0].mxu0
      %v1489 = vadd.f32 %v1328, %v1488
      %v1490 = vpop.f32.mrb[0].mxu0
      %v1491 = vpop.f32.mrb[0].mxu0
      %v1492 = vadd.f32 %v1331, %v1491
      %v1493 = vpop.f32.mrb[0].mxu0
      %1494 = vmatprep.mubr.bf16.mxu0 0
      %1495 = vmatmul.mubr.bf16.gmra.mrb[0].mxu0 %v1016
      %v1496 = vpop.f32.mrb[0].mxu0
      %v1497 = vadd.f32 %v1336, %v1496
      %v1498 = vpop.f32.mrb[0].mxu0
      %v1499 = vpop.f32.mrb[0].mxu0
      %v1500 = vadd.f32 %v1339, %v1499
      %v1501 = vpop.f32.mrb[0].mxu0
      %1502 = vmatprep.mubr.bf16.mxu0 0
      %1503 = vmatmul.mubr.bf16.gmra.mrb[0].mxu0 %v1017
      %v1504 = vpop.f32.mrb[0].mxu0
      %v1505 = vadd.f32 %v1344, %v1504
      %v1506 = vpop.f32.mrb[0].mxu0
      %v1507 = vpop.f32.mrb[0].mxu0
      %v1508 = vadd.f32 %v1347, %v1507
      %v1509 = vpop.f32.mrb[0].mxu0
      %1510 = vmatprep.mubr.bf16.mxu0 0
      %1511 = vmatmul.mubr.bf16.gmra.mrb[0].mxu0 %v1018
      %v1512 = vpop.f32.mrb[0].mxu0
      %v1513 = vadd.f32 %v1352, %v1512
      %v1514 = vpop.f32.mrb[0].mxu0
      %v1515 = vpop.f32.mrb[0].mxu0
      %v1516 = vadd.f32 %v1355, %v1515
      %v1517 = vpop.f32.mrb[0].mxu0
      %1518 = vmatprep.mubr.bf16.mxu0 0
      %1519 = vmatmul.mubr.bf16.gmra.mrb[0].mxu0 %v1019
      %v1520 = vpop.f32.mrb[0].mxu0
      %v1521 = vadd.f32 %v1360, %v1520
      %v1522 = vpop.f32.mrb[0].mxu0
      %v1523 = vpop.f32.mrb[0].mxu0
      %v1524 = vadd.f32 %v1363, %v1523
      %v1525 = vpop.f32.mrb[0].mxu0
      %1526 = vmatprep.mubr.bf16.mxu0 0
      %1527 = vmatmul.mubr.bf16.gmra.mrb[0].mxu0 %v1020
      %v1528 = vpop.f32.mrb[0].mxu0
      %v1529 = vadd.f32 %v1368, %v1528
      %v1530 = vpop.f32.mrb[0].mxu0
      %v1531 = vpop.f32.mrb[0].mxu0
      %v1532 = vadd.f32 %v1371, %v1531
      %v1533 = vpop.f32.mrb[0].mxu0
      %1534 = vdwg.mxu0
      %v1535 = vsel %vm935, 1, 0
      %v1536 = vsel %vm936, 1, 0
      %v1537 = vsel %vm937, 1, 0
      %v1538 = vsel %vm938, 1, 0
      %v1539 = vsel %vm939, 1, 0
      %v1540 = vsel %vm940, 1, 0
      %v1541 = vsel %vm941, 1, 0
      %v1542 = vsel %vm942, 1, 0
      %v1543 = vsel %vm943, 1, 0
      %v1544 = vsel %vm944, 1, 0
      %v1545 = vsel %vm945, 1, 0
      %v1546 = vsel %vm946, 1, 0
      %v1547 = vsel %vm947, 1, 0
      %v1548 = vsel %vm948, 1, 0
      %v1549 = vsel %vm949, 1, 0
      %v1550 = vsel %vm950, 1, 0
      %v1551 = vsel %vm951, 1, 0
      %v1552 = vsel %vm952, 1, 0
      %v1553 = vsel %vm953, 1, 0
      %v1554 = vsel %vm954, 1, 0
      %v1555 = vsel %vm955, 1, 0
      %v1556 = vsel %vm956, 1, 0
      %v1557 = vsel %vm957, 1, 0
      %v1558 = vsel %vm958, 1, 0
      %v1559 = vsel %vm959, 1, 0
      %v1560 = vsel %vm960, 1, 0
      %v1561 = vsel %vm961, 1, 0
      %v1562 = vsel %vm962, 1, 0
      %v1563 = vsel %vm963, 1, 0
      %v1564 = vsel %vm964, 1, 0
      %v1565 = vsel %vm965, 1, 0
      %v1566 = vsel %vm966, 1, 0
      %vm1567 = vcmp.eq.s32.totalorder %v1535, 1
      %vm1568 = vcmp.eq.s32.totalorder %v1536, 1
      %vm1569 = vcmp.eq.s32.totalorder %v1537, 1
      %vm1570 = vcmp.eq.s32.totalorder %v1538, 1
      %vm1571 = vcmp.eq.s32.totalorder %v1539, 1
      %vm1572 = vcmp.eq.s32.totalorder %v1540, 1
      %vm1573 = vcmp.eq.s32.totalorder %v1541, 1
      %vm1574 = vcmp.eq.s32.totalorder %v1542, 1
      %vm1575 = vcmp.eq.s32.totalorder %v1543, 1
      %vm1576 = vcmp.eq.s32.totalorder %v1544, 1
      %vm1577 = vcmp.eq.s32.totalorder %v1545, 1
      %vm1578 = vcmp.eq.s32.totalorder %v1546, 1
      %vm1579 = vcmp.eq.s32.totalorder %v1547, 1
      %vm1580 = vcmp.eq.s32.totalorder %v1548, 1
      %vm1581 = vcmp.eq.s32.totalorder %v1549, 1
      %vm1582 = vcmp.eq.s32.totalorder %v1550, 1
      %vm1583 = vcmp.eq.s32.totalorder %v1551, 1
      %vm1584 = vcmp.eq.s32.totalorder %v1552, 1
      %vm1585 = vcmp.eq.s32.totalorder %v1553, 1
      %vm1586 = vcmp.eq.s32.totalorder %v1554, 1
      %vm1587 = vcmp.eq.s32.totalorder %v1555, 1
      %vm1588 = vcmp.eq.s32.totalorder %v1556, 1
      %vm1589 = vcmp.eq.s32.totalorder %v1557, 1
      %vm1590 = vcmp.eq.s32.totalorder %v1558, 1
      %vm1591 = vcmp.eq.s32.totalorder %v1559, 1
      %vm1592 = vcmp.eq.s32.totalorder %v1560, 1
      %vm1593 = vcmp.eq.s32.totalorder %v1561, 1
      %vm1594 = vcmp.eq.s32.totalorder %v1562, 1
      %vm1595 = vcmp.eq.s32.totalorder %v1563, 1
      %vm1596 = vcmp.eq.s32.totalorder %v1564, 1
      %vm1597 = vcmp.eq.s32.totalorder %v1565, 1
      %vm1598 = vcmp.eq.s32.totalorder %v1566, 1
      %v1599 = vsel %vm1567, %v1409, 0.0
      %v1600 = vsel %vm1568, %v1412, 0.0
      %v1601 = vsel %vm1569, %v1417, 0.0
      %v1602 = vsel %vm1570, %v1420, 0.0
      %v1603 = vsel %vm1571, %v1425, 0.0
      %v1604 = vsel %vm1572, %v1428, 0.0
      %v1605 = vsel %vm1573, %v1433, 0.0
      %v1606 = vsel %vm1574, %v1436, 0.0
      %v1607 = vsel %vm1575, %v1441, 0.0
      %v1608 = vsel %vm1576, %v1444, 0.0
      %v1609 = vsel %vm1577, %v1449, 0.0
      %v1610 = vsel %vm1578, %v1452, 0.0
      %v1611 = vsel %vm1579, %v1457, 0.0
      %v1612 = vsel %vm1580, %v1460, 0.0
      %v1613 = vsel %vm1581, %v1465, 0.0
      %v1614 = vsel %vm1582, %v1468, 0.0
      %v1615 = vsel %vm1583, %v1473, 0.0
      %v1616 = vsel %vm1584, %v1476, 0.0
      %v1617 = vsel %vm1585, %v1481, 0.0
      %v1618 = vsel %vm1586, %v1484, 0.0
      %v1619 = vsel %vm1587, %v1489, 0.0
      %v1620 = vsel %vm1588, %v1492, 0.0
      %v1621 = vsel %vm1589, %v1497, 0.0
      %v1622 = vsel %vm1590, %v1500, 0.0
      %v1623 = vsel %vm1591, %v1505, 0.0
      %v1624 = vsel %vm1592, %v1508, 0.0
      %v1625 = vsel %vm1593, %v1513, 0.0
      %v1626 = vsel %vm1594, %v1516, 0.0
      %v1627 = vsel %vm1595, %v1521, 0.0
      %v1628 = vsel %vm1596, %v1524, 0.0
      %v1629 = vsel %vm1597, %v1529, 0.0
      %v1630 = vsel %vm1598, %v1532, 0.0
      %v1631 = vld [vmem:[#allocation2 + $0x8] sm:$0xff]
      %v1632 = vld [vmem:[#allocation2 + $0x10] sm:$0xff]
      %v1633 = vld [vmem:[#allocation2 + $0x18] sm:$0xff]
      %v1634 = vld [vmem:[#allocation2 + $0x20] sm:$0xff]
      %v1635 = vld [vmem:[#allocation2 + $0x28] sm:$0xff]
      %v1636 = vld [vmem:[#allocation2 + $0x30] sm:$0xff]
      %v1637 = vld [vmem:[#allocation2 + $0x38] sm:$0xff]
      %v1638 = vld [vmem:[#allocation2 + $0x40] sm:$0xff]
      %v1639 = vld [vmem:[#allocation2 + $0x48] sm:$0xff]
      %v1640 = vld [vmem:[#allocation2 + $0x50] sm:$0xff]
      %v1641 = vld [vmem:[#allocation2 + $0x58] sm:$0xff]
      %v1642 = vld [vmem:[#allocation2 + $0x60] sm:$0xff]
      %v1643 = vld [vmem:[#allocation2 + $0x68] sm:$0xff]
      %v1644 = vld [vmem:[#allocation2 + $0x70] sm:$0xff]
      %v1645 = vld [vmem:[#allocation2 + $0x78] sm:$0xff]
      %v1646 = vld [vmem:[#allocation2 + $0x80] sm:$0xff]
      %v1647 = vld [vmem:[#allocation2 + $0x88] sm:$0xff]
      %v1648 = vld [vmem:[#allocation2 + $0x90] sm:$0xff]
      %v1649 = vld [vmem:[#allocation2 + $0x98] sm:$0xff]
      %v1650 = vld [vmem:[#allocation2 + $0xa0] sm:$0xff]
      %v1651 = vld [vmem:[#allocation2 + $0xa8] sm:$0xff]
      %v1652 = vld [vmem:[#allocation2 + $0xb0] sm:$0xff]
      %v1653 = vld [vmem:[#allocation2 + $0xb8] sm:$0xff]
      %v1654 = vld [vmem:[#allocation2 + $0xc0] sm:$0xff]
      %v1655 = vld [vmem:[#allocation2 + $0xc8] sm:$0xff]
      %v1656 = vld [vmem:[#allocation2 + $0xd0] sm:$0xff]
      %v1657 = vld [vmem:[#allocation2 + $0xd8] sm:$0xff]
      %v1658 = vld [vmem:[#allocation2 + $0xe0] sm:$0xff]
      %v1659 = vld [vmem:[#allocation2 + $0xe8] sm:$0xff]
      %v1660 = vld [vmem:[#allocation2 + $0xf0] sm:$0xff]
      %v1661 = vld [vmem:[#allocation2 + $0xf8] sm:$0xff]
      %v1662 = vld [vmem:[#allocation2 + $0x100] sm:$0xff]
      %v1663 = vld [vmem:[#allocation2 + $0x108] sm:$0xff]
      %v1664 = vld [vmem:[#allocation2 + $0x110] sm:$0xff]
      %v1665 = vld [vmem:[#allocation2 + $0x118] sm:$0xff]
      %v1666 = vld [vmem:[#allocation2 + $0x120] sm:$0xff]
      %v1667 = vpack.c.bf16 %v1632, %v1631
      %v1668 = vpack.c.bf16 %v1634, %v1633
      %v1669 = vpack.c.bf16 %v1636, %v1635
      %v1670 = vpack.c.bf16 %v1638, %v1637
      %v1671 = vpack.c.bf16 %v1640, %v1639
      %v1672 = vpack.c.bf16 %v1642, %v1641
      %v1673 = vpack.c.bf16 %v1644, %v1643
      %v1674 = vpack.c.bf16 %v1646, %v1645
      %v1675 = vpack.c.bf16 %v1648, %v1647
      %v1676 = vpack.c.bf16 %v1650, %v1649
      %v1677 = vpack.c.bf16 %v1652, %v1651
      %v1678 = vpack.c.bf16 %v1654, %v1653
      %v1679 = vpack.c.bf16 %v1656, %v1655
      %v1680 = vpack.c.bf16 %v1658, %v1657
      %v1681 = vpack.c.bf16 %v1660, %v1659
      %v1682 = vpack.c.bf16 %v1662, %v1661
      %v1683 = vpack.c.bf16 %v1664, %v1663
      %v1684 = vpack.c.bf16 %v1666, %v1665
      %s1685 = scalar_lea.vmem %s3, 192
      %v1686 = vld [vmem:[%s1685] sm:$0xf]
      %v1687 = vld [vmem:[%s1685 + $0x4] sm:$0xf]
      %v1688 = vld [vmem:[%s1685 + $0x8] sm:$0xf]
      %v1689 = vld [vmem:[%s1685 + $0xc] sm:$0xf]
      %v1690 = vld [vmem:[%s1685 + $0x10] sm:$0xf]
      %v1691 = vld [vmem:[%s1685 + $0x14] sm:$0xf]
      %v1692 = vld [vmem:[%s1685 + $0x18] sm:$0xf]
      %v1693 = vld [vmem:[%s1685 + $0x1c] sm:$0xf]
      %v1694 = vld [vmem:[%s1685 + $0x20] sm:$0xf]
      %v1695 = vld [vmem:[%s1685 + $0x24] sm:$0xf]
      %v1696 = vld [vmem:[%s1685 + $0x28] sm:$0xf]
      %v1697 = vld [vmem:[%s1685 + $0x2c] sm:$0xf]
      %v1698 = vld [vmem:[%s1685 + $0x30] sm:$0xf]
      %v1699 = vld [vmem:[%s1685 + $0x34] sm:$0xf]
      %v1700 = vld [vmem:[%s1685 + $0x38] sm:$0xf]
      %v1701 = vld [vmem:[%s1685 + $0x3c] sm:$0xf]
      %v1702 = vld [vmem:[%s1685 + $0x40] sm:$0xf]
      %v1703 = vld [vmem:[%s1685 + $0x44] sm:$0xf]
      %v1704 = vld [vmem:[%s1685 + $0x48] sm:$0xf]
      %v1705 = vld [vmem:[%s1685 + $0x4c] sm:$0xf]
      %v1706 = vld [vmem:[%s1685 + $0x50] sm:$0xf]
      %v1707 = vld [vmem:[%s1685 + $0x54] sm:$0xf]
      %v1708 = vld [vmem:[%s1685 + $0x58] sm:$0xf]
      %v1709 = vld [vmem:[%s1685 + $0x5c] sm:$0xf]
      %v1710 = vld [vmem:[%s1685 + $0x60] sm:$0xf]
      %v1711 = vld [vmem:[%s1685 + $0x64] sm:$0xf]
      %v1712 = vld [vmem:[%s1685 + $0x68] sm:$0xf]
      %v1713 = vld [vmem:[%s1685 + $0x6c] sm:$0xf]
      %v1714 = vld [vmem:[%s1685 + $0x70] sm:$0xf]
      %v1715 = vld [vmem:[%s1685 + $0x74] sm:$0xf]
      %v1716 = vld [vmem:[%s1685 + $0x78] sm:$0xf]
      %v1717 = vld [vmem:[%s1685 + $0x7c] sm:$0xf]
      %v1718 = vld [vmem:[%s1685 + $0x80] sm:$0xf]
      %v1719 = vld [vmem:[%s1685 + $0x84] sm:$0xf]
      %v1720 = vld [vmem:[%s1685 + $0x88] sm:$0xf]
      %v1721 = vld [vmem:[%s1685 + $0x8c] sm:$0xf]
      %v1722 = vld [vmem:[%s1685 + $0x90] sm:$0xf]
      %v1723 = vld [vmem:[%s1685 + $0x94] sm:$0xf]
      %v1724 = vld [vmem:[%s1685 + $0x98] sm:$0xf]
      %v1725 = vld [vmem:[%s1685 + $0x9c] sm:$0xf]
      %v1726 = vld [vmem:[%s1685 + $0xa0] sm:$0xf]
      %v1727 = vld [vmem:[%s1685 + $0xa4] sm:$0xf]
      %v1728 = vld [vmem:[%s1685 + $0xa8] sm:$0xf]
      %v1729 = vld [vmem:[%s1685 + $0xac] sm:$0xf]
      %v1730 = vld [vmem:[%s1685 + $0xb0] sm:$0xf]
      %v1731 = vld [vmem:[%s1685 + $0xb4] sm:$0xf]
      %v1732 = vld [vmem:[%s1685 + $0xb8] sm:$0xf]
      %v1733 = vld [vmem:[%s1685 + $0xbc] sm:$0xf]
      %v1782 = vunpack.c.l.b16 %v1686
      %v1783 = vunpack.c.l.b16 %v1687
      %v1784 = vunpack.c.l.b16 %v1688
      %v1785 = vunpack.c.l.b16 %v1689
      %v1786 = vunpack.c.l.b16 %v1690
      %v1787 = vunpack.c.l.b16 %v1691
      %v1788 = vunpack.c.l.b16 %v1692
      %v1789 = vunpack.c.l.b16 %v1693
      %v1790 = vunpack.c.l.b16 %v1694
      %v1791 = vunpack.c.l.b16 %v1695
      %v1792 = vunpack.c.l.b16 %v1696
      %v1793 = vunpack.c.l.b16 %v1697
      %v1794 = vunpack.c.l.b16 %v1698
      %v1795 = vunpack.c.l.b16 %v1699
      %v1796 = vunpack.c.l.b16 %v1700
      %v1797 = vunpack.c.l.b16 %v1701
      %v1798 = vunpack.c.l.b16 %v1702
      %v1799 = vunpack.c.l.b16 %v1703
      %v1800 = vunpack.c.l.b16 %v1704
      %v1801 = vunpack.c.l.b16 %v1705
      %v1802 = vunpack.c.l.b16 %v1706
      %v1803 = vunpack.c.l.b16 %v1707
      %v1804 = vunpack.c.l.b16 %v1708
      %v1805 = vunpack.c.l.b16 %v1709
      %v1806 = vunpack.c.l.b16 %v1710
      %v1807 = vunpack.c.l.b16 %v1711
      %v1808 = vunpack.c.l.b16 %v1712
      %v1809 = vunpack.c.l.b16 %v1713
      %v1810 = vunpack.c.l.b16 %v1714
      %v1811 = vunpack.c.l.b16 %v1715
      %v1812 = vunpack.c.l.b16 %v1716
      %v1813 = vunpack.c.l.b16 %v1717
      %v1814 = vunpack.c.l.b16 %v1718
      %v1815 = vunpack.c.l.b16 %v1719
      %v1816 = vunpack.c.l.b16 %v1720
      %v1817 = vunpack.c.l.b16 %v1721
      %v1818 = vunpack.c.l.b16 %v1722
      %v1819 = vunpack.c.l.b16 %v1723
      %v1820 = vunpack.c.l.b16 %v1724
      %v1821 = vunpack.c.l.b16 %v1725
      %v1822 = vunpack.c.l.b16 %v1726
      %v1823 = vunpack.c.l.b16 %v1727
      %v1824 = vunpack.c.l.b16 %v1728
      %v1825 = vunpack.c.l.b16 %v1729
      %v1826 = vunpack.c.l.b16 %v1730
      %v1827 = vunpack.c.l.b16 %v1731
      %v1828 = vunpack.c.l.b16 %v1732
      %v1829 = vunpack.c.l.b16 %v1733
      %v1830 = vpack.c.b16 %v1783, %v1782
      %v1831 = vpack.c.b16 %v1785, %v1784
      %v1832 = vpack.c.b16 %v1787, %v1786
      %v1833 = vpack.c.b16 %v1789, %v1788
      %v1834 = vpack.c.b16 %v1791, %v1790
      %v1835 = vpack.c.b16 %v1793, %v1792
      %v1836 = vpack.c.b16 %v1795, %v1794
      %v1837 = vpack.c.b16 %v1797, %v1796
      %v1838 = vpack.c.b16 %v1799, %v1798
      %v1839 = vpack.c.b16 %v1801, %v1800
      %v1840 = vpack.c.b16 %v1803, %v1802
      %v1841 = vpack.c.b16 %v1805, %v1804
      %v1842 = vpack.c.b16 %v1807, %v1806
      %v1843 = vpack.c.b16 %v1809, %v1808
      %v1844 = vpack.c.b16 %v1811, %v1810
      %v1845 = vpack.c.b16 %v1813, %v1812
      %v1846 = vpack.c.b16 %v1815, %v1814
      %v1847 = vpack.c.b16 %v1817, %v1816
      %v1848 = vpack.c.b16 %v1819, %v1818
      %v1849 = vpack.c.b16 %v1821, %v1820
      %v1850 = vpack.c.b16 %v1823, %v1822
      %v1851 = vpack.c.b16 %v1825, %v1824
      %v1852 = vpack.c.b16 %v1827, %v1826
      %v1853 = vpack.c.b16 %v1829, %v1828
      %1878 = vmatprep.subr.bf16.mxu0 0
      %1879 = vmatpush1.bf16.msra.mxu0 %v1830
      %1880 = vmatprep.subr.bf16.mxu0 0
      %1881 = vmatpush1.bf16.msra.mxu0 %v1831
      %1882 = vmatprep.subr.bf16.mxu0 0
      %1883 = vmatpush1.bf16.msra.mxu0 %v1832
      %1884 = vmatprep.subr.bf16.mxu0 0
      %1885 = vmatpush1.bf16.msra.mxu0 %v1833
      %1886 = vmatprep.subr.bf16.mxu0 0
      %1887 = vmatpush1.bf16.msra.mxu0 %v1834
      %1888 = vmatprep.subr.bf16.mxu0 0
      %1889 = vmatpush1.bf16.msra.mxu0 %v1835
      %1890 = vmatprep.subr.bf16.mxu0 0
      %1891 = vmatpush1.bf16.msra.mxu0 %v1836
      %1892 = vmatprep.subr.bf16.mxu0 0
      %1893 = vmatpush1.bf16.msra.mxu0 %v1837
      %1894 = vmatprep.subr.bf16.mxu0 0
      %1895 = vmatpush1.bf16.msra.mxu0 %v1838
      %1896 = vmatprep.subr.bf16.mxu0 0
      %1897 = vmatpush1.bf16.msra.mxu0 %v1839
      %1898 = vmatprep.subr.bf16.mxu0 0
      %1899 = vmatpush1.bf16.msra.mxu0 %v1840
      %1900 = vmatprep.subr.bf16.mxu0 0
      %1901 = vmatpush1.bf16.msra.mxu0 %v1841
      %1902 = vmatprep.subr.bf16.mxu0 0
      %1903 = vmatpush1.bf16.msra.mxu0 %v1842
      %1904 = vmatprep.subr.bf16.mxu0 0
      %1905 = vmatpush1.bf16.msra.mxu0 %v1843
      %1906 = vmatprep.subr.bf16.mxu0 0
      %1907 = vmatpush1.bf16.msra.mxu0 %v1844
      %1908 = vmatprep.subr.bf16.mxu0 0
      %1909 = vmatpush1.bf16.msra.mxu0 %v1845
      %1910 = vmatprep.mubr.bf16.mxu0 %v1668
      %1911 = vmatmul.mubr.bf16.gmra.mrb[0].mxu0 %v1667
      %v1912 = vpop.f32.mrb[0].mxu0
      %v1913 = vadd.f32 0.0, %v1912
      %v1914 = vpop.f32.mrb[0].mxu0
      %v1915 = vpop.f32.mrb[0].mxu0
      %v1916 = vadd.f32 0.0, %v1915
      %v1917 = vpop.f32.mrb[0].mxu0
      %1918 = vmatprep.mubr.bf16.mxu0 %v1669
      %1919 = vmatmul.mubr.bf16.gmra.mrb[0].mxu0 %v1668
      %v1920 = vpop.f32.mrb[0].mxu0
      %v1921 = vadd.f32 0.0, %v1920
      %v1922 = vpop.f32.mrb[0].mxu0
      %v1923 = vpop.f32.mrb[0].mxu0
      %v1924 = vadd.f32 0.0, %v1923
      %v1925 = vpop.f32.mrb[0].mxu0
      %1926 = vmatprep.mubr.bf16.mxu0 %v1670
      %1927 = vmatmul.mubr.bf16.gmra.mrb[0].mxu0 %v1669
      %v1928 = vpop.f32.mrb[0].mxu0
      %v1929 = vadd.f32 0.0, %v1928
      %v1930 = vpop.f32.mrb[0].mxu0
      %v1931 = vpop.f32.mrb[0].mxu0
      %v1932 = vadd.f32 0.0, %v1931
      %v1933 = vpop.f32.mrb[0].mxu0
      %1934 = vmatprep.mubr.bf16.mxu0 %v1671
      %1935 = vmatmul.mubr.bf16.gmra.mrb[0].mxu0 %v1670
      %v1936 = vpop.f32.mrb[0].mxu0
      %v1937 = vadd.f32 0.0, %v1936
      %v1938 = vpop.f32.mrb[0].mxu0
      %v1939 = vpop.f32.mrb[0].mxu0
      %v1940 = vadd.f32 0.0, %v1939
      %v1941 = vpop.f32.mrb[0].mxu0
      %1942 = vmatprep.mubr.bf16.mxu0 %v1672
      %1943 = vmatmul.mubr.bf16.gmra.mrb[0].mxu0 %v1671
      %v1944 = vpop.f32.mrb[0].mxu0
      %v1945 = vadd.f32 0.0, %v1944
      %v1946 = vpop.f32.mrb[0].mxu0
      %v1947 = vpop.f32.mrb[0].mxu0
      %v1948 = vadd.f32 0.0, %v1947
      %v1949 = vpop.f32.mrb[0].mxu0
      %1950 = vmatprep.mubr.bf16.mxu0 %v1673
      %1951 = vmatmul.mubr.bf16.gmra.mrb[0].mxu0 %v1672
      %v1952 = vpop.f32.mrb[0].mxu0
      %v1953 = vadd.f32 0.0, %v1952
      %v1954 = vpop.f32.mrb[0].mxu0
      %v1955 = vpop.f32.mrb[0].mxu0
      %v1956 = vadd.f32 0.0, %v1955
      %v1957 = vpop.f32.mrb[0].mxu0
      %1958 = vmatprep.mubr.bf16.mxu0 %v1674
      %1959 = vmatmul.mubr.bf16.gmra.mrb[0].mxu0 %v1673
      %v1960 = vpop.f32.mrb[0].mxu0
      %v1961 = vadd.f32 0.0, %v1960
      %v1962 = vpop.f32.mrb[0].mxu0
      %v1963 = vpop.f32.mrb[0].mxu0
      %v1964 = vadd.f32 0.0, %v1963
      %v1965 = vpop.f32.mrb[0].mxu0
      %1966 = vmatprep.mubr.bf16.mxu0 %v1675
      %1967 = vmatmul.mubr.bf16.gmra.mrb[0].mxu0 %v1674
      %v1968 = vpop.f32.mrb[0].mxu0
      %v1969 = vadd.f32 0.0, %v1968
      %v1970 = vpop.f32.mrb[0].mxu0
      %v1971 = vpop.f32.mrb[0].mxu0
      %v1972 = vadd.f32 0.0, %v1971
      %v1973 = vpop.f32.mrb[0].mxu0
      %1974 = vmatprep.mubr.bf16.mxu0 %v1676
      %1975 = vmatmul.mubr.bf16.gmra.mrb[0].mxu0 %v1675
      %v1976 = vpop.f32.mrb[0].mxu0
      %v1977 = vadd.f32 0.0, %v1976
      %v1978 = vpop.f32.mrb[0].mxu0
      %v1979 = vpop.f32.mrb[0].mxu0
      %v1980 = vadd.f32 0.0, %v1979
      %v1981 = vpop.f32.mrb[0].mxu0
      %1982 = vmatprep.mubr.bf16.mxu0 %v1677
      %1983 = vmatmul.mubr.bf16.gmra.mrb[0].mxu0 %v1676
      %v1984 = vpop.f32.mrb[0].mxu0
      %v1985 = vadd.f32 0.0, %v1984
      %v1986 = vpop.f32.mrb[0].mxu0
      %v1987 = vpop.f32.mrb[0].mxu0
      %v1988 = vadd.f32 0.0, %v1987
      %v1989 = vpop.f32.mrb[0].mxu0
      %1990 = vmatprep.mubr.bf16.mxu0 %v1678
      %1991 = vmatmul.mubr.bf16.gmra.mrb[0].mxu0 %v1677
      %v1992 = vpop.f32.mrb[0].mxu0
      %v1993 = vadd.f32 0.0, %v1992
      %v1994 = vpop.f32.mrb[0].mxu0
      %v1995 = vpop.f32.mrb[0].mxu0
      %v1996 = vadd.f32 0.0, %v1995
      %v1997 = vpop.f32.mrb[0].mxu0
      %1998 = vmatprep.mubr.bf16.mxu0 %v1679
      %1999 = vmatmul.mubr.bf16.gmra.mrb[0].mxu0 %v1678
      %v2000 = vpop.f32.mrb[0].mxu0
      %v2001 = vadd.f32 0.0, %v2000
      %v2002 = vpop.f32.mrb[0].mxu0
      %v2003 = vpop.f32.mrb[0].mxu0
      %v2004 = vadd.f32 0.0, %v2003
      %v2005 = vpop.f32.mrb[0].mxu0
      %2006 = vmatprep.mubr.bf16.mxu0 %v1680
      %2007 = vmatmul.mubr.bf16.gmra.mrb[0].mxu0 %v1679
      %v2008 = vpop.f32.mrb[0].mxu0
      %v2009 = vadd.f32 0.0, %v2008
      %v2010 = vpop.f32.mrb[0].mxu0
      %v2011 = vpop.f32.mrb[0].mxu0
      %v2012 = vadd.f32 0.0, %v2011
      %v2013 = vpop.f32.mrb[0].mxu0
      %2014 = vmatprep.mubr.bf16.mxu0 %v1681
      %2015 = vmatmul.mubr.bf16.gmra.mrb[0].mxu0 %v1680
      %v2016 = vpop.f32.mrb[0].mxu0
      %v2017 = vadd.f32 0.0, %v2016
      %v2018 = vpop.f32.mrb[0].mxu0
      %v2019 = vpop.f32.mrb[0].mxu0
      %v2020 = vadd.f32 0.0, %v2019
      %v2021 = vpop.f32.mrb[0].mxu0
      %2022 = vmatprep.mubr.bf16.mxu0 %v1682
      %2023 = vmatmul.mubr.bf16.gmra.mrb[0].mxu0 %v1681
      %v2024 = vpop.f32.mrb[0].mxu0
      %v2025 = vadd.f32 0.0, %v2024
      %v2026 = vpop.f32.mrb[0].mxu0
      %v2027 = vpop.f32.mrb[0].mxu0
      %v2028 = vadd.f32 0.0, %v2027
      %v2029 = vpop.f32.mrb[0].mxu0
      %2030 = vmatprep.mubr.bf16.mxu0 %v1683
      %2031 = vmatmul.mubr.bf16.gmra.mrb[0].mxu0 %v1682
      %v2032 = vpop.f32.mrb[0].mxu0
      %v2033 = vadd.f32 0.0, %v2032
      %v2034 = vpop.f32.mrb[0].mxu0
      %v2035 = vpop.f32.mrb[0].mxu0
      %v2036 = vadd.f32 0.0, %v2035
      %v2037 = vpop.f32.mrb[0].mxu0
      %2038 = vdwg.mxu0
      %2039 = vmatprep.subr.bf16.mxu0 0
      %2040 = vmatpush1.bf16.msra.mxu0 %v1846
      %2041 = vmatprep.subr.bf16.mxu0 0
      %2042 = vmatpush1.bf16.msra.mxu0 %v1847
      %2043 = vmatprep.subr.bf16.mxu0 0
      %2044 = vmatpush1.bf16.msra.mxu0 %v1848
      %2045 = vmatprep.subr.bf16.mxu0 0
      %2046 = vmatpush1.bf16.msra.mxu0 %v1849
      %2047 = vmatprep.subr.bf16.mxu0 0
      %2048 = vmatpush1.bf16.msra.mxu0 %v1850
      %2049 = vmatprep.subr.bf16.mxu0 0
      %2050 = vmatpush1.bf16.msra.mxu0 %v1851
      %2051 = vmatprep.subr.bf16.mxu0 0
      %2052 = vmatpush1.bf16.msra.mxu0 %v1852
      %2053 = vmatprep.subr.bf16.mxu0 0
      %2054 = vmatpush1.bf16.msra.mxu0 %v1853
      %2055 = vmatprep.subr.bf16.mxu0 0
      %2056 = vmatpush1.bf16.msra.mxu0 0
      %2057 = vmatprep.subr.bf16.mxu0 0
      %2058 = vmatpush1.bf16.msra.mxu0 0
      %2059 = vmatprep.subr.bf16.mxu0 0
      %2060 = vmatpush1.bf16.msra.mxu0 0
      %2061 = vmatprep.subr.bf16.mxu0 0
      %2062 = vmatpush1.bf16.msra.mxu0 0
      %2063 = vmatprep.subr.bf16.mxu0 0
      %2064 = vmatpush1.bf16.msra.mxu0 0
      %2065 = vmatprep.subr.bf16.mxu0 0
      %2066 = vmatpush1.bf16.msra.mxu0 0
      %2067 = vmatprep.subr.bf16.mxu0 0
      %2068 = vmatpush1.bf16.msra.mxu0 0
      %2069 = vmatprep.subr.bf16.mxu0 0
      %2070 = vmatpush1.bf16.msra.mxu0 0
      %2071 = vmatprep.mubr.bf16.mxu0 0
      %2072 = vmatmul.mubr.bf16.gmra.mrb[0].mxu0 %v1669
      %v2073 = vpop.f32.mrb[0].mxu0
      %v2074 = vadd.f32 %v1913, %v2073
      %v2075 = vpop.f32.mrb[0].mxu0
      %v2076 = vpop.f32.mrb[0].mxu0
      %v2077 = vadd.f32 %v1916, %v2076
      %v2078 = vpop.f32.mrb[0].mxu0
      %2079 = vmatprep.mubr.bf16.mxu0 0
      %2080 = vmatmul.mubr.bf16.gmra.mrb[0].mxu0 %v1670
      %v2081 = vpop.f32.mrb[0].mxu0
      %v2082 = vadd.f32 %v1921, %v2081
      %v2083 = vpop.f32.mrb[0].mxu0
      %v2084 = vpop.f32.mrb[0].mxu0
      %v2085 = vadd.f32 %v1924, %v2084
      %v2086 = vpop.f32.mrb[0].mxu0
      %2087 = vmatprep.mubr.bf16.mxu0 0
      %2088 = vmatmul.mubr.bf16.gmra.mrb[0].mxu0 %v1671
      %v2089 = vpop.f32.mrb[0].mxu0
      %v2090 = vadd.f32 %v1929, %v2089
      %v2091 = vpop.f32.mrb[0].mxu0
      %v2092 = vpop.f32.mrb[0].mxu0
      %v2093 = vadd.f32 %v1932, %v2092
      %v2094 = vpop.f32.mrb[0].mxu0
      %2095 = vmatprep.mubr.bf16.mxu0 0
      %2096 = vmatmul.mubr.bf16.gmra.mrb[0].mxu0 %v1672
      %v2097 = vpop.f32.mrb[0].mxu0
      %v2098 = vadd.f32 %v1937, %v2097
      %v2099 = vpop.f32.mrb[0].mxu0
      %v2100 = vpop.f32.mrb[0].mxu0
      %v2101 = vadd.f32 %v1940, %v2100
      %v2102 = vpop.f32.mrb[0].mxu0
      %2103 = vmatprep.mubr.bf16.mxu0 0
      %2104 = vmatmul.mubr.bf16.gmra.mrb[0].mxu0 %v1673
      %v2105 = vpop.f32.mrb[0].mxu0
      %v2106 = vadd.f32 %v1945, %v2105
      %v2107 = vpop.f32.mrb[0].mxu0
      %v2108 = vpop.f32.mrb[0].mxu0
      %v2109 = vadd.f32 %v1948, %v2108
      %v2110 = vpop.f32.mrb[0].mxu0
      %2111 = vmatprep.mubr.bf16.mxu0 0
      %2112 = vmatmul.mubr.bf16.gmra.mrb[0].mxu0 %v1674
      %v2113 = vpop.f32.mrb[0].mxu0
      %v2114 = vadd.f32 %v1953, %v2113
      %v2115 = vpop.f32.mrb[0].mxu0
      %v2116 = vpop.f32.mrb[0].mxu0
      %v2117 = vadd.f32 %v1956, %v2116
      %v2118 = vpop.f32.mrb[0].mxu0
      %2119 = vmatprep.mubr.bf16.mxu0 0
      %2120 = vmatmul.mubr.bf16.gmra.mrb[0].mxu0 %v1675
      %v2121 = vpop.f32.mrb[0].mxu0
      %v2122 = vadd.f32 %v1961, %v2121
      %v2123 = vpop.f32.mrb[0].mxu0
      %v2124 = vpop.f32.mrb[0].mxu0
      %v2125 = vadd.f32 %v1964, %v2124
      %v2126 = vpop.f32.mrb[0].mxu0
      %2127 = vmatprep.mubr.bf16.mxu0 0
      %2128 = vmatmul.mubr.bf16.gmra.mrb[0].mxu0 %v1676
      %v2129 = vpop.f32.mrb[0].mxu0
      %v2130 = vadd.f32 %v1969, %v2129
      %v2131 = vpop.f32.mrb[0].mxu0
      %v2132 = vpop.f32.mrb[0].mxu0
      %v2133 = vadd.f32 %v1972, %v2132
      %v2134 = vpop.f32.mrb[0].mxu0
      %2135 = vmatprep.mubr.bf16.mxu0 0
      %2136 = vmatmul.mubr.bf16.gmra.mrb[0].mxu0 %v1677
      %v2137 = vpop.f32.mrb[0].mxu0
      %v2138 = vadd.f32 %v1977, %v2137
      %v2139 = vpop.f32.mrb[0].mxu0
      %v2140 = vpop.f32.mrb[0].mxu0
      %v2141 = vadd.f32 %v1980, %v2140
      %v2142 = vpop.f32.mrb[0].mxu0
      %2143 = vmatprep.mubr.bf16.mxu0 0
      %2144 = vmatmul.mubr.bf16.gmra.mrb[0].mxu0 %v1678
      %v2145 = vpop.f32.mrb[0].mxu0
      %v2146 = vadd.f32 %v1985, %v2145
      %v2147 = vpop.f32.mrb[0].mxu0
      %v2148 = vpop.f32.mrb[0].mxu0
      %v2149 = vadd.f32 %v1988, %v2148
      %v2150 = vpop.f32.mrb[0].mxu0
      %2151 = vmatprep.mubr.bf16.mxu0 0
      %2152 = vmatmul.mubr.bf16.gmra.mrb[0].mxu0 %v1679
      %v2153 = vpop.f32.mrb[0].mxu0
      %v2154 = vadd.f32 %v1993, %v2153
      %v2155 = vpop.f32.mrb[0].mxu0
      %v2156 = vpop.f32.mrb[0].mxu0
      %v2157 = vadd.f32 %v1996, %v2156
      %v2158 = vpop.f32.mrb[0].mxu0
      %2159 = vmatprep.mubr.bf16.mxu0 0
      %2160 = vmatmul.mubr.bf16.gmra.mrb[0].mxu0 %v1680
      %v2161 = vpop.f32.mrb[0].mxu0
      %v2162 = vadd.f32 %v2001, %v2161
      %v2163 = vpop.f32.mrb[0].mxu0
      %v2164 = vpop.f32.mrb[0].mxu0
      %v2165 = vadd.f32 %v2004, %v2164
      %v2166 = vpop.f32.mrb[0].mxu0
      %2167 = vmatprep.mubr.bf16.mxu0 0
      %2168 = vmatmul.mubr.bf16.gmra.mrb[0].mxu0 %v1681
      %v2169 = vpop.f32.mrb[0].mxu0
      %v2170 = vadd.f32 %v2009, %v2169
      %v2171 = vpop.f32.mrb[0].mxu0
      %v2172 = vpop.f32.mrb[0].mxu0
      %v2173 = vadd.f32 %v2012, %v2172
      %v2174 = vpop.f32.mrb[0].mxu0
      %2175 = vmatprep.mubr.bf16.mxu0 0
      %2176 = vmatmul.mubr.bf16.gmra.mrb[0].mxu0 %v1682
      %v2177 = vpop.f32.mrb[0].mxu0
      %v2178 = vadd.f32 %v2017, %v2177
      %v2179 = vpop.f32.mrb[0].mxu0
      %v2180 = vpop.f32.mrb[0].mxu0
      %v2181 = vadd.f32 %v2020, %v2180
      %v2182 = vpop.f32.mrb[0].mxu0
      %2183 = vmatprep.mubr.bf16.mxu0 0
      %2184 = vmatmul.mubr.bf16.gmra.mrb[0].mxu0 %v1683
      %v2185 = vpop.f32.mrb[0].mxu0
      %v2186 = vadd.f32 %v2025, %v2185
      %v2187 = vpop.f32.mrb[0].mxu0
      %v2188 = vpop.f32.mrb[0].mxu0
      %v2189 = vadd.f32 %v2028, %v2188
      %v2190 = vpop.f32.mrb[0].mxu0
      %2191 = vmatprep.mubr.bf16.mxu0 0
      %2192 = vmatmul.mubr.bf16.gmra.mrb[0].mxu0 %v1684
      %v2193 = vpop.f32.mrb[0].mxu0
      %v2194 = vadd.f32 %v2033, %v2193
      %v2195 = vpop.f32.mrb[0].mxu0
      %v2196 = vpop.f32.mrb[0].mxu0
      %v2197 = vadd.f32 %v2036, %v2196
      %v2198 = vpop.f32.mrb[0].mxu0
      %2199 = vdwg.mxu0
      %v2200 = vadd.f32 %v1599, %v2074
      %v2201 = vadd.f32 %v1600, %v2077
      %v2202 = vadd.f32 %v1601, %v2082
      %v2203 = vadd.f32 %v1602, %v2085
      %v2204 = vadd.f32 %v1603, %v2090
      %v2205 = vadd.f32 %v1604, %v2093
      %v2206 = vadd.f32 %v1605, %v2098
      %v2207 = vadd.f32 %v1606, %v2101
      %v2208 = vadd.f32 %v1607, %v2106
      %v2209 = vadd.f32 %v1608, %v2109
      %v2210 = vadd.f32 %v1609, %v2114
      %v2211 = vadd.f32 %v1610, %v2117
      %v2212 = vadd.f32 %v1611, %v2122
      %v2213 = vadd.f32 %v1612, %v2125
      %v2214 = vadd.f32 %v1613, %v2130
      %v2215 = vadd.f32 %v1614, %v2133
      %v2216 = vadd.f32 %v1615, %v2138
      %v2217 = vadd.f32 %v1616, %v2141
      %v2218 = vadd.f32 %v1617, %v2146
      %v2219 = vadd.f32 %v1618, %v2149
      %v2220 = vadd.f32 %v1619, %v2154
      %v2221 = vadd.f32 %v1620, %v2157
      %v2222 = vadd.f32 %v1621, %v2162
      %v2223 = vadd.f32 %v1622, %v2165
      %v2224 = vadd.f32 %v1623, %v2170
      %v2225 = vadd.f32 %v1624, %v2173
      %v2226 = vadd.f32 %v1625, %v2178
      %v2227 = vadd.f32 %v1626, %v2181
      %v2228 = vadd.f32 %v1627, %v2186
      %v2229 = vadd.f32 %v1628, %v2189
      %v2230 = vadd.f32 %v1629, %v2194
      %v2231 = vadd.f32 %v1630, %v2197
      %vm2232 = vcmp.le.s32.totalorder %v903, 14
      %vm2233 = vcmp.le.s32.totalorder %v904, 14
      %vm2234 = vcmp.le.s32.totalorder %v905, 14
      %vm2235 = vcmp.le.s32.totalorder %v906, 14
      %vm2236 = vcmp.le.s32.totalorder %v907, 14
      %vm2237 = vcmp.le.s32.totalorder %v908, 14
      %vm2238 = vcmp.le.s32.totalorder %v909, 14
      %vm2239 = vcmp.le.s32.totalorder %v910, 14
      %vm2240 = vcmp.le.s32.totalorder %v911, 14
      %vm2241 = vcmp.le.s32.totalorder %v912, 14
      %vm2242 = vcmp.le.s32.totalorder %v913, 14
      %vm2243 = vcmp.le.s32.totalorder %v914, 14
      %vm2244 = vcmp.le.s32.totalorder %v915, 14
      %vm2245 = vcmp.le.s32.totalorder %v916, 14
      %vm2246 = vcmp.le.s32.totalorder %v917, 14
      %vm2247 = vcmp.le.s32.totalorder %v918, 14
      %vm2248 = vcmp.le.s32.totalorder %v919, 14
      %vm2249 = vcmp.le.s32.totalorder %v920, 14
      %vm2250 = vcmp.le.s32.totalorder %v921, 14
      %vm2251 = vcmp.le.s32.totalorder %v922, 14
      %vm2252 = vcmp.le.s32.totalorder %v923, 14
      %vm2253 = vcmp.le.s32.totalorder %v924, 14
      %vm2254 = vcmp.le.s32.totalorder %v925, 14
      %vm2255 = vcmp.le.s32.totalorder %v926, 14
      %vm2256 = vcmp.le.s32.totalorder %v927, 14
      %vm2257 = vcmp.le.s32.totalorder %v928, 14
      %vm2258 = vcmp.le.s32.totalorder %v929, 14
      %vm2259 = vcmp.le.s32.totalorder %v930, 14
      %vm2260 = vcmp.le.s32.totalorder %v931, 14
      %vm2261 = vcmp.le.s32.totalorder %v932, 14
      %vm2262 = vcmp.le.s32.totalorder %v933, 14
      %vm2263 = vcmp.le.s32.totalorder %v934, 14
      %v2264 = vld [vmem:[#allocation2 + $0x9] sm:$0xff]
      %v2265 = vld [vmem:[#allocation2 + $0x11] sm:$0xff]
      %v2266 = vld [vmem:[#allocation2 + $0x19] sm:$0xff]
      %v2267 = vld [vmem:[#allocation2 + $0x21] sm:$0xff]
      %v2268 = vld [vmem:[#allocation2 + $0x29] sm:$0xff]
      %v2269 = vld [vmem:[#allocation2 + $0x31] sm:$0xff]
      %v2270 = vld [vmem:[#allocation2 + $0x39] sm:$0xff]
      %v2271 = vld [vmem:[#allocation2 + $0x41] sm:$0xff]
      %v2272 = vld [vmem:[#allocation2 + $0x49] sm:$0xff]
      %v2273 = vld [vmem:[#allocation2 + $0x51] sm:$0xff]
      %v2274 = vld [vmem:[#allocation2 + $0x59] sm:$0xff]
      %v2275 = vld [vmem:[#allocation2 + $0x61] sm:$0xff]
      %v2276 = vld [vmem:[#allocation2 + $0x69] sm:$0xff]
      %v2277 = vld [vmem:[#allocation2 + $0x71] sm:$0xff]
      %v2278 = vld [vmem:[#allocation2 + $0x79] sm:$0xff]
      %v2279 = vld [vmem:[#allocation2 + $0x81] sm:$0xff]
      %v2280 = vld [vmem:[#allocation2 + $0x89] sm:$0xff]
      %v2281 = vld [vmem:[#allocation2 + $0x91] sm:$0xff]
      %v2282 = vld [vmem:[#allocation2 + $0x99] sm:$0xff]
      %v2283 = vld [vmem:[#allocation2 + $0xa1] sm:$0xff]
      %v2284 = vld [vmem:[#allocation2 + $0xa9] sm:$0xff]
      %v2285 = vld [vmem:[#allocation2 + $0xb1] sm:$0xff]
      %v2286 = vld [vmem:[#allocation2 + $0xb9] sm:$0xff]
      %v2287 = vld [vmem:[#allocation2 + $0xc1] sm:$0xff]
      %v2288 = vld [vmem:[#allocation2 + $0xc9] sm:$0xff]
      %v2289 = vld [vmem:[#allocation2 + $0xd1] sm:$0xff]
      %v2290 = vld [vmem:[#allocation2 + $0xd9] sm:$0xff]
      %v2291 = vld [vmem:[#allocation2 + $0xe1] sm:$0xff]
      %v2292 = vld [vmem:[#allocation2 + $0xe9] sm:$0xff]
      %v2293 = vld [vmem:[#allocation2 + $0xf1] sm:$0xff]
      %v2294 = vld [vmem:[#allocation2 + $0xf9] sm:$0xff]
      %v2295 = vld [vmem:[#allocation2 + $0x101] sm:$0xff]
      %v2296 = vld [vmem:[#allocation2 + $0x109] sm:$0xff]
      %v2297 = vld [vmem:[#allocation2 + $0x111] sm:$0xff]
      %v2298 = vld [vmem:[#allocation2 + $0x119] sm:$0xff]
      %v2299 = vld [vmem:[#allocation2 + $0x121] sm:$0xff]
      %v2300 = vpack.c.bf16 %v2265, %v2264
      %v2301 = vpack.c.bf16 %v2267, %v2266
      %v2302 = vpack.c.bf16 %v2269, %v2268
      %v2303 = vpack.c.bf16 %v2271, %v2270
      %v2304 = vpack.c.bf16 %v2273, %v2272
      %v2305 = vpack.c.bf16 %v2275, %v2274
      %v2306 = vpack.c.bf16 %v2277, %v2276
      %v2307 = vpack.c.bf16 %v2279, %v2278
      %v2308 = vpack.c.bf16 %v2281, %v2280
      %v2309 = vpack.c.bf16 %v2283, %v2282
      %v2310 = vpack.c.bf16 %v2285, %v2284
      %v2311 = vpack.c.bf16 %v2287, %v2286
      %v2312 = vpack.c.bf16 %v2289, %v2288
      %v2313 = vpack.c.bf16 %v2291, %v2290
      %v2314 = vpack.c.bf16 %v2293, %v2292
      %v2315 = vpack.c.bf16 %v2295, %v2294
      %v2316 = vpack.c.bf16 %v2297, %v2296
      %v2317 = vpack.c.bf16 %v2299, %v2298
      %s2318 = scalar_lea.vmem %s3, 384
      %v2319 = vld [vmem:[%s2318] sm:$0xf]
      %v2320 = vld [vmem:[%s2318 + $0x4] sm:$0xf]
      %v2321 = vld [vmem:[%s2318 + $0x8] sm:$0xf]
      %v2322 = vld [vmem:[%s2318 + $0xc] sm:$0xf]
      %v2323 = vld [vmem:[%s2318 + $0x10] sm:$0xf]
      %v2324 = vld [vmem:[%s2318 + $0x14] sm:$0xf]
      %v2325 = vld [vmem:[%s2318 + $0x18] sm:$0xf]
      %v2326 = vld [vmem:[%s2318 + $0x1c] sm:$0xf]
      %v2327 = vld [vmem:[%s2318 + $0x20] sm:$0xf]
      %v2328 = vld [vmem:[%s2318 + $0x24] sm:$0xf]
      %v2329 = vld [vmem:[%s2318 + $0x28] sm:$0xf]
      %v2330 = vld [vmem:[%s2318 + $0x2c] sm:$0xf]
      %v2331 = vld [vmem:[%s2318 + $0x30] sm:$0xf]
      %v2332 = vld [vmem:[%s2318 + $0x34] sm:$0xf]
      %v2333 = vld [vmem:[%s2318 + $0x38] sm:$0xf]
      %v2334 = vld [vmem:[%s2318 + $0x3c] sm:$0xf]
      %v2335 = vld [vmem:[%s2318 + $0x40] sm:$0xf]
      %v2336 = vld [vmem:[%s2318 + $0x44] sm:$0xf]
      %v2337 = vld [vmem:[%s2318 + $0x48] sm:$0xf]
      %v2338 = vld [vmem:[%s2318 + $0x4c] sm:$0xf]
      %v2339 = vld [vmem:[%s2318 + $0x50] sm:$0xf]
      %v2340 = vld [vmem:[%s2318 + $0x54] sm:$0xf]
      %v2341 = vld [vmem:[%s2318 + $0x58] sm:$0xf]
      %v2342 = vld [vmem:[%s2318 + $0x5c] sm:$0xf]
      %v2343 = vld [vmem:[%s2318 + $0x60] sm:$0xf]
      %v2344 = vld [vmem:[%s2318 + $0x64] sm:$0xf]
      %v2345 = vld [vmem:[%s2318 + $0x68] sm:$0xf]
      %v2346 = vld [vmem:[%s2318 + $0x6c] sm:$0xf]
      %v2347 = vld [vmem:[%s2318 + $0x70] sm:$0xf]
      %v2348 = vld [vmem:[%s2318 + $0x74] sm:$0xf]
      %v2349 = vld [vmem:[%s2318 + $0x78] sm:$0xf]
      %v2350 = vld [vmem:[%s2318 + $0x7c] sm:$0xf]
      %v2351 = vld [vmem:[%s2318 + $0x80] sm:$0xf]
      %v2352 = vld [vmem:[%s2318 + $0x84] sm:$0xf]
      %v2353 = vld [vmem:[%s2318 + $0x88] sm:$0xf]
      %v2354 = vld [vmem:[%s2318 + $0x8c] sm:$0xf]
      %v2355 = vld [vmem:[%s2318 + $0x90] sm:$0xf]
      %v2356 = vld [vmem:[%s2318 + $0x94] sm:$0xf]
      %v2357 = vld [vmem:[%s2318 + $0x98] sm:$0xf]
      %v2358 = vld [vmem:[%s2318 + $0x9c] sm:$0xf]
      %v2359 = vld [vmem:[%s2318 + $0xa0] sm:$0xf]
      %v2360 = vld [vmem:[%s2318 + $0xa4] sm:$0xf]
      %v2361 = vld [vmem:[%s2318 + $0xa8] sm:$0xf]
      %v2362 = vld [vmem:[%s2318 + $0xac] sm:$0xf]
      %v2363 = vld [vmem:[%s2318 + $0xb0] sm:$0xf]
      %v2364 = vld [vmem:[%s2318 + $0xb4] sm:$0xf]
      %v2365 = vld [vmem:[%s2318 + $0xb8] sm:$0xf]
      %v2366 = vld [vmem:[%s2318 + $0xbc] sm:$0xf]
      %v2415 = vunpack.c.l.b16 %v2319
      %v2416 = vunpack.c.l.b16 %v2320
      %v2417 = vunpack.c.l.b16 %v2321
      %v2418 = vunpack.c.l.b16 %v2322
      %v2419 = vunpack.c.l.b16 %v2323
      %v2420 = vunpack.c.l.b16 %v2324
      %v2421 = vunpack.c.l.b16 %v2325
      %v2422 = vunpack.c.l.b16 %v2326
      %v2423 = vunpack.c.l.b16 %v2327
      %v2424 = vunpack.c.l.b16 %v2328
      %v2425 = vunpack.c.l.b16 %v2329
      %v2426 = vunpack.c.l.b16 %v2330
      %v2427 = vunpack.c.l.b16 %v2331
      %v2428 = vunpack.c.l.b16 %v2332
      %v2429 = vunpack.c.l.b16 %v2333
      %v2430 = vunpack.c.l.b16 %v2334
      %v2431 = vunpack.c.l.b16 %v2335
      %v2432 = vunpack.c.l.b16 %v2336
      %v2433 = vunpack.c.l.b16 %v2337
      %v2434 = vunpack.c.l.b16 %v2338
      %v2435 = vunpack.c.l.b16 %v2339
      %v2436 = vunpack.c.l.b16 %v2340
      %v2437 = vunpack.c.l.b16 %v2341
      %v2438 = vunpack.c.l.b16 %v2342
      %v2439 = vunpack.c.l.b16 %v2343
      %v2440 = vunpack.c.l.b16 %v2344
      %v2441 = vunpack.c.l.b16 %v2345
      %v2442 = vunpack.c.l.b16 %v2346
      %v2443 = vunpack.c.l.b16 %v2347
      %v2444 = vunpack.c.l.b16 %v2348
      %v2445 = vunpack.c.l.b16 %v2349
      %v2446 = vunpack.c.l.b16 %v2350
      %v2447 = vunpack.c.l.b16 %v2351
      %v2448 = vunpack.c.l.b16 %v2352
      %v2449 = vunpack.c.l.b16 %v2353
      %v2450 = vunpack.c.l.b16 %v2354
      %v2451 = vunpack.c.l.b16 %v2355
      %v2452 = vunpack.c.l.b16 %v2356
      %v2453 = vunpack.c.l.b16 %v2357
      %v2454 = vunpack.c.l.b16 %v2358
      %v2455 = vunpack.c.l.b16 %v2359
      %v2456 = vunpack.c.l.b16 %v2360
      %v2457 = vunpack.c.l.b16 %v2361
      %v2458 = vunpack.c.l.b16 %v2362
      %v2459 = vunpack.c.l.b16 %v2363
      %v2460 = vunpack.c.l.b16 %v2364
      %v2461 = vunpack.c.l.b16 %v2365
      %v2462 = vunpack.c.l.b16 %v2366
      %v2463 = vpack.c.b16 %v2416, %v2415
      %v2464 = vpack.c.b16 %v2418, %v2417
      %v2465 = vpack.c.b16 %v2420, %v2419
      %v2466 = vpack.c.b16 %v2422, %v2421
      %v2467 = vpack.c.b16 %v2424, %v2423
      %v2468 = vpack.c.b16 %v2426, %v2425
      %v2469 = vpack.c.b16 %v2428, %v2427
      %v2470 = vpack.c.b16 %v2430, %v2429
      %v2471 = vpack.c.b16 %v2432, %v2431
      %v2472 = vpack.c.b16 %v2434, %v2433
      %v2473 = vpack.c.b16 %v2436, %v2435
      %v2474 = vpack.c.b16 %v2438, %v2437
      %v2475 = vpack.c.b16 %v2440, %v2439
      %v2476 = vpack.c.b16 %v2442, %v2441
      %v2477 = vpack.c.b16 %v2444, %v2443
      %v2478 = vpack.c.b16 %v2446, %v2445
      %v2479 = vpack.c.b16 %v2448, %v2447
      %v2480 = vpack.c.b16 %v2450, %v2449
      %v2481 = vpack.c.b16 %v2452, %v2451
      %v2482 = vpack.c.b16 %v2454, %v2453
      %v2483 = vpack.c.b16 %v2456, %v2455
      %v2484 = vpack.c.b16 %v2458, %v2457
      %v2485 = vpack.c.b16 %v2460, %v2459
      %v2486 = vpack.c.b16 %v2462, %v2461
      %2511 = vmatprep.subr.bf16.mxu0 0
      %2512 = vmatpush1.bf16.msra.mxu0 %v2463
      %2513 = vmatprep.subr.bf16.mxu0 0
      %2514 = vmatpush1.bf16.msra.mxu0 %v2464
      %2515 = vmatprep.subr.bf16.mxu0 0
      %2516 = vmatpush1.bf16.msra.mxu0 %v2465
      %2517 = vmatprep.subr.bf16.mxu0 0
      %2518 = vmatpush1.bf16.msra.mxu0 %v2466
      %2519 = vmatprep.subr.bf16.mxu0 0
      %2520 = vmatpush1.bf16.msra.mxu0 %v2467
      %2521 = vmatprep.subr.bf16.mxu0 0
      %2522 = vmatpush1.bf16.msra.mxu0 %v2468
      %2523 = vmatprep.subr.bf16.mxu0 0
      %2524 = vmatpush1.bf16.msra.mxu0 %v2469
      %2525 = vmatprep.subr.bf16.mxu0 0
      %2526 = vmatpush1.bf16.msra.mxu0 %v2470
      %2527 = vmatprep.subr.bf16.mxu0 0
      %2528 = vmatpush1.bf16.msra.mxu0 %v2471
      %2529 = vmatprep.subr.bf16.mxu0 0
      %2530 = vmatpush1.bf16.msra.mxu0 %v2472
      %2531 = vmatprep.subr.bf16.mxu0 0
      %2532 = vmatpush1.bf16.msra.mxu0 %v2473
      %2533 = vmatprep.subr.bf16.mxu0 0
      %2534 = vmatpush1.bf16.msra.mxu0 %v2474
      %2535 = vmatprep.subr.bf16.mxu0 0
      %2536 = vmatpush1.bf16.msra.mxu0 %v2475
      %2537 = vmatprep.subr.bf16.mxu0 0
      %2538 = vmatpush1.bf16.msra.mxu0 %v2476
      %2539 = vmatprep.subr.bf16.mxu0 0
      %2540 = vmatpush1.bf16.msra.mxu0 %v2477
      %2541 = vmatprep.subr.bf16.mxu0 0
      %2542 = vmatpush1.bf16.msra.mxu0 %v2478
      %2543 = vmatprep.mubr.bf16.mxu0 %v2301
      %2544 = vmatmul.mubr.bf16.gmra.mrb[0].mxu0 %v2300
      %v2545 = vpop.f32.mrb[0].mxu0
      %v2546 = vadd.f32 0.0, %v2545
      %v2547 = vpop.f32.mrb[0].mxu0
      %v2548 = vpop.f32.mrb[0].mxu0
      %v2549 = vadd.f32 0.0, %v2548
      %v2550 = vpop.f32.mrb[0].mxu0
      %2551 = vmatprep.mubr.bf16.mxu0 %v2302
      %2552 = vmatmul.mubr.bf16.gmra.mrb[0].mxu0 %v2301
      %v2553 = vpop.f32.mrb[0].mxu0
      %v2554 = vadd.f32 0.0, %v2553
      %v2555 = vpop.f32.mrb[0].mxu0
      %v2556 = vpop.f32.mrb[0].mxu0
      %v2557 = vadd.f32 0.0, %v2556
      %v2558 = vpop.f32.mrb[0].mxu0
      %2559 = vmatprep.mubr.bf16.mxu0 %v2303
      %2560 = vmatmul.mubr.bf16.gmra.mrb[0].mxu0 %v2302
      %v2561 = vpop.f32.mrb[0].mxu0
      %v2562 = vadd.f32 0.0, %v2561
      %v2563 = vpop.f32.mrb[0].mxu0
      %v2564 = vpop.f32.mrb[0].mxu0
      %v2565 = vadd.f32 0.0, %v2564
      %v2566 = vpop.f32.mrb[0].mxu0
      %2567 = vmatprep.mubr.bf16.mxu0 %v2304
      %2568 = vmatmul.mubr.bf16.gmra.mrb[0].mxu0 %v2303
      %v2569 = vpop.f32.mrb[0].mxu0
      %v2570 = vadd.f32 0.0, %v2569
      %v2571 = vpop.f32.mrb[0].mxu0
      %v2572 = vpop.f32.mrb[0].mxu0
      %v2573 = vadd.f32 0.0, %v2572
      %v2574 = vpop.f32.mrb[0].mxu0
      %2575 = vmatprep.mubr.bf16.mxu0 %v2305
      %2576 = vmatmul.mubr.bf16.gmra.mrb[0].mxu0 %v2304
      %v2577 = vpop.f32.mrb[0].mxu0
      %v2578 = vadd.f32 0.0, %v2577
      %v2579 = vpop.f32.mrb[0].mxu0
      %v2580 = vpop.f32.mrb[0].mxu0
      %v2581 = vadd.f32 0.0, %v2580
      %v2582 = vpop.f32.mrb[0].mxu0
      %2583 = vmatprep.mubr.bf16.mxu0 %v2306
      %2584 = vmatmul.mubr.bf16.gmra.mrb[0].mxu0 %v2305
      %v2585 = vpop.f32.mrb[0].mxu0
      %v2586 = vadd.f32 0.0, %v2585
      %v2587 = vpop.f32.mrb[0].mxu0
      %v2588 = vpop.f32.mrb[0].mxu0
      %v2589 = vadd.f32 0.0, %v2588
      %v2590 = vpop.f32.mrb[0].mxu0
      %2591 = vmatprep.mubr.bf16.mxu0 %v2307
      %2592 = vmatmul.mubr.bf16.gmra.mrb[0].mxu0 %v2306
      %v2593 = vpop.f32.mrb[0].mxu0
      %v2594 = vadd.f32 0.0, %v2593
      %v2595 = vpop.f32.mrb[0].mxu0
      %v2596 = vpop.f32.mrb[0].mxu0
      %v2597 = vadd.f32 0.0, %v2596
      %v2598 = vpop.f32.mrb[0].mxu0
      %2599 = vmatprep.mubr.bf16.mxu0 %v2308
      %2600 = vmatmul.mubr.bf16.gmra.mrb[0].mxu0 %v2307
      %v2601 = vpop.f32.mrb[0].mxu0
      %v2602 = vadd.f32 0.0, %v2601
      %v2603 = vpop.f32.mrb[0].mxu0
      %v2604 = vpop.f32.mrb[0].mxu0
      %v2605 = vadd.f32 0.0, %v2604
      %v2606 = vpop.f32.mrb[0].mxu0
      %2607 = vmatprep.mubr.bf16.mxu0 %v2309
      %2608 = vmatmul.mubr.bf16.gmra.mrb[0].mxu0 %v2308
      %v2609 = vpop.f32.mrb[0].mxu0
      %v2610 = vadd.f32 0.0, %v2609
      %v2611 = vpop.f32.mrb[0].mxu0
      %v2612 = vpop.f32.mrb[0].mxu0
      %v2613 = vadd.f32 0.0, %v2612
      %v2614 = vpop.f32.mrb[0].mxu0
      %2615 = vmatprep.mubr.bf16.mxu0 %v2310
      %2616 = vmatmul.mubr.bf16.gmra.mrb[0].mxu0 %v2309
      %v2617 = vpop.f32.mrb[0].mxu0
      %v2618 = vadd.f32 0.0, %v2617
      %v2619 = vpop.f32.mrb[0].mxu0
      %v2620 = vpop.f32.mrb[0].mxu0
      %v2621 = vadd.f32 0.0, %v2620
      %v2622 = vpop.f32.mrb[0].mxu0
      %2623 = vmatprep.mubr.bf16.mxu0 %v2311
      %2624 = vmatmul.mubr.bf16.gmra.mrb[0].mxu0 %v2310
      %v2625 = vpop.f32.mrb[0].mxu0
      %v2626 = vadd.f32 0.0, %v2625
      %v2627 = vpop.f32.mrb[0].mxu0
      %v2628 = vpop.f32.mrb[0].mxu0
      %v2629 = vadd.f32 0.0, %v2628
      %v2630 = vpop.f32.mrb[0].mxu0
      %2631 = vmatprep.mubr.bf16.mxu0 %v2312
      %2632 = vmatmul.mubr.bf16.gmra.mrb[0].mxu0 %v2311
      %v2633 = vpop.f32.mrb[0].mxu0
      %v2634 = vadd.f32 0.0, %v2633
      %v2635 = vpop.f32.mrb[0].mxu0
      %v2636 = vpop.f32.mrb[0].mxu0
      %v2637 = vadd.f32 0.0, %v2636
      %v2638 = vpop.f32.mrb[0].mxu0
      %2639 = vmatprep.mubr.bf16.mxu0 %v2313
      %2640 = vmatmul.mubr.bf16.gmra.mrb[0].mxu0 %v2312
      %v2641 = vpop.f32.mrb[0].mxu0
      %v2642 = vadd.f32 0.0, %v2641
      %v2643 = vpop.f32.mrb[0].mxu0
      %v2644 = vpop.f32.mrb[0].mxu0
      %v2645 = vadd.f32 0.0, %v2644
      %v2646 = vpop.f32.mrb[0].mxu0
      %2647 = vmatprep.mubr.bf16.mxu0 %v2314
      %2648 = vmatmul.mubr.bf16.gmra.mrb[0].mxu0 %v2313
      %v2649 = vpop.f32.mrb[0].mxu0
      %v2650 = vadd.f32 0.0, %v2649
      %v2651 = vpop.f32.mrb[0].mxu0
      %v2652 = vpop.f32.mrb[0].mxu0
      %v2653 = vadd.f32 0.0, %v2652
      %v2654 = vpop.f32.mrb[0].mxu0
      %2655 = vmatprep.mubr.bf16.mxu0 %v2315
      %2656 = vmatmul.mubr.bf16.gmra.mrb[0].mxu0 %v2314
      %v2657 = vpop.f32.mrb[0].mxu0
      %v2658 = vadd.f32 0.0, %v2657
      %v2659 = vpop.f32.mrb[0].mxu0
      %v2660 = vpop.f32.mrb[0].mxu0
      %v2661 = vadd.f32 0.0, %v2660
      %v2662 = vpop.f32.mrb[0].mxu0
      %2663 = vmatprep.mubr.bf16.mxu0 %v2316
      %2664 = vmatmul.mubr.bf16.gmra.mrb[0].mxu0 %v2315
      %v2665 = vpop.f32.mrb[0].mxu0
      %v2666 = vadd.f32 0.0, %v2665
      %v2667 = vpop.f32.mrb[0].mxu0
      %v2668 = vpop.f32.mrb[0].mxu0
      %v2669 = vadd.f32 0.0, %v2668
      %v2670 = vpop.f32.mrb[0].mxu0
      %2671 = vdwg.mxu0
      %2672 = vmatprep.subr.bf16.mxu0 0
      %2673 = vmatpush1.bf16.msra.mxu0 %v2479
      %2674 = vmatprep.subr.bf16.mxu0 0
      %2675 = vmatpush1.bf16.msra.mxu0 %v2480
      %2676 = vmatprep.subr.bf16.mxu0 0
      %2677 = vmatpush1.bf16.msra.mxu0 %v2481
      %2678 = vmatprep.subr.bf16.mxu0 0
      %2679 = vmatpush1.bf16.msra.mxu0 %v2482
      %2680 = vmatprep.subr.bf16.mxu0 0
      %2681 = vmatpush1.bf16.msra.mxu0 %v2483
      %2682 = vmatprep.subr.bf16.mxu0 0
      %2683 = vmatpush1.bf16.msra.mxu0 %v2484
      %2684 = vmatprep.subr.bf16.mxu0 0
      %2685 = vmatpush1.bf16.msra.mxu0 %v2485
      %2686 = vmatprep.subr.bf16.mxu0 0
      %2687 = vmatpush1.bf16.msra.mxu0 %v2486
      %2688 = vmatprep.subr.bf16.mxu0 0
      %2689 = vmatpush1.bf16.msra.mxu0 0
      %2690 = vmatprep.subr.bf16.mxu0 0
      %2691 = vmatpush1.bf16.msra.mxu0 0
      %2692 = vmatprep.subr.bf16.mxu0 0
      %2693 = vmatpush1.bf16.msra.mxu0 0
      %2694 = vmatprep.subr.bf16.mxu0 0
      %2695 = vmatpush1.bf16.msra.mxu0 0
      %2696 = vmatprep.subr.bf16.mxu0 0
      %2697 = vmatpush1.bf16.msra.mxu0 0
      %2698 = vmatprep.subr.bf16.mxu0 0
      %2699 = vmatpush1.bf16.msra.mxu0 0
      %2700 = vmatprep.subr.bf16.mxu0 0
      %2701 = vmatpush1.bf16.msra.mxu0 0
      %2702 = vmatprep.subr.bf16.mxu0 0
      %2703 = vmatpush1.bf16.msra.mxu0 0
      %2704 = vmatprep.mubr.bf16.mxu0 0
      %2705 = vmatmul.mubr.bf16.gmra.mrb[0].mxu0 %v2302
      %v2706 = vpop.f32.mrb[0].mxu0
      %v2707 = vadd.f32 %v2546, %v2706
      %v2708 = vpop.f32.mrb[0].mxu0
      %v2709 = vpop.f32.mrb[0].mxu0
      %v2710 = vadd.f32 %v2549, %v2709
      %v2711 = vpop.f32.mrb[0].mxu0
      %2712 = vmatprep.mubr.bf16.mxu0 0
      %2713 = vmatmul.mubr.bf16.gmra.mrb[0].mxu0 %v2303
      %v2714 = vpop.f32.mrb[0].mxu0
      %v2715 = vadd.f32 %v2554, %v2714
      %v2716 = vpop.f32.mrb[0].mxu0
      %v2717 = vpop.f32.mrb[0].mxu0
      %v2718 = vadd.f32 %v2557, %v2717
      %v2719 = vpop.f32.mrb[0].mxu0
      %2720 = vmatprep.mubr.bf16.mxu0 0
      %2721 = vmatmul.mubr.bf16.gmra.mrb[0].mxu0 %v2304
      %v2722 = vpop.f32.mrb[0].mxu0
      %v2723 = vadd.f32 %v2562, %v2722
      %v2724 = vpop.f32.mrb[0].mxu0
      %v2725 = vpop.f32.mrb[0].mxu0
      %v2726 = vadd.f32 %v2565, %v2725
      %v2727 = vpop.f32.mrb[0].mxu0
      %2728 = vmatprep.mubr.bf16.mxu0 0
      %2729 = vmatmul.mubr.bf16.gmra.mrb[0].mxu0 %v2305
      %v2730 = vpop.f32.mrb[0].mxu0
      %v2731 = vadd.f32 %v2570, %v2730
      %v2732 = vpop.f32.mrb[0].mxu0
      %v2733 = vpop.f32.mrb[0].mxu0
      %v2734 = vadd.f32 %v2573, %v2733
      %v2735 = vpop.f32.mrb[0].mxu0
      %2736 = vmatprep.mubr.bf16.mxu0 0
      %2737 = vmatmul.mubr.bf16.gmra.mrb[0].mxu0 %v2306
      %v2738 = vpop.f32.mrb[0].mxu0
      %v2739 = vadd.f32 %v2578, %v2738
      %v2740 = vpop.f32.mrb[0].mxu0
      %v2741 = vpop.f32.mrb[0].mxu0
      %v2742 = vadd.f32 %v2581, %v2741
      %v2743 = vpop.f32.mrb[0].mxu0
      %2744 = vmatprep.mubr.bf16.mxu0 0
      %2745 = vmatmul.mubr.bf16.gmra.mrb[0].mxu0 %v2307
      %v2746 = vpop.f32.mrb[0].mxu0
      %v2747 = vadd.f32 %v2586, %v2746
      %v2748 = vpop.f32.mrb[0].mxu0
      %v2749 = vpop.f32.mrb[0].mxu0
      %v2750 = vadd.f32 %v2589, %v2749
      %v2751 = vpop.f32.mrb[0].mxu0
      %2752 = vmatprep.mubr.bf16.mxu0 0
      %2753 = vmatmul.mubr.bf16.gmra.mrb[0].mxu0 %v2308
      %v2754 = vpop.f32.mrb[0].mxu0
      %v2755 = vadd.f32 %v2594, %v2754
      %v2756 = vpop.f32.mrb[0].mxu0
      %v2757 = vpop.f32.mrb[0].mxu0
      %v2758 = vadd.f32 %v2597, %v2757
      %v2759 = vpop.f32.mrb[0].mxu0
      %2760 = vmatprep.mubr.bf16.mxu0 0
      %2761 = vmatmul.mubr.bf16.gmra.mrb[0].mxu0 %v2309
      %v2762 = vpop.f32.mrb[0].mxu0
      %v2763 = vadd.f32 %v2602, %v2762
      %v2764 = vpop.f32.mrb[0].mxu0
      %v2765 = vpop.f32.mrb[0].mxu0
      %v2766 = vadd.f32 %v2605, %v2765
      %v2767 = vpop.f32.mrb[0].mxu0
      %2768 = vmatprep.mubr.bf16.mxu0 0
      %2769 = vmatmul.mubr.bf16.gmra.mrb[0].mxu0 %v2310
      %v2770 = vpop.f32.mrb[0].mxu0
      %v2771 = vadd.f32 %v2610, %v2770
      %v2772 = vpop.f32.mrb[0].mxu0
      %v2773 = vpop.f32.mrb[0].mxu0
      %v2774 = vadd.f32 %v2613, %v2773
      %v2775 = vpop.f32.mrb[0].mxu0
      %2776 = vmatprep.mubr.bf16.mxu0 0
      %2777 = vmatmul.mubr.bf16.gmra.mrb[0].mxu0 %v2311
      %v2778 = vpop.f32.mrb[0].mxu0
      %v2779 = vadd.f32 %v2618, %v2778
      %v2780 = vpop.f32.mrb[0].mxu0
      %v2781 = vpop.f32.mrb[0].mxu0
      %v2782 = vadd.f32 %v2621, %v2781
      %v2783 = vpop.f32.mrb[0].mxu0
      %2784 = vmatprep.mubr.bf16.mxu0 0
      %2785 = vmatmul.mubr.bf16.gmra.mrb[0].mxu0 %v2312
      %v2786 = vpop.f32.mrb[0].mxu0
      %v2787 = vadd.f32 %v2626, %v2786
      %v2788 = vpop.f32.mrb[0].mxu0
      %v2789 = vpop.f32.mrb[0].mxu0
      %v2790 = vadd.f32 %v2629, %v2789
      %v2791 = vpop.f32.mrb[0].mxu0
      %2792 = vmatprep.mubr.bf16.mxu0 0
      %2793 = vmatmul.mubr.bf16.gmra.mrb[0].mxu0 %v2313
      %v2794 = vpop.f32.mrb[0].mxu0
      %v2795 = vadd.f32 %v2634, %v2794
      %v2796 = vpop.f32.mrb[0].mxu0
      %v2797 = vpop.f32.mrb[0].mxu0
      %v2798 = vadd.f32 %v2637, %v2797
      %v2799 = vpop.f32.mrb[0].mxu0
      %2800 = vmatprep.mubr.bf16.mxu0 0
      %2801 = vmatmul.mubr.bf16.gmra.mrb[0].mxu0 %v2314
      %v2802 = vpop.f32.mrb[0].mxu0
      %v2803 = vadd.f32 %v2642, %v2802
      %v2804 = vpop.f32.mrb[0].mxu0
      %v2805 = vpop.f32.mrb[0].mxu0
      %v2806 = vadd.f32 %v2645, %v2805
      %v2807 = vpop.f32.mrb[0].mxu0
      %2808 = vmatprep.mubr.bf16.mxu0 0
      %2809 = vmatmul.mubr.bf16.gmra.mrb[0].mxu0 %v2315
      %v2810 = vpop.f32.mrb[0].mxu0
      %v2811 = vadd.f32 %v2650, %v2810
      %v2812 = vpop.f32.mrb[0].mxu0
      %v2813 = vpop.f32.mrb[0].mxu0
      %v2814 = vadd.f32 %v2653, %v2813
      %v2815 = vpop.f32.mrb[0].mxu0
      %2816 = vmatprep.mubr.bf16.mxu0 0
      %2817 = vmatmul.mubr.bf16.gmra.mrb[0].mxu0 %v2316
      %v2818 = vpop.f32.mrb[0].mxu0
      %v2819 = vadd.f32 %v2658, %v2818
      %v2820 = vpop.f32.mrb[0].mxu0
      %v2821 = vpop.f32.mrb[0].mxu0
      %v2822 = vadd.f32 %v2661, %v2821
      %v2823 = vpop.f32.mrb[0].mxu0
      %2824 = vmatprep.mubr.bf16.mxu0 0
      %2825 = vmatmul.mubr.bf16.gmra.mrb[0].mxu0 %v2317
      %v2826 = vpop.f32.mrb[0].mxu0
      %v2827 = vadd.f32 %v2666, %v2826
      %v2828 = vpop.f32.mrb[0].mxu0
      %v2829 = vpop.f32.mrb[0].mxu0
      %v2830 = vadd.f32 %v2669, %v2829
      %v2831 = vpop.f32.mrb[0].mxu0
      %2832 = vdwg.mxu0
      %v2833 = vsel %vm2232, 1, 0
      %v2834 = vsel %vm2233, 1, 0
      %v2835 = vsel %vm2234, 1, 0
      %v2836 = vsel %vm2235, 1, 0
      %v2837 = vsel %vm2236, 1, 0
      %v2838 = vsel %vm2237, 1, 0
      %v2839 = vsel %vm2238, 1, 0
      %v2840 = vsel %vm2239, 1, 0
      %v2841 = vsel %vm2240, 1, 0
      %v2842 = vsel %vm2241, 1, 0
      %v2843 = vsel %vm2242, 1, 0
      %v2844 = vsel %vm2243, 1, 0
      %v2845 = vsel %vm2244, 1, 0
      %v2846 = vsel %vm2245, 1, 0
      %v2847 = vsel %vm2246, 1, 0
      %v2848 = vsel %vm2247, 1, 0
      %v2849 = vsel %vm2248, 1, 0
      %v2850 = vsel %vm2249, 1, 0
      %v2851 = vsel %vm2250, 1, 0
      %v2852 = vsel %vm2251, 1, 0
      %v2853 = vsel %vm2252, 1, 0
      %v2854 = vsel %vm2253, 1, 0
      %v2855 = vsel %vm2254, 1, 0
      %v2856 = vsel %vm2255, 1, 0
      %v2857 = vsel %vm2256, 1, 0
      %v2858 = vsel %vm2257, 1, 0
      %v2859 = vsel %vm2258, 1, 0
      %v2860 = vsel %vm2259, 1, 0
      %v2861 = vsel %vm2260, 1, 0
      %v2862 = vsel %vm2261, 1, 0
      %v2863 = vsel %vm2262, 1, 0
      %v2864 = vsel %vm2263, 1, 0
      %vm2865 = vcmp.eq.s32.totalorder %v2833, 1
      %vm2866 = vcmp.eq.s32.totalorder %v2834, 1
      %vm2867 = vcmp.eq.s32.totalorder %v2835, 1
      %vm2868 = vcmp.eq.s32.totalorder %v2836, 1
      %vm2869 = vcmp.eq.s32.totalorder %v2837, 1
      %vm2870 = vcmp.eq.s32.totalorder %v2838, 1
      %vm2871 = vcmp.eq.s32.totalorder %v2839, 1
      %vm2872 = vcmp.eq.s32.totalorder %v2840, 1
      %vm2873 = vcmp.eq.s32.totalorder %v2841, 1
      %vm2874 = vcmp.eq.s32.totalorder %v2842, 1
      %vm2875 = vcmp.eq.s32.totalorder %v2843, 1
      %vm2876 = vcmp.eq.s32.totalorder %v2844, 1
      %vm2877 = vcmp.eq.s32.totalorder %v2845, 1
      %vm2878 = vcmp.eq.s32.totalorder %v2846, 1
      %vm2879 = vcmp.eq.s32.totalorder %v2847, 1
      %vm2880 = vcmp.eq.s32.totalorder %v2848, 1
      %vm2881 = vcmp.eq.s32.totalorder %v2849, 1
      %vm2882 = vcmp.eq.s32.totalorder %v2850, 1
      %vm2883 = vcmp.eq.s32.totalorder %v2851, 1
      %vm2884 = vcmp.eq.s32.totalorder %v2852, 1
      %vm2885 = vcmp.eq.s32.totalorder %v2853, 1
      %vm2886 = vcmp.eq.s32.totalorder %v2854, 1
      %vm2887 = vcmp.eq.s32.totalorder %v2855, 1
      %vm2888 = vcmp.eq.s32.totalorder %v2856, 1
      %vm2889 = vcmp.eq.s32.totalorder %v2857, 1
      %vm2890 = vcmp.eq.s32.totalorder %v2858, 1
      %vm2891 = vcmp.eq.s32.totalorder %v2859, 1
      %vm2892 = vcmp.eq.s32.totalorder %v2860, 1
      %vm2893 = vcmp.eq.s32.totalorder %v2861, 1
      %vm2894 = vcmp.eq.s32.totalorder %v2862, 1
      %vm2895 = vcmp.eq.s32.totalorder %v2863, 1
      %vm2896 = vcmp.eq.s32.totalorder %v2864, 1
      %v2897 = vsel %vm2865, %v2707, 0.0
      %v2898 = vsel %vm2866, %v2710, 0.0
      %v2899 = vsel %vm2867, %v2715, 0.0
      %v2900 = vsel %vm2868, %v2718, 0.0
      %v2901 = vsel %vm2869, %v2723, 0.0
      %v2902 = vsel %vm2870, %v2726, 0.0
      %v2903 = vsel %vm2871, %v2731, 0.0
      %v2904 = vsel %vm2872, %v2734, 0.0
      %v2905 = vsel %vm2873, %v2739, 0.0
      %v2906 = vsel %vm2874, %v2742, 0.0
      %v2907 = vsel %vm2875, %v2747, 0.0
      %v2908 = vsel %vm2876, %v2750, 0.0
      %v2909 = vsel %vm2877, %v2755, 0.0
      %v2910 = vsel %vm2878, %v2758, 0.0
      %v2911 = vsel %vm2879, %v2763, 0.0
      %v2912 = vsel %vm2880, %v2766, 0.0
      %v2913 = vsel %vm2881, %v2771, 0.0
      %v2914 = vsel %vm2882, %v2774, 0.0
      %v2915 = vsel %vm2883, %v2779, 0.0
      %v2916 = vsel %vm2884, %v2782, 0.0
      %v2917 = vsel %vm2885, %v2787, 0.0
      %v2918 = vsel %vm2886, %v2790, 0.0
      %v2919 = vsel %vm2887, %v2795, 0.0
      %v2920 = vsel %vm2888, %v2798, 0.0
      %v2921 = vsel %vm2889, %v2803, 0.0
      %v2922 = vsel %vm2890, %v2806, 0.0
      %v2923 = vsel %vm2891, %v2811, 0.0
      %v2924 = vsel %vm2892, %v2814, 0.0
      %v2925 = vsel %vm2893, %v2819, 0.0
      %v2926 = vsel %vm2894, %v2822, 0.0
      %v2927 = vsel %vm2895, %v2827, 0.0
      %v2928 = vsel %vm2896, %v2830, 0.0
      %v2929 = vadd.f32 %v2200, %v2897
      %v2930 = vadd.f32 %v2201, %v2898
      %v2931 = vadd.f32 %v2202, %v2899
      %v2932 = vadd.f32 %v2203, %v2900
      %v2933 = vadd.f32 %v2204, %v2901
      %v2934 = vadd.f32 %v2205, %v2902
      %v2935 = vadd.f32 %v2206, %v2903
      %v2936 = vadd.f32 %v2207, %v2904
      %v2937 = vadd.f32 %v2208, %v2905
      %v2938 = vadd.f32 %v2209, %v2906
      %v2939 = vadd.f32 %v2210, %v2907
      %v2940 = vadd.f32 %v2211, %v2908
      %v2941 = vadd.f32 %v2212, %v2909
      %v2942 = vadd.f32 %v2213, %v2910
      %v2943 = vadd.f32 %v2214, %v2911
      %v2944 = vadd.f32 %v2215, %v2912
      %v2945 = vadd.f32 %v2216, %v2913
      %v2946 = vadd.f32 %v2217, %v2914
      %v2947 = vadd.f32 %v2218, %v2915
      %v2948 = vadd.f32 %v2219, %v2916
      %v2949 = vadd.f32 %v2220, %v2917
      %v2950 = vadd.f32 %v2221, %v2918
      %v2951 = vadd.f32 %v2222, %v2919
      %v2952 = vadd.f32 %v2223, %v2920
      %v2953 = vadd.f32 %v2224, %v2921
      %v2954 = vadd.f32 %v2225, %v2922
      %v2955 = vadd.f32 %v2226, %v2923
      %v2956 = vadd.f32 %v2227, %v2924
      %v2957 = vadd.f32 %v2228, %v2925
      %v2958 = vadd.f32 %v2229, %v2926
      %v2959 = vadd.f32 %v2230, %v2927
      %v2960 = vadd.f32 %v2231, %v2928
      %v2961 = vpack.c.bf16 %v2930, %v2929
      %v2962 = vpack.c.bf16 %v2932, %v2931
      %v2963 = vpack.c.bf16 %v2934, %v2933
      %v2964 = vpack.c.bf16 %v2936, %v2935
      %v2965 = vpack.c.bf16 %v2938, %v2937
      %v2966 = vpack.c.bf16 %v2940, %v2939
      %v2967 = vpack.c.bf16 %v2942, %v2941
      %v2968 = vpack.c.bf16 %v2944, %v2943
      %v2969 = vpack.c.bf16 %v2946, %v2945
      %v2970 = vpack.c.bf16 %v2948, %v2947
      %v2971 = vpack.c.bf16 %v2950, %v2949
      %v2972 = vpack.c.bf16 %v2952, %v2951
      %v2973 = vpack.c.bf16 %v2954, %v2953
      %v2974 = vpack.c.bf16 %v2956, %v2955
      %v2975 = vpack.c.bf16 %v2958, %v2957
      %v2976 = vpack.c.bf16 %v2960, %v2959
      %v2993 = vunpack.c.l.b16 %v2961
      %v2994 = vunpack.c.h.b16 %v2961
      %v2995 = vunpack.c.l.b16 %v2962
      %v2996 = vunpack.c.h.b16 %v2962
      %v2997 = vunpack.c.l.b16 %v2963
      %v2998 = vunpack.c.h.b16 %v2963
      %v2999 = vunpack.c.l.b16 %v2964
      %v3000 = vunpack.c.h.b16 %v2964
      %v3001 = vunpack.c.l.b16 %v2965
      %v3002 = vunpack.c.h.b16 %v2965
      %v3003 = vunpack.c.l.b16 %v2966
      %v3004 = vunpack.c.h.b16 %v2966
      %v3005 = vunpack.c.l.b16 %v2967
      %v3006 = vunpack.c.h.b16 %v2967
      %v3007 = vunpack.c.l.b16 %v2968
      %v3008 = vunpack.c.h.b16 %v2968
      %v3009 = vunpack.c.l.b16 %v2969
      %v3010 = vunpack.c.h.b16 %v2969
      %v3011 = vunpack.c.l.b16 %v2970
      %v3012 = vunpack.c.h.b16 %v2970
      %v3013 = vunpack.c.l.b16 %v2971
      %v3014 = vunpack.c.h.b16 %v2971
      %v3015 = vunpack.c.l.b16 %v2972
      %v3016 = vunpack.c.h.b16 %v2972
      %v3017 = vunpack.c.l.b16 %v2973
      %v3018 = vunpack.c.h.b16 %v2973
      %v3019 = vunpack.c.l.b16 %v2974
      %v3020 = vunpack.c.h.b16 %v2974
      %v3021 = vunpack.c.l.b16 %v2975
      %v3022 = vunpack.c.h.b16 %v2975
      %v3023 = vunpack.c.l.b16 %v2976
      %v3024 = vunpack.c.h.b16 %v2976
      %v3025 = vpack.c.b16 %v2993, %v2993
      %v3026 = vpack.c.b16 %v2994, %v2994
      %v3027 = vpack.c.b16 %v2995, %v2995
      %v3028 = vpack.c.b16 %v2996, %v2996
      %v3029 = vpack.c.b16 %v2997, %v2997
      %v3030 = vpack.c.b16 %v2998, %v2998
      %v3031 = vpack.c.b16 %v2999, %v2999
      %v3032 = vpack.c.b16 %v3000, %v3000
      %v3033 = vpack.c.b16 %v3001, %v3001
      %v3034 = vpack.c.b16 %v3002, %v3002
      %v3035 = vpack.c.b16 %v3003, %v3003
      %v3036 = vpack.c.b16 %v3004, %v3004
      %v3037 = vpack.c.b16 %v3005, %v3005
      %v3038 = vpack.c.b16 %v3006, %v3006
      %v3039 = vpack.c.b16 %v3007, %v3007
      %v3040 = vpack.c.b16 %v3008, %v3008
      %v3041 = vpack.c.b16 %v3009, %v3009
      %v3042 = vpack.c.b16 %v3010, %v3010
      %v3043 = vpack.c.b16 %v3011, %v3011
      %v3044 = vpack.c.b16 %v3012, %v3012
      %v3045 = vpack.c.b16 %v3013, %v3013
      %v3046 = vpack.c.b16 %v3014, %v3014
      %v3047 = vpack.c.b16 %v3015, %v3015
      %v3048 = vpack.c.b16 %v3016, %v3016
      %v3049 = vpack.c.b16 %v3017, %v3017
      %v3050 = vpack.c.b16 %v3018, %v3018
      %v3051 = vpack.c.b16 %v3019, %v3019
      %v3052 = vpack.c.b16 %v3020, %v3020
      %v3053 = vpack.c.b16 %v3021, %v3021
      %v3054 = vpack.c.b16 %v3022, %v3022
      %v3055 = vpack.c.b16 %v3023, %v3023
      %v3056 = vpack.c.b16 %v3024, %v3024
      %3089 = vst [vmem:[%s262] sm:$0xf] %v3025
      %3090 = vst [vmem:[%s262 + $0x4] sm:$0xf] %v3026
      %3091 = vst [vmem:[%s262 + $0x8] sm:$0xf] %v3027
      %3092 = vst [vmem:[%s262 + $0xc] sm:$0xf] %v3028
      %3093 = vst [vmem:[%s262 + $0x10] sm:$0xf] %v3029
      %3094 = vst [vmem:[%s262 + $0x14] sm:$0xf] %v3030
      %3095 = vst [vmem:[%s262 + $0x18] sm:$0xf] %v3031
      %3096 = vst [vmem:[%s262 + $0x1c] sm:$0xf] %v3032
      %3097 = vst [vmem:[%s262 + $0x20] sm:$0xf] %v3033
      %3098 = vst [vmem:[%s262 + $0x24] sm:$0xf] %v3034
      %3099 = vst [vmem:[%s262 + $0x28] sm:$0xf] %v3035
      %3100 = vst [vmem:[%s262 + $0x2c] sm:$0xf] %v3036
      %3101 = vst [vmem:[%s262 + $0x30] sm:$0xf] %v3037
      %3102 = vst [vmem:[%s262 + $0x34] sm:$0xf] %v3038
      %3103 = vst [vmem:[%s262 + $0x38] sm:$0xf] %v3039
      %3104 = vst [vmem:[%s262 + $0x3c] sm:$0xf] %v3040
      %3105 = vst [vmem:[%s262 + $0x40] sm:$0xf] %v3041
      %3106 = vst [vmem:[%s262 + $0x44] sm:$0xf] %v3042
      %3107 = vst [vmem:[%s262 + $0x48] sm:$0xf] %v3043
      %3108 = vst [vmem:[%s262 + $0x4c] sm:$0xf] %v3044
      %3109 = vst [vmem:[%s262 + $0x50] sm:$0xf] %v3045
      %3110 = vst [vmem:[%s262 + $0x54] sm:$0xf] %v3046
      %3111 = vst [vmem:[%s262 + $0x58] sm:$0xf] %v3047
      %3112 = vst [vmem:[%s262 + $0x5c] sm:$0xf] %v3048
      %3113 = vst [vmem:[%s262 + $0x60] sm:$0xf] %v3049
      %3114 = vst [vmem:[%s262 + $0x64] sm:$0xf] %v3050
      %3115 = vst [vmem:[%s262 + $0x68] sm:$0xf] %v3051
      %3116 = vst [vmem:[%s262 + $0x6c] sm:$0xf] %v3052
      %3117 = vst [vmem:[%s262 + $0x70] sm:$0xf] %v3053
      %3118 = vst [vmem:[%s262 + $0x74] sm:$0xf] %v3054
      %3119 = vst [vmem:[%s262 + $0x78] sm:$0xf] %v3055
      %3120 = vst [vmem:[%s262 + $0x7c] sm:$0xf] %v3056
      %v3121 = vadd.f32 %v2929, %v2930
      %v3122 = vadd.f32 %v3121, %v2931
      %v3123 = vadd.f32 %v3122, %v2932
      %v3124 = vadd.f32 %v3123, %v2933
      %v3125 = vadd.f32 %v3124, %v2934
      %v3126 = vadd.f32 %v3125, %v2935
      %v3127 = vadd.f32 %v3126, %v2936
      %v3128 = vadd.f32 %v3127, %v2937
      %v3129 = vadd.f32 %v3128, %v2938
      %v3130 = vadd.f32 %v3129, %v2939
      %v3131 = vadd.f32 %v3130, %v2940
      %v3132 = vadd.f32 %v3131, %v2941
      %v3133 = vadd.f32 %v3132, %v2942
      %v3134 = vadd.f32 %v3133, %v2943
      %v3135 = vadd.f32 %v3134, %v2944
      %v3136 = vadd.f32 %v3135, %v2945
      %v3137 = vadd.f32 %v3136, %v2946
      %v3138 = vadd.f32 %v3137, %v2947
      %v3139 = vadd.f32 %v3138, %v2948
      %v3140 = vadd.f32 %v3139, %v2949
      %v3141 = vadd.f32 %v3140, %v2950
      %v3142 = vadd.f32 %v3141, %v2951
      %v3143 = vadd.f32 %v3142, %v2952
      %v3144 = vadd.f32 %v3143, %v2953
      %v3145 = vadd.f32 %v3144, %v2954
      %v3146 = vadd.f32 %v3145, %v2955
      %v3147 = vadd.f32 %v3146, %v2956
      %v3148 = vadd.f32 %v3147, %v2957
      %v3149 = vadd.f32 %v3148, %v2958
      %v3150 = vadd.f32 %v3149, %v2959
      %v3151 = vadd.f32 %v3150, %v2960
      %v3152 = vrot.slane %v3151, 4
      %v3153 = vadd.f32 %v3151, %v3152
      %v3154 = vrot.slane %v3153, 2
      %v3155 = vadd.f32 %v3153, %v3154
      %v3156 = vrot.slane %v3155, 1
      %v3157 = vadd.f32 %v3155, %v3156
      %3158 = vst [vmem:[%s265] sm:$0x1] %v3157
      %v3159 = vmul.f32 %v2929, %v2929
      %v3160 = vmul.f32 %v2930, %v2930
      %v3161 = vmul.f32 %v2931, %v2931
      %v3162 = vmul.f32 %v2932, %v2932
      %v3163 = vmul.f32 %v2933, %v2933
      %v3164 = vmul.f32 %v2934, %v2934
      %v3165 = vmul.f32 %v2935, %v2935
      %v3166 = vmul.f32 %v2936, %v2936
      %v3167 = vmul.f32 %v2937, %v2937
      %v3168 = vmul.f32 %v2938, %v2938
      %v3169 = vmul.f32 %v2939, %v2939
      %v3170 = vmul.f32 %v2940, %v2940
      %v3171 = vmul.f32 %v2941, %v2941
      %v3172 = vmul.f32 %v2942, %v2942
      %v3173 = vmul.f32 %v2943, %v2943
      %v3174 = vmul.f32 %v2944, %v2944
      %v3175 = vmul.f32 %v2945, %v2945
      %v3176 = vmul.f32 %v2946, %v2946
      %v3177 = vmul.f32 %v2947, %v2947
      %v3178 = vmul.f32 %v2948, %v2948
      %v3179 = vmul.f32 %v2949, %v2949
      %v3180 = vmul.f32 %v2950, %v2950
      %v3181 = vmul.f32 %v2951, %v2951
      %v3182 = vmul.f32 %v2952, %v2952
      %v3183 = vmul.f32 %v2953, %v2953
      %v3184 = vmul.f32 %v2954, %v2954
      %v3185 = vmul.f32 %v2955, %v2955
      %v3186 = vmul.f32 %v2956, %v2956
      %v3187 = vmul.f32 %v2957, %v2957
      %v3188 = vmul.f32 %v2958, %v2958
      %v3189 = vmul.f32 %v2959, %v2959
      %v3190 = vmul.f32 %v2960, %v2960
      %v3191 = vadd.f32 %v3159, %v3160
      %v3192 = vadd.f32 %v3191, %v3161
      %v3193 = vadd.f32 %v3192, %v3162
      %v3194 = vadd.f32 %v3193, %v3163
      %v3195 = vadd.f32 %v3194, %v3164
      %v3196 = vadd.f32 %v3195, %v3165
      %v3197 = vadd.f32 %v3196, %v3166
      %v3198 = vadd.f32 %v3197, %v3167
      %v3199 = vadd.f32 %v3198, %v3168
      %v3200 = vadd.f32 %v3199, %v3169
      %v3201 = vadd.f32 %v3200, %v3170
      %v3202 = vadd.f32 %v3201, %v3171
      %v3203 = vadd.f32 %v3202, %v3172
      %v3204 = vadd.f32 %v3203, %v3173
      %v3205 = vadd.f32 %v3204, %v3174
      %v3206 = vadd.f32 %v3205, %v3175
      %v3207 = vadd.f32 %v3206, %v3176
      %v3208 = vadd.f32 %v3207, %v3177
      %v3209 = vadd.f32 %v3208, %v3178
      %v3210 = vadd.f32 %v3209, %v3179
      %v3211 = vadd.f32 %v3210, %v3180
      %v3212 = vadd.f32 %v3211, %v3181
      %v3213 = vadd.f32 %v3212, %v3182
      %v3214 = vadd.f32 %v3213, %v3183
      %v3215 = vadd.f32 %v3214, %v3184
      %v3216 = vadd.f32 %v3215, %v3185
      %v3217 = vadd.f32 %v3216, %v3186
      %v3218 = vadd.f32 %v3217, %v3187
      %v3219 = vadd.f32 %v3218, %v3188
      %v3220 = vadd.f32 %v3219, %v3189
      %v3221 = vadd.f32 %v3220, %v3190
      %v3222 = vrot.slane %v3221, 4
      %v3223 = vadd.f32 %v3221, %v3222
      %v3224 = vrot.slane %v3223, 2
      %v3225 = vadd.f32 %v3223, %v3224
      %v3226 = vrot.slane %v3225, 1
      %v3227 = vadd.f32 %v3225, %v3226
      %3228 = vst [vmem:[%s268] sm:$0x1] %v3227
      %p3229 = scmp.lt.s32.totalorder %s18, 1
      %s3230 = scalar_select %p3229, %s18, 1
      %s3231 = smul.addr %s3230, 32
      %s3232 = smul.addr %s3231, 4
      %s3233 = scalar_lea.vmem %s4, %s3232
      %p3234 = scmp.lt.s32.totalorder %s18, 1
      %s3235 = scalar_select %p3234, %s18, 1
      %s3236 = scalar_lea.vmem %s5, %s3235
      %p3237 = scmp.lt.s32.totalorder %s18, 1
      %s3238 = scalar_select %p3237, %s18, 1
      %s3239 = scalar_lea.vmem %s6, %s3238
      // Predicated region
      $region41: #{bottleneck_forward.5} parent=35 // pred_check
        %p3240 = pneg %p125
      $region42: #{bottleneck_forward.5} parent=35 // pred_check_branch
        %3242 = sbr.rel (%p3240) target = $region44
      $region43: #{bottleneck_forward.5} parent=35 // pred_region
        _
      $region44: #{bottleneck_forward.5} parent=35 // pred_fallthru
        _
      // Predicated region
      $region45: #{bottleneck_forward.5} parent=35 // pred_check
        %p3243 = pneg %p151
      $region46: #{bottleneck_forward.5} parent=35 // pred_check_branch
        %3245 = sbr.rel (%p3243) target = $region48
      $region47: #{bottleneck_forward.5} parent=35 // pred_region
        _
      $region48: #{bottleneck_forward.5} parent=35 // pred_fallthru
        _
      // Predicated region
      $region49: #{bottleneck_forward.5} parent=35 // pred_check
        %p3246 = pneg %p177
      $region50: #{bottleneck_forward.5} parent=35 // pred_check_branch
        %3248 = sbr.rel (%p3246) target = $region52
      $region51: #{bottleneck_forward.5} parent=35 // pred_region
        _
      $region52: #{bottleneck_forward.5} parent=35 // pred_fallthru
        _
    $region36: #{bottleneck_forward.5} parent=5 // pred_fallthru
      _
    %p3249 = scmp.le.s32.totalorder 2, %s13
    // Predicated region
    $region53: #{bottleneck_forward.5} parent=5 // pred_check
      %p3250 = pneg %p3249
    $region54: #{bottleneck_forward.5} parent=5 // pred_check_branch
      %3252 = sbr.rel (%p3250) target = $region56
    $region55: #{bottleneck_forward.5} parent=5 // pred_region
      %s3253 = ssub.s32 %s13, 2
      // Predicated region
      $region57: #{bottleneck_forward.5} parent=55 // pred_check
        %p3254 = pneg %p131
      $region58: #{bottleneck_forward.5} parent=55 // pred_check_branch
        %3256 = sbr.rel (%p3254) target = $region60
      $region59: #{bottleneck_forward.5} parent=55 // pred_region
        %p3257 = scmp.lt.s32.totalorder %s19, 1
        %s3258 = scalar_select %p3257, %s19, 1
        %s3259 = smul.addr %s3258, 32
        %s3260 = smul.addr %s3259, 4
        %s3261 = scalar_lea.vmem %s4, %s3260
      $region60: #{bottleneck_forward.5} parent=55 // pred_fallthru
        _
      // Predicated region
      $region61: #{bottleneck_forward.5} parent=55 // pred_check
        %p3262 = pneg %p157
      $region62: #{bottleneck_forward.5} parent=55 // pred_check_branch
        %3264 = sbr.rel (%p3262) target = $region64
      $region63: #{bottleneck_forward.5} parent=55 // pred_region
        %p3265 = scmp.lt.s32.totalorder %s19, 1
        %s3266 = scalar_select %p3265, %s19, 1
        %s3267 = scalar_lea.vmem %s5, %s3266
      $region64: #{bottleneck_forward.5} parent=55 // pred_fallthru
        _
      // Predicated region
      $region65: #{bottleneck_forward.5} parent=55 // pred_check
        %p3268 = pneg %p183
      $region66: #{bottleneck_forward.5} parent=55 // pred_check_branch
        %3270 = sbr.rel (%p3268) target = $region68
      $region67: #{bottleneck_forward.5} parent=55 // pred_region
        %p3271 = scmp.lt.s32.totalorder %s19, 1
        %s3272 = scalar_select %p3271, %s19, 1
        %s3273 = scalar_lea.vmem %s6, %s3272
      $region68: #{bottleneck_forward.5} parent=55 // pred_fallthru
        _
    $region56: #{bottleneck_forward.5} parent=5 // pred_fallthru
      _
  $region6: #{bottleneck_forward.5} parent=0 // loop_footer
    %s17 = sadd.s32 1, %s13
  $region7: #{bottleneck_forward.5} parent=0 // loop_footer_branch
    %12 = sbr.rel target = $region3
  $region8: #{bottleneck_forward.5} parent=0 // loop_exit
    _

</llo_original>
